<compile_context>
chip_gen: v7x
topology: tpu7x:2x2x1
jax: 0.10.0
libtpu: 0.0.40
codegen_flags: <defaults>
</compile_context>

<pallas_src>
import functools

import jax
import jax.numpy as jnp
from jax.experimental import pallas as pl
from jax.experimental.pallas import tpu as pltpu

EPS = 1e-5
_MIB = 1024 * 1024


# ----------------------------- hardware-aware config -----------------------------
def _device_kind():
    try:
        return jax.devices()[0].device_kind.lower()
    except Exception:
        return ""


def _vmem_limit_bytes():
    """Scoped-VMEM budget: ~80% of this generation's physical VMEM (never above it)."""
    kind = _device_kind()
    cap = None
    try:
        cap = int(pltpu.get_tpu_info().vmem_capacity_bytes)
    except Exception:
        cap = None
    if not cap or cap <= 0:
        cap = 64 * _MIB if "v7" in kind else 128 * _MIB
    if "v7" in kind:                      # 64 MiB per TensorCore on v7x
        cap = min(cap, 64 * _MIB)
    if ("v2" in kind) or ("v3" in kind):  # conservative for very old parts
        cap = min(cap, 16 * _MIB)
    return int(0.8 * cap)


def _use_bf16_exp():
    # bf16 EUP exists on v6e / v7x; keep f32 softmax math elsewhere.
    kind = _device_kind()
    return ("v6" in kind) or ("v7" in kind)


def _attn_tile_prefs():
    """(tq_pref, tk_pref): big content tiles on 128-MiB parts, moderate on v7x."""
    lim = _vmem_limit_bytes()
    if lim >= 96 * _MIB:      # v5e / v6e
        return 4096, 512
    return 2048, 512          # v7x: keep blocks + scratch well inside 64 MiB


def _pick_tile(n, pref):
    """Largest multiple-of-128 divisor of n that is <= pref (or n itself if n <= pref).

    NOTE: for spatial sizes that are not a multiple of 128 this falls back to a single
    full-size tile; pad + mask instead if such feature maps become large.
    """
    if n <= pref:
        return n
    t = (pref // 128) * 128
    while t >= 128:
        if n % t == 0:
            return t
        t -= 128
    return n


def _mvn_stats(x_flat):
    """Per-(batch, channel) mean and 1/std over spatial positions (unbiased, +eps)."""
    n = x_flat.shape[-1]
    mu = jnp.mean(x_flat, axis=-1, keepdims=True)
    var = jnp.sum((x_flat - mu) ** 2, axis=-1, keepdims=True) / (n - 1)
    return mu, jax.lax.rsqrt(var + EPS)


# ------------------------- fused flash-style SANet kernel -----------------------
def _sanet_attn_kernel(c_ref, cmu_ref, cinv_ref, s_ref, smu_ref, sinv_ref,
                       wf_ref, bf_ref, wg_ref, bg_ref, wh_ref, bh_ref,
                       wo_ref, bo_ref, o_ref,
                       f_scr, g_scr, h_scr, m_scr, l_scr, acc_scr, *, bf16_exp):
    i = pl.program_id(1)
    j = pl.program_id(2)

    # Style projections for tile j, computed once per batch (i == 0) and cached in VMEM.
    @pl.when(i == 0)
    def _style_proj():
        s_raw = s_ref[0]                                              # (C, tk) bf16
        sn = ((s_raw.astype(jnp.float32) - smu_ref[0]) * sinv_ref[0]).astype(jnp.bfloat16)
        g = jnp.dot(wg_ref[...], sn, preferred_element_type=jnp.float32) + bg_ref[...]
        h = jnp.dot(wh_ref[...], s_raw, preferred_element_type=jnp.float32) + bh_ref[...]
        g_scr[j] = g.astype(jnp.bfloat16)
        h_scr[j] = h.astype(jnp.bfloat16)

    # Content projection F for tile i, computed once per content tile (j == 0).
    @pl.when(j == 0)
    def _init():
        cn = ((c_ref[0].astype(jnp.float32) - cmu_ref[0]) * cinv_ref[0]).astype(jnp.bfloat16)
        f = jnp.dot(wf_ref[...], cn, preferred_element_type=jnp.float32) + bf_ref[...]
        f_scr[...] = f.astype(jnp.bfloat16)
        m_scr[...] = jnp.full(m_scr.shape, -jnp.inf, jnp.float32)
        l_scr[...] = jnp.zeros(l_scr.shape, jnp.float32)
        acc_scr[...] = jnp.zeros(acc_scr.shape, jnp.float32)

    g_j = g_scr[j]                                                    # (C, tk) bf16
    h_j = h_scr[j]

    # scores (tq, tk) = F^T G, transpose folded into the contraction
    s_sc = jax.lax.dot_general(f_scr[...], g_j, (((0,), (0,)), ((), ())),
                               preferred_element_type=jnp.float32)
    m_prev = m_scr[...]
    m_new = jnp.maximum(m_prev, jnp.max(s_sc, axis=-1, keepdims=True))   # (tq, 1)
    rescale = jnp.exp(m_prev - m_new)
    if bf16_exp:
        p = jnp.exp((s_sc - m_new).astype(jnp.bfloat16))                 # bf16 EUP path
        p_sum = jnp.sum(p.astype(jnp.float32), axis=-1, keepdims=True)
        p_mm = p
    else:
        p_f32 = jnp.exp(s_sc - m_new)
        p_sum = jnp.sum(p_f32, axis=-1, keepdims=True)
        p_mm = p_f32.astype(jnp.bfloat16)
    l_scr[...] = rescale * l_scr[...] + p_sum
    # (tq, C) contribution; contraction over style positions folded (no P.T copy)
    acc_scr[...] = rescale * acc_scr[...] + jax.lax.dot_general(
        p_mm, h_j, (((1,), (1,)), ((), ())), preferred_element_type=jnp.float32)
    m_scr[...] = m_new

    @pl.when(j == pl.num_programs(2) - 1)
    def _finalize():
        o_att = acc_scr[...] * pl.reciprocal(l_scr[...], approx=True)     # (tq, C)
        out = jax.lax.dot_general(wo_ref[...], o_att.astype(jnp.bfloat16),
                                  (((1,), (1,)), ((), ())),
                                  preferred_element_type=jnp.float32) + bo_ref[...]
        o_ref[0] = (out + c_ref[0].astype(jnp.float32)).astype(o_ref.dtype)  # residual


def sanet_apply(c_bf, c_mu, c_inv, s_bf, s_mu, s_inv, params, tq_pref, tk_pref):
    """Fused SANet attention on flattened (B, C, N) bf16 inputs; returns (B, C, Nc) bf16."""
    B, C, nc = c_bf.shape
    ns = s_bf.shape[-1]
    wf, bf_, wg, bg, wh, bh, wo, bo = params
    wf, wg, wh, wo = [w.astype(jnp.bfloat16) for w in (wf, wg, wh, wo)]
    bf_, bg, bh, bo = [b.reshape(C, 1).astype(jnp.float32) for b in (bf_, bg, bh, bo)]

    tq = _pick_tile(nc, tq_pref)
    tk = _pick_tile(ns, tk_pref)
    nq, nk = nc // tq, ns // tk

    return pl.pallas_call(
        functools.partial(_sanet_attn_kernel, bf16_exp=_use_bf16_exp()),
        out_shape=jax.ShapeDtypeStruct((B, C, nc), jnp.bfloat16),
        grid=(B, nq, nk),
        in_specs=[
            pl.BlockSpec((1, C, tq), lambda b, i, j: (b, 0, i)),   # content (bf16)
            pl.BlockSpec((1, C, 1), lambda b, i, j: (b, 0, 0)),    # content mean
            pl.BlockSpec((1, C, 1), lambda b, i, j: (b, 0, 0)),    # content inv-std
            pl.BlockSpec((1, C, tk), lambda b, i, j: (b, 0, j)),   # style (bf16)
            pl.BlockSpec((1, C, 1), lambda b, i, j: (b, 0, 0)),    # style mean
            pl.BlockSpec((1, C, 1), lambda b, i, j: (b, 0, 0)),    # style inv-std
            pl.BlockSpec((C, C), lambda b, i, j: (0, 0)),          # Wf
            pl.BlockSpec((C, 1), lambda b, i, j: (0, 0)),
            pl.BlockSpec((C, C), lambda b, i, j: (0, 0)),          # Wg
            pl.BlockSpec((C, 1), lambda b, i, j: (0, 0)),
            pl.BlockSpec((C, C), lambda b, i, j: (0, 0)),          # Wh
            pl.BlockSpec((C, 1), lambda b, i, j: (0, 0)),
            pl.BlockSpec((C, C), lambda b, i, j: (0, 0)),          # Wo
            pl.BlockSpec((C, 1), lambda b, i, j: (0, 0)),
        ],
        out_specs=pl.BlockSpec((1, C, tq), lambda b, i, j: (b, 0, i)),
        scratch_shapes=[
            pltpu.VMEM((C, tq), jnp.bfloat16),       # F tile (per content tile)
            pltpu.VMEM((nk, C, tk), jnp.bfloat16),   # cached G (whole style, per batch)
            pltpu.VMEM((nk, C, tk), jnp.bfloat16),   # cached H
            pltpu.VMEM((tq, 1), jnp.float32),        # running max
            pltpu.VMEM((tq, 1), jnp.float32),        # running sum(exp)
            pltpu.VMEM((tq, C), jnp.float32),        # output accumulator
        ],
        compiler_params=pltpu.CompilerParams(
            # Only batch is parallel: i/j must run in order on a single core so the
            # cached G/H (written at i==0) and the online-softmax carry stay valid
            # even when v7x shards parallel axes across its two TensorCores.
            dimension_semantics=("parallel", "arbitrary", "arbitrary"),
            vmem_limit_bytes=_vmem_limit_bytes()),
    )(c_bf, c_mu, c_inv, s_bf, s_mu, s_inv, wf, bf_, wg, bg, wh, bh, wo, bo)


# ----------------------------- 3x3 merge-conv kernel -----------------------------
def _merge_conv_kernel(xp_ref, w_ref, b_ref, o_ref, *, Wp, win):
    xp = xp_ref[0]                                 # (C_in, lpad) bf16, loaded once
    tc = o_ref.shape[1]
    acc = jnp.zeros((tc, win), jnp.float32)
    for ky in range(3):
        for kx in range(3):
            off = ky * Wp + kx
            acc = acc + jnp.dot(w_ref[3 * ky + kx], xp[:, off:off + win],
                                preferred_element_type=jnp.float32)
    # store the lane-dense padded (H, Wp) row layout; pad columns cropped in the wrapper
    o_ref[0] = acc + b_ref[...]


def merge_conv_apply(o4, o5, weight, bias):
    """conv3x3(reflect_pad(o4 + nearest_upsample_2x(o5))) + bias; f32 output."""
    B, C, H, W = o4.shape
    Hp, Wp = H + 2, W + 2
    win = H * Wp
    # bf16 fused XLA producer (o4/o5 are already bf16): upsample + add + reflect pad.
    # TODO(synk): fold the upsample/add/reflect-pad into the Pallas kernel itself to
    # save this remaining HBM round trip of the merged tensor.
    o5_up = jnp.repeat(jnp.repeat(o5, 2, axis=2), 2, axis=3)
    xp = jnp.pad((o4 + o5_up).astype(jnp.bfloat16),
                 ((0, 0), (0, 0), (1, 1), (1, 1)), mode="reflect")
    lpad = ((Hp * Wp + 2 + 127) // 128) * 128        # room for the (ky=2, kx=2) window
    xp_flat = jnp.pad(xp.reshape(B, C, Hp * Wp), ((0, 0), (0, 0), (0, lpad - Hp * Wp)))

    w_taps = jnp.transpose(weight, (2, 3, 0, 1)).reshape(9, C, C).astype(jnp.bfloat16)
    bcol = bias.reshape(C, 1).astype(jnp.float32)

    tc = C if C <= 128 else 128                      # output-channel tile
    assert C % tc == 0
    # TODO(synk): tile the lane (spatial) axis of xp as well if feature maps grow beyond
    # ~64x64 at C=512 (v7x VMEM headroom).
    out = pl.pallas_call(
        functools.partial(_merge_conv_kernel, Wp=Wp, win=win),
        out_shape=jax.ShapeDtypeStruct((B, C, win), jnp.float32),
        grid=(B, C // tc),
        in_specs=[
            pl.BlockSpec((1, C, lpad), lambda b, t: (b, 0, 0)),
            pl.BlockSpec((9, tc, C), lambda b, t: (0, t, 0)),
            pl.BlockSpec((tc, 1), lambda b, t: (t, 0)),
        ],
        out_specs=pl.BlockSpec((1, tc, win), lambda b, t: (b, t, 0)),
        compiler_params=pltpu.CompilerParams(
            dimension_semantics=("parallel", "parallel"),
            vmem_limit_bytes=_vmem_limit_bytes()),
    )(xp_flat, w_taps, bcol)
    # crop the two reflection-pad columns of every padded-width row (fuses at HBM BW)
    return out.reshape(B, C, H, Wp)[:, :, :, :W]


# ----------------------------- Transform / Mlmodel glue -----------------------------
def _prep(x):
    """Flatten to (B, C, N): bf16 data for the kernels + f32 MVN stats (computed once)."""
    B, C, H, W = x.shape
    xf = x.reshape(B, C, H * W).astype(jnp.float32)
    mu, inv = _mvn_stats(xf)
    return xf.astype(jnp.bfloat16), mu, inv


def transform_apply(c4p, s4p, c5p, s5p, shapes, params, tile_prefs):
    (H4, W4), (H5, W5) = shapes
    tq_pref, tk_pref = tile_prefs
    o4 = sanet_apply(*c4p, *s4p, params["sanet4_1"], tq_pref, tk_pref)
    o5 = sanet_apply(*c5p, *s5p, params["sanet5_1"], tq_pref, tk_pref)
    B, C = o4.shape[:2]
    o4 = o4.reshape(B, C, H4, W4)
    o5 = o5.reshape(B, C, H5, W5)
    return merge_conv_apply(o4, o5, params["merge_w"], params["merge_b"])


def transform_mlmodel_forward(content4, style4, content5, style5, alpha, params,
                              tile_prefs=None):
    if tile_prefs is None:
        tile_prefs = _attn_tile_prefs()
    shapes = (content4.shape[2:], content5.shape[2:])
    # flatten + stats once; the content prep is shared between the (c,s) and (c,c) passes
    c4p, s4p = _prep(content4), _prep(style4)
    c5p, s5p = _prep(content5), _prep(style5)
    out_cc = transform_apply(c4p, c4p, c5p, c5p, shapes, params, tile_prefs)
    out_cs = transform_apply(c4p, s4p, c5p, s5p, shapes, params, tile_prefs)
    return alpha * out_cs + (1.0 - alpha) * out_cc       # elementwise blend (glue)


# ----------------------------- pure-JAX f32 reference -----------------------------
def _reference_forward(c4, s4, c5, s5, alpha, params):
    def mvn(x):
        B, C, H, W = x.shape
        xf = x.reshape(B, C, -1)
        mu = jnp.mean(xf, axis=-1, keepdims=True)
        var = jnp.sum((xf - mu) ** 2, axis=-1, keepdims=True) / (xf.shape[-1] - 1)
        return ((xf - mu) * jax.lax.rsqrt(var + EPS)).reshape(x.shape)

    def sanet(c, s, p):
        wf, bf_, wg, bg, wh, bh, wo, bo = p
        B, C, H, W = c.shape
        nc = H * W
        ns = s.shape[2] * s.shape[3]
        F = jnp.einsum("oc,bcn->bon", wf, mvn(c).reshape(B, C, nc)) + bf_[None]
        G = jnp.einsum("oc,bcn->bon", wg, mvn(s).reshape(B, C, ns)) + bg[None]
        Hm = jnp.einsum("oc,bcn->bon", wh, s.reshape(B, C, ns)) + bh[None]
        S = jax.nn.softmax(jnp.einsum("bcq,bck->bqk", F, G), axis=-1)
        O = jnp.einsum("bck,bqk->bcq", Hm, S)
        O = jnp.einsum("oc,bcq->boq", wo, O) + bo[None]
        return (O + c.reshape(B, C, nc)).reshape(B, C, H, W)

    def transform(c4_, s4_, c5_, s5_):
        o4 = sanet(c4_, s4_, params["sanet4_1"])
        o5 = sanet(c5_, s5_, params["sanet5_1"])
        o5 = jnp.repeat(jnp.repeat(o5, 2, axis=2), 2, axis=3)
        x = jnp.pad(o4 + o5, ((0, 0), (0, 0), (1, 1), (1, 1)), mode="reflect")
        y = jax.lax.conv_general_dilated(x, params["merge_w"], (1, 1), "VALID",
                                         dimension_numbers=("NCHW", "OIHW", "NCHW"))
        return y + params["merge_b"].reshape(1, -1, 1, 1)

    cc = transform(c4, c4, c5, c5)
    cs = transform(c4, s4, c5, s5)
    return alpha * cs + (1.0 - alpha) * cc


# ----------------------------- deterministic parameter init -----------------------------
def init_params(key, C):
    def conv1x1(k):
        kw, kb = jax.random.split(k)
        return (jax.random.normal(kw, (C, C), jnp.float32) * 0.05,
                jax.random.normal(kb, (C, 1), jnp.float32) * 0.05)

    keys = jax.random.split(key, 10)

    def sanet_params(ks):
        wf, bf_ = conv1x1(ks[0]); wg, bg = conv1x1(ks[1])
        wh, bh = conv1x1(ks[2]); wo, bo = conv1x1(ks[3])
        return (wf, bf_, wg, bg, wh, bh, wo, bo)

    return {
        "sanet4_1": sanet_params(keys[0:4]),
        "sanet5_1": sanet_params(keys[4:8]),
        "merge_w": jax.random.normal(keys[8], (C, C, 3, 3), jnp.float32) * 0.05,
        "merge_b": jax.random.normal(keys[9], (C,), jnp.float32) * 0.05,
    }


if __name__ == "__main__":
    key = jax.random.PRNGKey(0)
    # Original module uses sanet.Transform(512, 512); small synthetic sizes for the demo.
    B, C = 2, 32
    H4 = W4 = 16
    H5 = W5 = 8   # relu5_1 features are half resolution of relu4_1 (upsampled x2)

    kc4, ks4, kc5, ks5, kp = jax.random.split(key, 5)
    content4 = jax.random.normal(kc4, (B, C, H4, W4), jnp.float32)
    style4 = jax.random.normal(ks4, (B, C, H4, W4), jnp.float32)
    content5 = jax.random.normal(kc5, (B, C, H5, W5), jnp.float32)
    style5 = jax.random.normal(ks5, (B, C, H5, W5), jnp.float32)
    alpha = jnp.float32(0.6)

    params = init_params(kp, C)

    # tile_prefs=(128, 128) so the level-4 attention (256 positions) exercises the
    # multi-tile flash-softmax path and the cached-G/H reuse (2x2 attention tiles).
    run = jax.jit(functools.partial(transform_mlmodel_forward, tile_prefs=(128, 128)))
    out = run(content4, style4, content5, style5, alpha, params)
    out = jax.block_until_ready(out)

    assert out.shape == (B, C, H4, W4)
    assert bool(jnp.all(jnp.isfinite(out)))

    # Tolerance check against a pure-JAX f32 reference (bf16 MXU/IO + approx reciprocal
    # give ~1e-2-level deviations, which is the expected envelope for style transfer).
    ref = _reference_forward(content4, style4, content5, style5, alpha, params)
    max_diff = float(jnp.max(jnp.abs(out - ref)))
    mean_diff = float(jnp.mean(jnp.abs(out - ref)))
    assert max_diff < 0.25 and mean_diff < 0.03, (max_diff, mean_diff)

    print("KERNEL_OK")
</pallas_src>

<mosaic_0001>
module attributes {stable_mosaic.version = 11 : i64} {
  func.func @_sanet_attn_kernel(%arg0: i32, %arg1: i32, %arg2: i32, %arg3: memref<1x32x64xbf16, #tpu.memory_space<vmem>>, %arg4: memref<1x32x1xf32, #tpu.memory_space<vmem>>, %arg5: memref<1x32x1xf32, #tpu.memory_space<vmem>>, %arg6: memref<1x32x64xbf16, #tpu.memory_space<vmem>>, %arg7: memref<1x32x1xf32, #tpu.memory_space<vmem>>, %arg8: memref<1x32x1xf32, #tpu.memory_space<vmem>>, %arg9: memref<32x32xbf16, #tpu.memory_space<vmem>>, %arg10: memref<32x1xf32, #tpu.memory_space<vmem>>, %arg11: memref<32x32xbf16, #tpu.memory_space<vmem>>, %arg12: memref<32x1xf32, #tpu.memory_space<vmem>>, %arg13: memref<32x32xbf16, #tpu.memory_space<vmem>>, %arg14: memref<32x1xf32, #tpu.memory_space<vmem>>, %arg15: memref<32x32xbf16, #tpu.memory_space<vmem>>, %arg16: memref<32x1xf32, #tpu.memory_space<vmem>>, %arg17: memref<1x32x64xbf16, #tpu.memory_space<vmem>>, %arg18: memref<32x64xbf16, #tpu.memory_space<vmem>>, %arg19: memref<1x32x64xbf16, #tpu.memory_space<vmem>>, %arg20: memref<1x32x64xbf16, #tpu.memory_space<vmem>>, %arg21: memref<64x1xf32, #tpu.memory_space<vmem>>, %arg22: memref<64x1xf32, #tpu.memory_space<vmem>>, %arg23: memref<64x32xf32, #tpu.memory_space<vmem>>) attributes {dimension_semantics = [#tpu.dimension_semantics<parallel>, #tpu.dimension_semantics<arbitrary>, #tpu.dimension_semantics<arbitrary>], iteration_bounds = array<i64: 2, 1, 1>, scalar_prefetch = 0 : i64, scratch_operands = 6 : i64, tpu.core_type = #tpu.core_type<tc>, window_params = [{transform_indices = @transform_0, window_bounds = array<i64: 1, 32, 64>}, {transform_indices = @transform_1, window_bounds = array<i64: 1, 32, 1>}, {transform_indices = @transform_2, window_bounds = array<i64: 1, 32, 1>}, {transform_indices = @transform_3, window_bounds = array<i64: 1, 32, 64>}, {transform_indices = @transform_4, window_bounds = array<i64: 1, 32, 1>}, {transform_indices = @transform_5, window_bounds = array<i64: 1, 32, 1>}, {pipeline_mode = #tpu.pipeline_mode<synchronous>, transform_indices = @transform_6, window_bounds = array<i64: 32, 32>}, {pipeline_mode = #tpu.pipeline_mode<synchronous>, transform_indices = @transform_7, window_bounds = array<i64: 32, 1>}, {pipeline_mode = #tpu.pipeline_mode<synchronous>, transform_indices = @transform_8, window_bounds = array<i64: 32, 32>}, {pipeline_mode = #tpu.pipeline_mode<synchronous>, transform_indices = @transform_9, window_bounds = array<i64: 32, 1>}, {pipeline_mode = #tpu.pipeline_mode<synchronous>, transform_indices = @transform_10, window_bounds = array<i64: 32, 32>}, {pipeline_mode = #tpu.pipeline_mode<synchronous>, transform_indices = @transform_11, window_bounds = array<i64: 32, 1>}, {pipeline_mode = #tpu.pipeline_mode<synchronous>, transform_indices = @transform_12, window_bounds = array<i64: 32, 32>}, {pipeline_mode = #tpu.pipeline_mode<synchronous>, transform_indices = @transform_13, window_bounds = array<i64: 32, 1>}, {transform_indices = @transform_14, window_bounds = array<i64: 1, 32, 64>}]} {
    %c0_i32 = arith.constant 0 : i32
    %0 = arith.cmpi eq, %arg1, %c0_i32 : i32
    %1 = arith.extui %0 : i1 to i32
    %c0_i32_0 = arith.constant 0 : i32
    %2 = arith.cmpi ne, %1, %c0_i32_0 : i32
    scf.if %2 {
      %c0_25 = arith.constant 0 : index
      %c0_26 = arith.constant 0 : index
      %c0_27 = arith.constant 0 : index
      %40 = vector.load %arg6[%c0_25, %c0_26, %c0_27] : memref<1x32x64xbf16, #tpu.memory_space<vmem>>, vector<1x32x64xbf16>
      %41 = vector.shape_cast %40 : vector<1x32x64xbf16> to vector<32x64xbf16>
      %42 = arith.extf %41 : vector<32x64xbf16> to vector<32x64xf32>
      %c0_28 = arith.constant 0 : index
      %c0_29 = arith.constant 0 : index
      %c0_30 = arith.constant 0 : index
      %43 = vector.load %arg7[%c0_28, %c0_29, %c0_30] : memref<1x32x1xf32, #tpu.memory_space<vmem>>, vector<1x32x1xf32>
      %44 = vector.shape_cast %43 : vector<1x32x1xf32> to vector<32x1xf32>
      %45 = vector.broadcast %44 : vector<32x1xf32> to vector<32x64xf32>
      %46 = arith.subf %42, %45 : vector<32x64xf32>
      %c0_31 = arith.constant 0 : index
      %c0_32 = arith.constant 0 : index
      %c0_33 = arith.constant 0 : index
      %47 = vector.load %arg8[%c0_31, %c0_32, %c0_33] : memref<1x32x1xf32, #tpu.memory_space<vmem>>, vector<1x32x1xf32>
      %48 = vector.shape_cast %47 : vector<1x32x1xf32> to vector<32x1xf32>
      %49 = vector.broadcast %48 : vector<32x1xf32> to vector<32x64xf32>
      %50 = arith.mulf %46, %49 : vector<32x64xf32>
      %51 = arith.truncf %50 : vector<32x64xf32> to vector<32x64xbf16>
      %c0_34 = arith.constant 0 : index
      %c0_35 = arith.constant 0 : index
      %52 = vector.load %arg11[%c0_34, %c0_35] : memref<32x32xbf16, #tpu.memory_space<vmem>>, vector<32x32xbf16>
      %cst_36 = arith.constant dense<0.000000e+00> : vector<32x64xf32>
      %53 = tpu.matmul %52, %51, %cst_36 {dimension_numbers = #tpu.dot_dimension_numbers<[1], [0], [0], [1], [0, 0, 1, 1], [], []>} : vector<32x32xbf16>, vector<32x64xbf16>, vector<32x64xf32> -> vector<32x64xf32>
      %c0_37 = arith.constant 0 : index
      %c0_38 = arith.constant 0 : index
      %54 = vector.load %arg12[%c0_37, %c0_38] : memref<32x1xf32, #tpu.memory_space<vmem>>, vector<32x1xf32>
      %55 = vector.broadcast %54 : vector<32x1xf32> to vector<32x64xf32>
      %56 = arith.addf %53, %55 : vector<32x64xf32>
      %c0_39 = arith.constant 0 : index
      %c0_40 = arith.constant 0 : index
      %57 = vector.load %arg13[%c0_39, %c0_40] : memref<32x32xbf16, #tpu.memory_space<vmem>>, vector<32x32xbf16>
      %cst_41 = arith.constant dense<0.000000e+00> : vector<32x64xf32>
      %58 = tpu.matmul %57, %41, %cst_41 {dimension_numbers = #tpu.dot_dimension_numbers<[1], [0], [0], [1], [0, 0, 1, 1], [], []>} : vector<32x32xbf16>, vector<32x64xbf16>, vector<32x64xf32> -> vector<32x64xf32>
      %c0_42 = arith.constant 0 : index
      %c0_43 = arith.constant 0 : index
      %59 = vector.load %arg14[%c0_42, %c0_43] : memref<32x1xf32, #tpu.memory_space<vmem>>, vector<32x1xf32>
      %60 = vector.broadcast %59 : vector<32x1xf32> to vector<32x64xf32>
      %61 = arith.addf %58, %60 : vector<32x64xf32>
      %62 = arith.truncf %56 : vector<32x64xf32> to vector<32x64xbf16>
      %63 = arith.index_cast %arg2 : i32 to index
      %c0_44 = arith.constant 0 : index
      %c0_45 = arith.constant 0 : index
      %64 = vector.load %arg19[%63, %c0_44, %c0_45] : memref<1x32x64xbf16, #tpu.memory_space<vmem>>, vector<1x32x64xbf16>
      %65 = vector.shape_cast %64 : vector<1x32x64xbf16> to vector<32x64xbf16>
      %66 = vector.shape_cast %62 : vector<32x64xbf16> to vector<1x32x64xbf16>
      tpu.vector_store %arg19[%63, %c0_44, %c0_45], %66 {strides = array<i32>} : memref<1x32x64xbf16, #tpu.memory_space<vmem>>, vector<1x32x64xbf16>,
      %67 = arith.truncf %61 : vector<32x64xf32> to vector<32x64xbf16>
      %68 = arith.index_cast %arg2 : i32 to index
      %c0_46 = arith.constant 0 : index
      %c0_47 = arith.constant 0 : index
      %69 = vector.load %arg20[%68, %c0_46, %c0_47] : memref<1x32x64xbf16, #tpu.memory_space<vmem>>, vector<1x32x64xbf16>
      %70 = vector.shape_cast %69 : vector<1x32x64xbf16> to vector<32x64xbf16>
      %71 = vector.shape_cast %67 : vector<32x64xbf16> to vector<1x32x64xbf16>
      tpu.vector_store %arg20[%68, %c0_46, %c0_47], %71 {strides = array<i32>} : memref<1x32x64xbf16, #tpu.memory_space<vmem>>, vector<1x32x64xbf16>,
    } else {
    }
    %c0_i32_1 = arith.constant 0 : i32
    %3 = arith.cmpi eq, %arg2, %c0_i32_1 : i32
    %4 = arith.extui %3 : i1 to i32
    %c0_i32_2 = arith.constant 0 : i32
    %5 = arith.cmpi ne, %4, %c0_i32_2 : i32
    scf.if %5 {
      %c0_25 = arith.constant 0 : index
      %c0_26 = arith.constant 0 : index
      %c0_27 = arith.constant 0 : index
      %40 = vector.load %arg3[%c0_25, %c0_26, %c0_27] : memref<1x32x64xbf16, #tpu.memory_space<vmem>>, vector<1x32x64xbf16>
      %41 = vector.shape_cast %40 : vector<1x32x64xbf16> to vector<32x64xbf16>
      %42 = arith.extf %41 : vector<32x64xbf16> to vector<32x64xf32>
      %c0_28 = arith.constant 0 : index
      %c0_29 = arith.constant 0 : index
      %c0_30 = arith.constant 0 : index
      %43 = vector.load %arg4[%c0_28, %c0_29, %c0_30] : memref<1x32x1xf32, #tpu.memory_space<vmem>>, vector<1x32x1xf32>
      %44 = vector.shape_cast %43 : vector<1x32x1xf32> to vector<32x1xf32>
      %45 = vector.broadcast %44 : vector<32x1xf32> to vector<32x64xf32>
      %46 = arith.subf %42, %45 : vector<32x64xf32>
      %c0_31 = arith.constant 0 : index
      %c0_32 = arith.constant 0 : index
      %c0_33 = arith.constant 0 : index
      %47 = vector.load %arg5[%c0_31, %c0_32, %c0_33] : memref<1x32x1xf32, #tpu.memory_space<vmem>>, vector<1x32x1xf32>
      %48 = vector.shape_cast %47 : vector<1x32x1xf32> to vector<32x1xf32>
      %49 = vector.broadcast %48 : vector<32x1xf32> to vector<32x64xf32>
      %50 = arith.mulf %46, %49 : vector<32x64xf32>
      %51 = arith.truncf %50 : vector<32x64xf32> to vector<32x64xbf16>
      %c0_34 = arith.constant 0 : index
      %c0_35 = arith.constant 0 : index
      %52 = vector.load %arg9[%c0_34, %c0_35] : memref<32x32xbf16, #tpu.memory_space<vmem>>, vector<32x32xbf16>
      %cst_36 = arith.constant dense<0.000000e+00> : vector<32x64xf32>
      %53 = tpu.matmul %52, %51, %cst_36 {dimension_numbers = #tpu.dot_dimension_numbers<[1], [0], [0], [1], [0, 0, 1, 1], [], []>} : vector<32x32xbf16>, vector<32x64xbf16>, vector<32x64xf32> -> vector<32x64xf32>
      %c0_37 = arith.constant 0 : index
      %c0_38 = arith.constant 0 : index
      %54 = vector.load %arg10[%c0_37, %c0_38] : memref<32x1xf32, #tpu.memory_space<vmem>>, vector<32x1xf32>
      %55 = vector.broadcast %54 : vector<32x1xf32> to vector<32x64xf32>
      %56 = arith.addf %53, %55 : vector<32x64xf32>
      %57 = arith.truncf %56 : vector<32x64xf32> to vector<32x64xbf16>
      %c0_39 = arith.constant 0 : index
      %c0_40 = arith.constant 0 : index
      %58 = vector.load %arg18[%c0_39, %c0_40] : memref<32x64xbf16, #tpu.memory_space<vmem>>, vector<32x64xbf16>
      tpu.vector_store %arg18[%c0_39, %c0_40], %57 {strides = array<i32>} : memref<32x64xbf16, #tpu.memory_space<vmem>>, vector<32x64xbf16>,
      %cst_41 = arith.constant 0xFF800000 : f32
      %59 = vector.broadcast %cst_41 : f32 to vector<64x1xf32>
      %c0_42 = arith.constant 0 : index
      %c0_43 = arith.constant 0 : index
      %60 = vector.load %arg21[%c0_42, %c0_43] : memref<64x1xf32, #tpu.memory_space<vmem>>, vector<64x1xf32>
      tpu.vector_store %arg21[%c0_42, %c0_43], %59 {strides = array<i32>} : memref<64x1xf32, #tpu.memory_space<vmem>>, vector<64x1xf32>,
      %cst_44 = arith.constant 0.000000e+00 : f32
      %61 = vector.broadcast %cst_44 : f32 to vector<64x1xf32>
      %c0_45 = arith.constant 0 : index
      %c0_46 = arith.constant 0 : index
      %62 = vector.load %arg22[%c0_45, %c0_46] : memref<64x1xf32, #tpu.memory_space<vmem>>, vector<64x1xf32>
      tpu.vector_store %arg22[%c0_45, %c0_46], %61 {strides = array<i32>} : memref<64x1xf32, #tpu.memory_space<vmem>>, vector<64x1xf32>,
      %cst_47 = arith.constant 0.000000e+00 : f32
      %63 = vector.broadcast %cst_47 : f32 to vector<64x32xf32>
      %c0_48 = arith.constant 0 : index
      %c0_49 = arith.constant 0 : index
      %64 = vector.load %arg23[%c0_48, %c0_49] : memref<64x32xf32, #tpu.memory_space<vmem>>, vector<64x32xf32>
      tpu.vector_store %arg23[%c0_48, %c0_49], %63 {strides = array<i32>} : memref<64x32xf32, #tpu.memory_space<vmem>>, vector<64x32xf32>,
    } else {
    }
    %6 = arith.index_cast %arg2 : i32 to index
    %c0 = arith.constant 0 : index
    %c0_3 = arith.constant 0 : index
    %7 = vector.load %arg19[%6, %c0, %c0_3] : memref<1x32x64xbf16, #tpu.memory_space<vmem>>, vector<1x32x64xbf16>
    %8 = vector.shape_cast %7 : vector<1x32x64xbf16> to vector<32x64xbf16>
    %9 = arith.index_cast %arg2 : i32 to index
    %c0_4 = arith.constant 0 : index
    %c0_5 = arith.constant 0 : index
    %10 = vector.load %arg20[%9, %c0_4, %c0_5] : memref<1x32x64xbf16, #tpu.memory_space<vmem>>, vector<1x32x64xbf16>
    %11 = vector.shape_cast %10 : vector<1x32x64xbf16> to vector<32x64xbf16>
    %c0_6 = arith.constant 0 : index
    %c0_7 = arith.constant 0 : index
    %12 = vector.load %arg18[%c0_6, %c0_7] : memref<32x64xbf16, #tpu.memory_space<vmem>>, vector<32x64xbf16>
    %cst = arith.constant dense<0.000000e+00> : vector<64x64xf32>
    %13 = tpu.matmul %12, %8, %cst {dimension_numbers = #tpu.dot_dimension_numbers<[0], [0], [1], [1], [0, 1, 1, 1], [], []>} : vector<32x64xbf16>, vector<32x64xbf16>, vector<64x64xf32> -> vector<64x64xf32>
    %c0_8 = arith.constant 0 : index
    %c0_9 = arith.constant 0 : index
    %14 = vector.load %arg21[%c0_8, %c0_9] : memref<64x1xf32, #tpu.memory_space<vmem>>, vector<64x1xf32>
    %cst_10 = arith.constant dense<0xFF800000> : vector<64xf32>
    %15 = vector.multi_reduction <maximumf>, %13, %cst_10 [1] : vector<64x64xf32> to vector<64xf32>
    %16 = vector.shape_cast %15 : vector<64xf32> to vector<64x1xf32>
    %17 = arith.maximumf %14, %16 : vector<64x1xf32>
    %18 = arith.subf %14, %17 : vector<64x1xf32>
    %19 = math.exp %18 : vector<64x1xf32>
    %20 = vector.broadcast %17 : vector<64x1xf32> to vector<64x64xf32>
    %21 = arith.subf %13, %20 : vector<64x64xf32>
    %22 = math.exp %21 : vector<64x64xf32>
    %cst_11 = arith.constant dense<0.000000e+00> : vector<64xf32>
    %23 = vector.multi_reduction <add>, %22, %cst_11 [1] : vector<64x64xf32> to vector<64xf32>
    %24 = vector.shape_cast %23 : vector<64xf32> to vector<64x1xf32>
    %25 = arith.truncf %22 : vector<64x64xf32> to vector<64x64xbf16>
    %c0_12 = arith.constant 0 : index
    %c0_13 = arith.constant 0 : index
    %26 = vector.load %arg22[%c0_12, %c0_13] : memref<64x1xf32, #tpu.memory_space<vmem>>, vector<64x1xf32>
    %27 = arith.mulf %19, %26 : vector<64x1xf32>
    %28 = arith.addf %27, %24 : vector<64x1xf32>
    %c0_14 = arith.constant 0 : index
    %c0_15 = arith.constant 0 : index
    %29 = vector.load %arg22[%c0_14, %c0_15] : memref<64x1xf32, #tpu.memory_space<vmem>>, vector<64x1xf32>
    tpu.vector_store %arg22[%c0_14, %c0_15], %28 {strides = array<i32>} : memref<64x1xf32, #tpu.memory_space<vmem>>, vector<64x1xf32>,
    %c0_16 = arith.constant 0 : index
    %c0_17 = arith.constant 0 : index
    %30 = vector.load %arg23[%c0_16, %c0_17] : memref<64x32xf32, #tpu.memory_space<vmem>>, vector<64x32xf32>
    %31 = vector.broadcast %19 : vector<64x1xf32> to vector<64x32xf32>
    %32 = arith.mulf %31, %30 : vector<64x32xf32>
    %cst_18 = arith.constant dense<0.000000e+00> : vector<64x32xf32>
    %33 = tpu.matmul %25, %11, %cst_18 {dimension_numbers = #tpu.dot_dimension_numbers<[1], [1], [0], [0], [0, 0, 1, 0], [], []>} : vector<64x64xbf16>, vector<32x64xbf16>, vector<64x32xf32> -> vector<64x32xf32>
    %34 = arith.addf %32, %33 : vector<64x32xf32>
    %c0_19 = arith.constant 0 : index
    %c0_20 = arith.constant 0 : index
    %35 = vector.load %arg23[%c0_19, %c0_20] : memref<64x32xf32, #tpu.memory_space<vmem>>, vector<64x32xf32>
    tpu.vector_store %arg23[%c0_19, %c0_20], %34 {strides = array<i32>} : memref<64x32xf32, #tpu.memory_space<vmem>>, vector<64x32xf32>,
    %c0_21 = arith.constant 0 : index
    %c0_22 = arith.constant 0 : index
    %36 = vector.load %arg21[%c0_21, %c0_22] : memref<64x1xf32, #tpu.memory_space<vmem>>, vector<64x1xf32>
    tpu.vector_store %arg21[%c0_21, %c0_22], %17 {strides = array<i32>} : memref<64x1xf32, #tpu.memory_space<vmem>>, vector<64x1xf32>,
    %c0_i32_23 = arith.constant 0 : i32
    %37 = arith.cmpi eq, %arg2, %c0_i32_23 : i32
    %38 = arith.extui %37 : i1 to i32
    %c0_i32_24 = arith.constant 0 : i32
    %39 = arith.cmpi ne, %38, %c0_i32_24 : i32
    scf.if %39 {
      %c0_25 = arith.constant 0 : index
      %c0_26 = arith.constant 0 : index
      %40 = vector.load %arg23[%c0_25, %c0_26] : memref<64x32xf32, #tpu.memory_space<vmem>>, vector<64x32xf32>
      %c0_27 = arith.constant 0 : index
      %c0_28 = arith.constant 0 : index
      %41 = vector.load %arg22[%c0_27, %c0_28] : memref<64x1xf32, #tpu.memory_space<vmem>>, vector<64x1xf32>
      %42 = tpu.reciprocal %41 {approx = true} : vector<64x1xf32> -> vector<64x1xf32>
      %43 = vector.broadcast %42 : vector<64x1xf32> to vector<64x32xf32>
      %44 = arith.mulf %40, %43 : vector<64x32xf32>
      %c0_29 = arith.constant 0 : index
      %c0_30 = arith.constant 0 : index
      %45 = vector.load %arg15[%c0_29, %c0_30] : memref<32x32xbf16, #tpu.memory_space<vmem>>, vector<32x32xbf16>
      %46 = arith.truncf %44 : vector<64x32xf32> to vector<64x32xbf16>
      %cst_31 = arith.constant dense<0.000000e+00> : vector<32x64xf32>
      %47 = tpu.matmul %45, %46, %cst_31 {dimension_numbers = #tpu.dot_dimension_numbers<[1], [1], [0], [0], [0, 0, 1, 0], [], []>} : vector<32x32xbf16>, vector<64x32xbf16>, vector<32x64xf32> -> vector<32x64xf32>
      %c0_32 = arith.constant 0 : index
      %c0_33 = arith.constant 0 : index
      %48 = vector.load %arg16[%c0_32, %c0_33] : memref<32x1xf32, #tpu.memory_space<vmem>>, vector<32x1xf32>
      %49 = vector.broadcast %48 : vector<32x1xf32> to vector<32x64xf32>
      %50 = arith.addf %47, %49 : vector<32x64xf32>
      %c0_34 = arith.constant 0 : index
      %c0_35 = arith.constant 0 : index
      %c0_36 = arith.constant 0 : index
      %51 = vector.load %arg3[%c0_34, %c0_35, %c0_36] : memref<1x32x64xbf16, #tpu.memory_space<vmem>>, vector<1x32x64xbf16>
      %52 = vector.shape_cast %51 : vector<1x32x64xbf16> to vector<32x64xbf16>
      %53 = arith.extf %52 : vector<32x64xbf16> to vector<32x64xf32>
      %54 = arith.addf %50, %53 : vector<32x64xf32>
      %55 = arith.truncf %54 : vector<32x64xf32> to vector<32x64xbf16>
      %c0_37 = arith.constant 0 : index
      %c0_38 = arith.constant 0 : index
      %c0_39 = arith.constant 0 : index
      %56 = vector.load %arg17[%c0_37, %c0_38, %c0_39] : memref<1x32x64xbf16, #tpu.memory_space<vmem>>, vector<1x32x64xbf16>
      %57 = vector.shape_cast %56 : vector<1x32x64xbf16> to vector<32x64xbf16>
      %58 = vector.shape_cast %55 : vector<32x64xbf16> to vector<1x32x64xbf16>
      tpu.vector_store %arg17[%c0_37, %c0_38, %c0_39], %58 {strides = array<i32>} : memref<1x32x64xbf16, #tpu.memory_space<vmem>>, vector<1x32x64xbf16>,
    } else {
    }
    return
  }
  func.func @transform_0(%arg0: i32, %arg1: i32, %arg2: i32) -> (i32, i32, i32) {
    %c0_i32 = arith.constant 0 : i32
    %c0_i32_0 = arith.constant 0 : i32
    return %arg0, %c0_i32, %arg1 : i32, i32, i32
  }
  func.func @transform_1(%arg0: i32, %arg1: i32, %arg2: i32) -> (i32, i32, i32) {
    %c0_i32 = arith.constant 0 : i32
    %c0_i32_0 = arith.constant 0 : i32
    %c0_i32_1 = arith.constant 0 : i32
    return %arg0, %c0_i32, %c0_i32_0 : i32, i32, i32
  }
  func.func @transform_2(%arg0: i32, %arg1: i32, %arg2: i32) -> (i32, i32, i32) {
    %c0_i32 = arith.constant 0 : i32
    %c0_i32_0 = arith.constant 0 : i32
    %c0_i32_1 = arith.constant 0 : i32
    return %arg0, %c0_i32, %c0_i32_0 : i32, i32, i32
  }
  func.func @transform_3(%arg0: i32, %arg1: i32, %arg2: i32) -> (i32, i32, i32) {
    %c0_i32 = arith.constant 0 : i32
    %c0_i32_0 = arith.constant 0 : i32
    return %arg0, %c0_i32, %arg2 : i32, i32, i32
  }
  func.func @transform_4(%arg0: i32, %arg1: i32, %arg2: i32) -> (i32, i32, i32) {
    %c0_i32 = arith.constant 0 : i32
    %c0_i32_0 = arith.constant 0 : i32
    %c0_i32_1 = arith.constant 0 : i32
    return %arg0, %c0_i32, %c0_i32_0 : i32, i32, i32
  }
  func.func @transform_5(%arg0: i32, %arg1: i32, %arg2: i32) -> (i32, i32, i32) {
    %c0_i32 = arith.constant 0 : i32
    %c0_i32_0 = arith.constant 0 : i32
    %c0_i32_1 = arith.constant 0 : i32
    return %arg0, %c0_i32, %c0_i32_0 : i32, i32, i32
  }
  func.func @transform_6(%arg0: i32, %arg1: i32, %arg2: i32) -> (i32, i32) {
    %c0_i32 = arith.constant 0 : i32
    %c0_i32_0 = arith.constant 0 : i32
    %c0_i32_1 = arith.constant 0 : i32
    return %c0_i32, %c0_i32_0 : i32, i32
  }
  func.func @transform_7(%arg0: i32, %arg1: i32, %arg2: i32) -> (i32, i32) {
    %c0_i32 = arith.constant 0 : i32
    %c0_i32_0 = arith.constant 0 : i32
    %c0_i32_1 = arith.constant 0 : i32
    return %c0_i32, %c0_i32_0 : i32, i32
  }
  func.func @transform_8(%arg0: i32, %arg1: i32, %arg2: i32) -> (i32, i32) {
    %c0_i32 = arith.constant 0 : i32
    %c0_i32_0 = arith.constant 0 : i32
    %c0_i32_1 = arith.constant 0 : i32
    return %c0_i32, %c0_i32_0 : i32, i32
  }
  func.func @transform_9(%arg0: i32, %arg1: i32, %arg2: i32) -> (i32, i32) {
    %c0_i32 = arith.constant 0 : i32
    %c0_i32_0 = arith.constant 0 : i32
    %c0_i32_1 = arith.constant 0 : i32
    return %c0_i32, %c0_i32_0 : i32, i32
  }
  func.func @transform_10(%arg0: i32, %arg1: i32, %arg2: i32) -> (i32, i32) {
    %c0_i32 = arith.constant 0 : i32
    %c0_i32_0 = arith.constant 0 : i32
    %c0_i32_1 = arith.constant 0 : i32
    return %c0_i32, %c0_i32_0 : i32, i32
  }
  func.func @transform_11(%arg0: i32, %arg1: i32, %arg2: i32) -> (i32, i32) {
    %c0_i32 = arith.constant 0 : i32
    %c0_i32_0 = arith.constant 0 : i32
    %c0_i32_1 = arith.constant 0 : i32
    return %c0_i32, %c0_i32_0 : i32, i32
  }
  func.func @transform_12(%arg0: i32, %arg1: i32, %arg2: i32) -> (i32, i32) {
    %c0_i32 = arith.constant 0 : i32
    %c0_i32_0 = arith.constant 0 : i32
    %c0_i32_1 = arith.constant 0 : i32
    return %c0_i32, %c0_i32_0 : i32, i32
  }
  func.func @transform_13(%arg0: i32, %arg1: i32, %arg2: i32) -> (i32, i32) {
    %c0_i32 = arith.constant 0 : i32
    %c0_i32_0 = arith.constant 0 : i32
    %c0_i32_1 = arith.constant 0 : i32
    return %c0_i32, %c0_i32_0 : i32, i32
  }
  func.func @transform_14(%arg0: i32, %arg1: i32, %arg2: i32) -> (i32, i32, i32) {
    %c0_i32 = arith.constant 0 : i32
    %c0_i32_0 = arith.constant 0 : i32
    return %arg0, %c0_i32, %arg1 : i32, i32, i32
  }
}

module attributes {stable_mosaic.version = 11 : i64} {
  func.func @_sanet_attn_kernel(%arg0: i32, %arg1: i32, %arg2: i32, %arg3: memref<1x32x128xbf16, #tpu.memory_space<vmem>>, %arg4: memref<1x32x1xf32, #tpu.memory_space<vmem>>, %arg5: memref<1x32x1xf32, #tpu.memory_space<vmem>>, %arg6: memref<1x32x128xbf16, #tpu.memory_space<vmem>>, %arg7: memref<1x32x1xf32, #tpu.memory_space<vmem>>, %arg8: memref<1x32x1xf32, #tpu.memory_space<vmem>>, %arg9: memref<32x32xbf16, #tpu.memory_space<vmem>>, %arg10: memref<32x1xf32, #tpu.memory_space<vmem>>, %arg11: memref<32x32xbf16, #tpu.memory_space<vmem>>, %arg12: memref<32x1xf32, #tpu.memory_space<vmem>>, %arg13: memref<32x32xbf16, #tpu.memory_space<vmem>>, %arg14: memref<32x1xf32, #tpu.memory_space<vmem>>, %arg15: memref<32x32xbf16, #tpu.memory_space<vmem>>, %arg16: memref<32x1xf32, #tpu.memory_space<vmem>>, %arg17: memref<1x32x128xbf16, #tpu.memory_space<vmem>>, %arg18: memref<32x128xbf16, #tpu.memory_space<vmem>>, %arg19: memref<2x32x128xbf16, #tpu.memory_space<vmem>>, %arg20: memref<2x32x128xbf16, #tpu.memory_space<vmem>>, %arg21: memref<128x1xf32, #tpu.memory_space<vmem>>, %arg22: memref<128x1xf32, #tpu.memory_space<vmem>>, %arg23: memref<128x32xf32, #tpu.memory_space<vmem>>) attributes {dimension_semantics = [#tpu.dimension_semantics<parallel>, #tpu.dimension_semantics<arbitrary>, #tpu.dimension_semantics<arbitrary>], iteration_bounds = array<i64: 2, 2, 2>, scalar_prefetch = 0 : i64, scratch_operands = 6 : i64, tpu.core_type = #tpu.core_type<tc>, window_params = [{transform_indices = @transform_0, window_bounds = array<i64: 1, 32, 128>}, {transform_indices = @transform_1, window_bounds = array<i64: 1, 32, 1>}, {transform_indices = @transform_2, window_bounds = array<i64: 1, 32, 1>}, {transform_indices = @transform_3, window_bounds = array<i64: 1, 32, 128>}, {transform_indices = @transform_4, window_bounds = array<i64: 1, 32, 1>}, {transform_indices = @transform_5, window_bounds = array<i64: 1, 32, 1>}, {pipeline_mode = #tpu.pipeline_mode<synchronous>, transform_indices = @transform_6, window_bounds = array<i64: 32, 32>}, {pipeline_mode = #tpu.pipeline_mode<synchronous>, transform_indices = @transform_7, window_bounds = array<i64: 32, 1>}, {pipeline_mode = #tpu.pipeline_mode<synchronous>, transform_indices = @transform_8, window_bounds = array<i64: 32, 32>}, {pipeline_mode = #tpu.pipeline_mode<synchronous>, transform_indices = @transform_9, window_bounds = array<i64: 32, 1>}, {pipeline_mode = #tpu.pipeline_mode<synchronous>, transform_indices = @transform_10, window_bounds = array<i64: 32, 32>}, {pipeline_mode = #tpu.pipeline_mode<synchronous>, transform_indices = @transform_11, window_bounds = array<i64: 32, 1>}, {pipeline_mode = #tpu.pipeline_mode<synchronous>, transform_indices = @transform_12, window_bounds = array<i64: 32, 32>}, {pipeline_mode = #tpu.pipeline_mode<synchronous>, transform_indices = @transform_13, window_bounds = array<i64: 32, 1>}, {transform_indices = @transform_14, window_bounds = array<i64: 1, 32, 128>}]} {
    %c0_i32 = arith.constant 0 : i32
    %0 = arith.cmpi eq, %arg1, %c0_i32 : i32
    %1 = arith.extui %0 : i1 to i32
    %c0_i32_0 = arith.constant 0 : i32
    %2 = arith.cmpi ne, %1, %c0_i32_0 : i32
    scf.if %2 {
      %c0_24 = arith.constant 0 : index
      %c0_25 = arith.constant 0 : index
      %c0_26 = arith.constant 0 : index
      %40 = vector.load %arg6[%c0_24, %c0_25, %c0_26] : memref<1x32x128xbf16, #tpu.memory_space<vmem>>, vector<1x32x128xbf16>
      %41 = vector.shape_cast %40 : vector<1x32x128xbf16> to vector<32x128xbf16>
      %42 = arith.extf %41 : vector<32x128xbf16> to vector<32x128xf32>
      %c0_27 = arith.constant 0 : index
      %c0_28 = arith.constant 0 : index
      %c0_29 = arith.constant 0 : index
      %43 = vector.load %arg7[%c0_27, %c0_28, %c0_29] : memref<1x32x1xf32, #tpu.memory_space<vmem>>, vector<1x32x1xf32>
      %44 = vector.shape_cast %43 : vector<1x32x1xf32> to vector<32x1xf32>
      %45 = vector.broadcast %44 : vector<32x1xf32> to vector<32x128xf32>
      %46 = arith.subf %42, %45 : vector<32x128xf32>
      %c0_30 = arith.constant 0 : index
      %c0_31 = arith.constant 0 : index
      %c0_32 = arith.constant 0 : index
      %47 = vector.load %arg8[%c0_30, %c0_31, %c0_32] : memref<1x32x1xf32, #tpu.memory_space<vmem>>, vector<1x32x1xf32>
      %48 = vector.shape_cast %47 : vector<1x32x1xf32> to vector<32x1xf32>
      %49 = vector.broadcast %48 : vector<32x1xf32> to vector<32x128xf32>
      %50 = arith.mulf %46, %49 : vector<32x128xf32>
      %51 = arith.truncf %50 : vector<32x128xf32> to vector<32x128xbf16>
      %c0_33 = arith.constant 0 : index
      %c0_34 = arith.constant 0 : index
      %52 = vector.load %arg11[%c0_33, %c0_34] : memref<32x32xbf16, #tpu.memory_space<vmem>>, vector<32x32xbf16>
      %cst_35 = arith.constant dense<0.000000e+00> : vector<32x128xf32>
      %53 = tpu.matmul %52, %51, %cst_35 {dimension_numbers = #tpu.dot_dimension_numbers<[1], [0], [0], [1], [0, 0, 1, 1], [], []>} : vector<32x32xbf16>, vector<32x128xbf16>, vector<32x128xf32> -> vector<32x128xf32>
      %c0_36 = arith.constant 0 : index
      %c0_37 = arith.constant 0 : index
      %54 = vector.load %arg12[%c0_36, %c0_37] : memref<32x1xf32, #tpu.memory_space<vmem>>, vector<32x1xf32>
      %55 = vector.broadcast %54 : vector<32x1xf32> to vector<32x128xf32>
      %56 = arith.addf %53, %55 : vector<32x128xf32>
      %c0_38 = arith.constant 0 : index
      %c0_39 = arith.constant 0 : index
      %57 = vector.load %arg13[%c0_38, %c0_39] : memref<32x32xbf16, #tpu.memory_space<vmem>>, vector<32x32xbf16>
      %cst_40 = arith.constant dense<0.000000e+00> : vector<32x128xf32>
      %58 = tpu.matmul %57, %41, %cst_40 {dimension_numbers = #tpu.dot_dimension_numbers<[1], [0], [0], [1], [0, 0, 1, 1], [], []>} : vector<32x32xbf16>, vector<32x128xbf16>, vector<32x128xf32> -> vector<32x128xf32>
      %c0_41 = arith.constant 0 : index
      %c0_42 = arith.constant 0 : index
      %59 = vector.load %arg14[%c0_41, %c0_42] : memref<32x1xf32, #tpu.memory_space<vmem>>, vector<32x1xf32>
      %60 = vector.broadcast %59 : vector<32x1xf32> to vector<32x128xf32>
      %61 = arith.addf %58, %60 : vector<32x128xf32>
      %62 = arith.truncf %56 : vector<32x128xf32> to vector<32x128xbf16>
      %63 = arith.index_cast %arg2 : i32 to index
      %c0_43 = arith.constant 0 : index
      %c0_44 = arith.constant 0 : index
      %64 = vector.load %arg19[%63, %c0_43, %c0_44] : memref<2x32x128xbf16, #tpu.memory_space<vmem>>, vector<1x32x128xbf16>
      %65 = vector.shape_cast %64 : vector<1x32x128xbf16> to vector<32x128xbf16>
      %66 = vector.shape_cast %62 : vector<32x128xbf16> to vector<1x32x128xbf16>
      tpu.vector_store %arg19[%63, %c0_43, %c0_44], %66 {strides = array<i32>} : memref<2x32x128xbf16, #tpu.memory_space<vmem>>, vector<1x32x128xbf16>,
      %67 = arith.truncf %61 : vector<32x128xf32> to vector<32x128xbf16>
      %68 = arith.index_cast %arg2 : i32 to index
      %c0_45 = arith.constant 0 : index
      %c0_46 = arith.constant 0 : index
      %69 = vector.load %arg20[%68, %c0_45, %c0_46] : memref<2x32x128xbf16, #tpu.memory_space<vmem>>, vector<1x32x128xbf16>
      %70 = vector.shape_cast %69 : vector<1x32x128xbf16> to vector<32x128xbf16>
      %71 = vector.shape_cast %67 : vector<32x128xbf16> to vector<1x32x128xbf16>
      tpu.vector_store %arg20[%68, %c0_45, %c0_46], %71 {strides = array<i32>} : memref<2x32x128xbf16, #tpu.memory_space<vmem>>, vector<1x32x128xbf16>,
    } else {
    }
    %c0_i32_1 = arith.constant 0 : i32
    %3 = arith.cmpi eq, %arg2, %c0_i32_1 : i32
    %4 = arith.extui %3 : i1 to i32
    %c0_i32_2 = arith.constant 0 : i32
    %5 = arith.cmpi ne, %4, %c0_i32_2 : i32
    scf.if %5 {
      %c0_24 = arith.constant 0 : index
      %c0_25 = arith.constant 0 : index
      %c0_26 = arith.constant 0 : index
      %40 = vector.load %arg3[%c0_24, %c0_25, %c0_26] : memref<1x32x128xbf16, #tpu.memory_space<vmem>>, vector<1x32x128xbf16>
      %41 = vector.shape_cast %40 : vector<1x32x128xbf16> to vector<32x128xbf16>
      %42 = arith.extf %41 : vector<32x128xbf16> to vector<32x128xf32>
      %c0_27 = arith.constant 0 : index
      %c0_28 = arith.constant 0 : index
      %c0_29 = arith.constant 0 : index
      %43 = vector.load %arg4[%c0_27, %c0_28, %c0_29] : memref<1x32x1xf32, #tpu.memory_space<vmem>>, vector<1x32x1xf32>
      %44 = vector.shape_cast %43 : vector<1x32x1xf32> to vector<32x1xf32>
      %45 = vector.broadcast %44 : vector<32x1xf32> to vector<32x128xf32>
      %46 = arith.subf %42, %45 : vector<32x128xf32>
      %c0_30 = arith.constant 0 : index
      %c0_31 = arith.constant 0 : index
      %c0_32 = arith.constant 0 : index
      %47 = vector.load %arg5[%c0_30, %c0_31, %c0_32] : memref<1x32x1xf32, #tpu.memory_space<vmem>>, vector<1x32x1xf32>
      %48 = vector.shape_cast %47 : vector<1x32x1xf32> to vector<32x1xf32>
      %49 = vector.broadcast %48 : vector<32x1xf32> to vector<32x128xf32>
      %50 = arith.mulf %46, %49 : vector<32x128xf32>
      %51 = arith.truncf %50 : vector<32x128xf32> to vector<32x128xbf16>
      %c0_33 = arith.constant 0 : index
      %c0_34 = arith.constant 0 : index
      %52 = vector.load %arg9[%c0_33, %c0_34] : memref<32x32xbf16, #tpu.memory_space<vmem>>, vector<32x32xbf16>
      %cst_35 = arith.constant dense<0.000000e+00> : vector<32x128xf32>
      %53 = tpu.matmul %52, %51, %cst_35 {dimension_numbers = #tpu.dot_dimension_numbers<[1], [0], [0], [1], [0, 0, 1, 1], [], []>} : vector<32x32xbf16>, vector<32x128xbf16>, vector<32x128xf32> -> vector<32x128xf32>
      %c0_36 = arith.constant 0 : index
      %c0_37 = arith.constant 0 : index
      %54 = vector.load %arg10[%c0_36, %c0_37] : memref<32x1xf32, #tpu.memory_space<vmem>>, vector<32x1xf32>
      %55 = vector.broadcast %54 : vector<32x1xf32> to vector<32x128xf32>
      %56 = arith.addf %53, %55 : vector<32x128xf32>
      %57 = arith.truncf %56 : vector<32x128xf32> to vector<32x128xbf16>
      %c0_38 = arith.constant 0 : index
      %c0_39 = arith.constant 0 : index
      %58 = vector.load %arg18[%c0_38, %c0_39] : memref<32x128xbf16, #tpu.memory_space<vmem>>, vector<32x128xbf16>
      tpu.vector_store %arg18[%c0_38, %c0_39], %57 {strides = array<i32>} : memref<32x128xbf16, #tpu.memory_space<vmem>>, vector<32x128xbf16>,
      %cst_40 = arith.constant 0xFF800000 : f32
      %59 = vector.broadcast %cst_40 : f32 to vector<128x1xf32>
      %c0_41 = arith.constant 0 : index
      %c0_42 = arith.constant 0 : index
      %60 = vector.load %arg21[%c0_41, %c0_42] : memref<128x1xf32, #tpu.memory_space<vmem>>, vector<128x1xf32>
      tpu.vector_store %arg21[%c0_41, %c0_42], %59 {strides = array<i32>} : memref<128x1xf32, #tpu.memory_space<vmem>>, vector<128x1xf32>,
      %cst_43 = arith.constant 0.000000e+00 : f32
      %61 = vector.broadcast %cst_43 : f32 to vector<128x1xf32>
      %c0_44 = arith.constant 0 : index
      %c0_45 = arith.constant 0 : index
      %62 = vector.load %arg22[%c0_44, %c0_45] : memref<128x1xf32, #tpu.memory_space<vmem>>, vector<128x1xf32>
      tpu.vector_store %arg22[%c0_44, %c0_45], %61 {strides = array<i32>} : memref<128x1xf32, #tpu.memory_space<vmem>>, vector<128x1xf32>,
      %cst_46 = arith.constant 0.000000e+00 : f32
      %63 = vector.broadcast %cst_46 : f32 to vector<128x32xf32>
      %c0_47 = arith.constant 0 : index
      %c0_48 = arith.constant 0 : index
      %64 = vector.load %arg23[%c0_47, %c0_48] : memref<128x32xf32, #tpu.memory_space<vmem>>, vector<128x32xf32>
      tpu.vector_store %arg23[%c0_47, %c0_48], %63 {strides = array<i32>} : memref<128x32xf32, #tpu.memory_space<vmem>>, vector<128x32xf32>,
    } else {
    }
    %6 = arith.index_cast %arg2 : i32 to index
    %c0 = arith.constant 0 : index
    %c0_3 = arith.constant 0 : index
    %7 = vector.load %arg19[%6, %c0, %c0_3] : memref<2x32x128xbf16, #tpu.memory_space<vmem>>, vector<1x32x128xbf16>
    %8 = vector.shape_cast %7 : vector<1x32x128xbf16> to vector<32x128xbf16>
    %9 = arith.index_cast %arg2 : i32 to index
    %c0_4 = arith.constant 0 : index
    %c0_5 = arith.constant 0 : index
    %10 = vector.load %arg20[%9, %c0_4, %c0_5] : memref<2x32x128xbf16, #tpu.memory_space<vmem>>, vector<1x32x128xbf16>
    %11 = vector.shape_cast %10 : vector<1x32x128xbf16> to vector<32x128xbf16>
    %c0_6 = arith.constant 0 : index
    %c0_7 = arith.constant 0 : index
    %12 = vector.load %arg18[%c0_6, %c0_7] : memref<32x128xbf16, #tpu.memory_space<vmem>>, vector<32x128xbf16>
    %cst = arith.constant dense<0.000000e+00> : vector<128x128xf32>
    %13 = tpu.matmul %12, %8, %cst {dimension_numbers = #tpu.dot_dimension_numbers<[0], [0], [1], [1], [0, 1, 1, 1], [], []>} : vector<32x128xbf16>, vector<32x128xbf16>, vector<128x128xf32> -> vector<128x128xf32>
    %c0_8 = arith.constant 0 : index
    %c0_9 = arith.constant 0 : index
    %14 = vector.load %arg21[%c0_8, %c0_9] : memref<128x1xf32, #tpu.memory_space<vmem>>, vector<128x1xf32>
    %cst_10 = arith.constant dense<0xFF800000> : vector<128xf32>
    %15 = vector.multi_reduction <maximumf>, %13, %cst_10 [1] : vector<128x128xf32> to vector<128xf32>
    %16 = vector.shape_cast %15 : vector<128xf32> to vector<128x1xf32>
    %17 = arith.maximumf %14, %16 : vector<128x1xf32>
    %18 = arith.subf %14, %17 : vector<128x1xf32>
    %19 = math.exp %18 : vector<128x1xf32>
    %20 = vector.broadcast %17 : vector<128x1xf32> to vector<128x128xf32>
    %21 = arith.subf %13, %20 : vector<128x128xf32>
    %22 = math.exp %21 : vector<128x128xf32>
    %cst_11 = arith.constant dense<0.000000e+00> : vector<128xf32>
    %23 = vector.multi_reduction <add>, %22, %cst_11 [1] : vector<128x128xf32> to vector<128xf32>
    %24 = vector.shape_cast %23 : vector<128xf32> to vector<128x1xf32>
    %25 = arith.truncf %22 : vector<128x128xf32> to vector<128x128xbf16>
    %c0_12 = arith.constant 0 : index
    %c0_13 = arith.constant 0 : index
    %26 = vector.load %arg22[%c0_12, %c0_13] : memref<128x1xf32, #tpu.memory_space<vmem>>, vector<128x1xf32>
    %27 = arith.mulf %19, %26 : vector<128x1xf32>
    %28 = arith.addf %27, %24 : vector<128x1xf32>
    %c0_14 = arith.constant 0 : index
    %c0_15 = arith.constant 0 : index
    %29 = vector.load %arg22[%c0_14, %c0_15] : memref<128x1xf32, #tpu.memory_space<vmem>>, vector<128x1xf32>
    tpu.vector_store %arg22[%c0_14, %c0_15], %28 {strides = array<i32>} : memref<128x1xf32, #tpu.memory_space<vmem>>, vector<128x1xf32>,
    %c0_16 = arith.constant 0 : index
    %c0_17 = arith.constant 0 : index
    %30 = vector.load %arg23[%c0_16, %c0_17] : memref<128x32xf32, #tpu.memory_space<vmem>>, vector<128x32xf32>
    %31 = vector.broadcast %19 : vector<128x1xf32> to vector<128x32xf32>
    %32 = arith.mulf %31, %30 : vector<128x32xf32>
    %cst_18 = arith.constant dense<0.000000e+00> : vector<128x32xf32>
    %33 = tpu.matmul %25, %11, %cst_18 {dimension_numbers = #tpu.dot_dimension_numbers<[1], [1], [0], [0], [0, 0, 1, 0], [], []>} : vector<128x128xbf16>, vector<32x128xbf16>, vector<128x32xf32> -> vector<128x32xf32>
    %34 = arith.addf %32, %33 : vector<128x32xf32>
    %c0_19 = arith.constant 0 : index
    %c0_20 = arith.constant 0 : index
    %35 = vector.load %arg23[%c0_19, %c0_20] : memref<128x32xf32, #tpu.memory_space<vmem>>, vector<128x32xf32>
    tpu.vector_store %arg23[%c0_19, %c0_20], %34 {strides = array<i32>} : memref<128x32xf32, #tpu.memory_space<vmem>>, vector<128x32xf32>,
    %c0_21 = arith.constant 0 : index
    %c0_22 = arith.constant 0 : index
    %36 = vector.load %arg21[%c0_21, %c0_22] : memref<128x1xf32, #tpu.memory_space<vmem>>, vector<128x1xf32>
    tpu.vector_store %arg21[%c0_21, %c0_22], %17 {strides = array<i32>} : memref<128x1xf32, #tpu.memory_space<vmem>>, vector<128x1xf32>,
    %c1_i32 = arith.constant 1 : i32
    %37 = arith.cmpi eq, %arg2, %c1_i32 : i32
    %38 = arith.extui %37 : i1 to i32
    %c0_i32_23 = arith.constant 0 : i32
    %39 = arith.cmpi ne, %38, %c0_i32_23 : i32
    scf.if %39 {
      %c0_24 = arith.constant 0 : index
      %c0_25 = arith.constant 0 : index
      %40 = vector.load %arg23[%c0_24, %c0_25] : memref<128x32xf32, #tpu.memory_space<vmem>>, vector<128x32xf32>
      %c0_26 = arith.constant 0 : index
      %c0_27 = arith.constant 0 : index
      %41 = vector.load %arg22[%c0_26, %c0_27] : memref<128x1xf32, #tpu.memory_space<vmem>>, vector<128x1xf32>
      %42 = tpu.reciprocal %41 {approx = true} : vector<128x1xf32> -> vector<128x1xf32>
      %43 = vector.broadcast %42 : vector<128x1xf32> to vector<128x32xf32>
      %44 = arith.mulf %40, %43 : vector<128x32xf32>
      %c0_28 = arith.constant 0 : index
      %c0_29 = arith.constant 0 : index
      %45 = vector.load %arg15[%c0_28, %c0_29] : memref<32x32xbf16, #tpu.memory_space<vmem>>, vector<32x32xbf16>
      %46 = arith.truncf %44 : vector<128x32xf32> to vector<128x32xbf16>
      %cst_30 = arith.constant dense<0.000000e+00> : vector<32x128xf32>
      %47 = tpu.matmul %45, %46, %cst_30 {dimension_numbers = #tpu.dot_dimension_numbers<[1], [1], [0], [0], [0, 0, 1, 0], [], []>} : vector<32x32xbf16>, vector<128x32xbf16>, vector<32x128xf32> -> vector<32x128xf32>
      %c0_31 = arith.constant 0 : index
      %c0_32 = arith.constant 0 : index
      %48 = vector.load %arg16[%c0_31, %c0_32] : memref<32x1xf32, #tpu.memory_space<vmem>>, vector<32x1xf32>
      %49 = vector.broadcast %48 : vector<32x1xf32> to vector<32x128xf32>
      %50 = arith.addf %47, %49 : vector<32x128xf32>
      %c0_33 = arith.constant 0 : index
      %c0_34 = arith.constant 0 : index
      %c0_35 = arith.constant 0 : index
      %51 = vector.load %arg3[%c0_33, %c0_34, %c0_35] : memref<1x32x128xbf16, #tpu.memory_space<vmem>>, vector<1x32x128xbf16>
      %52 = vector.shape_cast %51 : vector<1x32x128xbf16> to vector<32x128xbf16>
      %53 = arith.extf %52 : vector<32x128xbf16> to vector<32x128xf32>
      %54 = arith.addf %50, %53 : vector<32x128xf32>
      %55 = arith.truncf %54 : vector<32x128xf32> to vector<32x128xbf16>
      %c0_36 = arith.constant 0 : index
      %c0_37 = arith.constant 0 : index
      %c0_38 = arith.constant 0 : index
      %56 = vector.load %arg17[%c0_36, %c0_37, %c0_38] : memref<1x32x128xbf16, #tpu.memory_space<vmem>>, vector<1x32x128xbf16>
      %57 = vector.shape_cast %56 : vector<1x32x128xbf16> to vector<32x128xbf16>
      %58 = vector.shape_cast %55 : vector<32x128xbf16> to vector<1x32x128xbf16>
      tpu.vector_store %arg17[%c0_36, %c0_37, %c0_38], %58 {strides = array<i32>} : memref<1x32x128xbf16, #tpu.memory_space<vmem>>, vector<1x32x128xbf16>,
    } else {
    }
    return
  }
  func.func @transform_0(%arg0: i32, %arg1: i32, %arg2: i32) -> (i32, i32, i32) {
    %c0_i32 = arith.constant 0 : i32
    %c0_i32_0 = arith.constant 0 : i32
    return %arg0, %c0_i32, %arg1 : i32, i32, i32
  }
  func.func @transform_1(%arg0: i32, %arg1: i32, %arg2: i32) -> (i32, i32, i32) {
    %c0_i32 = arith.constant 0 : i32
    %c0_i32_0 = arith.constant 0 : i32
    %c0_i32_1 = arith.constant 0 : i32
    return %arg0, %c0_i32, %c0_i32_0 : i32, i32, i32
  }
  func.func @transform_2(%arg0: i32, %arg1: i32, %arg2: i32) -> (i32, i32, i32) {
    %c0_i32 = arith.constant 0 : i32
    %c0_i32_0 = arith.constant 0 : i32
    %c0_i32_1 = arith.constant 0 : i32
    return %arg0, %c0_i32, %c0_i32_0 : i32, i32, i32
  }
  func.func @transform_3(%arg0: i32, %arg1: i32, %arg2: i32) -> (i32, i32, i32) {
    %c0_i32 = arith.constant 0 : i32
    %c0_i32_0 = arith.constant 0 : i32
    return %arg0, %c0_i32, %arg2 : i32, i32, i32
  }
  func.func @transform_4(%arg0: i32, %arg1: i32, %arg2: i32) -> (i32, i32, i32) {
    %c0_i32 = arith.constant 0 : i32
    %c0_i32_0 = arith.constant 0 : i32
    %c0_i32_1 = arith.constant 0 : i32
    return %arg0, %c0_i32, %c0_i32_0 : i32, i32, i32
  }
  func.func @transform_5(%arg0: i32, %arg1: i32, %arg2: i32) -> (i32, i32, i32) {
    %c0_i32 = arith.constant 0 : i32
    %c0_i32_0 = arith.constant 0 : i32
    %c0_i32_1 = arith.constant 0 : i32
    return %arg0, %c0_i32, %c0_i32_0 : i32, i32, i32
  }
  func.func @transform_6(%arg0: i32, %arg1: i32, %arg2: i32) -> (i32, i32) {
    %c0_i32 = arith.constant 0 : i32
    %c0_i32_0 = arith.constant 0 : i32
    %c0_i32_1 = arith.constant 0 : i32
    return %c0_i32, %c0_i32_0 : i32, i32
  }
  func.func @transform_7(%arg0: i32, %arg1: i32, %arg2: i32) -> (i32, i32) {
    %c0_i32 = arith.constant 0 : i32
    %c0_i32_0 = arith.constant 0 : i32
    %c0_i32_1 = arith.constant 0 : i32
    return %c0_i32, %c0_i32_0 : i32, i32
  }
  func.func @transform_8(%arg0: i32, %arg1: i32, %arg2: i32) -> (i32, i32) {
    %c0_i32 = arith.constant 0 : i32
    %c0_i32_0 = arith.constant 0 : i32
    %c0_i32_1 = arith.constant 0 : i32
    return %c0_i32, %c0_i32_0 : i32, i32
  }
  func.func @transform_9(%arg0: i32, %arg1: i32, %arg2: i32) -> (i32, i32) {
    %c0_i32 = arith.constant 0 : i32
    %c0_i32_0 = arith.constant 0 : i32
    %c0_i32_1 = arith.constant 0 : i32
    return %c0_i32, %c0_i32_0 : i32, i32
  }
  func.func @transform_10(%arg0: i32, %arg1: i32, %arg2: i32) -> (i32, i32) {
    %c0_i32 = arith.constant 0 : i32
    %c0_i32_0 = arith.constant 0 : i32
    %c0_i32_1 = arith.constant 0 : i32
    return %c0_i32, %c0_i32_0 : i32, i32
  }
  func.func @transform_11(%arg0: i32, %arg1: i32, %arg2: i32) -> (i32, i32) {
    %c0_i32 = arith.constant 0 : i32
    %c0_i32_0 = arith.constant 0 : i32
    %c0_i32_1 = arith.constant 0 : i32
    return %c0_i32, %c0_i32_0 : i32, i32
  }
  func.func @transform_12(%arg0: i32, %arg1: i32, %arg2: i32) -> (i32, i32) {
    %c0_i32 = arith.constant 0 : i32
    %c0_i32_0 = arith.constant 0 : i32
    %c0_i32_1 = arith.constant 0 : i32
    return %c0_i32, %c0_i32_0 : i32, i32
  }
  func.func @transform_13(%arg0: i32, %arg1: i32, %arg2: i32) -> (i32, i32) {
    %c0_i32 = arith.constant 0 : i32
    %c0_i32_0 = arith.constant 0 : i32
    %c0_i32_1 = arith.constant 0 : i32
    return %c0_i32, %c0_i32_0 : i32, i32
  }
  func.func @transform_14(%arg0: i32, %arg1: i32, %arg2: i32) -> (i32, i32, i32) {
    %c0_i32 = arith.constant 0 : i32
    %c0_i32_0 = arith.constant 0 : i32
    return %arg0, %c0_i32, %arg1 : i32, i32, i32
  }
}

module attributes {stable_mosaic.version = 11 : i64} {
  func.func @_merge_conv_kernel(%arg0: i32, %arg1: i32, %arg2: memref<1x32x384xbf16, #tpu.memory_space<vmem>>, %arg3: memref<9x32x32xbf16, #tpu.memory_space<vmem>>, %arg4: memref<32x1xf32, #tpu.memory_space<vmem>>, %arg5: memref<1x32x288xf32, #tpu.memory_space<vmem>>) attributes {dimension_semantics = [#tpu.dimension_semantics<parallel>, #tpu.dimension_semantics<parallel>], iteration_bounds = array<i64: 2, 1>, scalar_prefetch = 0 : i64, scratch_operands = 0 : i64, tpu.core_type = #tpu.core_type<tc>, window_params = [{transform_indices = @transform_0, window_bounds = array<i64: 1, 32, 384>}, {transform_indices = @transform_1, window_bounds = array<i64: 9, 32, 32>}, {transform_indices = @transform_2, window_bounds = array<i64: 32, 1>}, {transform_indices = @transform_3, window_bounds = array<i64: 1, 32, 288>}]} {
    %c0 = arith.constant 0 : index
    %c0_0 = arith.constant 0 : index
    %c0_1 = arith.constant 0 : index
    %0 = vector.load %arg2[%c0, %c0_0, %c0_1] : memref<1x32x384xbf16, #tpu.memory_space<vmem>>, vector<1x32x384xbf16>
    %1 = vector.shape_cast %0 : vector<1x32x384xbf16> to vector<32x384xbf16>
    %cst = arith.constant 0.000000e+00 : f32
    %2 = vector.broadcast %cst : f32 to vector<32x288xf32>
    %c0_2 = arith.constant 0 : index
    %c0_3 = arith.constant 0 : index
    %c0_4 = arith.constant 0 : index
    %3 = vector.load %arg3[%c0_2, %c0_3, %c0_4] : memref<9x32x32xbf16, #tpu.memory_space<vmem>>, vector<1x32x32xbf16>
    %4 = vector.shape_cast %3 : vector<1x32x32xbf16> to vector<32x32xbf16>
    %5 = vector.extract_strided_slice %1 {offsets = [0, 0], sizes = [32, 288], strides = [1, 1]} : vector<32x384xbf16> to vector<32x288xbf16>
    %cst_5 = arith.constant dense<0.000000e+00> : vector<32x288xf32>
    %6 = tpu.matmul %4, %5, %cst_5 {dimension_numbers = #tpu.dot_dimension_numbers<[1], [0], [0], [1], [0, 0, 1, 1], [], []>} : vector<32x32xbf16>, vector<32x288xbf16>, vector<32x288xf32> -> vector<32x288xf32>
    %7 = arith.addf %2, %6 : vector<32x288xf32>
    %c1 = arith.constant 1 : index
    %c0_6 = arith.constant 0 : index
    %c0_7 = arith.constant 0 : index
    %8 = vector.load %arg3[%c1, %c0_6, %c0_7] : memref<9x32x32xbf16, #tpu.memory_space<vmem>>, vector<1x32x32xbf16>
    %9 = vector.shape_cast %8 : vector<1x32x32xbf16> to vector<32x32xbf16>
    %10 = vector.extract_strided_slice %1 {offsets = [0, 1], sizes = [32, 288], strides = [1, 1]} : vector<32x384xbf16> to vector<32x288xbf16>
    %cst_8 = arith.constant dense<0.000000e+00> : vector<32x288xf32>
    %11 = tpu.matmul %9, %10, %cst_8 {dimension_numbers = #tpu.dot_dimension_numbers<[1], [0], [0], [1], [0, 0, 1, 1], [], []>} : vector<32x32xbf16>, vector<32x288xbf16>, vector<32x288xf32> -> vector<32x288xf32>
    %12 = arith.addf %7, %11 : vector<32x288xf32>
    %c2 = arith.constant 2 : index
    %c0_9 = arith.constant 0 : index
    %c0_10 = arith.constant 0 : index
    %13 = vector.load %arg3[%c2, %c0_9, %c0_10] : memref<9x32x32xbf16, #tpu.memory_space<vmem>>, vector<1x32x32xbf16>
    %14 = vector.shape_cast %13 : vector<1x32x32xbf16> to vector<32x32xbf16>
    %15 = vector.extract_strided_slice %1 {offsets = [0, 2], sizes = [32, 288], strides = [1, 1]} : vector<32x384xbf16> to vector<32x288xbf16>
    %cst_11 = arith.constant dense<0.000000e+00> : vector<32x288xf32>
    %16 = tpu.matmul %14, %15, %cst_11 {dimension_numbers = #tpu.dot_dimension_numbers<[1], [0], [0], [1], [0, 0, 1, 1], [], []>} : vector<32x32xbf16>, vector<32x288xbf16>, vector<32x288xf32> -> vector<32x288xf32>
    %17 = arith.addf %12, %16 : vector<32x288xf32>
    %c3 = arith.constant 3 : index
    %c0_12 = arith.constant 0 : index
    %c0_13 = arith.constant 0 : index
    %18 = vector.load %arg3[%c3, %c0_12, %c0_13] : memref<9x32x32xbf16, #tpu.memory_space<vmem>>, vector<1x32x32xbf16>
    %19 = vector.shape_cast %18 : vector<1x32x32xbf16> to vector<32x32xbf16>
    %20 = vector.extract_strided_slice %1 {offsets = [0, 18], sizes = [32, 288], strides = [1, 1]} : vector<32x384xbf16> to vector<32x288xbf16>
    %cst_14 = arith.constant dense<0.000000e+00> : vector<32x288xf32>
    %21 = tpu.matmul %19, %20, %cst_14 {dimension_numbers = #tpu.dot_dimension_numbers<[1], [0], [0], [1], [0, 0, 1, 1], [], []>} : vector<32x32xbf16>, vector<32x288xbf16>, vector<32x288xf32> -> vector<32x288xf32>
    %22 = arith.addf %17, %21 : vector<32x288xf32>
    %c4 = arith.constant 4 : index
    %c0_15 = arith.constant 0 : index
    %c0_16 = arith.constant 0 : index
    %23 = vector.load %arg3[%c4, %c0_15, %c0_16] : memref<9x32x32xbf16, #tpu.memory_space<vmem>>, vector<1x32x32xbf16>
    %24 = vector.shape_cast %23 : vector<1x32x32xbf16> to vector<32x32xbf16>
    %25 = vector.extract_strided_slice %1 {offsets = [0, 19], sizes = [32, 288], strides = [1, 1]} : vector<32x384xbf16> to vector<32x288xbf16>
    %cst_17 = arith.constant dense<0.000000e+00> : vector<32x288xf32>
    %26 = tpu.matmul %24, %25, %cst_17 {dimension_numbers = #tpu.dot_dimension_numbers<[1], [0], [0], [1], [0, 0, 1, 1], [], []>} : vector<32x32xbf16>, vector<32x288xbf16>, vector<32x288xf32> -> vector<32x288xf32>
    %27 = arith.addf %22, %26 : vector<32x288xf32>
    %c5 = arith.constant 5 : index
    %c0_18 = arith.constant 0 : index
    %c0_19 = arith.constant 0 : index
    %28 = vector.load %arg3[%c5, %c0_18, %c0_19] : memref<9x32x32xbf16, #tpu.memory_space<vmem>>, vector<1x32x32xbf16>
    %29 = vector.shape_cast %28 : vector<1x32x32xbf16> to vector<32x32xbf16>
    %30 = vector.extract_strided_slice %1 {offsets = [0, 20], sizes = [32, 288], strides = [1, 1]} : vector<32x384xbf16> to vector<32x288xbf16>
    %cst_20 = arith.constant dense<0.000000e+00> : vector<32x288xf32>
    %31 = tpu.matmul %29, %30, %cst_20 {dimension_numbers = #tpu.dot_dimension_numbers<[1], [0], [0], [1], [0, 0, 1, 1], [], []>} : vector<32x32xbf16>, vector<32x288xbf16>, vector<32x288xf32> -> vector<32x288xf32>
    %32 = arith.addf %27, %31 : vector<32x288xf32>
    %c6 = arith.constant 6 : index
    %c0_21 = arith.constant 0 : index
    %c0_22 = arith.constant 0 : index
    %33 = vector.load %arg3[%c6, %c0_21, %c0_22] : memref<9x32x32xbf16, #tpu.memory_space<vmem>>, vector<1x32x32xbf16>
    %34 = vector.shape_cast %33 : vector<1x32x32xbf16> to vector<32x32xbf16>
    %35 = vector.extract_strided_slice %1 {offsets = [0, 36], sizes = [32, 288], strides = [1, 1]} : vector<32x384xbf16> to vector<32x288xbf16>
    %cst_23 = arith.constant dense<0.000000e+00> : vector<32x288xf32>
    %36 = tpu.matmul %34, %35, %cst_23 {dimension_numbers = #tpu.dot_dimension_numbers<[1], [0], [0], [1], [0, 0, 1, 1], [], []>} : vector<32x32xbf16>, vector<32x288xbf16>, vector<32x288xf32> -> vector<32x288xf32>
    %37 = arith.addf %32, %36 : vector<32x288xf32>
    %c7 = arith.constant 7 : index
    %c0_24 = arith.constant 0 : index
    %c0_25 = arith.constant 0 : index
    %38 = vector.load %arg3[%c7, %c0_24, %c0_25] : memref<9x32x32xbf16, #tpu.memory_space<vmem>>, vector<1x32x32xbf16>
    %39 = vector.shape_cast %38 : vector<1x32x32xbf16> to vector<32x32xbf16>
    %40 = vector.extract_strided_slice %1 {offsets = [0, 37], sizes = [32, 288], strides = [1, 1]} : vector<32x384xbf16> to vector<32x288xbf16>
    %cst_26 = arith.constant dense<0.000000e+00> : vector<32x288xf32>
    %41 = tpu.matmul %39, %40, %cst_26 {dimension_numbers = #tpu.dot_dimension_numbers<[1], [0], [0], [1], [0, 0, 1, 1], [], []>} : vector<32x32xbf16>, vector<32x288xbf16>, vector<32x288xf32> -> vector<32x288xf32>
    %42 = arith.addf %37, %41 : vector<32x288xf32>
    %c8 = arith.constant 8 : index
    %c0_27 = arith.constant 0 : index
    %c0_28 = arith.constant 0 : index
    %43 = vector.load %arg3[%c8, %c0_27, %c0_28] : memref<9x32x32xbf16, #tpu.memory_space<vmem>>, vector<1x32x32xbf16>
    %44 = vector.shape_cast %43 : vector<1x32x32xbf16> to vector<32x32xbf16>
    %45 = vector.extract_strided_slice %1 {offsets = [0, 38], sizes = [32, 288], strides = [1, 1]} : vector<32x384xbf16> to vector<32x288xbf16>
    %cst_29 = arith.constant dense<0.000000e+00> : vector<32x288xf32>
    %46 = tpu.matmul %44, %45, %cst_29 {dimension_numbers = #tpu.dot_dimension_numbers<[1], [0], [0], [1], [0, 0, 1, 1], [], []>} : vector<32x32xbf16>, vector<32x288xbf16>, vector<32x288xf32> -> vector<32x288xf32>
    %47 = arith.addf %42, %46 : vector<32x288xf32>
    %c0_30 = arith.constant 0 : index
    %c0_31 = arith.constant 0 : index
    %48 = vector.load %arg4[%c0_30, %c0_31] : memref<32x1xf32, #tpu.memory_space<vmem>>, vector<32x1xf32>
    %49 = vector.broadcast %48 : vector<32x1xf32> to vector<32x288xf32>
    %50 = arith.addf %47, %49 : vector<32x288xf32>
    %c0_32 = arith.constant 0 : index
    %c0_33 = arith.constant 0 : index
    %c0_34 = arith.constant 0 : index
    %51 = vector.load %arg5[%c0_32, %c0_33, %c0_34] : memref<1x32x288xf32, #tpu.memory_space<vmem>>, vector<1x32x288xf32>
    %52 = vector.shape_cast %51 : vector<1x32x288xf32> to vector<32x288xf32>
    %53 = vector.shape_cast %50 : vector<32x288xf32> to vector<1x32x288xf32>
    tpu.vector_store %arg5[%c0_32, %c0_33, %c0_34], %53 {strides = array<i32>} : memref<1x32x288xf32, #tpu.memory_space<vmem>>, vector<1x32x288xf32>,
    return
  }
  func.func @transform_0(%arg0: i32, %arg1: i32) -> (i32, i32, i32) {
    %c0_i32 = arith.constant 0 : i32
    %c0_i32_0 = arith.constant 0 : i32
    %c0_i32_1 = arith.constant 0 : i32
    return %arg0, %c0_i32, %c0_i32_0 : i32, i32, i32
  }
  func.func @transform_1(%arg0: i32, %arg1: i32) -> (i32, i32, i32) {
    %c0_i32 = arith.constant 0 : i32
    %c0_i32_0 = arith.constant 0 : i32
    %c0_i32_1 = arith.constant 0 : i32
    return %c0_i32, %arg1, %c0_i32_0 : i32, i32, i32
  }
  func.func @transform_2(%arg0: i32, %arg1: i32) -> (i32, i32) {
    %c0_i32 = arith.constant 0 : i32
    %c0_i32_0 = arith.constant 0 : i32
    return %arg1, %c0_i32 : i32, i32
  }
  func.func @transform_3(%arg0: i32, %arg1: i32) -> (i32, i32, i32) {
    %c0_i32 = arith.constant 0 : i32
    %c0_i32_0 = arith.constant 0 : i32
    return %arg0, %arg1, %c0_i32 : i32, i32, i32
  }
}

</mosaic_0001>

<llo_original>
// kernel: transform_mlmodel_forward.7
$region0: #{transform_mlmodel_forward.7}
  #allocation0 [shape = 'u32[]', space=smem, size = 0x4, offset = 0x4, fixed_abs, tag = 'smem constant byte address 0x4 - core index']
  #allocation1 [shape = 'u32[144,128]{1,0:T(1,128)}', space=vmem, size = 0x12000, scoped, tag = 'internal scratch']
  #allocation2 [shape = 'bf16[32,64]{1,0:T(16,128)(2,1)}', space=vmem, size = 0x2000, scoped, tag = 'scratch operand']
  #allocation3 [shape = 'bf16[1,32,64]{2,1,0:T(16,128)(2,1)}', space=vmem, size = 0x2000, scoped, tag = 'scratch operand']
  #allocation4 [shape = 'bf16[1,32,64]{2,1,0:T(16,128)(2,1)}', space=vmem, size = 0x2000, scoped, tag = 'scratch operand']
  #allocation5 [shape = 'f32[64,1]{1,0:T(8,128)}', space=vmem, size = 0x8000, scoped, tag = 'scratch operand']
  #allocation6 [shape = 'f32[64,1]{1,0:T(8,128)}', space=vmem, size = 0x8000, scoped, tag = 'scratch operand']
  #allocation7 [shape = 'f32[64,32]{1,0:T(8,128)}', space=vmem, size = 0x8000, scoped, tag = 'scratch operand']
  %s0 = inlined_call_operand.hbm [shape: bf16[2,32,64], index: 0, kind: input, shape index: {}, may-alias: {0,3}]
  %s1 = inlined_call_operand.hbm [shape: f32[2,32,1], index: 1, kind: input, shape index: {}, may-alias: {1,4}]
  %s2 = inlined_call_operand.hbm [shape: f32[2,32,1], index: 2, kind: input, shape index: {}, may-alias: {2,5}]
  %s3 = inlined_call_operand.hbm [shape: bf16[2,32,64], index: 3, kind: input, shape index: {}, may-alias: {0,3}]
  %s4 = inlined_call_operand.hbm [shape: f32[2,32,1], index: 4, kind: input, shape index: {}, may-alias: {1,4}]
  %s5 = inlined_call_operand.hbm [shape: f32[2,32,1], index: 5, kind: input, shape index: {}, may-alias: {2,5}]
  %s6 = inlined_call_operand.hbm [shape: bf16[32,32], index: 6, kind: input, shape index: {}]
  %s7 = inlined_call_operand.hbm [shape: f32[32,1], index: 7, kind: input, shape index: {}]
  %s8 = inlined_call_operand.hbm [shape: bf16[32,32], index: 8, kind: input, shape index: {}]
  %s9 = inlined_call_operand.hbm [shape: f32[32,1], index: 9, kind: input, shape index: {}]
  %s10 = inlined_call_operand.hbm [shape: bf16[32,32], index: 10, kind: input, shape index: {}]
  %s11 = inlined_call_operand.hbm [shape: f32[32,1], index: 11, kind: input, shape index: {}]
  %s12 = inlined_call_operand.hbm [shape: bf16[32,32], index: 12, kind: input, shape index: {}]
  %s13 = inlined_call_operand.hbm [shape: f32[32,1], index: 13, kind: input, shape index: {}]
  %s14 = inlined_call_operand.hbm [shape: bf16[2,32,64], index: 14, kind: output, shape index: {}]
  %s15 = sld [smem:[#allocation0]]
  $region157: #{transform_mlmodel_forward.7} parent=0
    _
  %s17 = ssub.s32 1, %s15
  %s18 = scalar_select 0, %s17, %s15
  $region1: #{transform_mlmodel_forward.7} parent=0
    #allocation8 [shape = 'u8[16384]{0}', space=vmem, size = 0x4000, scoped, tag = 'input window, operand 0']
    #allocation9 [shape = 's32[2]{0}', space=sflag, size = 0x8, scoped, tag = 'scoped memory for transform_mlmodel_forward.7']
    #allocation10 [shape = 's32[2]{0}', space=sflag, size = 0x8, scoped, tag = 'scoped memory for transform_mlmodel_forward.7']
    #allocation11 [shape = 'u8[32768]{0}', space=vmem, size = 0x8000, scoped, tag = 'input window, operand 1']
    #allocation12 [shape = 's32[2]{0}', space=sflag, size = 0x8, scoped, tag = 'scoped memory for transform_mlmodel_forward.7']
    #allocation13 [shape = 'u8[32768]{0}', space=vmem, size = 0x8000, scoped, tag = 'input window, operand 2']
    #allocation14 [shape = 'u8[16384]{0}', space=vmem, size = 0x4000, scoped, tag = 'input window, operand 3']
    #allocation15 [shape = 's32[2]{0}', space=sflag, size = 0x8, scoped, tag = 'scoped memory for transform_mlmodel_forward.7']
    #allocation16 [shape = 'u8[32768]{0}', space=vmem, size = 0x8000, scoped, tag = 'input window, operand 4']
    #allocation17 [shape = 'u8[32768]{0}', space=vmem, size = 0x8000, scoped, tag = 'input window, operand 5']
    #allocation18 [shape = 's32[2]{0}', space=sflag, size = 0x8, scoped, tag = 'scoped memory for transform_mlmodel_forward.7']
    #allocation19 [shape = 'u8[8192]{0}', space=vmem, size = 0x2000, scoped, tag = 'input window, operand 6, single buffered']
    #allocation20 [shape = 'u8[16384]{0}', space=vmem, size = 0x4000, scoped, tag = 'input window, operand 7, single buffered']
    #allocation21 [shape = 's32[1]{0}', space=sflag, size = 0x4, scoped, tag = 'scoped memory for transform_mlmodel_forward.7']
    #allocation22 [shape = 'u8[8192]{0}', space=vmem, size = 0x2000, scoped, tag = 'input window, operand 8, single buffered']
    #allocation23 [shape = 'u8[16384]{0}', space=vmem, size = 0x4000, scoped, tag = 'input window, operand 9, single buffered']
    #allocation24 [shape = 's32[1]{0}', space=sflag, size = 0x4, scoped, tag = 'scoped memory for transform_mlmodel_forward.7']
    #allocation25 [shape = 'u8[8192]{0}', space=vmem, size = 0x2000, scoped, tag = 'input window, operand 10, single buffered']
    #allocation26 [shape = 'u8[16384]{0}', space=vmem, size = 0x4000, scoped, tag = 'input window, operand 11, single buffered']
    #allocation27 [shape = 's32[1]{0}', space=sflag, size = 0x4, scoped, tag = 'scoped memory for transform_mlmodel_forward.7']
    #allocation28 [shape = 'u8[8192]{0}', space=vmem, size = 0x2000, scoped, tag = 'input window, operand 12, single buffered']
    #allocation29 [shape = 'u8[16384]{0}', space=vmem, size = 0x4000, scoped, tag = 'input window, operand 13, single buffered']
    #allocation30 [shape = 's32[1]{0}', space=sflag, size = 0x4, scoped, tag = 'scoped memory for transform_mlmodel_forward.7']
    #allocation31 [shape = 'u8[16384]{0}', space=vmem, size = 0x4000, scoped, tag = 'output window, operand 0']
    %19 = vsyncpa [#allocation9], 0
    %s20 = scalar_lea.sflag [#allocation9], 1
    %21 = vsyncpa %s20, 0
    %22 = vsyncpa [#allocation12], 0
    %s23 = scalar_lea.sflag [#allocation12], 1
    %24 = vsyncpa %s23, 0
    %25 = vsyncpa [#allocation15], 0
    %s26 = scalar_lea.sflag [#allocation15], 1
    %27 = vsyncpa %s26, 0
    %28 = vsyncpa [#allocation18], 0
    %s29 = scalar_lea.sflag [#allocation18], 1
    %30 = vsyncpa %s29, 0
    %31 = vsyncpa [#allocation21], 0
    %32 = vsyncpa [#allocation24], 0
    %33 = vsyncpa [#allocation27], 0
    %34 = vsyncpa [#allocation30], 0
    %35 = vsyncpa [#allocation10], 0
    %s36 = scalar_lea.sflag [#allocation10], 1
    %37 = vsyncpa %s36, 0
    loop: start=0, step=1, limit=4
    $region2: #{transform_mlmodel_forward.7} parent=1 // loop_pre_header
      _
    $region3: #{transform_mlmodel_forward.7} parent=1 // loop_header
      %s39 = sphi 0, %s43
      %p40 = scmp.ge.s32.totalorder %s39, 4
      %s46 = sphi 0, %s65
      %s47 = sphi 0, %s61
      %s48 = sphi 0, %s57
      %s49 = sphi 0, %s46
      %s50 = sphi 0, %s47
      %s51 = sphi 0, %s48
      %s52 = sphi 0, %s49
      %s53 = sphi 0, %s50
      %s54 = sphi 0, %s51
      %s70 = sphi 0, %s72
      %s73 = sphi 0, %s70
      %s74 = sphi 0, %s73
      %s90 = sphi 0, %s74
      %s96 = sphi 0, %s98
      %s99 = sphi 0, %s96
      %s100 = sphi 0, %s99
      %s116 = sphi 0, %s100
      %s122 = sphi 0, %s124
      %s125 = sphi 0, %s122
      %s126 = sphi 0, %s125
      %s142 = sphi 0, %s126
      %s150 = sphi 0, %s152
      %s153 = sphi 0, %s150
      %s154 = sphi 0, %s153
      %s170 = sphi 0, %s154
      %s176 = sphi 0, %s178
      %s179 = sphi 0, %s176
      %s180 = sphi 0, %s179
      %s196 = sphi 0, %s180
      %s202 = sphi 0, %s204
      %s205 = sphi 0, %s202
      %s206 = sphi 0, %s205
      %s222 = sphi 0, %s206
      %s226 = sphi 0, %s226
      %s228 = sphi 0, %s226
      %s229 = sphi 0, %s228
      %s243 = sphi 0, %s229
      %s247 = sphi 0, %s247
      %s249 = sphi 0, %s247
      %s250 = sphi 0, %s249
      %s264 = sphi 0, %s250
      %s268 = sphi 0, %s268
      %s270 = sphi 0, %s268
      %s271 = sphi 0, %s270
      %s285 = sphi 0, %s271
      %s289 = sphi 0, %s289
      %s291 = sphi 0, %s289
      %s292 = sphi 0, %s291
      %s306 = sphi 0, %s292
      %s310 = sphi 0, %s310
      %s312 = sphi 0, %s310
      %s313 = sphi 0, %s312
      %s327 = sphi 0, %s313
      %s331 = sphi 0, %s331
      %s333 = sphi 0, %s331
      %s334 = sphi 0, %s333
      %s348 = sphi 0, %s334
      %s352 = sphi 0, %s352
      %s354 = sphi 0, %s352
      %s355 = sphi 0, %s354
      %s369 = sphi 0, %s355
      %s373 = sphi 0, %s373
      %s375 = sphi 0, %s373
      %s376 = sphi 0, %s375
      %s390 = sphi 0, %s376
      %s398 = sphi 0, %s400
      %s401 = sphi 0, %s398
      %s402 = sphi 0, %s401
      %s418 = sphi 0, %s402
    $region4: #{transform_mlmodel_forward.7} parent=1 // loop_header_branch
      %42 = sbr.rel (%p40) target = $region8
    $region5: #{transform_mlmodel_forward.7} parent=1 // loop_body
      %s44 = ssub.s32 %s39, 1
      %s45 = ssub.s32 %s39, 2
      %s55 = sadd.s32 1, %s48
      %p56 = scmp.ge.s32.totalorder %s55, 1
      %s57 = scalar_select %p56, 0, %s55
      %s58 = sadd.s32 1, %s47
      %s59 = scalar_select %p56, %s58, %s47
      %p60 = scmp.ge.s32.totalorder %s59, 1
      %s61 = scalar_select %p60, 0, %s59
      %s62 = sadd.s32 1, %s46
      %s63 = scalar_select %p60, %s62, %s46
      %p64 = scmp.ge.s32.totalorder %s63, 2
      %s65 = scalar_select %p64, 0, %s63
      %s66 = ssub.s32 %s46, %s65
      %s67 = ssub.s32 %s47, %s61
      %s68 = sor.u32 %s66, %s67
      %p69 = scmp.eq.s32.totalorder %s68, 0
      %s71 = sadd.s32 %s70, 1
      %s72 = scalar_select %p69, %s70, %s71
      %p75 = pneg %p69
      %p76 = scmp.eq.s32.totalorder %s39, 1
      %p77 = por %p75, %p76
      %p78 = scmp.ne.s32.totalorder %s70, %s73
      %p79 = scmp.eq.s32.totalorder %s39, 0
      %p80 = por %p78, %p79
      %p81 = scmp.ne.s32.totalorder %s70, %s73
      %p82 = scmp.eq.s32.totalorder %s44, 1
      %p83 = por %p81, %p82
      %p84 = scmp.ne.s32.totalorder %s73, %s74
      %p85 = scmp.eq.s32.totalorder %s44, 0
      %p86 = por %p84, %p85
      %p87 = scmp.ne.s32.totalorder %s73, %s74
      %p88 = scmp.eq.s32.totalorder %s45, 1
      %p89 = por %p87, %p88
      %p91 = scmp.ne.s32.totalorder %s74, %s90
      %p92 = scmp.eq.s32.totalorder %s45, 0
      %p93 = por %p91, %p92
      %s94 = ssub.s32 %s46, %s65
      %p95 = scmp.eq.s32.totalorder %s94, 0
      %s97 = sadd.s32 %s96, 1
      %s98 = scalar_select %p95, %s96, %s97
      %p101 = pneg %p95
      %p102 = scmp.eq.s32.totalorder %s39, 1
      %p103 = por %p101, %p102
      %p104 = scmp.ne.s32.totalorder %s96, %s99
      %p105 = scmp.eq.s32.totalorder %s39, 0
      %p106 = por %p104, %p105
      %p107 = scmp.ne.s32.totalorder %s96, %s99
      %p108 = scmp.eq.s32.totalorder %s44, 1
      %p109 = por %p107, %p108
      %p110 = scmp.ne.s32.totalorder %s99, %s100
      %p111 = scmp.eq.s32.totalorder %s44, 0
      %p112 = por %p110, %p111
      %p113 = scmp.ne.s32.totalorder %s99, %s100
      %p114 = scmp.eq.s32.totalorder %s45, 1
      %p115 = por %p113, %p114
      %p117 = scmp.ne.s32.totalorder %s100, %s116
      %p118 = scmp.eq.s32.totalorder %s45, 0
      %p119 = por %p117, %p118
      %s120 = ssub.s32 %s46, %s65
      %p121 = scmp.eq.s32.totalorder %s120, 0
      %s123 = sadd.s32 %s122, 1
      %s124 = scalar_select %p121, %s122, %s123
      %p127 = pneg %p121
      %p128 = scmp.eq.s32.totalorder %s39, 1
      %p129 = por %p127, %p128
      %p130 = scmp.ne.s32.totalorder %s122, %s125
      %p131 = scmp.eq.s32.totalorder %s39, 0
      %p132 = por %p130, %p131
      %p133 = scmp.ne.s32.totalorder %s122, %s125
      %p134 = scmp.eq.s32.totalorder %s44, 1
      %p135 = por %p133, %p134
      %p136 = scmp.ne.s32.totalorder %s125, %s126
      %p137 = scmp.eq.s32.totalorder %s44, 0
      %p138 = por %p136, %p137
      %p139 = scmp.ne.s32.totalorder %s125, %s126
      %p140 = scmp.eq.s32.totalorder %s45, 1
      %p141 = por %p139, %p140
      %p143 = scmp.ne.s32.totalorder %s126, %s142
      %p144 = scmp.eq.s32.totalorder %s45, 0
      %p145 = por %p143, %p144
      %s146 = ssub.s32 %s46, %s65
      %s147 = ssub.s32 %s48, %s57
      %s148 = sor.u32 %s146, %s147
      %p149 = scmp.eq.s32.totalorder %s148, 0
      %s151 = sadd.s32 %s150, 1
      %s152 = scalar_select %p149, %s150, %s151
      %p155 = pneg %p149
      %p156 = scmp.eq.s32.totalorder %s39, 1
      %p157 = por %p155, %p156
      %p158 = scmp.ne.s32.totalorder %s150, %s153
      %p159 = scmp.eq.s32.totalorder %s39, 0
      %p160 = por %p158, %p159
      %p161 = scmp.ne.s32.totalorder %s150, %s153
      %p162 = scmp.eq.s32.totalorder %s44, 1
      %p163 = por %p161, %p162
      %p164 = scmp.ne.s32.totalorder %s153, %s154
      %p165 = scmp.eq.s32.totalorder %s44, 0
      %p166 = por %p164, %p165
      %p167 = scmp.ne.s32.totalorder %s153, %s154
      %p168 = scmp.eq.s32.totalorder %s45, 1
      %p169 = por %p167, %p168
      %p171 = scmp.ne.s32.totalorder %s154, %s170
      %p172 = scmp.eq.s32.totalorder %s45, 0
      %p173 = por %p171, %p172
      %s174 = ssub.s32 %s46, %s65
      %p175 = scmp.eq.s32.totalorder %s174, 0
      %s177 = sadd.s32 %s176, 1
      %s178 = scalar_select %p175, %s176, %s177
      %p181 = pneg %p175
      %p182 = scmp.eq.s32.totalorder %s39, 1
      %p183 = por %p181, %p182
      %p184 = scmp.ne.s32.totalorder %s176, %s179
      %p185 = scmp.eq.s32.totalorder %s39, 0
      %p186 = por %p184, %p185
      %p187 = scmp.ne.s32.totalorder %s176, %s179
      %p188 = scmp.eq.s32.totalorder %s44, 1
      %p189 = por %p187, %p188
      %p190 = scmp.ne.s32.totalorder %s179, %s180
      %p191 = scmp.eq.s32.totalorder %s44, 0
      %p192 = por %p190, %p191
      %p193 = scmp.ne.s32.totalorder %s179, %s180
      %p194 = scmp.eq.s32.totalorder %s45, 1
      %p195 = por %p193, %p194
      %p197 = scmp.ne.s32.totalorder %s180, %s196
      %p198 = scmp.eq.s32.totalorder %s45, 0
      %p199 = por %p197, %p198
      %s200 = ssub.s32 %s46, %s65
      %p201 = scmp.eq.s32.totalorder %s200, 0
      %s203 = sadd.s32 %s202, 1
      %s204 = scalar_select %p201, %s202, %s203
      %p207 = pneg %p201
      %p208 = scmp.eq.s32.totalorder %s39, 1
      %p209 = por %p207, %p208
      %p210 = scmp.ne.s32.totalorder %s202, %s205
      %p211 = scmp.eq.s32.totalorder %s39, 0
      %p212 = por %p210, %p211
      %p213 = scmp.ne.s32.totalorder %s202, %s205
      %p214 = scmp.eq.s32.totalorder %s44, 1
      %p215 = por %p213, %p214
      %p216 = scmp.ne.s32.totalorder %s205, %s206
      %p217 = scmp.eq.s32.totalorder %s44, 0
      %p218 = por %p216, %p217
      %p219 = scmp.ne.s32.totalorder %s205, %s206
      %p220 = scmp.eq.s32.totalorder %s45, 1
      %p221 = por %p219, %p220
      %p223 = scmp.ne.s32.totalorder %s206, %s222
      %p224 = scmp.eq.s32.totalorder %s45, 0
      %p225 = por %p223, %p224
      %s227 = sadd.s32 %s226, 1
      %p230 = scmp.eq.s32.totalorder %s39, 1
      %p231 = scmp.ne.s32.totalorder %s226, %s228
      %p232 = scmp.eq.s32.totalorder %s39, 0
      %p233 = por %p231, %p232
      %p234 = scmp.ne.s32.totalorder %s226, %s228
      %p235 = scmp.eq.s32.totalorder %s44, 1
      %p236 = por %p234, %p235
      %p237 = scmp.ne.s32.totalorder %s228, %s229
      %p238 = scmp.eq.s32.totalorder %s44, 0
      %p239 = por %p237, %p238
      %p240 = scmp.ne.s32.totalorder %s228, %s229
      %p241 = scmp.eq.s32.totalorder %s45, 1
      %p242 = por %p240, %p241
      %p244 = scmp.ne.s32.totalorder %s229, %s243
      %p245 = scmp.eq.s32.totalorder %s45, 0
      %p246 = por %p244, %p245
      %s248 = sadd.s32 %s247, 1
      %p251 = scmp.eq.s32.totalorder %s39, 1
      %p252 = scmp.ne.s32.totalorder %s247, %s249
      %p253 = scmp.eq.s32.totalorder %s39, 0
      %p254 = por %p252, %p253
      %p255 = scmp.ne.s32.totalorder %s247, %s249
      %p256 = scmp.eq.s32.totalorder %s44, 1
      %p257 = por %p255, %p256
      %p258 = scmp.ne.s32.totalorder %s249, %s250
      %p259 = scmp.eq.s32.totalorder %s44, 0
      %p260 = por %p258, %p259
      %p261 = scmp.ne.s32.totalorder %s249, %s250
      %p262 = scmp.eq.s32.totalorder %s45, 1
      %p263 = por %p261, %p262
      %p265 = scmp.ne.s32.totalorder %s250, %s264
      %p266 = scmp.eq.s32.totalorder %s45, 0
      %p267 = por %p265, %p266
      %s269 = sadd.s32 %s268, 1
      %p272 = scmp.eq.s32.totalorder %s39, 1
      %p273 = scmp.ne.s32.totalorder %s268, %s270
      %p274 = scmp.eq.s32.totalorder %s39, 0
      %p275 = por %p273, %p274
      %p276 = scmp.ne.s32.totalorder %s268, %s270
      %p277 = scmp.eq.s32.totalorder %s44, 1
      %p278 = por %p276, %p277
      %p279 = scmp.ne.s32.totalorder %s270, %s271
      %p280 = scmp.eq.s32.totalorder %s44, 0
      %p281 = por %p279, %p280
      %p282 = scmp.ne.s32.totalorder %s270, %s271
      %p283 = scmp.eq.s32.totalorder %s45, 1
      %p284 = por %p282, %p283
      %p286 = scmp.ne.s32.totalorder %s271, %s285
      %p287 = scmp.eq.s32.totalorder %s45, 0
      %p288 = por %p286, %p287
      %s290 = sadd.s32 %s289, 1
      %p293 = scmp.eq.s32.totalorder %s39, 1
      %p294 = scmp.ne.s32.totalorder %s289, %s291
      %p295 = scmp.eq.s32.totalorder %s39, 0
      %p296 = por %p294, %p295
      %p297 = scmp.ne.s32.totalorder %s289, %s291
      %p298 = scmp.eq.s32.totalorder %s44, 1
      %p299 = por %p297, %p298
      %p300 = scmp.ne.s32.totalorder %s291, %s292
      %p301 = scmp.eq.s32.totalorder %s44, 0
      %p302 = por %p300, %p301
      %p303 = scmp.ne.s32.totalorder %s291, %s292
      %p304 = scmp.eq.s32.totalorder %s45, 1
      %p305 = por %p303, %p304
      %p307 = scmp.ne.s32.totalorder %s292, %s306
      %p308 = scmp.eq.s32.totalorder %s45, 0
      %p309 = por %p307, %p308
      %s311 = sadd.s32 %s310, 1
      %p314 = scmp.eq.s32.totalorder %s39, 1
      %p315 = scmp.ne.s32.totalorder %s310, %s312
      %p316 = scmp.eq.s32.totalorder %s39, 0
      %p317 = por %p315, %p316
      %p318 = scmp.ne.s32.totalorder %s310, %s312
      %p319 = scmp.eq.s32.totalorder %s44, 1
      %p320 = por %p318, %p319
      %p321 = scmp.ne.s32.totalorder %s312, %s313
      %p322 = scmp.eq.s32.totalorder %s44, 0
      %p323 = por %p321, %p322
      %p324 = scmp.ne.s32.totalorder %s312, %s313
      %p325 = scmp.eq.s32.totalorder %s45, 1
      %p326 = por %p324, %p325
      %p328 = scmp.ne.s32.totalorder %s313, %s327
      %p329 = scmp.eq.s32.totalorder %s45, 0
      %p330 = por %p328, %p329
      %s332 = sadd.s32 %s331, 1
      %p335 = scmp.eq.s32.totalorder %s39, 1
      %p336 = scmp.ne.s32.totalorder %s331, %s333
      %p337 = scmp.eq.s32.totalorder %s39, 0
      %p338 = por %p336, %p337
      %p339 = scmp.ne.s32.totalorder %s331, %s333
      %p340 = scmp.eq.s32.totalorder %s44, 1
      %p341 = por %p339, %p340
      %p342 = scmp.ne.s32.totalorder %s333, %s334
      %p343 = scmp.eq.s32.totalorder %s44, 0
      %p344 = por %p342, %p343
      %p345 = scmp.ne.s32.totalorder %s333, %s334
      %p346 = scmp.eq.s32.totalorder %s45, 1
      %p347 = por %p345, %p346
      %p349 = scmp.ne.s32.totalorder %s334, %s348
      %p350 = scmp.eq.s32.totalorder %s45, 0
      %p351 = por %p349, %p350
      %s353 = sadd.s32 %s352, 1
      %p356 = scmp.eq.s32.totalorder %s39, 1
      %p357 = scmp.ne.s32.totalorder %s352, %s354
      %p358 = scmp.eq.s32.totalorder %s39, 0
      %p359 = por %p357, %p358
      %p360 = scmp.ne.s32.totalorder %s352, %s354
      %p361 = scmp.eq.s32.totalorder %s44, 1
      %p362 = por %p360, %p361
      %p363 = scmp.ne.s32.totalorder %s354, %s355
      %p364 = scmp.eq.s32.totalorder %s44, 0
      %p365 = por %p363, %p364
      %p366 = scmp.ne.s32.totalorder %s354, %s355
      %p367 = scmp.eq.s32.totalorder %s45, 1
      %p368 = por %p366, %p367
      %p370 = scmp.ne.s32.totalorder %s355, %s369
      %p371 = scmp.eq.s32.totalorder %s45, 0
      %p372 = por %p370, %p371
      %s374 = sadd.s32 %s373, 1
      %p377 = scmp.eq.s32.totalorder %s39, 1
      %p378 = scmp.ne.s32.totalorder %s373, %s375
      %p379 = scmp.eq.s32.totalorder %s39, 0
      %p380 = por %p378, %p379
      %p381 = scmp.ne.s32.totalorder %s373, %s375
      %p382 = scmp.eq.s32.totalorder %s44, 1
      %p383 = por %p381, %p382
      %p384 = scmp.ne.s32.totalorder %s375, %s376
      %p385 = scmp.eq.s32.totalorder %s44, 0
      %p386 = por %p384, %p385
      %p387 = scmp.ne.s32.totalorder %s375, %s376
      %p388 = scmp.eq.s32.totalorder %s45, 1
      %p389 = por %p387, %p388
      %p391 = scmp.ne.s32.totalorder %s376, %s390
      %p392 = scmp.eq.s32.totalorder %s45, 0
      %p393 = por %p391, %p392
      %s394 = ssub.s32 %s46, %s65
      %s395 = ssub.s32 %s47, %s61
      %s396 = sor.u32 %s394, %s395
      %p397 = scmp.eq.s32.totalorder %s396, 0
      %s399 = sadd.s32 %s398, 1
      %s400 = scalar_select %p397, %s398, %s399
      %p403 = pneg %p397
      %p404 = scmp.eq.s32.totalorder %s39, 1
      %p405 = por %p403, %p404
      %p406 = scmp.ne.s32.totalorder %s398, %s401
      %p407 = scmp.eq.s32.totalorder %s39, 0
      %p408 = por %p406, %p407
      %p409 = scmp.ne.s32.totalorder %s398, %s401
      %p410 = scmp.eq.s32.totalorder %s44, 1
      %p411 = por %p409, %p410
      %p412 = scmp.ne.s32.totalorder %s401, %s402
      %p413 = scmp.eq.s32.totalorder %s44, 0
      %p414 = por %p412, %p413
      %p415 = scmp.ne.s32.totalorder %s401, %s402
      %p416 = scmp.eq.s32.totalorder %s45, 1
      %p417 = por %p415, %p416
      %p419 = scmp.ne.s32.totalorder %s402, %s418
      %p420 = scmp.eq.s32.totalorder %s45, 0
      %p421 = por %p419, %p420
      %p422 = scmp.le.s32.totalorder 1, %s39
      %p423 = scmp.lt.s32.totalorder %s39, 3
      %p424 = pnand %p422, %p423
      %p425 = pneg %p424
      // Predicated region
      $region9: #{transform_mlmodel_forward.7} parent=5 // pred_check
        _
      $region10: #{transform_mlmodel_forward.7} parent=5 // pred_check_branch
        %427 = sbr.rel (%p424) target = $region12
      $region11: #{transform_mlmodel_forward.7} parent=5 // pred_region
        %s428 = ssub.s32 %s39, 1
        // Predicated region
        $region13: #{transform_mlmodel_forward.7} parent=11 // pred_check
          %p429 = pneg %p239
        $region14: #{transform_mlmodel_forward.7} parent=11 // pred_check_branch
          %431 = sbr.rel (%p429) target = $region16
        $region15: #{transform_mlmodel_forward.7} parent=11 // pred_region
          %s433 = ssub.s32 256, 256
          %434 = vsyncadd [#allocation18], %s433
          %s435 = sshll.u32 [#allocation19], 4
          %s436 = int_to_ptr.vmem [resolvable:$true] %s435
          %441 = dma.hbm_to_vmem [thread:$0]  %s6, 256, %s436, [#allocation18], 64, 64, 4
        $region16: #{transform_mlmodel_forward.7} parent=11 // pred_fallthru
          _
        // Predicated region
        $region17: #{transform_mlmodel_forward.7} parent=11 // pred_check
          %p442 = pneg %p260
        $region18: #{transform_mlmodel_forward.7} parent=11 // pred_check_branch
          %444 = sbr.rel (%p442) target = $region20
        $region19: #{transform_mlmodel_forward.7} parent=11 // pred_region
          %s446 = ssub.s32 512, 512
          %447 = vsyncadd [#allocation21], %s446
          %s448 = sshll.u32 [#allocation20], 4
          %s449 = int_to_ptr.vmem [resolvable:$true] %s448
          %454 = dma.hbm_to_vmem [thread:$0]  %s7, 512, %s449, [#allocation21], 128, 128, 8
        $region20: #{transform_mlmodel_forward.7} parent=11 // pred_fallthru
          _
        // Predicated region
        $region21: #{transform_mlmodel_forward.7} parent=11 // pred_check
          %p455 = pneg %p281
        $region22: #{transform_mlmodel_forward.7} parent=11 // pred_check_branch
          %457 = sbr.rel (%p455) target = $region24
        $region23: #{transform_mlmodel_forward.7} parent=11 // pred_region
          %s459 = ssub.s32 256, 256
          %460 = vsyncadd [#allocation21], %s459
          %s461 = sshll.u32 [#allocation22], 4
          %s462 = int_to_ptr.vmem [resolvable:$true] %s461
          %467 = dma.hbm_to_vmem [thread:$0]  %s8, 256, %s462, [#allocation21], 64, 64, 4
        $region24: #{transform_mlmodel_forward.7} parent=11 // pred_fallthru
          _
        // Predicated region
        $region25: #{transform_mlmodel_forward.7} parent=11 // pred_check
          %p468 = pneg %p302
        $region26: #{transform_mlmodel_forward.7} parent=11 // pred_check_branch
          %470 = sbr.rel (%p468) target = $region28
        $region27: #{transform_mlmodel_forward.7} parent=11 // pred_region
          %s472 = ssub.s32 512, 512
          %473 = vsyncadd [#allocation24], %s472
          %s474 = sshll.u32 [#allocation23], 4
          %s475 = int_to_ptr.vmem [resolvable:$true] %s474
          %480 = dma.hbm_to_vmem [thread:$0]  %s9, 512, %s475, [#allocation24], 128, 128, 8
        $region28: #{transform_mlmodel_forward.7} parent=11 // pred_fallthru
          _
        // Predicated region
        $region29: #{transform_mlmodel_forward.7} parent=11 // pred_check
          %p481 = pneg %p323
        $region30: #{transform_mlmodel_forward.7} parent=11 // pred_check_branch
          %483 = sbr.rel (%p481) target = $region32
        $region31: #{transform_mlmodel_forward.7} parent=11 // pred_region
          %s485 = ssub.s32 256, 256
          %486 = vsyncadd [#allocation24], %s485
          %s487 = sshll.u32 [#allocation25], 4
          %s488 = int_to_ptr.vmem [resolvable:$true] %s487
          %493 = dma.hbm_to_vmem [thread:$0]  %s10, 256, %s488, [#allocation24], 64, 64, 4
        $region32: #{transform_mlmodel_forward.7} parent=11 // pred_fallthru
          _
        // Predicated region
        $region33: #{transform_mlmodel_forward.7} parent=11 // pred_check
          %p494 = pneg %p344
        $region34: #{transform_mlmodel_forward.7} parent=11 // pred_check_branch
          %496 = sbr.rel (%p494) target = $region36
        $region35: #{transform_mlmodel_forward.7} parent=11 // pred_region
          %s498 = ssub.s32 512, 512
          %499 = vsyncadd [#allocation27], %s498
          %s500 = sshll.u32 [#allocation26], 4
          %s501 = int_to_ptr.vmem [resolvable:$true] %s500
          %506 = dma.hbm_to_vmem [thread:$0]  %s11, 512, %s501, [#allocation27], 128, 128, 8
        $region36: #{transform_mlmodel_forward.7} parent=11 // pred_fallthru
          _
        // Predicated region
        $region37: #{transform_mlmodel_forward.7} parent=11 // pred_check
          %p507 = pneg %p365
        $region38: #{transform_mlmodel_forward.7} parent=11 // pred_check_branch
          %509 = sbr.rel (%p507) target = $region40
        $region39: #{transform_mlmodel_forward.7} parent=11 // pred_region
          %s511 = ssub.s32 256, 256
          %512 = vsyncadd [#allocation27], %s511
          %s513 = sshll.u32 [#allocation28], 4
          %s514 = int_to_ptr.vmem [resolvable:$true] %s513
          %519 = dma.hbm_to_vmem [thread:$0]  %s12, 256, %s514, [#allocation27], 64, 64, 4
        $region40: #{transform_mlmodel_forward.7} parent=11 // pred_fallthru
          _
        // Predicated region
        $region41: #{transform_mlmodel_forward.7} parent=11 // pred_check
          %p520 = pneg %p386
        $region42: #{transform_mlmodel_forward.7} parent=11 // pred_check_branch
          %522 = sbr.rel (%p520) target = $region44
        $region43: #{transform_mlmodel_forward.7} parent=11 // pred_region
          %s524 = ssub.s32 512, 512
          %525 = vsyncadd [#allocation30], %s524
          %s526 = sshll.u32 [#allocation29], 4
          %s527 = int_to_ptr.vmem [resolvable:$true] %s526
          %532 = dma.hbm_to_vmem [thread:$0]  %s13, 512, %s527, [#allocation30], 128, 128, 8
        $region44: #{transform_mlmodel_forward.7} parent=11 // pred_fallthru
          _
      $region12: #{transform_mlmodel_forward.7} parent=5 // pred_fallthru
        _
      %p533 = scmp.lt.s32.totalorder %s39, 2
      // Predicated region
      $region45: #{transform_mlmodel_forward.7} parent=5 // pred_check
        %p534 = pneg %p533
      $region46: #{transform_mlmodel_forward.7} parent=5 // pred_check_branch
        %536 = sbr.rel (%p534) target = $region48
      $region47: #{transform_mlmodel_forward.7} parent=5 // pred_region
        // Predicated region
        $region49: #{transform_mlmodel_forward.7} parent=47 // pred_check
          %p537 = pneg %p80
        $region50: #{transform_mlmodel_forward.7} parent=47 // pred_check_branch
          %539 = sbr.rel (%p537) target = $region52
        $region51: #{transform_mlmodel_forward.7} parent=47 // pred_region
          %s540 = sand.u32 %s70, 1
          %s541 = scalar_lea.sflag [#allocation9], %s540
          %s542 = sand.u32 %s70, 1
          %s543 = smul.addr %s542, 16
          %s544 = scalar_lea.vmem [#allocation8], %s543
          %s546 = ssub.s32 256, 256
          %547 = vsyncadd %s541, %s546
          %s548 = smul.addr %s46, 4
          %s549 = sadd.s32 %s47, %s548
          %s550 = smul.addr %s549, 64
          %s551 = scalar_lea.hbm %s0, %s550
          %s552 = sshll.u32 %s544, 4
          %s553 = int_to_ptr.vmem [resolvable:$true] %s552
          %558 = dma.hbm_to_vmem [thread:$0]  %s551, 256, %s553, %s541, 64, 64, 4
        $region52: #{transform_mlmodel_forward.7} parent=47 // pred_fallthru
          _
        // Predicated region
        $region53: #{transform_mlmodel_forward.7} parent=47 // pred_check
          %p559 = pneg %p106
        $region54: #{transform_mlmodel_forward.7} parent=47 // pred_check_branch
          %561 = sbr.rel (%p559) target = $region56
        $region55: #{transform_mlmodel_forward.7} parent=47 // pred_region
          %s562 = sand.u32 %s39, 1
          %s563 = scalar_lea.sflag [#allocation12], %s562
          %s564 = sand.u32 %s96, 1
          %s565 = smul.addr %s564, 32
          %s566 = scalar_lea.vmem [#allocation11], %s565
          %s568 = ssub.s32 512, 512
          %569 = vsyncadd %s563, %s568
          %s570 = smul.addr %s46, 4
          %s571 = smul.addr %s570, 128
          %s572 = scalar_lea.hbm %s1, %s571
          %s573 = sshll.u32 %s566, 4
          %s574 = int_to_ptr.vmem [resolvable:$true] %s573
          %579 = dma.hbm_to_vmem [thread:$0]  %s572, 512, %s574, %s563, 128, 128, 8
        $region56: #{transform_mlmodel_forward.7} parent=47 // pred_fallthru
          _
        // Predicated region
        $region57: #{transform_mlmodel_forward.7} parent=47 // pred_check
          %p580 = pneg %p132
        $region58: #{transform_mlmodel_forward.7} parent=47 // pred_check_branch
          %582 = sbr.rel (%p580) target = $region60
        $region59: #{transform_mlmodel_forward.7} parent=47 // pred_region
          %s583 = sand.u32 %s39, 1
          %s584 = scalar_lea.sflag [#allocation12], %s583
          %s585 = sand.u32 %s122, 1
          %s586 = smul.addr %s585, 32
          %s587 = scalar_lea.vmem [#allocation13], %s586
          %s589 = ssub.s32 512, 512
          %590 = vsyncadd %s584, %s589
          %s591 = smul.addr %s46, 4
          %s592 = smul.addr %s591, 128
          %s593 = scalar_lea.hbm %s2, %s592
          %s594 = sshll.u32 %s587, 4
          %s595 = int_to_ptr.vmem [resolvable:$true] %s594
          %600 = dma.hbm_to_vmem [thread:$0]  %s593, 512, %s595, %s584, 128, 128, 8
        $region60: #{transform_mlmodel_forward.7} parent=47 // pred_fallthru
          _
        // Predicated region
        $region61: #{transform_mlmodel_forward.7} parent=47 // pred_check
          %p601 = pneg %p160
        $region62: #{transform_mlmodel_forward.7} parent=47 // pred_check_branch
          %603 = sbr.rel (%p601) target = $region64
        $region63: #{transform_mlmodel_forward.7} parent=47 // pred_region
          %s604 = sand.u32 %s39, 1
          %s605 = scalar_lea.sflag [#allocation15], %s604
          %s606 = sand.u32 %s150, 1
          %s607 = smul.addr %s606, 16
          %s608 = scalar_lea.vmem [#allocation14], %s607
          %s610 = ssub.s32 256, 256
          %611 = vsyncadd %s605, %s610
          %s612 = smul.addr %s46, 4
          %s613 = sadd.s32 %s48, %s612
          %s614 = smul.addr %s613, 64
          %s615 = scalar_lea.hbm %s3, %s614
          %s616 = sshll.u32 %s608, 4
          %s617 = int_to_ptr.vmem [resolvable:$true] %s616
          %622 = dma.hbm_to_vmem [thread:$0]  %s615, 256, %s617, %s605, 64, 64, 4
        $region64: #{transform_mlmodel_forward.7} parent=47 // pred_fallthru
          _
        // Predicated region
        $region65: #{transform_mlmodel_forward.7} parent=47 // pred_check
          %p623 = pneg %p186
        $region66: #{transform_mlmodel_forward.7} parent=47 // pred_check_branch
          %625 = sbr.rel (%p623) target = $region68
        $region67: #{transform_mlmodel_forward.7} parent=47 // pred_region
          %s626 = sand.u32 %s39, 1
          %s627 = scalar_lea.sflag [#allocation15], %s626
          %s628 = sand.u32 %s176, 1
          %s629 = smul.addr %s628, 32
          %s630 = scalar_lea.vmem [#allocation16], %s629
          %s632 = ssub.s32 512, 512
          %633 = vsyncadd %s627, %s632
          %s634 = smul.addr %s46, 4
          %s635 = smul.addr %s634, 128
          %s636 = scalar_lea.hbm %s4, %s635
          %s637 = sshll.u32 %s630, 4
          %s638 = int_to_ptr.vmem [resolvable:$true] %s637
          %643 = dma.hbm_to_vmem [thread:$0]  %s636, 512, %s638, %s627, 128, 128, 8
        $region68: #{transform_mlmodel_forward.7} parent=47 // pred_fallthru
          _
        // Predicated region
        $region69: #{transform_mlmodel_forward.7} parent=47 // pred_check
          %p644 = pneg %p212
        $region70: #{transform_mlmodel_forward.7} parent=47 // pred_check_branch
          %646 = sbr.rel (%p644) target = $region72
        $region71: #{transform_mlmodel_forward.7} parent=47 // pred_region
          %s647 = sand.u32 %s39, 1
          %s648 = scalar_lea.sflag [#allocation18], %s647
          %s649 = sand.u32 %s202, 1
          %s650 = smul.addr %s649, 32
          %s651 = scalar_lea.vmem [#allocation17], %s650
          %s653 = ssub.s32 512, 512
          %654 = vsyncadd %s648, %s653
          %s655 = smul.addr %s46, 4
          %s656 = smul.addr %s655, 128
          %s657 = scalar_lea.hbm %s5, %s656
          %s658 = sshll.u32 %s651, 4
          %s659 = int_to_ptr.vmem [resolvable:$true] %s658
          %664 = dma.hbm_to_vmem [thread:$0]  %s657, 512, %s659, %s648, 128, 128, 8
        $region72: #{transform_mlmodel_forward.7} parent=47 // pred_fallthru
          _
      $region48: #{transform_mlmodel_forward.7} parent=5 // pred_fallthru
        _
      %p665 = scmp.le.s32.totalorder 1, %s39
      %p666 = scmp.lt.s32.totalorder %s39, 3
      %p667 = pnand %p665, %p666
      %p668 = pneg %p667
      // Predicated region
      $region73: #{transform_mlmodel_forward.7} parent=5 // pred_check
        _
      $region74: #{transform_mlmodel_forward.7} parent=5 // pred_check_branch
        %670 = sbr.rel (%p667) target = $region76
      $region75: #{transform_mlmodel_forward.7} parent=5 // pred_region
        %s671 = ssub.s32 %s39, 1
        %s672 = sand.u32 %s73, 1
        %s673 = scalar_lea.sflag [#allocation9], %s672
        %s674 = sand.u32 %s73, 1
        %s675 = smul.addr %s674, 16
        %s676 = scalar_lea.vmem [#allocation8], %s675
        // Predicated region
        $region77: #{transform_mlmodel_forward.7} parent=75 // pred_check
          %p677 = pneg %p86
        $region78: #{transform_mlmodel_forward.7} parent=75 // pred_check_branch
          %679 = sbr.rel (%p677) target = $region80
        $region79: #{transform_mlmodel_forward.7} parent=75 // pred_region
          %680 = dma.done %s673, 256
        $region80: #{transform_mlmodel_forward.7} parent=75 // pred_fallthru
          _
        %s681 = sand.u32 %s44, 1
        %s682 = scalar_lea.sflag [#allocation12], %s681
        %s683 = sand.u32 %s99, 1
        %s684 = smul.addr %s683, 32
        %s685 = scalar_lea.vmem [#allocation11], %s684
        // Predicated region
        $region81: #{transform_mlmodel_forward.7} parent=75 // pred_check
          %p686 = pneg %p112
        $region82: #{transform_mlmodel_forward.7} parent=75 // pred_check_branch
          %688 = sbr.rel (%p686) target = $region84
        $region83: #{transform_mlmodel_forward.7} parent=75 // pred_region
          %689 = dma.done %s682, 512
        $region84: #{transform_mlmodel_forward.7} parent=75 // pred_fallthru
          _
        %s690 = sand.u32 %s44, 1
        %s691 = scalar_lea.sflag [#allocation12], %s690
        %s692 = sand.u32 %s125, 1
        %s693 = smul.addr %s692, 32
        %s694 = scalar_lea.vmem [#allocation13], %s693
        // Predicated region
        $region85: #{transform_mlmodel_forward.7} parent=75 // pred_check
          %p695 = pneg %p138
        $region86: #{transform_mlmodel_forward.7} parent=75 // pred_check_branch
          %697 = sbr.rel (%p695) target = $region88
        $region87: #{transform_mlmodel_forward.7} parent=75 // pred_region
          %698 = dma.done %s691, 512
        $region88: #{transform_mlmodel_forward.7} parent=75 // pred_fallthru
          _
        %s699 = sand.u32 %s44, 1
        %s700 = scalar_lea.sflag [#allocation15], %s699
        %s701 = sand.u32 %s153, 1
        %s702 = smul.addr %s701, 16
        %s703 = scalar_lea.vmem [#allocation14], %s702
        // Predicated region
        $region89: #{transform_mlmodel_forward.7} parent=75 // pred_check
          %p704 = pneg %p166
        $region90: #{transform_mlmodel_forward.7} parent=75 // pred_check_branch
          %706 = sbr.rel (%p704) target = $region92
        $region91: #{transform_mlmodel_forward.7} parent=75 // pred_region
          %707 = dma.done %s700, 256
        $region92: #{transform_mlmodel_forward.7} parent=75 // pred_fallthru
          _
        %s708 = sand.u32 %s44, 1
        %s709 = scalar_lea.sflag [#allocation15], %s708
        %s710 = sand.u32 %s179, 1
        %s711 = smul.addr %s710, 32
        %s712 = scalar_lea.vmem [#allocation16], %s711
        // Predicated region
        $region93: #{transform_mlmodel_forward.7} parent=75 // pred_check
          %p713 = pneg %p192
        $region94: #{transform_mlmodel_forward.7} parent=75 // pred_check_branch
          %715 = sbr.rel (%p713) target = $region96
        $region95: #{transform_mlmodel_forward.7} parent=75 // pred_region
          %716 = dma.done %s709, 512
        $region96: #{transform_mlmodel_forward.7} parent=75 // pred_fallthru
          _
        %s717 = sand.u32 %s44, 1
        %s718 = scalar_lea.sflag [#allocation18], %s717
        %s719 = sand.u32 %s205, 1
        %s720 = smul.addr %s719, 32
        %s721 = scalar_lea.vmem [#allocation17], %s720
        // Predicated region
        $region97: #{transform_mlmodel_forward.7} parent=75 // pred_check
          %p722 = pneg %p218
        $region98: #{transform_mlmodel_forward.7} parent=75 // pred_check_branch
          %724 = sbr.rel (%p722) target = $region100
        $region99: #{transform_mlmodel_forward.7} parent=75 // pred_region
          %725 = dma.done %s718, 512
        $region100: #{transform_mlmodel_forward.7} parent=75 // pred_fallthru
          _
        // Predicated region
        $region101: #{transform_mlmodel_forward.7} parent=75 // pred_check
          %p726 = pneg %p239
        $region102: #{transform_mlmodel_forward.7} parent=75 // pred_check_branch
          %728 = sbr.rel (%p726) target = $region104
        $region103: #{transform_mlmodel_forward.7} parent=75 // pred_region
          %729 = dma.done [#allocation18], 256
        $region104: #{transform_mlmodel_forward.7} parent=75 // pred_fallthru
          _
        // Predicated region
        $region105: #{transform_mlmodel_forward.7} parent=75 // pred_check
          %p730 = pneg %p260
        $region106: #{transform_mlmodel_forward.7} parent=75 // pred_check_branch
          %732 = sbr.rel (%p730) target = $region108
        $region107: #{transform_mlmodel_forward.7} parent=75 // pred_region
          %733 = dma.done [#allocation21], 512
        $region108: #{transform_mlmodel_forward.7} parent=75 // pred_fallthru
          _
        // Predicated region
        $region109: #{transform_mlmodel_forward.7} parent=75 // pred_check
          %p734 = pneg %p281
        $region110: #{transform_mlmodel_forward.7} parent=75 // pred_check_branch
          %736 = sbr.rel (%p734) target = $region112
        $region111: #{transform_mlmodel_forward.7} parent=75 // pred_region
          %737 = dma.done [#allocation21], 256
        $region112: #{transform_mlmodel_forward.7} parent=75 // pred_fallthru
          _
        // Predicated region
        $region113: #{transform_mlmodel_forward.7} parent=75 // pred_check
          %p738 = pneg %p302
        $region114: #{transform_mlmodel_forward.7} parent=75 // pred_check_branch
          %740 = sbr.rel (%p738) target = $region116
        $region115: #{transform_mlmodel_forward.7} parent=75 // pred_region
          %741 = dma.done [#allocation24], 512
        $region116: #{transform_mlmodel_forward.7} parent=75 // pred_fallthru
          _
        // Predicated region
        $region117: #{transform_mlmodel_forward.7} parent=75 // pred_check
          %p742 = pneg %p323
        $region118: #{transform_mlmodel_forward.7} parent=75 // pred_check_branch
          %744 = sbr.rel (%p742) target = $region120
        $region119: #{transform_mlmodel_forward.7} parent=75 // pred_region
          %745 = dma.done [#allocation24], 256
        $region120: #{transform_mlmodel_forward.7} parent=75 // pred_fallthru
          _
        // Predicated region
        $region121: #{transform_mlmodel_forward.7} parent=75 // pred_check
          %p746 = pneg %p344
        $region122: #{transform_mlmodel_forward.7} parent=75 // pred_check_branch
          %748 = sbr.rel (%p746) target = $region124
        $region123: #{transform_mlmodel_forward.7} parent=75 // pred_region
          %749 = dma.done [#allocation27], 512
        $region124: #{transform_mlmodel_forward.7} parent=75 // pred_fallthru
          _
        // Predicated region
        $region125: #{transform_mlmodel_forward.7} parent=75 // pred_check
          %p750 = pneg %p365
        $region126: #{transform_mlmodel_forward.7} parent=75 // pred_check_branch
          %752 = sbr.rel (%p750) target = $region128
        $region127: #{transform_mlmodel_forward.7} parent=75 // pred_region
          %753 = dma.done [#allocation27], 256
        $region128: #{transform_mlmodel_forward.7} parent=75 // pred_fallthru
          _
        // Predicated region
        $region129: #{transform_mlmodel_forward.7} parent=75 // pred_check
          %p754 = pneg %p386
        $region130: #{transform_mlmodel_forward.7} parent=75 // pred_check_branch
          %756 = sbr.rel (%p754) target = $region132
        $region131: #{transform_mlmodel_forward.7} parent=75 // pred_region
          %757 = dma.done [#allocation30], 512
        $region132: #{transform_mlmodel_forward.7} parent=75 // pred_fallthru
          _
        %s758 = sand.u32 %s73, 1
        %s759 = scalar_lea.sflag [#allocation9], %s758
        %s760 = sand.u32 %s73, 1
        %s761 = smul.addr %s760, 16
        %s762 = scalar_lea.vmem [#allocation8], %s761
        %p763 = pneg %p86
        %p764 = pneg %p83
        %s765 = sand.u32 %s44, 1
        %s766 = scalar_lea.sflag [#allocation12], %s765
        %s767 = sand.u32 %s99, 1
        %s768 = smul.addr %s767, 32
        %s769 = scalar_lea.vmem [#allocation11], %s768
        %p770 = pneg %p112
        %p771 = pneg %p109
        %s772 = sand.u32 %s44, 1
        %s773 = scalar_lea.sflag [#allocation12], %s772
        %s774 = sand.u32 %s125, 1
        %s775 = smul.addr %s774, 32
        %s776 = scalar_lea.vmem [#allocation13], %s775
        %p777 = pneg %p138
        %p778 = pneg %p135
        %s779 = sand.u32 %s44, 1
        %s780 = scalar_lea.sflag [#allocation15], %s779
        %s781 = sand.u32 %s153, 1
        %s782 = smul.addr %s781, 16
        %s783 = scalar_lea.vmem [#allocation14], %s782
        %p784 = pneg %p166
        %p785 = pneg %p163
        %s786 = sand.u32 %s44, 1
        %s787 = scalar_lea.sflag [#allocation15], %s786
        %s788 = sand.u32 %s179, 1
        %s789 = smul.addr %s788, 32
        %s790 = scalar_lea.vmem [#allocation16], %s789
        %p791 = pneg %p192
        %p792 = pneg %p189
        %s793 = sand.u32 %s44, 1
        %s794 = scalar_lea.sflag [#allocation18], %s793
        %s795 = sand.u32 %s205, 1
        %s796 = smul.addr %s795, 32
        %s797 = scalar_lea.vmem [#allocation17], %s796
        %p798 = pneg %p218
        %p799 = pneg %p215
        %p800 = pneg %p239
        %p801 = pneg %p236
        %p802 = pneg %p260
        %p803 = pneg %p257
        %p804 = pneg %p281
        %p805 = pneg %p278
        %p806 = pneg %p302
        %p807 = pneg %p299
        %p808 = pneg %p323
        %p809 = pneg %p320
        %p810 = pneg %p344
        %p811 = pneg %p341
        %p812 = pneg %p365
        %p813 = pneg %p362
        %p814 = pneg %p386
        %p815 = pneg %p383
        %p816 = pneg %p414
        %p817 = pneg %p411
        %s818 = sand.u32 %s401, 1
        %s819 = scalar_lea.sflag [#allocation10], %s818
        %s820 = sand.u32 %s401, 1
        %s821 = smul.addr %s820, 16
        %s822 = scalar_lea.vmem [#allocation31], %s821
        %p824 = scmp.eq.s32.totalorder %s50, 0
        // Predicated region
        $region133: #{transform_mlmodel_forward.7} parent=75 // pred_check
          %p825 = pneg %p824
        $region134: #{transform_mlmodel_forward.7} parent=75 // pred_check_branch
          %827 = sbr.rel (%p825) target = $region136
        $region135: #{transform_mlmodel_forward.7} parent=75 // pred_region
          %v828 = vld [vmem:[%s703] sm:$0xf]
          %v829 = vld [vmem:[%s703 + $0x4] sm:$0xf]
          %v830 = vld [vmem:[%s703 + $0x8] sm:$0xf]
          %v831 = vld [vmem:[%s703 + $0xc] sm:$0xf]
          %v832 = vunpack.c.l.bf16 %v828
          %v833 = vunpack.c.l.bf16 %v829
          %v834 = vunpack.c.l.bf16 %v830
          %v835 = vunpack.c.l.bf16 %v831
          %v836 = vld [vmem:[%s712] sm:$0xff]
          %v837 = vld [vmem:[%s712 + $0x8] sm:$0xff]
          %v838 = vld [vmem:[%s712 + $0x10] sm:$0xff]
          %v839 = vld [vmem:[%s712 + $0x18] sm:$0xff]
          %841 = vset.pattern.permute.xlu0 0
          %842 = vperm.xlu0 %841, %v836
          %v843 = vpop.permute.xlu0 %842
          %846 = vset.pattern.permute.xlu0 0
          %847 = vperm.xlu0 %846, %v837
          %v848 = vpop.permute.xlu0 %847
          %851 = vset.pattern.permute.xlu0 0
          %852 = vperm.xlu0 %851, %v838
          %v853 = vpop.permute.xlu0 %852
          %856 = vset.pattern.permute.xlu0 0
          %857 = vperm.xlu0 %856, %v839
          %v858 = vpop.permute.xlu0 %857
          %v860 = vsub.f32 %v832, %v843
          %v861 = vsub.f32 %v833, %v848
          %v862 = vsub.f32 %v834, %v853
          %v863 = vsub.f32 %v835, %v858
          %v864 = vld [vmem:[%s721] sm:$0xff]
          %v865 = vld [vmem:[%s721 + $0x8] sm:$0xff]
          %v866 = vld [vmem:[%s721 + $0x10] sm:$0xff]
          %v867 = vld [vmem:[%s721 + $0x18] sm:$0xff]
          %869 = vset.pattern.permute.xlu0 0
          %870 = vperm.xlu0 %869, %v864
          %v871 = vpop.permute.xlu0 %870
          %874 = vset.pattern.permute.xlu0 0
          %875 = vperm.xlu0 %874, %v865
          %v876 = vpop.permute.xlu0 %875
          %879 = vset.pattern.permute.xlu0 0
          %880 = vperm.xlu0 %879, %v866
          %v881 = vpop.permute.xlu0 %880
          %884 = vset.pattern.permute.xlu0 0
          %885 = vperm.xlu0 %884, %v867
          %v886 = vpop.permute.xlu0 %885
          %v888 = vmul.f32 %v860, %v871
          %v889 = vmul.f32 %v861, %v876
          %v890 = vmul.f32 %v862, %v881
          %v891 = vmul.f32 %v863, %v886
          %v892 = vpack.c.bf16 %v889, %v888
          %v893 = vpack.c.bf16 %v891, %v890
          %v894 = vld [vmem:[#allocation22] sm:$0xf]
          %v895 = vld [vmem:[#allocation22 + $0x4] sm:$0xf]
          %v896 = vld [vmem:[#allocation22 + $0x8] sm:$0xf]
          %v897 = vld [vmem:[#allocation22 + $0xc] sm:$0xf]
          %v898 = vld [vmem:[#allocation23] sm:$0xff]
          %v899 = vld [vmem:[#allocation23 + $0x8] sm:$0xff]
          %v900 = vld [vmem:[#allocation23 + $0x10] sm:$0xff]
          %v901 = vld [vmem:[#allocation23 + $0x18] sm:$0xff]
          %903 = vset.pattern.permute.xlu0 0
          %904 = vperm.xlu0 %903, %v898
          %v905 = vpop.permute.xlu0 %904
          %908 = vset.pattern.permute.xlu0 0
          %909 = vperm.xlu0 %908, %v899
          %v910 = vpop.permute.xlu0 %909
          %913 = vset.pattern.permute.xlu0 0
          %914 = vperm.xlu0 %913, %v900
          %v915 = vpop.permute.xlu0 %914
          %918 = vset.pattern.permute.xlu0 0
          %919 = vperm.xlu0 %918, %v901
          %v920 = vpop.permute.xlu0 %919
          %v926 = vunpack.c.l.b16 %v894
          %v927 = vunpack.c.l.b16 %v895
          %v928 = vunpack.c.l.b16 %v896
          %v929 = vunpack.c.l.b16 %v897
          %v930 = vpack.c.b16 %v927, %v926
          %v931 = vpack.c.b16 %v929, %v928
          %vm932 = vcmask 261120
          %v934 = vsel %vm932, %v930, 0
          %v937 = vsel %vm932, %v931, 0
          %939 = vmatprep.subr.bf16.mxu0 0
          %940 = vmatpush1.bf16.msra.mxu0 %v892
          %941 = vmatprep.subr.bf16.mxu0 0
          %942 = vmatpush1.bf16.msra.mxu0 %v893
          %943 = vmatprep.subr.bf16.mxu0 0
          %944 = vmatpush1.bf16.msra.mxu0 0
          %945 = vmatprep.subr.bf16.mxu0 0
          %946 = vmatpush1.bf16.msra.mxu0 0
          %947 = vmatprep.subr.bf16.mxu0 0
          %948 = vmatpush1.bf16.msra.mxu0 0
          %949 = vmatprep.subr.bf16.mxu0 0
          %950 = vmatpush1.bf16.msra.mxu0 0
          %951 = vmatprep.subr.bf16.mxu0 0
          %952 = vmatpush1.bf16.msra.mxu0 0
          %953 = vmatprep.subr.bf16.mxu0 0
          %954 = vmatpush1.bf16.msra.mxu0 0
          %955 = vmatprep.subr.bf16.mxu0 0
          %956 = vmatpush1.bf16.msra.mxu0 0
          %957 = vmatprep.subr.bf16.mxu0 0
          %958 = vmatpush1.bf16.msra.mxu0 0
          %959 = vmatprep.subr.bf16.mxu0 0
          %960 = vmatpush1.bf16.msra.mxu0 0
          %961 = vmatprep.subr.bf16.mxu0 0
          %962 = vmatpush1.bf16.msra.mxu0 0
          %963 = vmatprep.subr.bf16.mxu0 0
          %964 = vmatpush1.bf16.msra.mxu0 0
          %965 = vmatprep.subr.bf16.mxu0 0
          %966 = vmatpush1.bf16.msra.mxu0 0
          %967 = vmatprep.subr.bf16.mxu0 0
          %968 = vmatpush1.bf16.msra.mxu0 0
          %969 = vmatprep.subr.bf16.mxu0 0
          %970 = vmatpush1.bf16.msra.mxu0 0
          %971 = vmatprep.mubr.bf16.mxu0 0
          %972 = vmatmul.mubr.bf16.gmra.mrb[0].mxu0 %v934
          %v973 = vpop.f32.mrb[0].mxu0
          %v974 = vadd.f32 %v905, %v973
          %v975 = vpop.f32.mrb[0].mxu0
          %v976 = vpop.f32.mrb[0].mxu0
          %v977 = vadd.f32 %v910, %v976
          %v978 = vpop.f32.mrb[0].mxu0
          %979 = vmatprep.mubr.bf16.mxu0 0
          %980 = vmatmul.mubr.bf16.gmra.mrb[0].mxu0 %v937
          %v981 = vpop.f32.mrb[0].mxu0
          %v982 = vadd.f32 %v915, %v981
          %v983 = vpop.f32.mrb[0].mxu0
          %v984 = vpop.f32.mrb[0].mxu0
          %v985 = vadd.f32 %v920, %v984
          %v986 = vpop.f32.mrb[0].mxu0
          %987 = vdwg.mxu0
          %v988 = vld [vmem:[#allocation25] sm:$0xf]
          %v989 = vld [vmem:[#allocation25 + $0x4] sm:$0xf]
          %v990 = vld [vmem:[#allocation25 + $0x8] sm:$0xf]
          %v991 = vld [vmem:[#allocation25 + $0xc] sm:$0xf]
          %v992 = vld [vmem:[#allocation26] sm:$0xff]
          %v993 = vld [vmem:[#allocation26 + $0x8] sm:$0xff]
          %v994 = vld [vmem:[#allocation26 + $0x10] sm:$0xff]
          %v995 = vld [vmem:[#allocation26 + $0x18] sm:$0xff]
          %997 = vset.pattern.permute.xlu0 0
          %998 = vperm.xlu0 %997, %v992
          %v999 = vpop.permute.xlu0 %998
          %1002 = vset.pattern.permute.xlu0 0
          %1003 = vperm.xlu0 %1002, %v993
          %v1004 = vpop.permute.xlu0 %1003
          %1007 = vset.pattern.permute.xlu0 0
          %1008 = vperm.xlu0 %1007, %v994
          %v1009 = vpop.permute.xlu0 %1008
          %1012 = vset.pattern.permute.xlu0 0
          %1013 = vperm.xlu0 %1012, %v995
          %v1014 = vpop.permute.xlu0 %1013
          %v1020 = vunpack.c.l.b16 %v988
          %v1021 = vunpack.c.l.b16 %v989
          %v1022 = vunpack.c.l.b16 %v990
          %v1023 = vunpack.c.l.b16 %v991
          %v1024 = vpack.c.b16 %v1021, %v1020
          %v1025 = vpack.c.b16 %v1023, %v1022
          %v1030 = vunpack.c.l.b16 %v828
          %v1031 = vunpack.c.l.b16 %v829
          %v1032 = vunpack.c.l.b16 %v830
          %v1033 = vunpack.c.l.b16 %v831
          %v1034 = vpack.c.b16 %v1031, %v1030
          %v1035 = vpack.c.b16 %v1033, %v1032
          %v1039 = vsel %vm932, %v1024, 0
          %v1042 = vsel %vm932, %v1025, 0
          %1044 = vmatprep.subr.bf16.mxu0 0
          %1045 = vmatpush1.bf16.msra.mxu0 %v1034
          %1046 = vmatprep.subr.bf16.mxu0 0
          %1047 = vmatpush1.bf16.msra.mxu0 %v1035
          %1048 = vmatprep.subr.bf16.mxu0 0
          %1049 = vmatpush1.bf16.msra.mxu0 0
          %1050 = vmatprep.subr.bf16.mxu0 0
          %1051 = vmatpush1.bf16.msra.mxu0 0
          %1052 = vmatprep.subr.bf16.mxu0 0
          %1053 = vmatpush1.bf16.msra.mxu0 0
          %1054 = vmatprep.subr.bf16.mxu0 0
          %1055 = vmatpush1.bf16.msra.mxu0 0
          %1056 = vmatprep.subr.bf16.mxu0 0
          %1057 = vmatpush1.bf16.msra.mxu0 0
          %1058 = vmatprep.subr.bf16.mxu0 0
          %1059 = vmatpush1.bf16.msra.mxu0 0
          %1060 = vmatprep.subr.bf16.mxu0 0
          %1061 = vmatpush1.bf16.msra.mxu0 0
          %1062 = vmatprep.subr.bf16.mxu0 0
          %1063 = vmatpush1.bf16.msra.mxu0 0
          %1064 = vmatprep.subr.bf16.mxu0 0
          %1065 = vmatpush1.bf16.msra.mxu0 0
          %1066 = vmatprep.subr.bf16.mxu0 0
          %1067 = vmatpush1.bf16.msra.mxu0 0
          %1068 = vmatprep.subr.bf16.mxu0 0
          %1069 = vmatpush1.bf16.msra.mxu0 0
          %1070 = vmatprep.subr.bf16.mxu0 0
          %1071 = vmatpush1.bf16.msra.mxu0 0
          %1072 = vmatprep.subr.bf16.mxu0 0
          %1073 = vmatpush1.bf16.msra.mxu0 0
          %1074 = vmatprep.subr.bf16.mxu0 0
          %1075 = vmatpush1.bf16.msra.mxu0 0
          %1076 = vmatprep.mubr.bf16.mxu0 0
          %1077 = vmatmul.mubr.bf16.gmra.mrb[0].mxu0 %v1039
          %v1078 = vpop.f32.mrb[0].mxu0
          %v1079 = vadd.f32 %v999, %v1078
          %v1080 = vpop.f32.mrb[0].mxu0
          %v1081 = vpop.f32.mrb[0].mxu0
          %v1082 = vadd.f32 %v1004, %v1081
          %v1083 = vpop.f32.mrb[0].mxu0
          %1084 = vmatprep.mubr.bf16.mxu0 0
          %1085 = vmatmul.mubr.bf16.gmra.mrb[0].mxu0 %v1042
          %v1086 = vpop.f32.mrb[0].mxu0
          %v1087 = vadd.f32 %v1009, %v1086
          %v1088 = vpop.f32.mrb[0].mxu0
          %v1089 = vpop.f32.mrb[0].mxu0
          %v1090 = vadd.f32 %v1014, %v1089
          %v1091 = vpop.f32.mrb[0].mxu0
          %1092 = vdwg.mxu0
          %v1093 = vpack.c.bf16 %v977, %v974
          %v1094 = vpack.c.bf16 %v985, %v982
          %s1095 = smul.u32 %s51, 2
          %s1096 = smul.addr %s1095, 8
          %s1097 = scalar_lea.vmem [#allocation3], %s1096
          %vm1098 = vcmask 523264
          %1099 = vst.msk [vmem:[%s1097] sm:$0xff] %vm1098, %v1093
          %1100 = vst.msk [vmem:[%s1097 + $0x8] sm:$0xff] %vm1098, %v1094
          %v1101 = vpack.c.bf16 %v1082, %v1079
          %v1102 = vpack.c.bf16 %v1090, %v1087
          %s1103 = smul.addr %s1095, 8
          %s1104 = scalar_lea.vmem [#allocation4], %s1103
          %1105 = vst.msk [vmem:[%s1104] sm:$0xff] %vm1098, %v1101
          %1106 = vst.msk [vmem:[%s1104 + $0x8] sm:$0xff] %vm1098, %v1102
        $region136: #{transform_mlmodel_forward.7} parent=75 // pred_fallthru
          _
        %p1107 = scmp.eq.s32.totalorder %s51, 0
        // Predicated region
        $region137: #{transform_mlmodel_forward.7} parent=75 // pred_check
          %p1108 = pneg %p1107
        $region138: #{transform_mlmodel_forward.7} parent=75 // pred_check_branch
          %1110 = sbr.rel (%p1108) target = $region140
        $region139: #{transform_mlmodel_forward.7} parent=75 // pred_region
          %v1111 = vld [vmem:[%s676] sm:$0xf]
          %v1112 = vld [vmem:[%s676 + $0x4] sm:$0xf]
          %v1113 = vld [vmem:[%s676 + $0x8] sm:$0xf]
          %v1114 = vld [vmem:[%s676 + $0xc] sm:$0xf]
          %v1115 = vunpack.c.l.bf16 %v1111
          %v1116 = vunpack.c.l.bf16 %v1112
          %v1117 = vunpack.c.l.bf16 %v1113
          %v1118 = vunpack.c.l.bf16 %v1114
          %v1119 = vld [vmem:[%s685] sm:$0xff]
          %v1120 = vld [vmem:[%s685 + $0x8] sm:$0xff]
          %v1121 = vld [vmem:[%s685 + $0x10] sm:$0xff]
          %v1122 = vld [vmem:[%s685 + $0x18] sm:$0xff]
          %1124 = vset.pattern.permute.xlu0 0
          %1125 = vperm.xlu0 %1124, %v1119
          %v1126 = vpop.permute.xlu0 %1125
          %1129 = vset.pattern.permute.xlu0 0
          %1130 = vperm.xlu0 %1129, %v1120
          %v1131 = vpop.permute.xlu0 %1130
          %1134 = vset.pattern.permute.xlu0 0
          %1135 = vperm.xlu0 %1134, %v1121
          %v1136 = vpop.permute.xlu0 %1135
          %1139 = vset.pattern.permute.xlu0 0
          %1140 = vperm.xlu0 %1139, %v1122
          %v1141 = vpop.permute.xlu0 %1140
          %v1143 = vsub.f32 %v1115, %v1126
          %v1144 = vsub.f32 %v1116, %v1131
          %v1145 = vsub.f32 %v1117, %v1136
          %v1146 = vsub.f32 %v1118, %v1141
          %v1147 = vld [vmem:[%s694] sm:$0xff]
          %v1148 = vld [vmem:[%s694 + $0x8] sm:$0xff]
          %v1149 = vld [vmem:[%s694 + $0x10] sm:$0xff]
          %v1150 = vld [vmem:[%s694 + $0x18] sm:$0xff]
          %1152 = vset.pattern.permute.xlu0 0
          %1153 = vperm.xlu0 %1152, %v1147
          %v1154 = vpop.permute.xlu0 %1153
          %1157 = vset.pattern.permute.xlu0 0
          %1158 = vperm.xlu0 %1157, %v1148
          %v1159 = vpop.permute.xlu0 %1158
          %1162 = vset.pattern.permute.xlu0 0
          %1163 = vperm.xlu0 %1162, %v1149
          %v1164 = vpop.permute.xlu0 %1163
          %1167 = vset.pattern.permute.xlu0 0
          %1168 = vperm.xlu0 %1167, %v1150
          %v1169 = vpop.permute.xlu0 %1168
          %v1171 = vmul.f32 %v1143, %v1154
          %v1172 = vmul.f32 %v1144, %v1159
          %v1173 = vmul.f32 %v1145, %v1164
          %v1174 = vmul.f32 %v1146, %v1169
          %v1175 = vpack.c.bf16 %v1172, %v1171
          %v1176 = vpack.c.bf16 %v1174, %v1173
          %v1177 = vld [vmem:[#allocation19] sm:$0xf]
          %v1178 = vld [vmem:[#allocation19 + $0x4] sm:$0xf]
          %v1179 = vld [vmem:[#allocation19 + $0x8] sm:$0xf]
          %v1180 = vld [vmem:[#allocation19 + $0xc] sm:$0xf]
          %v1181 = vld [vmem:[#allocation20] sm:$0xff]
          %v1182 = vld [vmem:[#allocation20 + $0x8] sm:$0xff]
          %v1183 = vld [vmem:[#allocation20 + $0x10] sm:$0xff]
          %v1184 = vld [vmem:[#allocation20 + $0x18] sm:$0xff]
          %1186 = vset.pattern.permute.xlu0 0
          %1187 = vperm.xlu0 %1186, %v1181
          %v1188 = vpop.permute.xlu0 %1187
          %1191 = vset.pattern.permute.xlu0 0
          %1192 = vperm.xlu0 %1191, %v1182
          %v1193 = vpop.permute.xlu0 %1192
          %1196 = vset.pattern.permute.xlu0 0
          %1197 = vperm.xlu0 %1196, %v1183
          %v1198 = vpop.permute.xlu0 %1197
          %1201 = vset.pattern.permute.xlu0 0
          %1202 = vperm.xlu0 %1201, %v1184
          %v1203 = vpop.permute.xlu0 %1202
          %v1209 = vunpack.c.l.b16 %v1177
          %v1210 = vunpack.c.l.b16 %v1178
          %v1211 = vunpack.c.l.b16 %v1179
          %v1212 = vunpack.c.l.b16 %v1180
          %v1213 = vpack.c.b16 %v1210, %v1209
          %v1214 = vpack.c.b16 %v1212, %v1211
          %vm1215 = vcmask 261120
          %v1217 = vsel %vm1215, %v1213, 0
          %v1220 = vsel %vm1215, %v1214, 0
          %1222 = vmatprep.subr.bf16.mxu0 0
          %1223 = vmatpush1.bf16.msra.mxu0 %v1175
          %1224 = vmatprep.subr.bf16.mxu0 0
          %1225 = vmatpush1.bf16.msra.mxu0 %v1176
          %1226 = vmatprep.subr.bf16.mxu0 0
          %1227 = vmatpush1.bf16.msra.mxu0 0
          %1228 = vmatprep.subr.bf16.mxu0 0
          %1229 = vmatpush1.bf16.msra.mxu0 0
          %1230 = vmatprep.subr.bf16.mxu0 0
          %1231 = vmatpush1.bf16.msra.mxu0 0
          %1232 = vmatprep.subr.bf16.mxu0 0
          %1233 = vmatpush1.bf16.msra.mxu0 0
          %1234 = vmatprep.subr.bf16.mxu0 0
          %1235 = vmatpush1.bf16.msra.mxu0 0
          %1236 = vmatprep.subr.bf16.mxu0 0
          %1237 = vmatpush1.bf16.msra.mxu0 0
          %1238 = vmatprep.subr.bf16.mxu0 0
          %1239 = vmatpush1.bf16.msra.mxu0 0
          %1240 = vmatprep.subr.bf16.mxu0 0
          %1241 = vmatpush1.bf16.msra.mxu0 0
          %1242 = vmatprep.subr.bf16.mxu0 0
          %1243 = vmatpush1.bf16.msra.mxu0 0
          %1244 = vmatprep.subr.bf16.mxu0 0
          %1245 = vmatpush1.bf16.msra.mxu0 0
          %1246 = vmatprep.subr.bf16.mxu0 0
          %1247 = vmatpush1.bf16.msra.mxu0 0
          %1248 = vmatprep.subr.bf16.mxu0 0
          %1249 = vmatpush1.bf16.msra.mxu0 0
          %1250 = vmatprep.subr.bf16.mxu0 0
          %1251 = vmatpush1.bf16.msra.mxu0 0
          %1252 = vmatprep.subr.bf16.mxu0 0
          %1253 = vmatpush1.bf16.msra.mxu0 0
          %1254 = vmatprep.mubr.bf16.mxu0 0
          %1255 = vmatmul.mubr.bf16.gmra.mrb[0].mxu0 %v1217
          %v1256 = vpop.f32.mrb[0].mxu0
          %v1257 = vadd.f32 %v1188, %v1256
          %v1258 = vpop.f32.mrb[0].mxu0
          %v1259 = vpop.f32.mrb[0].mxu0
          %v1260 = vadd.f32 %v1193, %v1259
          %v1261 = vpop.f32.mrb[0].mxu0
          %1262 = vmatprep.mubr.bf16.mxu0 0
          %1263 = vmatmul.mubr.bf16.gmra.mrb[0].mxu0 %v1220
          %v1264 = vpop.f32.mrb[0].mxu0
          %v1265 = vadd.f32 %v1198, %v1264
          %v1266 = vpop.f32.mrb[0].mxu0
          %v1267 = vpop.f32.mrb[0].mxu0
          %v1268 = vadd.f32 %v1203, %v1267
          %v1269 = vpop.f32.mrb[0].mxu0
          %1270 = vdwg.mxu0
          %v1271 = vpack.c.bf16 %v1260, %v1257
          %v1272 = vpack.c.bf16 %v1268, %v1265
          %vm1273 = vcmask 523264
          %1274 = vst.msk [vmem:[#allocation2] sm:$0xff] %vm1273, %v1271
          %1275 = vst.msk [vmem:[#allocation2 + $0x8] sm:$0xff] %vm1273, %v1272
          %vm1276 = vcmask 7168
          %1277 = vst.msk [vmem:[#allocation5] sm:$0xff] %vm1276, -inf
          %1278 = vst.msk [vmem:[#allocation5 + $0x8] sm:$0xff] %vm1276, -inf
          %1279 = vst.msk [vmem:[#allocation5 + $0x10] sm:$0xff] %vm1276, -inf
          %1280 = vst.msk [vmem:[#allocation5 + $0x18] sm:$0xff] %vm1276, -inf
          %1281 = vst.msk [vmem:[#allocation5 + $0x20] sm:$0xff] %vm1276, -inf
          %1282 = vst.msk [vmem:[#allocation5 + $0x28] sm:$0xff] %vm1276, -inf
          %1283 = vst.msk [vmem:[#allocation5 + $0x30] sm:$0xff] %vm1276, -inf
          %1284 = vst.msk [vmem:[#allocation5 + $0x38] sm:$0xff] %vm1276, -inf
          %1285 = vst.msk [vmem:[#allocation6] sm:$0xff] %vm1276, 0.0
          %1286 = vst.msk [vmem:[#allocation6 + $0x8] sm:$0xff] %vm1276, 0.0
          %1287 = vst.msk [vmem:[#allocation6 + $0x10] sm:$0xff] %vm1276, 0.0
          %1288 = vst.msk [vmem:[#allocation6 + $0x18] sm:$0xff] %vm1276, 0.0
          %1289 = vst.msk [vmem:[#allocation6 + $0x20] sm:$0xff] %vm1276, 0.0
          %1290 = vst.msk [vmem:[#allocation6 + $0x28] sm:$0xff] %vm1276, 0.0
          %1291 = vst.msk [vmem:[#allocation6 + $0x30] sm:$0xff] %vm1276, 0.0
          %1292 = vst.msk [vmem:[#allocation6 + $0x38] sm:$0xff] %vm1276, 0.0
          %1293 = vst.msk [vmem:[#allocation7] sm:$0xff] %vm1215, 0.0
          %1294 = vst.msk [vmem:[#allocation7 + $0x8] sm:$0xff] %vm1215, 0.0
          %1295 = vst.msk [vmem:[#allocation7 + $0x10] sm:$0xff] %vm1215, 0.0
          %1296 = vst.msk [vmem:[#allocation7 + $0x18] sm:$0xff] %vm1215, 0.0
          %1297 = vst.msk [vmem:[#allocation7 + $0x20] sm:$0xff] %vm1215, 0.0
          %1298 = vst.msk [vmem:[#allocation7 + $0x28] sm:$0xff] %vm1215, 0.0
          %1299 = vst.msk [vmem:[#allocation7 + $0x30] sm:$0xff] %vm1215, 0.0
          %1300 = vst.msk [vmem:[#allocation7 + $0x38] sm:$0xff] %vm1215, 0.0
        $region140: #{transform_mlmodel_forward.7} parent=75 // pred_fallthru
          _
        %s1301 = smul.u32 %s51, 2
        %s1302 = smul.addr %s1301, 8
        %s1303 = scalar_lea.vmem [#allocation3], %s1302
        %v1304 = vld [vmem:[%s1303] sm:$0xff]
        %v1305 = vld [vmem:[%s1303 + $0x8] sm:$0xff]
        %s1306 = smul.addr %s1301, 8
        %s1307 = scalar_lea.vmem [#allocation4], %s1306
        %v1308 = vld [vmem:[%s1307] sm:$0xff]
        %v1309 = vld [vmem:[%s1307 + $0x8] sm:$0xff]
        %v1310 = vld [vmem:[#allocation2] sm:$0xff]
        %v1311 = vld [vmem:[#allocation2 + $0x8] sm:$0xff]
        %1312 = vxpose.xlu0.c.b16.start [1/8] %v1310, 128
        %1313 = vxpose.xlu0.c.b16.cont [2/8] %v1311, 128
        %1314 = vxpose.xlu0.c.b16.cont [3/8] 0, 128
        %1315 = vxpose.xlu0.c.b16.cont [4/8] 0, 128
        %1316 = vxpose.xlu0.c.b16.cont [5/8] 0, 128
        %1317 = vxpose.xlu0.c.b16.cont [6/8] 0, 128
        %1318 = vxpose.xlu0.c.b16.cont [7/8] 0, 128
        %1319 = vxpose.xlu0.c.b16.end [8/8] 0, 128
        %v1320 = vpop.trf.xlu0
        %v1321 = vpop.trf.xlu0
        %v1322 = vpop.trf.xlu0
        %v1323 = vpop.trf.xlu0
        %v1324 = vpop.trf.xlu0
        %v1325 = vpop.trf.xlu0
        %v1326 = vpop.trf.xlu0
        %v1327 = vpop.trf.xlu0
        %vm1328 = vcmask 261120
        %v1330 = vsel %vm1328, %v1320, 0
        %v1333 = vsel %vm1328, %v1321, 0
        %v1336 = vsel %vm1328, %v1322, 0
        %v1339 = vsel %vm1328, %v1323, 0
        %1341 = vmatprep.subr.bf16.mxu0 0
        %1342 = vmatpush1.bf16.msra.mxu0 %v1304
        %1343 = vmatprep.subr.bf16.mxu0 0
        %1344 = vmatpush1.bf16.msra.mxu0 %v1305
        %1345 = vmatprep.subr.bf16.mxu0 0
        %1346 = vmatpush1.bf16.msra.mxu0 0
        %1347 = vmatprep.subr.bf16.mxu0 0
        %1348 = vmatpush1.bf16.msra.mxu0 0
        %1349 = vmatprep.subr.bf16.mxu0 0
        %1350 = vmatpush1.bf16.msra.mxu0 0
        %1351 = vmatprep.subr.bf16.mxu0 0
        %1352 = vmatpush1.bf16.msra.mxu0 0
        %1353 = vmatprep.subr.bf16.mxu0 0
        %1354 = vmatpush1.bf16.msra.mxu0 0
        %1355 = vmatprep.subr.bf16.mxu0 0
        %1356 = vmatpush1.bf16.msra.mxu0 0
        %1357 = vmatprep.subr.bf16.mxu0 0
        %1358 = vmatpush1.bf16.msra.mxu0 0
        %1359 = vmatprep.subr.bf16.mxu0 0
        %1360 = vmatpush1.bf16.msra.mxu0 0
        %1361 = vmatprep.subr.bf16.mxu0 0
        %1362 = vmatpush1.bf16.msra.mxu0 0
        %1363 = vmatprep.subr.bf16.mxu0 0
        %1364 = vmatpush1.bf16.msra.mxu0 0
        %1365 = vmatprep.subr.bf16.mxu0 0
        %1366 = vmatpush1.bf16.msra.mxu0 0
        %1367 = vmatprep.subr.bf16.mxu0 0
        %1368 = vmatpush1.bf16.msra.mxu0 0
        %1369 = vmatprep.subr.bf16.mxu0 0
        %1370 = vmatpush1.bf16.msra.mxu0 0
        %1371 = vmatprep.subr.bf16.mxu0 0
        %1372 = vmatpush1.bf16.msra.mxu0 0
        %1373 = vmatprep.mubr.bf16.mxu0 0
        %1374 = vmatmul.mubr.bf16.gmra.mrb[0].mxu0 %v1330
        %v1375 = vpop.f32.mrb[0].mxu0
        %v1376 = vadd.f32 0.0, %v1375
        %v1377 = vpop.f32.mrb[0].mxu0
        %v1378 = vpop.f32.mrb[0].mxu0
        %v1379 = vadd.f32 0.0, %v1378
        %v1380 = vpop.f32.mrb[0].mxu0
        %1381 = vmatprep.mubr.bf16.mxu0 0
        %1382 = vmatmul.mubr.bf16.gmra.mrb[0].mxu0 %v1333
        %v1383 = vpop.f32.mrb[0].mxu0
        %v1384 = vadd.f32 0.0, %v1383
        %v1385 = vpop.f32.mrb[0].mxu0
        %v1386 = vpop.f32.mrb[0].mxu0
        %v1387 = vadd.f32 0.0, %v1386
        %v1388 = vpop.f32.mrb[0].mxu0
        %1389 = vmatprep.mubr.bf16.mxu0 0
        %1390 = vmatmul.mubr.bf16.gmra.mrb[0].mxu0 %v1336
        %v1391 = vpop.f32.mrb[0].mxu0
        %v1392 = vadd.f32 0.0, %v1391
        %v1393 = vpop.f32.mrb[0].mxu0
        %v1394 = vpop.f32.mrb[0].mxu0
        %v1395 = vadd.f32 0.0, %v1394
        %v1396 = vpop.f32.mrb[0].mxu0
        %1397 = vmatprep.mubr.bf16.mxu0 0
        %1398 = vmatmul.mubr.bf16.gmra.mrb[0].mxu0 %v1339
        %v1399 = vpop.f32.mrb[0].mxu0
        %v1400 = vadd.f32 0.0, %v1399
        %v1401 = vpop.f32.mrb[0].mxu0
        %v1402 = vpop.f32.mrb[0].mxu0
        %v1403 = vadd.f32 0.0, %v1402
        %v1404 = vpop.f32.mrb[0].mxu0
        %1405 = vdwg.mxu0
        %v1406 = vld [vmem:[#allocation5] sm:$0xff]
        %v1407 = vld [vmem:[#allocation5 + $0x8] sm:$0xff]
        %v1408 = vld [vmem:[#allocation5 + $0x10] sm:$0xff]
        %v1409 = vld [vmem:[#allocation5 + $0x18] sm:$0xff]
        %v1410 = vld [vmem:[#allocation5 + $0x20] sm:$0xff]
        %v1411 = vld [vmem:[#allocation5 + $0x28] sm:$0xff]
        %v1412 = vld [vmem:[#allocation5 + $0x30] sm:$0xff]
        %v1413 = vld [vmem:[#allocation5 + $0x38] sm:$0xff]
        %vm1414 = vcmask 523264
        %v1415 = vsel %vm1414, %v1376, -inf
        %1416 = vmax.xlane.f32.xlu0 %v1415
        %v1417 = vpop.xlane.xlu0 %1416
        %v1418 = vsel %vm1414, %v1379, -inf
        %1419 = vmax.xlane.f32.xlu0 %v1418
        %v1420 = vpop.xlane.xlu0 %1419
        %v1421 = vsel %vm1414, %v1384, -inf
        %1422 = vmax.xlane.f32.xlu0 %v1421
        %v1423 = vpop.xlane.xlu0 %1422
        %v1424 = vsel %vm1414, %v1387, -inf
        %1425 = vmax.xlane.f32.xlu0 %v1424
        %v1426 = vpop.xlane.xlu0 %1425
        %v1427 = vsel %vm1414, %v1392, -inf
        %1428 = vmax.xlane.f32.xlu0 %v1427
        %v1429 = vpop.xlane.xlu0 %1428
        %v1430 = vsel %vm1414, %v1395, -inf
        %1431 = vmax.xlane.f32.xlu0 %v1430
        %v1432 = vpop.xlane.xlu0 %1431
        %v1433 = vsel %vm1414, %v1400, -inf
        %1434 = vmax.xlane.f32.xlu0 %v1433
        %v1435 = vpop.xlane.xlu0 %1434
        %v1436 = vsel %vm1414, %v1403, -inf
        %1437 = vmax.xlane.f32.xlu0 %v1436
        %v1438 = vpop.xlane.xlu0 %1437
        %v1439 = vmax.f32 %v1406, %v1417
        %v1440 = vmax.f32 %v1407, %v1420
        %v1441 = vmax.f32 %v1408, %v1423
        %v1442 = vmax.f32 %v1409, %v1426
        %v1443 = vmax.f32 %v1410, %v1429
        %v1444 = vmax.f32 %v1411, %v1432
        %v1445 = vmax.f32 %v1412, %v1435
        %v1446 = vmax.f32 %v1413, %v1438
        %v1447 = vsub.f32 %v1406, %v1439
        %v1448 = vsub.f32 %v1407, %v1440
        %v1449 = vsub.f32 %v1408, %v1441
        %v1450 = vsub.f32 %v1409, %v1442
        %v1451 = vsub.f32 %v1410, %v1443
        %v1452 = vsub.f32 %v1411, %v1444
        %v1453 = vsub.f32 %v1412, %v1445
        %v1454 = vsub.f32 %v1413, %v1446
        %v1455 = vmul.f32 %v1447, 1.442695
        %v1456 = vpow.pop %v1455
        %v1457 = vmul.f32 %v1448, 1.442695
        %v1458 = vpow.pop %v1457
        %v1459 = vmul.f32 %v1449, 1.442695
        %v1460 = vpow.pop %v1459
        %v1461 = vmul.f32 %v1450, 1.442695
        %v1462 = vpow.pop %v1461
        %v1463 = vmul.f32 %v1451, 1.442695
        %v1464 = vpow.pop %v1463
        %v1465 = vmul.f32 %v1452, 1.442695
        %v1466 = vpow.pop %v1465
        %v1467 = vmul.f32 %v1453, 1.442695
        %v1468 = vpow.pop %v1467
        %v1469 = vmul.f32 %v1454, 1.442695
        %v1470 = vpow.pop %v1469
        %1472 = vset.pattern.permute.xlu0 0
        %1473 = vperm.xlu0 %1472, %v1439
        %v1474 = vpop.permute.xlu0 %1473
        %1477 = vset.pattern.permute.xlu0 0
        %1478 = vperm.xlu0 %1477, %v1440
        %v1479 = vpop.permute.xlu0 %1478
        %1482 = vset.pattern.permute.xlu0 0
        %1483 = vperm.xlu0 %1482, %v1441
        %v1484 = vpop.permute.xlu0 %1483
        %1487 = vset.pattern.permute.xlu0 0
        %1488 = vperm.xlu0 %1487, %v1442
        %v1489 = vpop.permute.xlu0 %1488
        %1492 = vset.pattern.permute.xlu0 0
        %1493 = vperm.xlu0 %1492, %v1443
        %v1494 = vpop.permute.xlu0 %1493
        %1497 = vset.pattern.permute.xlu0 0
        %1498 = vperm.xlu0 %1497, %v1444
        %v1499 = vpop.permute.xlu0 %1498
        %1502 = vset.pattern.permute.xlu0 0
        %1503 = vperm.xlu0 %1502, %v1445
        %v1504 = vpop.permute.xlu0 %1503
        %1507 = vset.pattern.permute.xlu0 0
        %1508 = vperm.xlu0 %1507, %v1446
        %v1509 = vpop.permute.xlu0 %1508
        %v1511 = vsub.f32 %v1376, %v1474
        %v1512 = vsub.f32 %v1379, %v1479
        %v1513 = vsub.f32 %v1384, %v1484
        %v1514 = vsub.f32 %v1387, %v1489
        %v1515 = vsub.f32 %v1392, %v1494
        %v1516 = vsub.f32 %v1395, %v1499
        %v1517 = vsub.f32 %v1400, %v1504
        %v1518 = vsub.f32 %v1403, %v1509
        %v1519 = vmul.f32 %v1511, 1.442695
        %v1520 = vpow.pop %v1519
        %v1521 = vmul.f32 %v1512, 1.442695
        %v1522 = vpow.pop %v1521
        %v1523 = vmul.f32 %v1513, 1.442695
        %v1524 = vpow.pop %v1523
        %v1525 = vmul.f32 %v1514, 1.442695
        %v1526 = vpow.pop %v1525
        %v1527 = vmul.f32 %v1515, 1.442695
        %v1528 = vpow.pop %v1527
        %v1529 = vmul.f32 %v1516, 1.442695
        %v1530 = vpow.pop %v1529
        %v1531 = vmul.f32 %v1517, 1.442695
        %v1532 = vpow.pop %v1531
        %v1533 = vmul.f32 %v1518, 1.442695
        %v1534 = vpow.pop %v1533
        %v1535 = vsel %vm1414, %v1520, 0.0
        %1536 = vadd.xlane.f32.xlu0 %v1535
        %v1537 = vpop.xlane.xlu0 %1536
        %v1538 = vsel %vm1414, %v1522, 0.0
        %1539 = vadd.xlane.f32.xlu0 %v1538
        %v1540 = vpop.xlane.xlu0 %1539
        %v1541 = vsel %vm1414, %v1524, 0.0
        %1542 = vadd.xlane.f32.xlu0 %v1541
        %v1543 = vpop.xlane.xlu0 %1542
        %v1544 = vsel %vm1414, %v1526, 0.0
        %1545 = vadd.xlane.f32.xlu0 %v1544
        %v1546 = vpop.xlane.xlu0 %1545
        %v1547 = vsel %vm1414, %v1528, 0.0
        %1548 = vadd.xlane.f32.xlu0 %v1547
        %v1549 = vpop.xlane.xlu0 %1548
        %v1550 = vsel %vm1414, %v1530, 0.0
        %1551 = vadd.xlane.f32.xlu0 %v1550
        %v1552 = vpop.xlane.xlu0 %1551
        %v1553 = vsel %vm1414, %v1532, 0.0
        %1554 = vadd.xlane.f32.xlu0 %v1553
        %v1555 = vpop.xlane.xlu0 %1554
        %v1556 = vsel %vm1414, %v1534, 0.0
        %1557 = vadd.xlane.f32.xlu0 %v1556
        %v1558 = vpop.xlane.xlu0 %1557
        %v1559 = vpack.c.bf16 %v1522, %v1520
        %v1560 = vpack.c.bf16 %v1526, %v1524
        %v1561 = vpack.c.bf16 %v1530, %v1528
        %v1562 = vpack.c.bf16 %v1534, %v1532
        %v1563 = vld [vmem:[#allocation6] sm:$0xff]
        %v1564 = vld [vmem:[#allocation6 + $0x8] sm:$0xff]
        %v1565 = vld [vmem:[#allocation6 + $0x10] sm:$0xff]
        %v1566 = vld [vmem:[#allocation6 + $0x18] sm:$0xff]
        %v1567 = vld [vmem:[#allocation6 + $0x20] sm:$0xff]
        %v1568 = vld [vmem:[#allocation6 + $0x28] sm:$0xff]
        %v1569 = vld [vmem:[#allocation6 + $0x30] sm:$0xff]
        %v1570 = vld [vmem:[#allocation6 + $0x38] sm:$0xff]
        %v1571 = vmul.f32 %v1456, %v1563
        %v1572 = vmul.f32 %v1458, %v1564
        %v1573 = vmul.f32 %v1460, %v1565
        %v1574 = vmul.f32 %v1462, %v1566
        %v1575 = vmul.f32 %v1464, %v1567
        %v1576 = vmul.f32 %v1466, %v1568
        %v1577 = vmul.f32 %v1468, %v1569
        %v1578 = vmul.f32 %v1470, %v1570
        %v1579 = vadd.f32 %v1571, %v1537
        %v1580 = vadd.f32 %v1572, %v1540
        %v1581 = vadd.f32 %v1573, %v1543
        %v1582 = vadd.f32 %v1574, %v1546
        %v1583 = vadd.f32 %v1575, %v1549
        %v1584 = vadd.f32 %v1576, %v1552
        %v1585 = vadd.f32 %v1577, %v1555
        %v1586 = vadd.f32 %v1578, %v1558
        %vm1587 = vcmask 7168
        %1588 = vst.msk [vmem:[#allocation6] sm:$0xff] %vm1587, %v1579
        %1589 = vst.msk [vmem:[#allocation6 + $0x8] sm:$0xff] %vm1587, %v1580
        %1590 = vst.msk [vmem:[#allocation6 + $0x10] sm:$0xff] %vm1587, %v1581
        %1591 = vst.msk [vmem:[#allocation6 + $0x18] sm:$0xff] %vm1587, %v1582
        %1592 = vst.msk [vmem:[#allocation6 + $0x20] sm:$0xff] %vm1587, %v1583
        %1593 = vst.msk [vmem:[#allocation6 + $0x28] sm:$0xff] %vm1587, %v1584
        %1594 = vst.msk [vmem:[#allocation6 + $0x30] sm:$0xff] %vm1587, %v1585
        %1595 = vst.msk [vmem:[#allocation6 + $0x38] sm:$0xff] %vm1587, %v1586
        %v1596 = vld [vmem:[#allocation7] sm:$0xff]
        %v1597 = vld [vmem:[#allocation7 + $0x8] sm:$0xff]
        %v1598 = vld [vmem:[#allocation7 + $0x10] sm:$0xff]
        %v1599 = vld [vmem:[#allocation7 + $0x18] sm:$0xff]
        %v1600 = vld [vmem:[#allocation7 + $0x20] sm:$0xff]
        %v1601 = vld [vmem:[#allocation7 + $0x28] sm:$0xff]
        %v1602 = vld [vmem:[#allocation7 + $0x30] sm:$0xff]
        %v1603 = vld [vmem:[#allocation7 + $0x38] sm:$0xff]
        %1605 = vset.pattern.permute.xlu0 0
        %1606 = vperm.xlu0 %1605, %v1456
        %v1607 = vpop.permute.xlu0 %1606
        %1610 = vset.pattern.permute.xlu0 0
        %1611 = vperm.xlu0 %1610, %v1458
        %v1612 = vpop.permute.xlu0 %1611
        %1615 = vset.pattern.permute.xlu0 0
        %1616 = vperm.xlu0 %1615, %v1460
        %v1617 = vpop.permute.xlu0 %1616
        %1620 = vset.pattern.permute.xlu0 0
        %1621 = vperm.xlu0 %1620, %v1462
        %v1622 = vpop.permute.xlu0 %1621
        %1625 = vset.pattern.permute.xlu0 0
        %1626 = vperm.xlu0 %1625, %v1464
        %v1627 = vpop.permute.xlu0 %1626
        %1630 = vset.pattern.permute.xlu0 0
        %1631 = vperm.xlu0 %1630, %v1466
        %v1632 = vpop.permute.xlu0 %1631
        %1635 = vset.pattern.permute.xlu0 0
        %1636 = vperm.xlu0 %1635, %v1468
        %v1637 = vpop.permute.xlu0 %1636
        %1640 = vset.pattern.permute.xlu0 0
        %1641 = vperm.xlu0 %1640, %v1470
        %v1642 = vpop.permute.xlu0 %1641
        %v1644 = vmul.f32 %v1607, %v1596
        %v1645 = vmul.f32 %v1612, %v1597
        %v1646 = vmul.f32 %v1617, %v1598
        %v1647 = vmul.f32 %v1622, %v1599
        %v1648 = vmul.f32 %v1627, %v1600
        %v1649 = vmul.f32 %v1632, %v1601
        %v1650 = vmul.f32 %v1637, %v1602
        %v1651 = vmul.f32 %v1642, %v1603
        %v1653 = vsel %vm1414, %v1559, 0
        %v1656 = vsel %vm1414, %v1560, 0
        %v1659 = vsel %vm1414, %v1561, 0
        %v1662 = vsel %vm1414, %v1562, 0
        %v1665 = vsel %vm1414, %v1308, 0
        %v1668 = vsel %vm1414, %v1309, 0
        %1670 = vmatprep.subr.bf16.mxu0 0
        %1671 = vmatpush1.bf16.xpose.msra.mxu0 %v1665
        %1672 = vmatprep.subr.bf16.mxu0 0
        %1673 = vmatpush1.bf16.xpose.msra.mxu0 %v1668
        %1674 = vmatprep.subr.bf16.mxu0 0
        %1675 = vmatpush1.bf16.xpose.msra.mxu0 0
        %1676 = vmatprep.subr.bf16.mxu0 0
        %1677 = vmatpush1.bf16.xpose.msra.mxu0 0
        %1678 = vmatprep.subr.bf16.mxu0 0
        %1679 = vmatpush1.bf16.xpose.msra.mxu0 0
        %1680 = vmatprep.subr.bf16.mxu0 0
        %1681 = vmatpush1.bf16.xpose.msra.mxu0 0
        %1682 = vmatprep.subr.bf16.mxu0 0
        %1683 = vmatpush1.bf16.xpose.msra.mxu0 0
        %1684 = vmatprep.subr.bf16.mxu0 0
        %1685 = vmatpush1.bf16.xpose.msra.mxu0 0
        %1686 = vmatprep.subr.bf16.mxu0 0
        %1687 = vmatpush1.bf16.xpose.msra.mxu0 0
        %1688 = vmatprep.subr.bf16.mxu0 0
        %1689 = vmatpush1.bf16.xpose.msra.mxu0 0
        %1690 = vmatprep.subr.bf16.mxu0 0
        %1691 = vmatpush1.bf16.xpose.msra.mxu0 0
        %1692 = vmatprep.subr.bf16.mxu0 0
        %1693 = vmatpush1.bf16.xpose.msra.mxu0 0
        %1694 = vmatprep.subr.bf16.mxu0 0
        %1695 = vmatpush1.bf16.xpose.msra.mxu0 0
        %1696 = vmatprep.subr.bf16.mxu0 0
        %1697 = vmatpush1.bf16.xpose.msra.mxu0 0
        %1698 = vmatprep.subr.bf16.mxu0 0
        %1699 = vmatpush1.bf16.xpose.msra.mxu0 0
        %1700 = vmatprep.subr.bf16.mxu0 0
        %1701 = vmatpush1.bf16.xpose.msra.mxu0 0
        %1702 = vmatprep.mubr.bf16.mxu0 0
        %1703 = vmatmul.mubr.bf16.gmra.mrb[0].mxu0 %v1653
        %v1704 = vpop.f32.mrb[0].mxu0
        %v1705 = vadd.f32 0.0, %v1704
        %v1706 = vpop.f32.mrb[0].mxu0
        %v1707 = vpop.f32.mrb[0].mxu0
        %v1708 = vadd.f32 0.0, %v1707
        %v1709 = vpop.f32.mrb[0].mxu0
        %1710 = vmatprep.mubr.bf16.mxu0 0
        %1711 = vmatmul.mubr.bf16.gmra.mrb[0].mxu0 %v1656
        %v1712 = vpop.f32.mrb[0].mxu0
        %v1713 = vadd.f32 0.0, %v1712
        %v1714 = vpop.f32.mrb[0].mxu0
        %v1715 = vpop.f32.mrb[0].mxu0
        %v1716 = vadd.f32 0.0, %v1715
        %v1717 = vpop.f32.mrb[0].mxu0
        %1718 = vmatprep.mubr.bf16.mxu0 0
        %1719 = vmatmul.mubr.bf16.gmra.mrb[0].mxu0 %v1659
        %v1720 = vpop.f32.mrb[0].mxu0
        %v1721 = vadd.f32 0.0, %v1720
        %v1722 = vpop.f32.mrb[0].mxu0
        %v1723 = vpop.f32.mrb[0].mxu0
        %v1724 = vadd.f32 0.0, %v1723
        %v1725 = vpop.f32.mrb[0].mxu0
        %1726 = vmatprep.mubr.bf16.mxu0 0
        %1727 = vmatmul.mubr.bf16.gmra.mrb[0].mxu0 %v1662
        %v1728 = vpop.f32.mrb[0].mxu0
        %v1729 = vadd.f32 0.0, %v1728
        %v1730 = vpop.f32.mrb[0].mxu0
        %v1731 = vpop.f32.mrb[0].mxu0
        %v1732 = vadd.f32 0.0, %v1731
        %v1733 = vpop.f32.mrb[0].mxu0
        %1734 = vdwg.mxu0
        %v1735 = vadd.f32 %v1644, %v1705
        %v1736 = vadd.f32 %v1645, %v1708
        %v1737 = vadd.f32 %v1646, %v1713
        %v1738 = vadd.f32 %v1647, %v1716
        %v1739 = vadd.f32 %v1648, %v1721
        %v1740 = vadd.f32 %v1649, %v1724
        %v1741 = vadd.f32 %v1650, %v1729
        %v1742 = vadd.f32 %v1651, %v1732
        %1743 = vst.msk [vmem:[#allocation7] sm:$0xff] %vm1328, %v1735
        %1744 = vst.msk [vmem:[#allocation7 + $0x8] sm:$0xff] %vm1328, %v1736
        %1745 = vst.msk [vmem:[#allocation7 + $0x10] sm:$0xff] %vm1328, %v1737
        %1746 = vst.msk [vmem:[#allocation7 + $0x18] sm:$0xff] %vm1328, %v1738
        %1747 = vst.msk [vmem:[#allocation7 + $0x20] sm:$0xff] %vm1328, %v1739
        %1748 = vst.msk [vmem:[#allocation7 + $0x28] sm:$0xff] %vm1328, %v1740
        %1749 = vst.msk [vmem:[#allocation7 + $0x30] sm:$0xff] %vm1328, %v1741
        %1750 = vst.msk [vmem:[#allocation7 + $0x38] sm:$0xff] %vm1328, %v1742
        %1751 = vst.msk [vmem:[#allocation5] sm:$0xff] %vm1587, %v1439
        %1752 = vst.msk [vmem:[#allocation5 + $0x8] sm:$0xff] %vm1587, %v1440
        %1753 = vst.msk [vmem:[#allocation5 + $0x10] sm:$0xff] %vm1587, %v1441
        %1754 = vst.msk [vmem:[#allocation5 + $0x18] sm:$0xff] %vm1587, %v1442
        %1755 = vst.msk [vmem:[#allocation5 + $0x20] sm:$0xff] %vm1587, %v1443
        %1756 = vst.msk [vmem:[#allocation5 + $0x28] sm:$0xff] %vm1587, %v1444
        %1757 = vst.msk [vmem:[#allocation5 + $0x30] sm:$0xff] %vm1587, %v1445
        %1758 = vst.msk [vmem:[#allocation5 + $0x38] sm:$0xff] %vm1587, %v1446
        // Predicated region
        $region141: #{transform_mlmodel_forward.7} parent=75 // pred_check
          %p1759 = pneg %p1107
        $region142: #{transform_mlmodel_forward.7} parent=75 // pred_check_branch
          %1761 = sbr.rel (%p1759) target = $region144
        $region143: #{transform_mlmodel_forward.7} parent=75 // pred_region
          %v1762 = vld [vmem:[#allocation7] sm:$0xff]
          %v1763 = vld [vmem:[#allocation7 + $0x8] sm:$0xff]
          %v1764 = vld [vmem:[#allocation7 + $0x10] sm:$0xff]
          %v1765 = vld [vmem:[#allocation7 + $0x18] sm:$0xff]
          %v1766 = vld [vmem:[#allocation7 + $0x20] sm:$0xff]
          %v1767 = vld [vmem:[#allocation7 + $0x28] sm:$0xff]
          %v1768 = vld [vmem:[#allocation7 + $0x30] sm:$0xff]
          %v1769 = vld [vmem:[#allocation7 + $0x38] sm:$0xff]
          %v1770 = vld [vmem:[#allocation6] sm:$0xff]
          %v1771 = vld [vmem:[#allocation6 + $0x8] sm:$0xff]
          %v1772 = vld [vmem:[#allocation6 + $0x10] sm:$0xff]
          %v1773 = vld [vmem:[#allocation6 + $0x18] sm:$0xff]
          %v1774 = vld [vmem:[#allocation6 + $0x20] sm:$0xff]
          %v1775 = vld [vmem:[#allocation6 + $0x28] sm:$0xff]
          %v1776 = vld [vmem:[#allocation6 + $0x30] sm:$0xff]
          %v1777 = vld [vmem:[#allocation6 + $0x38] sm:$0xff]
          %v1778 = vrcp.pop %v1770
          %v1779 = vrcp.pop %v1771
          %v1780 = vrcp.pop %v1772
          %v1781 = vrcp.pop %v1773
          %v1782 = vrcp.pop %v1774
          %v1783 = vrcp.pop %v1775
          %v1784 = vrcp.pop %v1776
          %v1785 = vrcp.pop %v1777
          %1787 = vset.pattern.permute.xlu0 0
          %1788 = vperm.xlu0 %1787, %v1778
          %v1789 = vpop.permute.xlu0 %1788
          %1792 = vset.pattern.permute.xlu0 0
          %1793 = vperm.xlu0 %1792, %v1779
          %v1794 = vpop.permute.xlu0 %1793
          %1797 = vset.pattern.permute.xlu0 0
          %1798 = vperm.xlu0 %1797, %v1780
          %v1799 = vpop.permute.xlu0 %1798
          %1802 = vset.pattern.permute.xlu0 0
          %1803 = vperm.xlu0 %1802, %v1781
          %v1804 = vpop.permute.xlu0 %1803
          %1807 = vset.pattern.permute.xlu0 0
          %1808 = vperm.xlu0 %1807, %v1782
          %v1809 = vpop.permute.xlu0 %1808
          %1812 = vset.pattern.permute.xlu0 0
          %1813 = vperm.xlu0 %1812, %v1783
          %v1814 = vpop.permute.xlu0 %1813
          %1817 = vset.pattern.permute.xlu0 0
          %1818 = vperm.xlu0 %1817, %v1784
          %v1819 = vpop.permute.xlu0 %1818
          %1822 = vset.pattern.permute.xlu0 0
          %1823 = vperm.xlu0 %1822, %v1785
          %v1824 = vpop.permute.xlu0 %1823
          %v1826 = vmul.f32 %v1762, %v1789
          %v1827 = vmul.f32 %v1763, %v1794
          %v1828 = vmul.f32 %v1764, %v1799
          %v1829 = vmul.f32 %v1765, %v1804
          %v1830 = vmul.f32 %v1766, %v1809
          %v1831 = vmul.f32 %v1767, %v1814
          %v1832 = vmul.f32 %v1768, %v1819
          %v1833 = vmul.f32 %v1769, %v1824
          %v1834 = vld [vmem:[#allocation28] sm:$0xf]
          %v1835 = vld [vmem:[#allocation28 + $0x4] sm:$0xf]
          %v1836 = vld [vmem:[#allocation28 + $0x8] sm:$0xf]
          %v1837 = vld [vmem:[#allocation28 + $0xc] sm:$0xf]
          %v1838 = vpack.c.bf16 %v1827, %v1826
          %v1839 = vpack.c.bf16 %v1829, %v1828
          %v1840 = vpack.c.bf16 %v1831, %v1830
          %v1841 = vpack.c.bf16 %v1833, %v1832
          %v1842 = vld [vmem:[#allocation29] sm:$0xff]
          %v1843 = vld [vmem:[#allocation29 + $0x8] sm:$0xff]
          %v1844 = vld [vmem:[#allocation29 + $0x10] sm:$0xff]
          %v1845 = vld [vmem:[#allocation29 + $0x18] sm:$0xff]
          %1847 = vset.pattern.permute.xlu0 0
          %1848 = vperm.xlu0 %1847, %v1842
          %v1849 = vpop.permute.xlu0 %1848
          %1852 = vset.pattern.permute.xlu0 0
          %1853 = vperm.xlu0 %1852, %v1843
          %v1854 = vpop.permute.xlu0 %1853
          %1857 = vset.pattern.permute.xlu0 0
          %1858 = vperm.xlu0 %1857, %v1844
          %v1859 = vpop.permute.xlu0 %1858
          %1862 = vset.pattern.permute.xlu0 0
          %1863 = vperm.xlu0 %1862, %v1845
          %v1864 = vpop.permute.xlu0 %1863
          %v1870 = vunpack.c.l.b16 %v1834
          %v1871 = vunpack.c.l.b16 %v1835
          %v1872 = vunpack.c.l.b16 %v1836
          %v1873 = vunpack.c.l.b16 %v1837
          %v1874 = vpack.c.b16 %v1871, %v1870
          %v1875 = vpack.c.b16 %v1873, %v1872
          %v1877 = vsel %vm1328, %v1874, 0
          %v1880 = vsel %vm1328, %v1875, 0
          %v1883 = vsel %vm1328, %v1838, 0
          %v1886 = vsel %vm1328, %v1839, 0
          %v1889 = vsel %vm1328, %v1840, 0
          %v1892 = vsel %vm1328, %v1841, 0
          %1894 = vmatprep.subr.bf16.mxu0 0
          %1895 = vmatpush1.bf16.xpose.msra.mxu0 %v1883
          %1896 = vmatprep.subr.bf16.mxu0 0
          %1897 = vmatpush1.bf16.xpose.msra.mxu0 %v1886
          %1898 = vmatprep.subr.bf16.mxu0 0
          %1899 = vmatpush1.bf16.xpose.msra.mxu0 %v1889
          %1900 = vmatprep.subr.bf16.mxu0 0
          %1901 = vmatpush1.bf16.xpose.msra.mxu0 %v1892
          %1902 = vmatprep.subr.bf16.mxu0 0
          %1903 = vmatpush1.bf16.xpose.msra.mxu0 0
          %1904 = vmatprep.subr.bf16.mxu0 0
          %1905 = vmatpush1.bf16.xpose.msra.mxu0 0
          %1906 = vmatprep.subr.bf16.mxu0 0
          %1907 = vmatpush1.bf16.xpose.msra.mxu0 0
          %1908 = vmatprep.subr.bf16.mxu0 0
          %1909 = vmatpush1.bf16.xpose.msra.mxu0 0
          %1910 = vmatprep.subr.bf16.mxu0 0
          %1911 = vmatpush1.bf16.xpose.msra.mxu0 0
          %1912 = vmatprep.subr.bf16.mxu0 0
          %1913 = vmatpush1.bf16.xpose.msra.mxu0 0
          %1914 = vmatprep.subr.bf16.mxu0 0
          %1915 = vmatpush1.bf16.xpose.msra.mxu0 0
          %1916 = vmatprep.subr.bf16.mxu0 0
          %1917 = vmatpush1.bf16.xpose.msra.mxu0 0
          %1918 = vmatprep.subr.bf16.mxu0 0
          %1919 = vmatpush1.bf16.xpose.msra.mxu0 0
          %1920 = vmatprep.subr.bf16.mxu0 0
          %1921 = vmatpush1.bf16.xpose.msra.mxu0 0
          %1922 = vmatprep.subr.bf16.mxu0 0
          %1923 = vmatpush1.bf16.xpose.msra.mxu0 0
          %1924 = vmatprep.subr.bf16.mxu0 0
          %1925 = vmatpush1.bf16.xpose.msra.mxu0 0
          %1926 = vmatprep.mubr.bf16.mxu0 0
          %1927 = vmatmul.mubr.bf16.gmra.mrb[0].mxu0 %v1877
          %v1928 = vpop.f32.mrb[0].mxu0
          %v1929 = vadd.f32 %v1849, %v1928
          %v1930 = vpop.f32.mrb[0].mxu0
          %v1931 = vpop.f32.mrb[0].mxu0
          %v1932 = vadd.f32 %v1854, %v1931
          %v1933 = vpop.f32.mrb[0].mxu0
          %1934 = vmatprep.mubr.bf16.mxu0 0
          %1935 = vmatmul.mubr.bf16.gmra.mrb[0].mxu0 %v1880
          %v1936 = vpop.f32.mrb[0].mxu0
          %v1937 = vadd.f32 %v1859, %v1936
          %v1938 = vpop.f32.mrb[0].mxu0
          %v1939 = vpop.f32.mrb[0].mxu0
          %v1940 = vadd.f32 %v1864, %v1939
          %v1941 = vpop.f32.mrb[0].mxu0
          %1942 = vdwg.mxu0
          %v1943 = vld [vmem:[%s676] sm:$0xf]
          %v1944 = vld [vmem:[%s676 + $0x4] sm:$0xf]
          %v1945 = vld [vmem:[%s676 + $0x8] sm:$0xf]
          %v1946 = vld [vmem:[%s676 + $0xc] sm:$0xf]
          %v1947 = vunpack.c.l.bf16 %v1943
          %v1948 = vunpack.c.l.bf16 %v1944
          %v1949 = vunpack.c.l.bf16 %v1945
          %v1950 = vunpack.c.l.bf16 %v1946
          %v1951 = vadd.f32 %v1929, %v1947
          %v1952 = vadd.f32 %v1932, %v1948
          %v1953 = vadd.f32 %v1937, %v1949
          %v1954 = vadd.f32 %v1940, %v1950
          %v1955 = vpack.c.bf16 %v1952, %v1951
          %v1956 = vpack.c.bf16 %v1954, %v1953
          %v1959 = vunpack.c.l.b16 %v1955
          %v1960 = vunpack.c.h.b16 %v1955
          %v1961 = vunpack.c.l.b16 %v1956
          %v1962 = vunpack.c.h.b16 %v1956
          %v1963 = vpack.c.b16 %v1959, %v1959
          %v1964 = vpack.c.b16 %v1960, %v1960
          %v1965 = vpack.c.b16 %v1961, %v1961
          %v1966 = vpack.c.b16 %v1962, %v1962
          %vm1971 = vcmask 519168
          %1972 = vst.msk [vmem:[%s822] sm:$0xf] %vm1971, %v1963
          %1973 = vst.msk [vmem:[%s822 + $0x4] sm:$0xf] %vm1971, %v1964
          %1974 = vst.msk [vmem:[%s822 + $0x8] sm:$0xf] %vm1971, %v1965
          %1975 = vst.msk [vmem:[%s822 + $0xc] sm:$0xf] %vm1971, %v1966
        $region144: #{transform_mlmodel_forward.7} parent=75 // pred_fallthru
          _
        %s1976 = sand.u32 %s401, 1
        %s1977 = scalar_lea.sflag [#allocation10], %s1976
        %s1978 = sand.u32 %s401, 1
        %s1979 = smul.addr %s1978, 16
        %s1980 = scalar_lea.vmem [#allocation31], %s1979
        // Predicated region
        $region145: #{transform_mlmodel_forward.7} parent=75 // pred_check
          %p1981 = pneg %p411
        $region146: #{transform_mlmodel_forward.7} parent=75 // pred_check_branch
          %1983 = sbr.rel (%p1981) target = $region148
        $region147: #{transform_mlmodel_forward.7} parent=75 // pred_region
          %s1985 = ssub.s32 256, 256
          %1986 = vsyncadd %s1977, %s1985
          %s1987 = smul.addr %s49, 4
          %s1988 = sadd.s32 %s50, %s1987
          %s1989 = smul.addr %s1988, 64
          %s1990 = scalar_lea.hbm %s14, %s1989
          %s1991 = sshll.u32 %s1980, 4
          %s1992 = int_to_ptr.vmem [resolvable:$true] %s1991
          %1997 = dma.vmem_to_hbm [thread:$0]  %s1992, 256, %s1990, %s1977, 64, 64, 4
        $region148: #{transform_mlmodel_forward.7} parent=75 // pred_fallthru
          _
      $region76: #{transform_mlmodel_forward.7} parent=5 // pred_fallthru
        _
      %p1998 = scmp.le.s32.totalorder 2, %s39
      // Predicated region
      $region149: #{transform_mlmodel_forward.7} parent=5 // pred_check
        %p1999 = pneg %p1998
      $region150: #{transform_mlmodel_forward.7} parent=5 // pred_check_branch
        %2001 = sbr.rel (%p1999) target = $region152
      $region151: #{transform_mlmodel_forward.7} parent=5 // pred_region
        %s2002 = ssub.s32 %s39, 2
        // Predicated region
        $region153: #{transform_mlmodel_forward.7} parent=151 // pred_check
          %p2003 = pneg %p417
        $region154: #{transform_mlmodel_forward.7} parent=151 // pred_check_branch
          %2005 = sbr.rel (%p2003) target = $region156
        $region155: #{transform_mlmodel_forward.7} parent=151 // pred_region
          %s2006 = sand.u32 %s402, 1
          %s2007 = scalar_lea.sflag [#allocation10], %s2006
          %s2008 = sand.u32 %s402, 1
          %s2009 = smul.addr %s2008, 16
          %s2010 = scalar_lea.vmem [#allocation31], %s2009
          %2011 = dma.done %s2007, 256
        $region156: #{transform_mlmodel_forward.7} parent=151 // pred_fallthru
          _
      $region152: #{transform_mlmodel_forward.7} parent=5 // pred_fallthru
        _
    $region6: #{transform_mlmodel_forward.7} parent=1 // loop_footer
      %s43 = sadd.s32 1, %s39
    $region7: #{transform_mlmodel_forward.7} parent=1 // loop_footer_branch
      %38 = sbr.rel target = $region3
    $region8: #{transform_mlmodel_forward.7} parent=1 // loop_exit
      _
    %2012 = vsyncpa [#allocation9], 1
    %s2013 = scalar_lea.sflag [#allocation9], 1
    %2014 = vsyncpa %s2013, 1
    %2015 = vsyncpa [#allocation12], 1
    %s2016 = scalar_lea.sflag [#allocation12], 1
    %2017 = vsyncpa %s2016, 1
    %2018 = vsyncpa [#allocation15], 1
    %s2019 = scalar_lea.sflag [#allocation15], 1
    %2020 = vsyncpa %s2019, 1
    %2021 = vsyncpa [#allocation18], 1
    %s2022 = scalar_lea.sflag [#allocation18], 1
    %2023 = vsyncpa %s2022, 1
    %2024 = vsyncpa [#allocation21], 1
    %2025 = vsyncpa [#allocation24], 1
    %2026 = vsyncpa [#allocation27], 1
    %2027 = vsyncpa [#allocation30], 1
    %2028 = vsyncpa [#allocation10], 1
    %s2029 = scalar_lea.sflag [#allocation10], 1
    %2030 = vsyncpa %s2029, 1

// kernel: transform_mlmodel_forward.6
$region0: #{transform_mlmodel_forward.6}
  #allocation0 [shape = 'u32[]', space=smem, size = 0x4, offset = 0x4, fixed_abs, tag = 'smem constant byte address 0x4 - core index']
  #allocation1 [shape = 'u32[144,128]{1,0:T(1,128)}', space=vmem, size = 0x12000, scoped, tag = 'internal scratch']
  #allocation2 [shape = 'bf16[32,128]{1,0:T(16,128)(2,1)}', space=vmem, size = 0x2000, scoped, tag = 'scratch operand']
  #allocation3 [shape = 'bf16[2,32,128]{2,1,0:T(16,128)(2,1)}', space=vmem, size = 0x4000, scoped, tag = 'scratch operand']
  #allocation4 [shape = 'bf16[2,32,128]{2,1,0:T(16,128)(2,1)}', space=vmem, size = 0x4000, scoped, tag = 'scratch operand']
  #allocation5 [shape = 'f32[128,1]{1,0:T(8,128)}', space=vmem, size = 0x10000, scoped, tag = 'scratch operand']
  #allocation6 [shape = 'f32[128,1]{1,0:T(8,128)}', space=vmem, size = 0x10000, scoped, tag = 'scratch operand']
  #allocation7 [shape = 'f32[128,32]{1,0:T(8,128)}', space=vmem, size = 0x10000, scoped, tag = 'scratch operand']
  %s0 = inlined_call_operand.hbm [shape: bf16[2,32,256], index: 0, kind: input, shape index: {}, may-alias: {0,3}]
  %s1 = inlined_call_operand.hbm [shape: f32[2,32,1], index: 1, kind: input, shape index: {}, may-alias: {1,4}]
  %s2 = inlined_call_operand.hbm [shape: f32[2,32,1], index: 2, kind: input, shape index: {}, may-alias: {2,5}]
  %s3 = inlined_call_operand.hbm [shape: bf16[2,32,256], index: 3, kind: input, shape index: {}, may-alias: {0,3}]
  %s4 = inlined_call_operand.hbm [shape: f32[2,32,1], index: 4, kind: input, shape index: {}, may-alias: {1,4}]
  %s5 = inlined_call_operand.hbm [shape: f32[2,32,1], index: 5, kind: input, shape index: {}, may-alias: {2,5}]
  %s6 = inlined_call_operand.hbm [shape: bf16[32,32], index: 6, kind: input, shape index: {}]
  %s7 = inlined_call_operand.hbm [shape: f32[32,1], index: 7, kind: input, shape index: {}]
  %s8 = inlined_call_operand.hbm [shape: bf16[32,32], index: 8, kind: input, shape index: {}]
  %s9 = inlined_call_operand.hbm [shape: f32[32,1], index: 9, kind: input, shape index: {}]
  %s10 = inlined_call_operand.hbm [shape: bf16[32,32], index: 10, kind: input, shape index: {}]
  %s11 = inlined_call_operand.hbm [shape: f32[32,1], index: 11, kind: input, shape index: {}]
  %s12 = inlined_call_operand.hbm [shape: bf16[32,32], index: 12, kind: input, shape index: {}]
  %s13 = inlined_call_operand.hbm [shape: f32[32,1], index: 13, kind: input, shape index: {}]
  %s14 = inlined_call_operand.hbm [shape: bf16[2,32,256], index: 14, kind: output, shape index: {}]
  %s15 = sld [smem:[#allocation0]]
  $region157: #{transform_mlmodel_forward.6} parent=0
    _
  %s17 = ssub.s32 1, %s15
  %s18 = scalar_select 0, %s17, %s15
  $region1: #{transform_mlmodel_forward.6} parent=0
    #allocation8 [shape = 'u8[16384]{0}', space=vmem, size = 0x4000, scoped, tag = 'input window, operand 0']
    #allocation9 [shape = 's32[2]{0}', space=sflag, size = 0x8, scoped, tag = 'scoped memory for transform_mlmodel_forward.6']
    #allocation10 [shape = 's32[2]{0}', space=sflag, size = 0x8, scoped, tag = 'scoped memory for transform_mlmodel_forward.6']
    #allocation11 [shape = 'u8[32768]{0}', space=vmem, size = 0x8000, scoped, tag = 'input window, operand 1']
    #allocation12 [shape = 's32[2]{0}', space=sflag, size = 0x8, scoped, tag = 'scoped memory for transform_mlmodel_forward.6']
    #allocation13 [shape = 'u8[32768]{0}', space=vmem, size = 0x8000, scoped, tag = 'input window, operand 2']
    #allocation14 [shape = 'u8[16384]{0}', space=vmem, size = 0x4000, scoped, tag = 'input window, operand 3']
    #allocation15 [shape = 's32[2]{0}', space=sflag, size = 0x8, scoped, tag = 'scoped memory for transform_mlmodel_forward.6']
    #allocation16 [shape = 'u8[32768]{0}', space=vmem, size = 0x8000, scoped, tag = 'input window, operand 4']
    #allocation17 [shape = 'u8[32768]{0}', space=vmem, size = 0x8000, scoped, tag = 'input window, operand 5']
    #allocation18 [shape = 's32[2]{0}', space=sflag, size = 0x8, scoped, tag = 'scoped memory for transform_mlmodel_forward.6']
    #allocation19 [shape = 'u8[8192]{0}', space=vmem, size = 0x2000, scoped, tag = 'input window, operand 6, single buffered']
    #allocation20 [shape = 'u8[16384]{0}', space=vmem, size = 0x4000, scoped, tag = 'input window, operand 7, single buffered']
    #allocation21 [shape = 's32[1]{0}', space=sflag, size = 0x4, scoped, tag = 'scoped memory for transform_mlmodel_forward.6']
    #allocation22 [shape = 'u8[8192]{0}', space=vmem, size = 0x2000, scoped, tag = 'input window, operand 8, single buffered']
    #allocation23 [shape = 'u8[16384]{0}', space=vmem, size = 0x4000, scoped, tag = 'input window, operand 9, single buffered']
    #allocation24 [shape = 's32[1]{0}', space=sflag, size = 0x4, scoped, tag = 'scoped memory for transform_mlmodel_forward.6']
    #allocation25 [shape = 'u8[8192]{0}', space=vmem, size = 0x2000, scoped, tag = 'input window, operand 10, single buffered']
    #allocation26 [shape = 'u8[16384]{0}', space=vmem, size = 0x4000, scoped, tag = 'input window, operand 11, single buffered']
    #allocation27 [shape = 's32[1]{0}', space=sflag, size = 0x4, scoped, tag = 'scoped memory for transform_mlmodel_forward.6']
    #allocation28 [shape = 'u8[8192]{0}', space=vmem, size = 0x2000, scoped, tag = 'input window, operand 12, single buffered']
    #allocation29 [shape = 'u8[16384]{0}', space=vmem, size = 0x4000, scoped, tag = 'input window, operand 13, single buffered']
    #allocation30 [shape = 's32[1]{0}', space=sflag, size = 0x4, scoped, tag = 'scoped memory for transform_mlmodel_forward.6']
    #allocation31 [shape = 'u8[16384]{0}', space=vmem, size = 0x4000, scoped, tag = 'output window, operand 0']
    %19 = vsyncpa [#allocation9], 0
    %s20 = scalar_lea.sflag [#allocation9], 1
    %21 = vsyncpa %s20, 0
    %22 = vsyncpa [#allocation12], 0
    %s23 = scalar_lea.sflag [#allocation12], 1
    %24 = vsyncpa %s23, 0
    %25 = vsyncpa [#allocation15], 0
    %s26 = scalar_lea.sflag [#allocation15], 1
    %27 = vsyncpa %s26, 0
    %28 = vsyncpa [#allocation18], 0
    %s29 = scalar_lea.sflag [#allocation18], 1
    %30 = vsyncpa %s29, 0
    %31 = vsyncpa [#allocation21], 0
    %32 = vsyncpa [#allocation24], 0
    %33 = vsyncpa [#allocation27], 0
    %34 = vsyncpa [#allocation30], 0
    %35 = vsyncpa [#allocation10], 0
    %s36 = scalar_lea.sflag [#allocation10], 1
    %37 = vsyncpa %s36, 0
    loop: start=0, step=1, limit=10
    $region2: #{transform_mlmodel_forward.6} parent=1 // loop_pre_header
      _
    $region3: #{transform_mlmodel_forward.6} parent=1 // loop_header
      %s39 = sphi 0, %s43
      %p40 = scmp.ge.s32.totalorder %s39, 10
      %s46 = sphi 0, %s65
      %s47 = sphi 0, %s61
      %s48 = sphi 0, %s57
      %s49 = sphi 0, %s46
      %s50 = sphi 0, %s47
      %s51 = sphi 0, %s48
      %s52 = sphi 0, %s49
      %s53 = sphi 0, %s50
      %s54 = sphi 0, %s51
      %s70 = sphi 0, %s72
      %s73 = sphi 0, %s70
      %s74 = sphi 0, %s73
      %s90 = sphi 0, %s74
      %s96 = sphi 0, %s98
      %s99 = sphi 0, %s96
      %s100 = sphi 0, %s99
      %s116 = sphi 0, %s100
      %s122 = sphi 0, %s124
      %s125 = sphi 0, %s122
      %s126 = sphi 0, %s125
      %s142 = sphi 0, %s126
      %s150 = sphi 0, %s152
      %s153 = sphi 0, %s150
      %s154 = sphi 0, %s153
      %s170 = sphi 0, %s154
      %s176 = sphi 0, %s178
      %s179 = sphi 0, %s176
      %s180 = sphi 0, %s179
      %s196 = sphi 0, %s180
      %s202 = sphi 0, %s204
      %s205 = sphi 0, %s202
      %s206 = sphi 0, %s205
      %s222 = sphi 0, %s206
      %s226 = sphi 0, %s226
      %s228 = sphi 0, %s226
      %s229 = sphi 0, %s228
      %s243 = sphi 0, %s229
      %s247 = sphi 0, %s247
      %s249 = sphi 0, %s247
      %s250 = sphi 0, %s249
      %s264 = sphi 0, %s250
      %s268 = sphi 0, %s268
      %s270 = sphi 0, %s268
      %s271 = sphi 0, %s270
      %s285 = sphi 0, %s271
      %s289 = sphi 0, %s289
      %s291 = sphi 0, %s289
      %s292 = sphi 0, %s291
      %s306 = sphi 0, %s292
      %s310 = sphi 0, %s310
      %s312 = sphi 0, %s310
      %s313 = sphi 0, %s312
      %s327 = sphi 0, %s313
      %s331 = sphi 0, %s331
      %s333 = sphi 0, %s331
      %s334 = sphi 0, %s333
      %s348 = sphi 0, %s334
      %s352 = sphi 0, %s352
      %s354 = sphi 0, %s352
      %s355 = sphi 0, %s354
      %s369 = sphi 0, %s355
      %s373 = sphi 0, %s373
      %s375 = sphi 0, %s373
      %s376 = sphi 0, %s375
      %s390 = sphi 0, %s376
      %s398 = sphi 0, %s400
      %s401 = sphi 0, %s398
      %s402 = sphi 0, %s401
      %s418 = sphi 0, %s402
    $region4: #{transform_mlmodel_forward.6} parent=1 // loop_header_branch
      %42 = sbr.rel (%p40) target = $region8
    $region5: #{transform_mlmodel_forward.6} parent=1 // loop_body
      %s44 = ssub.s32 %s39, 1
      %s45 = ssub.s32 %s39, 2
      %s55 = sadd.s32 1, %s48
      %p56 = scmp.ge.s32.totalorder %s55, 2
      %s57 = scalar_select %p56, 0, %s55
      %s58 = sadd.s32 1, %s47
      %s59 = scalar_select %p56, %s58, %s47
      %p60 = scmp.ge.s32.totalorder %s59, 2
      %s61 = scalar_select %p60, 0, %s59
      %s62 = sadd.s32 1, %s46
      %s63 = scalar_select %p60, %s62, %s46
      %p64 = scmp.ge.s32.totalorder %s63, 2
      %s65 = scalar_select %p64, 0, %s63
      %s66 = ssub.s32 %s46, %s65
      %s67 = ssub.s32 %s47, %s61
      %s68 = sor.u32 %s66, %s67
      %p69 = scmp.eq.s32.totalorder %s68, 0
      %s71 = sadd.s32 %s70, 1
      %s72 = scalar_select %p69, %s70, %s71
      %p75 = pneg %p69
      %p76 = scmp.eq.s32.totalorder %s39, 7
      %p77 = por %p75, %p76
      %p78 = scmp.ne.s32.totalorder %s70, %s73
      %p79 = scmp.eq.s32.totalorder %s39, 0
      %p80 = por %p78, %p79
      %p81 = scmp.ne.s32.totalorder %s70, %s73
      %p82 = scmp.eq.s32.totalorder %s44, 7
      %p83 = por %p81, %p82
      %p84 = scmp.ne.s32.totalorder %s73, %s74
      %p85 = scmp.eq.s32.totalorder %s44, 0
      %p86 = por %p84, %p85
      %p87 = scmp.ne.s32.totalorder %s73, %s74
      %p88 = scmp.eq.s32.totalorder %s45, 7
      %p89 = por %p87, %p88
      %p91 = scmp.ne.s32.totalorder %s74, %s90
      %p92 = scmp.eq.s32.totalorder %s45, 0
      %p93 = por %p91, %p92
      %s94 = ssub.s32 %s46, %s65
      %p95 = scmp.eq.s32.totalorder %s94, 0
      %s97 = sadd.s32 %s96, 1
      %s98 = scalar_select %p95, %s96, %s97
      %p101 = pneg %p95
      %p102 = scmp.eq.s32.totalorder %s39, 7
      %p103 = por %p101, %p102
      %p104 = scmp.ne.s32.totalorder %s96, %s99
      %p105 = scmp.eq.s32.totalorder %s39, 0
      %p106 = por %p104, %p105
      %p107 = scmp.ne.s32.totalorder %s96, %s99
      %p108 = scmp.eq.s32.totalorder %s44, 7
      %p109 = por %p107, %p108
      %p110 = scmp.ne.s32.totalorder %s99, %s100
      %p111 = scmp.eq.s32.totalorder %s44, 0
      %p112 = por %p110, %p111
      %p113 = scmp.ne.s32.totalorder %s99, %s100
      %p114 = scmp.eq.s32.totalorder %s45, 7
      %p115 = por %p113, %p114
      %p117 = scmp.ne.s32.totalorder %s100, %s116
      %p118 = scmp.eq.s32.totalorder %s45, 0
      %p119 = por %p117, %p118
      %s120 = ssub.s32 %s46, %s65
      %p121 = scmp.eq.s32.totalorder %s120, 0
      %s123 = sadd.s32 %s122, 1
      %s124 = scalar_select %p121, %s122, %s123
      %p127 = pneg %p121
      %p128 = scmp.eq.s32.totalorder %s39, 7
      %p129 = por %p127, %p128
      %p130 = scmp.ne.s32.totalorder %s122, %s125
      %p131 = scmp.eq.s32.totalorder %s39, 0
      %p132 = por %p130, %p131
      %p133 = scmp.ne.s32.totalorder %s122, %s125
      %p134 = scmp.eq.s32.totalorder %s44, 7
      %p135 = por %p133, %p134
      %p136 = scmp.ne.s32.totalorder %s125, %s126
      %p137 = scmp.eq.s32.totalorder %s44, 0
      %p138 = por %p136, %p137
      %p139 = scmp.ne.s32.totalorder %s125, %s126
      %p140 = scmp.eq.s32.totalorder %s45, 7
      %p141 = por %p139, %p140
      %p143 = scmp.ne.s32.totalorder %s126, %s142
      %p144 = scmp.eq.s32.totalorder %s45, 0
      %p145 = por %p143, %p144
      %s146 = ssub.s32 %s46, %s65
      %s147 = ssub.s32 %s48, %s57
      %s148 = sor.u32 %s146, %s147
      %p149 = scmp.eq.s32.totalorder %s148, 0
      %s151 = sadd.s32 %s150, 1
      %s152 = scalar_select %p149, %s150, %s151
      %p155 = pneg %p149
      %p156 = scmp.eq.s32.totalorder %s39, 7
      %p157 = por %p155, %p156
      %p158 = scmp.ne.s32.totalorder %s150, %s153
      %p159 = scmp.eq.s32.totalorder %s39, 0
      %p160 = por %p158, %p159
      %p161 = scmp.ne.s32.totalorder %s150, %s153
      %p162 = scmp.eq.s32.totalorder %s44, 7
      %p163 = por %p161, %p162
      %p164 = scmp.ne.s32.totalorder %s153, %s154
      %p165 = scmp.eq.s32.totalorder %s44, 0
      %p166 = por %p164, %p165
      %p167 = scmp.ne.s32.totalorder %s153, %s154
      %p168 = scmp.eq.s32.totalorder %s45, 7
      %p169 = por %p167, %p168
      %p171 = scmp.ne.s32.totalorder %s154, %s170
      %p172 = scmp.eq.s32.totalorder %s45, 0
      %p173 = por %p171, %p172
      %s174 = ssub.s32 %s46, %s65
      %p175 = scmp.eq.s32.totalorder %s174, 0
      %s177 = sadd.s32 %s176, 1
      %s178 = scalar_select %p175, %s176, %s177
      %p181 = pneg %p175
      %p182 = scmp.eq.s32.totalorder %s39, 7
      %p183 = por %p181, %p182
      %p184 = scmp.ne.s32.totalorder %s176, %s179
      %p185 = scmp.eq.s32.totalorder %s39, 0
      %p186 = por %p184, %p185
      %p187 = scmp.ne.s32.totalorder %s176, %s179
      %p188 = scmp.eq.s32.totalorder %s44, 7
      %p189 = por %p187, %p188
      %p190 = scmp.ne.s32.totalorder %s179, %s180
      %p191 = scmp.eq.s32.totalorder %s44, 0
      %p192 = por %p190, %p191
      %p193 = scmp.ne.s32.totalorder %s179, %s180
      %p194 = scmp.eq.s32.totalorder %s45, 7
      %p195 = por %p193, %p194
      %p197 = scmp.ne.s32.totalorder %s180, %s196
      %p198 = scmp.eq.s32.totalorder %s45, 0
      %p199 = por %p197, %p198
      %s200 = ssub.s32 %s46, %s65
      %p201 = scmp.eq.s32.totalorder %s200, 0
      %s203 = sadd.s32 %s202, 1
      %s204 = scalar_select %p201, %s202, %s203
      %p207 = pneg %p201
      %p208 = scmp.eq.s32.totalorder %s39, 7
      %p209 = por %p207, %p208
      %p210 = scmp.ne.s32.totalorder %s202, %s205
      %p211 = scmp.eq.s32.totalorder %s39, 0
      %p212 = por %p210, %p211
      %p213 = scmp.ne.s32.totalorder %s202, %s205
      %p214 = scmp.eq.s32.totalorder %s44, 7
      %p215 = por %p213, %p214
      %p216 = scmp.ne.s32.totalorder %s205, %s206
      %p217 = scmp.eq.s32.totalorder %s44, 0
      %p218 = por %p216, %p217
      %p219 = scmp.ne.s32.totalorder %s205, %s206
      %p220 = scmp.eq.s32.totalorder %s45, 7
      %p221 = por %p219, %p220
      %p223 = scmp.ne.s32.totalorder %s206, %s222
      %p224 = scmp.eq.s32.totalorder %s45, 0
      %p225 = por %p223, %p224
      %s227 = sadd.s32 %s226, 1
      %p230 = scmp.eq.s32.totalorder %s39, 7
      %p231 = scmp.ne.s32.totalorder %s226, %s228
      %p232 = scmp.eq.s32.totalorder %s39, 0
      %p233 = por %p231, %p232
      %p234 = scmp.ne.s32.totalorder %s226, %s228
      %p235 = scmp.eq.s32.totalorder %s44, 7
      %p236 = por %p234, %p235
      %p237 = scmp.ne.s32.totalorder %s228, %s229
      %p238 = scmp.eq.s32.totalorder %s44, 0
      %p239 = por %p237, %p238
      %p240 = scmp.ne.s32.totalorder %s228, %s229
      %p241 = scmp.eq.s32.totalorder %s45, 7
      %p242 = por %p240, %p241
      %p244 = scmp.ne.s32.totalorder %s229, %s243
      %p245 = scmp.eq.s32.totalorder %s45, 0
      %p246 = por %p244, %p245
      %s248 = sadd.s32 %s247, 1
      %p251 = scmp.eq.s32.totalorder %s39, 7
      %p252 = scmp.ne.s32.totalorder %s247, %s249
      %p253 = scmp.eq.s32.totalorder %s39, 0
      %p254 = por %p252, %p253
      %p255 = scmp.ne.s32.totalorder %s247, %s249
      %p256 = scmp.eq.s32.totalorder %s44, 7
      %p257 = por %p255, %p256
      %p258 = scmp.ne.s32.totalorder %s249, %s250
      %p259 = scmp.eq.s32.totalorder %s44, 0
      %p260 = por %p258, %p259
      %p261 = scmp.ne.s32.totalorder %s249, %s250
      %p262 = scmp.eq.s32.totalorder %s45, 7
      %p263 = por %p261, %p262
      %p265 = scmp.ne.s32.totalorder %s250, %s264
      %p266 = scmp.eq.s32.totalorder %s45, 0
      %p267 = por %p265, %p266
      %s269 = sadd.s32 %s268, 1
      %p272 = scmp.eq.s32.totalorder %s39, 7
      %p273 = scmp.ne.s32.totalorder %s268, %s270
      %p274 = scmp.eq.s32.totalorder %s39, 0
      %p275 = por %p273, %p274
      %p276 = scmp.ne.s32.totalorder %s268, %s270
      %p277 = scmp.eq.s32.totalorder %s44, 7
      %p278 = por %p276, %p277
      %p279 = scmp.ne.s32.totalorder %s270, %s271
      %p280 = scmp.eq.s32.totalorder %s44, 0
      %p281 = por %p279, %p280
      %p282 = scmp.ne.s32.totalorder %s270, %s271
      %p283 = scmp.eq.s32.totalorder %s45, 7
      %p284 = por %p282, %p283
      %p286 = scmp.ne.s32.totalorder %s271, %s285
      %p287 = scmp.eq.s32.totalorder %s45, 0
      %p288 = por %p286, %p287
      %s290 = sadd.s32 %s289, 1
      %p293 = scmp.eq.s32.totalorder %s39, 7
      %p294 = scmp.ne.s32.totalorder %s289, %s291
      %p295 = scmp.eq.s32.totalorder %s39, 0
      %p296 = por %p294, %p295
      %p297 = scmp.ne.s32.totalorder %s289, %s291
      %p298 = scmp.eq.s32.totalorder %s44, 7
      %p299 = por %p297, %p298
      %p300 = scmp.ne.s32.totalorder %s291, %s292
      %p301 = scmp.eq.s32.totalorder %s44, 0
      %p302 = por %p300, %p301
      %p303 = scmp.ne.s32.totalorder %s291, %s292
      %p304 = scmp.eq.s32.totalorder %s45, 7
      %p305 = por %p303, %p304
      %p307 = scmp.ne.s32.totalorder %s292, %s306
      %p308 = scmp.eq.s32.totalorder %s45, 0
      %p309 = por %p307, %p308
      %s311 = sadd.s32 %s310, 1
      %p314 = scmp.eq.s32.totalorder %s39, 7
      %p315 = scmp.ne.s32.totalorder %s310, %s312
      %p316 = scmp.eq.s32.totalorder %s39, 0
      %p317 = por %p315, %p316
      %p318 = scmp.ne.s32.totalorder %s310, %s312
      %p319 = scmp.eq.s32.totalorder %s44, 7
      %p320 = por %p318, %p319
      %p321 = scmp.ne.s32.totalorder %s312, %s313
      %p322 = scmp.eq.s32.totalorder %s44, 0
      %p323 = por %p321, %p322
      %p324 = scmp.ne.s32.totalorder %s312, %s313
      %p325 = scmp.eq.s32.totalorder %s45, 7
      %p326 = por %p324, %p325
      %p328 = scmp.ne.s32.totalorder %s313, %s327
      %p329 = scmp.eq.s32.totalorder %s45, 0
      %p330 = por %p328, %p329
      %s332 = sadd.s32 %s331, 1
      %p335 = scmp.eq.s32.totalorder %s39, 7
      %p336 = scmp.ne.s32.totalorder %s331, %s333
      %p337 = scmp.eq.s32.totalorder %s39, 0
      %p338 = por %p336, %p337
      %p339 = scmp.ne.s32.totalorder %s331, %s333
      %p340 = scmp.eq.s32.totalorder %s44, 7
      %p341 = por %p339, %p340
      %p342 = scmp.ne.s32.totalorder %s333, %s334
      %p343 = scmp.eq.s32.totalorder %s44, 0
      %p344 = por %p342, %p343
      %p345 = scmp.ne.s32.totalorder %s333, %s334
      %p346 = scmp.eq.s32.totalorder %s45, 7
      %p347 = por %p345, %p346
      %p349 = scmp.ne.s32.totalorder %s334, %s348
      %p350 = scmp.eq.s32.totalorder %s45, 0
      %p351 = por %p349, %p350
      %s353 = sadd.s32 %s352, 1
      %p356 = scmp.eq.s32.totalorder %s39, 7
      %p357 = scmp.ne.s32.totalorder %s352, %s354
      %p358 = scmp.eq.s32.totalorder %s39, 0
      %p359 = por %p357, %p358
      %p360 = scmp.ne.s32.totalorder %s352, %s354
      %p361 = scmp.eq.s32.totalorder %s44, 7
      %p362 = por %p360, %p361
      %p363 = scmp.ne.s32.totalorder %s354, %s355
      %p364 = scmp.eq.s32.totalorder %s44, 0
      %p365 = por %p363, %p364
      %p366 = scmp.ne.s32.totalorder %s354, %s355
      %p367 = scmp.eq.s32.totalorder %s45, 7
      %p368 = por %p366, %p367
      %p370 = scmp.ne.s32.totalorder %s355, %s369
      %p371 = scmp.eq.s32.totalorder %s45, 0
      %p372 = por %p370, %p371
      %s374 = sadd.s32 %s373, 1
      %p377 = scmp.eq.s32.totalorder %s39, 7
      %p378 = scmp.ne.s32.totalorder %s373, %s375
      %p379 = scmp.eq.s32.totalorder %s39, 0
      %p380 = por %p378, %p379
      %p381 = scmp.ne.s32.totalorder %s373, %s375
      %p382 = scmp.eq.s32.totalorder %s44, 7
      %p383 = por %p381, %p382
      %p384 = scmp.ne.s32.totalorder %s375, %s376
      %p385 = scmp.eq.s32.totalorder %s44, 0
      %p386 = por %p384, %p385
      %p387 = scmp.ne.s32.totalorder %s375, %s376
      %p388 = scmp.eq.s32.totalorder %s45, 7
      %p389 = por %p387, %p388
      %p391 = scmp.ne.s32.totalorder %s376, %s390
      %p392 = scmp.eq.s32.totalorder %s45, 0
      %p393 = por %p391, %p392
      %s394 = ssub.s32 %s46, %s65
      %s395 = ssub.s32 %s47, %s61
      %s396 = sor.u32 %s394, %s395
      %p397 = scmp.eq.s32.totalorder %s396, 0
      %s399 = sadd.s32 %s398, 1
      %s400 = scalar_select %p397, %s398, %s399
      %p403 = pneg %p397
      %p404 = scmp.eq.s32.totalorder %s39, 7
      %p405 = por %p403, %p404
      %p406 = scmp.ne.s32.totalorder %s398, %s401
      %p407 = scmp.eq.s32.totalorder %s39, 0
      %p408 = por %p406, %p407
      %p409 = scmp.ne.s32.totalorder %s398, %s401
      %p410 = scmp.eq.s32.totalorder %s44, 7
      %p411 = por %p409, %p410
      %p412 = scmp.ne.s32.totalorder %s401, %s402
      %p413 = scmp.eq.s32.totalorder %s44, 0
      %p414 = por %p412, %p413
      %p415 = scmp.ne.s32.totalorder %s401, %s402
      %p416 = scmp.eq.s32.totalorder %s45, 7
      %p417 = por %p415, %p416
      %p419 = scmp.ne.s32.totalorder %s402, %s418
      %p420 = scmp.eq.s32.totalorder %s45, 0
      %p421 = por %p419, %p420
      %p422 = scmp.le.s32.totalorder 1, %s39
      %p423 = scmp.lt.s32.totalorder %s39, 9
      %p424 = pnand %p422, %p423
      %p425 = pneg %p424
      // Predicated region
      $region9: #{transform_mlmodel_forward.6} parent=5 // pred_check
        _
      $region10: #{transform_mlmodel_forward.6} parent=5 // pred_check_branch
        %427 = sbr.rel (%p424) target = $region12
      $region11: #{transform_mlmodel_forward.6} parent=5 // pred_region
        %s428 = ssub.s32 %s39, 1
        // Predicated region
        $region13: #{transform_mlmodel_forward.6} parent=11 // pred_check
          %p429 = pneg %p239
        $region14: #{transform_mlmodel_forward.6} parent=11 // pred_check_branch
          %431 = sbr.rel (%p429) target = $region16
        $region15: #{transform_mlmodel_forward.6} parent=11 // pred_region
          %s433 = ssub.s32 256, 256
          %434 = vsyncadd [#allocation18], %s433
          %s435 = sshll.u32 [#allocation19], 4
          %s436 = int_to_ptr.vmem [resolvable:$true] %s435
          %441 = dma.hbm_to_vmem [thread:$0]  %s6, 256, %s436, [#allocation18], 64, 64, 4
        $region16: #{transform_mlmodel_forward.6} parent=11 // pred_fallthru
          _
        // Predicated region
        $region17: #{transform_mlmodel_forward.6} parent=11 // pred_check
          %p442 = pneg %p260
        $region18: #{transform_mlmodel_forward.6} parent=11 // pred_check_branch
          %444 = sbr.rel (%p442) target = $region20
        $region19: #{transform_mlmodel_forward.6} parent=11 // pred_region
          %s446 = ssub.s32 512, 512
          %447 = vsyncadd [#allocation21], %s446
          %s448 = sshll.u32 [#allocation20], 4
          %s449 = int_to_ptr.vmem [resolvable:$true] %s448
          %454 = dma.hbm_to_vmem [thread:$0]  %s7, 512, %s449, [#allocation21], 128, 128, 8
        $region20: #{transform_mlmodel_forward.6} parent=11 // pred_fallthru
          _
        // Predicated region
        $region21: #{transform_mlmodel_forward.6} parent=11 // pred_check
          %p455 = pneg %p281
        $region22: #{transform_mlmodel_forward.6} parent=11 // pred_check_branch
          %457 = sbr.rel (%p455) target = $region24
        $region23: #{transform_mlmodel_forward.6} parent=11 // pred_region
          %s459 = ssub.s32 256, 256
          %460 = vsyncadd [#allocation21], %s459
          %s461 = sshll.u32 [#allocation22], 4
          %s462 = int_to_ptr.vmem [resolvable:$true] %s461
          %467 = dma.hbm_to_vmem [thread:$0]  %s8, 256, %s462, [#allocation21], 64, 64, 4
        $region24: #{transform_mlmodel_forward.6} parent=11 // pred_fallthru
          _
        // Predicated region
        $region25: #{transform_mlmodel_forward.6} parent=11 // pred_check
          %p468 = pneg %p302
        $region26: #{transform_mlmodel_forward.6} parent=11 // pred_check_branch
          %470 = sbr.rel (%p468) target = $region28
        $region27: #{transform_mlmodel_forward.6} parent=11 // pred_region
          %s472 = ssub.s32 512, 512
          %473 = vsyncadd [#allocation24], %s472
          %s474 = sshll.u32 [#allocation23], 4
          %s475 = int_to_ptr.vmem [resolvable:$true] %s474
          %480 = dma.hbm_to_vmem [thread:$0]  %s9, 512, %s475, [#allocation24], 128, 128, 8
        $region28: #{transform_mlmodel_forward.6} parent=11 // pred_fallthru
          _
        // Predicated region
        $region29: #{transform_mlmodel_forward.6} parent=11 // pred_check
          %p481 = pneg %p323
        $region30: #{transform_mlmodel_forward.6} parent=11 // pred_check_branch
          %483 = sbr.rel (%p481) target = $region32
        $region31: #{transform_mlmodel_forward.6} parent=11 // pred_region
          %s485 = ssub.s32 256, 256
          %486 = vsyncadd [#allocation24], %s485
          %s487 = sshll.u32 [#allocation25], 4
          %s488 = int_to_ptr.vmem [resolvable:$true] %s487
          %493 = dma.hbm_to_vmem [thread:$0]  %s10, 256, %s488, [#allocation24], 64, 64, 4
        $region32: #{transform_mlmodel_forward.6} parent=11 // pred_fallthru
          _
        // Predicated region
        $region33: #{transform_mlmodel_forward.6} parent=11 // pred_check
          %p494 = pneg %p344
        $region34: #{transform_mlmodel_forward.6} parent=11 // pred_check_branch
          %496 = sbr.rel (%p494) target = $region36
        $region35: #{transform_mlmodel_forward.6} parent=11 // pred_region
          %s498 = ssub.s32 512, 512
          %499 = vsyncadd [#allocation27], %s498
          %s500 = sshll.u32 [#allocation26], 4
          %s501 = int_to_ptr.vmem [resolvable:$true] %s500
          %506 = dma.hbm_to_vmem [thread:$0]  %s11, 512, %s501, [#allocation27], 128, 128, 8
        $region36: #{transform_mlmodel_forward.6} parent=11 // pred_fallthru
          _
        // Predicated region
        $region37: #{transform_mlmodel_forward.6} parent=11 // pred_check
          %p507 = pneg %p365
        $region38: #{transform_mlmodel_forward.6} parent=11 // pred_check_branch
          %509 = sbr.rel (%p507) target = $region40
        $region39: #{transform_mlmodel_forward.6} parent=11 // pred_region
          %s511 = ssub.s32 256, 256
          %512 = vsyncadd [#allocation27], %s511
          %s513 = sshll.u32 [#allocation28], 4
          %s514 = int_to_ptr.vmem [resolvable:$true] %s513
          %519 = dma.hbm_to_vmem [thread:$0]  %s12, 256, %s514, [#allocation27], 64, 64, 4
        $region40: #{transform_mlmodel_forward.6} parent=11 // pred_fallthru
          _
        // Predicated region
        $region41: #{transform_mlmodel_forward.6} parent=11 // pred_check
          %p520 = pneg %p386
        $region42: #{transform_mlmodel_forward.6} parent=11 // pred_check_branch
          %522 = sbr.rel (%p520) target = $region44
        $region43: #{transform_mlmodel_forward.6} parent=11 // pred_region
          %s524 = ssub.s32 512, 512
          %525 = vsyncadd [#allocation30], %s524
          %s526 = sshll.u32 [#allocation29], 4
          %s527 = int_to_ptr.vmem [resolvable:$true] %s526
          %532 = dma.hbm_to_vmem [thread:$0]  %s13, 512, %s527, [#allocation30], 128, 128, 8
        $region44: #{transform_mlmodel_forward.6} parent=11 // pred_fallthru
          _
      $region12: #{transform_mlmodel_forward.6} parent=5 // pred_fallthru
        _
      %p533 = scmp.lt.s32.totalorder %s39, 8
      // Predicated region
      $region45: #{transform_mlmodel_forward.6} parent=5 // pred_check
        %p534 = pneg %p533
      $region46: #{transform_mlmodel_forward.6} parent=5 // pred_check_branch
        %536 = sbr.rel (%p534) target = $region48
      $region47: #{transform_mlmodel_forward.6} parent=5 // pred_region
        // Predicated region
        $region49: #{transform_mlmodel_forward.6} parent=47 // pred_check
          %p537 = pneg %p80
        $region50: #{transform_mlmodel_forward.6} parent=47 // pred_check_branch
          %539 = sbr.rel (%p537) target = $region52
        $region51: #{transform_mlmodel_forward.6} parent=47 // pred_region
          %s540 = sand.u32 %s70, 1
          %s541 = scalar_lea.sflag [#allocation9], %s540
          %s542 = sand.u32 %s70, 1
          %s543 = smul.addr %s542, 16
          %s544 = scalar_lea.vmem [#allocation8], %s543
          %s546 = ssub.s32 256, 256
          %547 = vsyncadd %s541, %s546
          %s548 = smul.addr %s46, 8
          %s549 = sadd.s32 %s47, %s548
          %s550 = smul.addr %s549, 64
          %s551 = scalar_lea.hbm %s0, %s550
          %s552 = sshll.u32 %s544, 4
          %s553 = int_to_ptr.vmem [resolvable:$true] %s552
          %558 = dma.hbm_to_vmem [thread:$0]  %s551, 256, %s553, %s541, 128, 64, 4
        $region52: #{transform_mlmodel_forward.6} parent=47 // pred_fallthru
          _
        // Predicated region
        $region53: #{transform_mlmodel_forward.6} parent=47 // pred_check
          %p559 = pneg %p106
        $region54: #{transform_mlmodel_forward.6} parent=47 // pred_check_branch
          %561 = sbr.rel (%p559) target = $region56
        $region55: #{transform_mlmodel_forward.6} parent=47 // pred_region
          %s562 = sand.u32 %s39, 1
          %s563 = scalar_lea.sflag [#allocation12], %s562
          %s564 = sand.u32 %s96, 1
          %s565 = smul.addr %s564, 32
          %s566 = scalar_lea.vmem [#allocation11], %s565
          %s568 = ssub.s32 512, 512
          %569 = vsyncadd %s563, %s568
          %s570 = smul.addr %s46, 4
          %s571 = smul.addr %s570, 128
          %s572 = scalar_lea.hbm %s1, %s571
          %s573 = sshll.u32 %s566, 4
          %s574 = int_to_ptr.vmem [resolvable:$true] %s573
          %579 = dma.hbm_to_vmem [thread:$0]  %s572, 512, %s574, %s563, 128, 128, 8
        $region56: #{transform_mlmodel_forward.6} parent=47 // pred_fallthru
          _
        // Predicated region
        $region57: #{transform_mlmodel_forward.6} parent=47 // pred_check
          %p580 = pneg %p132
        $region58: #{transform_mlmodel_forward.6} parent=47 // pred_check_branch
          %582 = sbr.rel (%p580) target = $region60
        $region59: #{transform_mlmodel_forward.6} parent=47 // pred_region
          %s583 = sand.u32 %s39, 1
          %s584 = scalar_lea.sflag [#allocation12], %s583
          %s585 = sand.u32 %s122, 1
          %s586 = smul.addr %s585, 32
          %s587 = scalar_lea.vmem [#allocation13], %s586
          %s589 = ssub.s32 512, 512
          %590 = vsyncadd %s584, %s589
          %s591 = smul.addr %s46, 4
          %s592 = smul.addr %s591, 128
          %s593 = scalar_lea.hbm %s2, %s592
          %s594 = sshll.u32 %s587, 4
          %s595 = int_to_ptr.vmem [resolvable:$true] %s594
          %600 = dma.hbm_to_vmem [thread:$0]  %s593, 512, %s595, %s584, 128, 128, 8
        $region60: #{transform_mlmodel_forward.6} parent=47 // pred_fallthru
          _
        // Predicated region
        $region61: #{transform_mlmodel_forward.6} parent=47 // pred_check
          %p601 = pneg %p160
        $region62: #{transform_mlmodel_forward.6} parent=47 // pred_check_branch
          %603 = sbr.rel (%p601) target = $region64
        $region63: #{transform_mlmodel_forward.6} parent=47 // pred_region
          %s604 = sand.u32 %s39, 1
          %s605 = scalar_lea.sflag [#allocation15], %s604
          %s606 = sand.u32 %s150, 1
          %s607 = smul.addr %s606, 16
          %s608 = scalar_lea.vmem [#allocation14], %s607
          %s610 = ssub.s32 256, 256
          %611 = vsyncadd %s605, %s610
          %s612 = smul.addr %s46, 8
          %s613 = sadd.s32 %s48, %s612
          %s614 = smul.addr %s613, 64
          %s615 = scalar_lea.hbm %s3, %s614
          %s616 = sshll.u32 %s608, 4
          %s617 = int_to_ptr.vmem [resolvable:$true] %s616
          %622 = dma.hbm_to_vmem [thread:$0]  %s615, 256, %s617, %s605, 128, 64, 4
        $region64: #{transform_mlmodel_forward.6} parent=47 // pred_fallthru
          _
        // Predicated region
        $region65: #{transform_mlmodel_forward.6} parent=47 // pred_check
          %p623 = pneg %p186
        $region66: #{transform_mlmodel_forward.6} parent=47 // pred_check_branch
          %625 = sbr.rel (%p623) target = $region68
        $region67: #{transform_mlmodel_forward.6} parent=47 // pred_region
          %s626 = sand.u32 %s39, 1
          %s627 = scalar_lea.sflag [#allocation15], %s626
          %s628 = sand.u32 %s176, 1
          %s629 = smul.addr %s628, 32
          %s630 = scalar_lea.vmem [#allocation16], %s629
          %s632 = ssub.s32 512, 512
          %633 = vsyncadd %s627, %s632
          %s634 = smul.addr %s46, 4
          %s635 = smul.addr %s634, 128
          %s636 = scalar_lea.hbm %s4, %s635
          %s637 = sshll.u32 %s630, 4
          %s638 = int_to_ptr.vmem [resolvable:$true] %s637
          %643 = dma.hbm_to_vmem [thread:$0]  %s636, 512, %s638, %s627, 128, 128, 8
        $region68: #{transform_mlmodel_forward.6} parent=47 // pred_fallthru
          _
        // Predicated region
        $region69: #{transform_mlmodel_forward.6} parent=47 // pred_check
          %p644 = pneg %p212
        $region70: #{transform_mlmodel_forward.6} parent=47 // pred_check_branch
          %646 = sbr.rel (%p644) target = $region72
        $region71: #{transform_mlmodel_forward.6} parent=47 // pred_region
          %s647 = sand.u32 %s39, 1
          %s648 = scalar_lea.sflag [#allocation18], %s647
          %s649 = sand.u32 %s202, 1
          %s650 = smul.addr %s649, 32
          %s651 = scalar_lea.vmem [#allocation17], %s650
          %s653 = ssub.s32 512, 512
          %654 = vsyncadd %s648, %s653
          %s655 = smul.addr %s46, 4
          %s656 = smul.addr %s655, 128
          %s657 = scalar_lea.hbm %s5, %s656
          %s658 = sshll.u32 %s651, 4
          %s659 = int_to_ptr.vmem [resolvable:$true] %s658
          %664 = dma.hbm_to_vmem [thread:$0]  %s657, 512, %s659, %s648, 128, 128, 8
        $region72: #{transform_mlmodel_forward.6} parent=47 // pred_fallthru
          _
      $region48: #{transform_mlmodel_forward.6} parent=5 // pred_fallthru
        _
      %p665 = scmp.le.s32.totalorder 1, %s39
      %p666 = scmp.lt.s32.totalorder %s39, 9
      %p667 = pnand %p665, %p666
      %p668 = pneg %p667
      // Predicated region
      $region73: #{transform_mlmodel_forward.6} parent=5 // pred_check
        _
      $region74: #{transform_mlmodel_forward.6} parent=5 // pred_check_branch
        %670 = sbr.rel (%p667) target = $region76
      $region75: #{transform_mlmodel_forward.6} parent=5 // pred_region
        %s671 = ssub.s32 %s39, 1
        %s672 = sand.u32 %s73, 1
        %s673 = scalar_lea.sflag [#allocation9], %s672
        %s674 = sand.u32 %s73, 1
        %s675 = smul.addr %s674, 16
        %s676 = scalar_lea.vmem [#allocation8], %s675
        // Predicated region
        $region77: #{transform_mlmodel_forward.6} parent=75 // pred_check
          %p677 = pneg %p86
        $region78: #{transform_mlmodel_forward.6} parent=75 // pred_check_branch
          %679 = sbr.rel (%p677) target = $region80
        $region79: #{transform_mlmodel_forward.6} parent=75 // pred_region
          %680 = dma.done %s673, 256
        $region80: #{transform_mlmodel_forward.6} parent=75 // pred_fallthru
          _
        %s681 = sand.u32 %s44, 1
        %s682 = scalar_lea.sflag [#allocation12], %s681
        %s683 = sand.u32 %s99, 1
        %s684 = smul.addr %s683, 32
        %s685 = scalar_lea.vmem [#allocation11], %s684
        // Predicated region
        $region81: #{transform_mlmodel_forward.6} parent=75 // pred_check
          %p686 = pneg %p112
        $region82: #{transform_mlmodel_forward.6} parent=75 // pred_check_branch
          %688 = sbr.rel (%p686) target = $region84
        $region83: #{transform_mlmodel_forward.6} parent=75 // pred_region
          %689 = dma.done %s682, 512
        $region84: #{transform_mlmodel_forward.6} parent=75 // pred_fallthru
          _
        %s690 = sand.u32 %s44, 1
        %s691 = scalar_lea.sflag [#allocation12], %s690
        %s692 = sand.u32 %s125, 1
        %s693 = smul.addr %s692, 32
        %s694 = scalar_lea.vmem [#allocation13], %s693
        // Predicated region
        $region85: #{transform_mlmodel_forward.6} parent=75 // pred_check
          %p695 = pneg %p138
        $region86: #{transform_mlmodel_forward.6} parent=75 // pred_check_branch
          %697 = sbr.rel (%p695) target = $region88
        $region87: #{transform_mlmodel_forward.6} parent=75 // pred_region
          %698 = dma.done %s691, 512
        $region88: #{transform_mlmodel_forward.6} parent=75 // pred_fallthru
          _
        %s699 = sand.u32 %s44, 1
        %s700 = scalar_lea.sflag [#allocation15], %s699
        %s701 = sand.u32 %s153, 1
        %s702 = smul.addr %s701, 16
        %s703 = scalar_lea.vmem [#allocation14], %s702
        // Predicated region
        $region89: #{transform_mlmodel_forward.6} parent=75 // pred_check
          %p704 = pneg %p166
        $region90: #{transform_mlmodel_forward.6} parent=75 // pred_check_branch
          %706 = sbr.rel (%p704) target = $region92
        $region91: #{transform_mlmodel_forward.6} parent=75 // pred_region
          %707 = dma.done %s700, 256
        $region92: #{transform_mlmodel_forward.6} parent=75 // pred_fallthru
          _
        %s708 = sand.u32 %s44, 1
        %s709 = scalar_lea.sflag [#allocation15], %s708
        %s710 = sand.u32 %s179, 1
        %s711 = smul.addr %s710, 32
        %s712 = scalar_lea.vmem [#allocation16], %s711
        // Predicated region
        $region93: #{transform_mlmodel_forward.6} parent=75 // pred_check
          %p713 = pneg %p192
        $region94: #{transform_mlmodel_forward.6} parent=75 // pred_check_branch
          %715 = sbr.rel (%p713) target = $region96
        $region95: #{transform_mlmodel_forward.6} parent=75 // pred_region
          %716 = dma.done %s709, 512
        $region96: #{transform_mlmodel_forward.6} parent=75 // pred_fallthru
          _
        %s717 = sand.u32 %s44, 1
        %s718 = scalar_lea.sflag [#allocation18], %s717
        %s719 = sand.u32 %s205, 1
        %s720 = smul.addr %s719, 32
        %s721 = scalar_lea.vmem [#allocation17], %s720
        // Predicated region
        $region97: #{transform_mlmodel_forward.6} parent=75 // pred_check
          %p722 = pneg %p218
        $region98: #{transform_mlmodel_forward.6} parent=75 // pred_check_branch
          %724 = sbr.rel (%p722) target = $region100
        $region99: #{transform_mlmodel_forward.6} parent=75 // pred_region
          %725 = dma.done %s718, 512
        $region100: #{transform_mlmodel_forward.6} parent=75 // pred_fallthru
          _
        // Predicated region
        $region101: #{transform_mlmodel_forward.6} parent=75 // pred_check
          %p726 = pneg %p239
        $region102: #{transform_mlmodel_forward.6} parent=75 // pred_check_branch
          %728 = sbr.rel (%p726) target = $region104
        $region103: #{transform_mlmodel_forward.6} parent=75 // pred_region
          %729 = dma.done [#allocation18], 256
        $region104: #{transform_mlmodel_forward.6} parent=75 // pred_fallthru
          _
        // Predicated region
        $region105: #{transform_mlmodel_forward.6} parent=75 // pred_check
          %p730 = pneg %p260
        $region106: #{transform_mlmodel_forward.6} parent=75 // pred_check_branch
          %732 = sbr.rel (%p730) target = $region108
        $region107: #{transform_mlmodel_forward.6} parent=75 // pred_region
          %733 = dma.done [#allocation21], 512
        $region108: #{transform_mlmodel_forward.6} parent=75 // pred_fallthru
          _
        // Predicated region
        $region109: #{transform_mlmodel_forward.6} parent=75 // pred_check
          %p734 = pneg %p281
        $region110: #{transform_mlmodel_forward.6} parent=75 // pred_check_branch
          %736 = sbr.rel (%p734) target = $region112
        $region111: #{transform_mlmodel_forward.6} parent=75 // pred_region
          %737 = dma.done [#allocation21], 256
        $region112: #{transform_mlmodel_forward.6} parent=75 // pred_fallthru
          _
        // Predicated region
        $region113: #{transform_mlmodel_forward.6} parent=75 // pred_check
          %p738 = pneg %p302
        $region114: #{transform_mlmodel_forward.6} parent=75 // pred_check_branch
          %740 = sbr.rel (%p738) target = $region116
        $region115: #{transform_mlmodel_forward.6} parent=75 // pred_region
          %741 = dma.done [#allocation24], 512
        $region116: #{transform_mlmodel_forward.6} parent=75 // pred_fallthru
          _
        // Predicated region
        $region117: #{transform_mlmodel_forward.6} parent=75 // pred_check
          %p742 = pneg %p323
        $region118: #{transform_mlmodel_forward.6} parent=75 // pred_check_branch
          %744 = sbr.rel (%p742) target = $region120
        $region119: #{transform_mlmodel_forward.6} parent=75 // pred_region
          %745 = dma.done [#allocation24], 256
        $region120: #{transform_mlmodel_forward.6} parent=75 // pred_fallthru
          _
        // Predicated region
        $region121: #{transform_mlmodel_forward.6} parent=75 // pred_check
          %p746 = pneg %p344
        $region122: #{transform_mlmodel_forward.6} parent=75 // pred_check_branch
          %748 = sbr.rel (%p746) target = $region124
        $region123: #{transform_mlmodel_forward.6} parent=75 // pred_region
          %749 = dma.done [#allocation27], 512
        $region124: #{transform_mlmodel_forward.6} parent=75 // pred_fallthru
          _
        // Predicated region
        $region125: #{transform_mlmodel_forward.6} parent=75 // pred_check
          %p750 = pneg %p365
        $region126: #{transform_mlmodel_forward.6} parent=75 // pred_check_branch
          %752 = sbr.rel (%p750) target = $region128
        $region127: #{transform_mlmodel_forward.6} parent=75 // pred_region
          %753 = dma.done [#allocation27], 256
        $region128: #{transform_mlmodel_forward.6} parent=75 // pred_fallthru
          _
        // Predicated region
        $region129: #{transform_mlmodel_forward.6} parent=75 // pred_check
          %p754 = pneg %p386
        $region130: #{transform_mlmodel_forward.6} parent=75 // pred_check_branch
          %756 = sbr.rel (%p754) target = $region132
        $region131: #{transform_mlmodel_forward.6} parent=75 // pred_region
          %757 = dma.done [#allocation30], 512
        $region132: #{transform_mlmodel_forward.6} parent=75 // pred_fallthru
          _
        %s758 = sand.u32 %s73, 1
        %s759 = scalar_lea.sflag [#allocation9], %s758
        %s760 = sand.u32 %s73, 1
        %s761 = smul.addr %s760, 16
        %s762 = scalar_lea.vmem [#allocation8], %s761
        %p763 = pneg %p86
        %p764 = pneg %p83
        %s765 = sand.u32 %s44, 1
        %s766 = scalar_lea.sflag [#allocation12], %s765
        %s767 = sand.u32 %s99, 1
        %s768 = smul.addr %s767, 32
        %s769 = scalar_lea.vmem [#allocation11], %s768
        %p770 = pneg %p112
        %p771 = pneg %p109
        %s772 = sand.u32 %s44, 1
        %s773 = scalar_lea.sflag [#allocation12], %s772
        %s774 = sand.u32 %s125, 1
        %s775 = smul.addr %s774, 32
        %s776 = scalar_lea.vmem [#allocation13], %s775
        %p777 = pneg %p138
        %p778 = pneg %p135
        %s779 = sand.u32 %s44, 1
        %s780 = scalar_lea.sflag [#allocation15], %s779
        %s781 = sand.u32 %s153, 1
        %s782 = smul.addr %s781, 16
        %s783 = scalar_lea.vmem [#allocation14], %s782
        %p784 = pneg %p166
        %p785 = pneg %p163
        %s786 = sand.u32 %s44, 1
        %s787 = scalar_lea.sflag [#allocation15], %s786
        %s788 = sand.u32 %s179, 1
        %s789 = smul.addr %s788, 32
        %s790 = scalar_lea.vmem [#allocation16], %s789
        %p791 = pneg %p192
        %p792 = pneg %p189
        %s793 = sand.u32 %s44, 1
        %s794 = scalar_lea.sflag [#allocation18], %s793
        %s795 = sand.u32 %s205, 1
        %s796 = smul.addr %s795, 32
        %s797 = scalar_lea.vmem [#allocation17], %s796
        %p798 = pneg %p218
        %p799 = pneg %p215
        %p800 = pneg %p239
        %p801 = pneg %p236
        %p802 = pneg %p260
        %p803 = pneg %p257
        %p804 = pneg %p281
        %p805 = pneg %p278
        %p806 = pneg %p302
        %p807 = pneg %p299
        %p808 = pneg %p323
        %p809 = pneg %p320
        %p810 = pneg %p344
        %p811 = pneg %p341
        %p812 = pneg %p365
        %p813 = pneg %p362
        %p814 = pneg %p386
        %p815 = pneg %p383
        %p816 = pneg %p414
        %p817 = pneg %p411
        %s818 = sand.u32 %s401, 1
        %s819 = scalar_lea.sflag [#allocation10], %s818
        %s820 = sand.u32 %s401, 1
        %s821 = smul.addr %s820, 16
        %s822 = scalar_lea.vmem [#allocation31], %s821
        %p824 = scmp.eq.s32.totalorder %s50, 0
        // Predicated region
        $region133: #{transform_mlmodel_forward.6} parent=75 // pred_check
          %p825 = pneg %p824
        $region134: #{transform_mlmodel_forward.6} parent=75 // pred_check_branch
          %827 = sbr.rel (%p825) target = $region136
        $region135: #{transform_mlmodel_forward.6} parent=75 // pred_region
          %v828 = vld [vmem:[%s703] sm:$0xf]
          %v829 = vld [vmem:[%s703 + $0x4] sm:$0xf]
          %v830 = vld [vmem:[%s703 + $0x8] sm:$0xf]
          %v831 = vld [vmem:[%s703 + $0xc] sm:$0xf]
          %v832 = vunpack.c.l.bf16 %v828
          %v833 = vunpack.c.l.bf16 %v829
          %v834 = vunpack.c.l.bf16 %v830
          %v835 = vunpack.c.l.bf16 %v831
          %v836 = vld [vmem:[%s712] sm:$0xff]
          %v837 = vld [vmem:[%s712 + $0x8] sm:$0xff]
          %v838 = vld [vmem:[%s712 + $0x10] sm:$0xff]
          %v839 = vld [vmem:[%s712 + $0x18] sm:$0xff]
          %841 = vset.pattern.permute.xlu0 0
          %842 = vperm.xlu0 %841, %v836
          %v843 = vpop.permute.xlu0 %842
          %846 = vset.pattern.permute.xlu0 0
          %847 = vperm.xlu0 %846, %v837
          %v848 = vpop.permute.xlu0 %847
          %851 = vset.pattern.permute.xlu0 0
          %852 = vperm.xlu0 %851, %v838
          %v853 = vpop.permute.xlu0 %852
          %856 = vset.pattern.permute.xlu0 0
          %857 = vperm.xlu0 %856, %v839
          %v858 = vpop.permute.xlu0 %857
          %v860 = vsub.f32 %v832, %v843
          %v861 = vsub.f32 %v833, %v848
          %v862 = vsub.f32 %v834, %v853
          %v863 = vsub.f32 %v835, %v858
          %v864 = vld [vmem:[%s721] sm:$0xff]
          %v865 = vld [vmem:[%s721 + $0x8] sm:$0xff]
          %v866 = vld [vmem:[%s721 + $0x10] sm:$0xff]
          %v867 = vld [vmem:[%s721 + $0x18] sm:$0xff]
          %869 = vset.pattern.permute.xlu0 0
          %870 = vperm.xlu0 %869, %v864
          %v871 = vpop.permute.xlu0 %870
          %874 = vset.pattern.permute.xlu0 0
          %875 = vperm.xlu0 %874, %v865
          %v876 = vpop.permute.xlu0 %875
          %879 = vset.pattern.permute.xlu0 0
          %880 = vperm.xlu0 %879, %v866
          %v881 = vpop.permute.xlu0 %880
          %884 = vset.pattern.permute.xlu0 0
          %885 = vperm.xlu0 %884, %v867
          %v886 = vpop.permute.xlu0 %885
          %v888 = vmul.f32 %v860, %v871
          %v889 = vmul.f32 %v861, %v876
          %v890 = vmul.f32 %v862, %v881
          %v891 = vmul.f32 %v863, %v886
          %v892 = vpack.c.bf16 %v889, %v888
          %v893 = vpack.c.bf16 %v891, %v890
          %v894 = vld [vmem:[#allocation22] sm:$0xf]
          %v895 = vld [vmem:[#allocation22 + $0x4] sm:$0xf]
          %v896 = vld [vmem:[#allocation22 + $0x8] sm:$0xf]
          %v897 = vld [vmem:[#allocation22 + $0xc] sm:$0xf]
          %v898 = vld [vmem:[#allocation23] sm:$0xff]
          %v899 = vld [vmem:[#allocation23 + $0x8] sm:$0xff]
          %v900 = vld [vmem:[#allocation23 + $0x10] sm:$0xff]
          %v901 = vld [vmem:[#allocation23 + $0x18] sm:$0xff]
          %903 = vset.pattern.permute.xlu0 0
          %904 = vperm.xlu0 %903, %v898
          %v905 = vpop.permute.xlu0 %904
          %908 = vset.pattern.permute.xlu0 0
          %909 = vperm.xlu0 %908, %v899
          %v910 = vpop.permute.xlu0 %909
          %913 = vset.pattern.permute.xlu0 0
          %914 = vperm.xlu0 %913, %v900
          %v915 = vpop.permute.xlu0 %914
          %918 = vset.pattern.permute.xlu0 0
          %919 = vperm.xlu0 %918, %v901
          %v920 = vpop.permute.xlu0 %919
          %v926 = vunpack.c.l.b16 %v894
          %v927 = vunpack.c.l.b16 %v895
          %v928 = vunpack.c.l.b16 %v896
          %v929 = vunpack.c.l.b16 %v897
          %v930 = vpack.c.b16 %v927, %v926
          %v931 = vpack.c.b16 %v929, %v928
          %vm932 = vcmask 261120
          %v934 = vsel %vm932, %v930, 0
          %v937 = vsel %vm932, %v931, 0
          %939 = vmatprep.subr.bf16.mxu0 0
          %940 = vmatpush1.bf16.msra.mxu0 %v892
          %941 = vmatprep.subr.bf16.mxu0 0
          %942 = vmatpush1.bf16.msra.mxu0 %v893
          %943 = vmatprep.subr.bf16.mxu0 0
          %944 = vmatpush1.bf16.msra.mxu0 0
          %945 = vmatprep.subr.bf16.mxu0 0
          %946 = vmatpush1.bf16.msra.mxu0 0
          %947 = vmatprep.subr.bf16.mxu0 0
          %948 = vmatpush1.bf16.msra.mxu0 0
          %949 = vmatprep.subr.bf16.mxu0 0
          %950 = vmatpush1.bf16.msra.mxu0 0
          %951 = vmatprep.subr.bf16.mxu0 0
          %952 = vmatpush1.bf16.msra.mxu0 0
          %953 = vmatprep.subr.bf16.mxu0 0
          %954 = vmatpush1.bf16.msra.mxu0 0
          %955 = vmatprep.subr.bf16.mxu0 0
          %956 = vmatpush1.bf16.msra.mxu0 0
          %957 = vmatprep.subr.bf16.mxu0 0
          %958 = vmatpush1.bf16.msra.mxu0 0
          %959 = vmatprep.subr.bf16.mxu0 0
          %960 = vmatpush1.bf16.msra.mxu0 0
          %961 = vmatprep.subr.bf16.mxu0 0
          %962 = vmatpush1.bf16.msra.mxu0 0
          %963 = vmatprep.subr.bf16.mxu0 0
          %964 = vmatpush1.bf16.msra.mxu0 0
          %965 = vmatprep.subr.bf16.mxu0 0
          %966 = vmatpush1.bf16.msra.mxu0 0
          %967 = vmatprep.subr.bf16.mxu0 0
          %968 = vmatpush1.bf16.msra.mxu0 0
          %969 = vmatprep.subr.bf16.mxu0 0
          %970 = vmatpush1.bf16.msra.mxu0 0
          %971 = vmatprep.mubr.bf16.mxu0 0
          %972 = vmatmul.mubr.bf16.gmra.mrb[0].mxu0 %v934
          %v973 = vpop.f32.mrb[0].mxu0
          %v974 = vadd.f32 %v905, %v973
          %v975 = vpop.f32.mrb[0].mxu0
          %v976 = vpop.f32.mrb[0].mxu0
          %v977 = vadd.f32 %v910, %v976
          %v978 = vpop.f32.mrb[0].mxu0
          %979 = vmatprep.mubr.bf16.mxu0 0
          %980 = vmatmul.mubr.bf16.gmra.mrb[0].mxu0 %v937
          %v981 = vpop.f32.mrb[0].mxu0
          %v982 = vadd.f32 %v915, %v981
          %v983 = vpop.f32.mrb[0].mxu0
          %v984 = vpop.f32.mrb[0].mxu0
          %v985 = vadd.f32 %v920, %v984
          %v986 = vpop.f32.mrb[0].mxu0
          %987 = vdwg.mxu0
          %v988 = vld [vmem:[#allocation25] sm:$0xf]
          %v989 = vld [vmem:[#allocation25 + $0x4] sm:$0xf]
          %v990 = vld [vmem:[#allocation25 + $0x8] sm:$0xf]
          %v991 = vld [vmem:[#allocation25 + $0xc] sm:$0xf]
          %v992 = vld [vmem:[#allocation26] sm:$0xff]
          %v993 = vld [vmem:[#allocation26 + $0x8] sm:$0xff]
          %v994 = vld [vmem:[#allocation26 + $0x10] sm:$0xff]
          %v995 = vld [vmem:[#allocation26 + $0x18] sm:$0xff]
          %997 = vset.pattern.permute.xlu0 0
          %998 = vperm.xlu0 %997, %v992
          %v999 = vpop.permute.xlu0 %998
          %1002 = vset.pattern.permute.xlu0 0
          %1003 = vperm.xlu0 %1002, %v993
          %v1004 = vpop.permute.xlu0 %1003
          %1007 = vset.pattern.permute.xlu0 0
          %1008 = vperm.xlu0 %1007, %v994
          %v1009 = vpop.permute.xlu0 %1008
          %1012 = vset.pattern.permute.xlu0 0
          %1013 = vperm.xlu0 %1012, %v995
          %v1014 = vpop.permute.xlu0 %1013
          %v1020 = vunpack.c.l.b16 %v988
          %v1021 = vunpack.c.l.b16 %v989
          %v1022 = vunpack.c.l.b16 %v990
          %v1023 = vunpack.c.l.b16 %v991
          %v1024 = vpack.c.b16 %v1021, %v1020
          %v1025 = vpack.c.b16 %v1023, %v1022
          %v1030 = vunpack.c.l.b16 %v828
          %v1031 = vunpack.c.l.b16 %v829
          %v1032 = vunpack.c.l.b16 %v830
          %v1033 = vunpack.c.l.b16 %v831
          %v1034 = vpack.c.b16 %v1031, %v1030
          %v1035 = vpack.c.b16 %v1033, %v1032
          %v1039 = vsel %vm932, %v1024, 0
          %v1042 = vsel %vm932, %v1025, 0
          %1044 = vmatprep.subr.bf16.mxu0 0
          %1045 = vmatpush1.bf16.msra.mxu0 %v1034
          %1046 = vmatprep.subr.bf16.mxu0 0
          %1047 = vmatpush1.bf16.msra.mxu0 %v1035
          %1048 = vmatprep.subr.bf16.mxu0 0
          %1049 = vmatpush1.bf16.msra.mxu0 0
          %1050 = vmatprep.subr.bf16.mxu0 0
          %1051 = vmatpush1.bf16.msra.mxu0 0
          %1052 = vmatprep.subr.bf16.mxu0 0
          %1053 = vmatpush1.bf16.msra.mxu0 0
          %1054 = vmatprep.subr.bf16.mxu0 0
          %1055 = vmatpush1.bf16.msra.mxu0 0
          %1056 = vmatprep.subr.bf16.mxu0 0
          %1057 = vmatpush1.bf16.msra.mxu0 0
          %1058 = vmatprep.subr.bf16.mxu0 0
          %1059 = vmatpush1.bf16.msra.mxu0 0
          %1060 = vmatprep.subr.bf16.mxu0 0
          %1061 = vmatpush1.bf16.msra.mxu0 0
          %1062 = vmatprep.subr.bf16.mxu0 0
          %1063 = vmatpush1.bf16.msra.mxu0 0
          %1064 = vmatprep.subr.bf16.mxu0 0
          %1065 = vmatpush1.bf16.msra.mxu0 0
          %1066 = vmatprep.subr.bf16.mxu0 0
          %1067 = vmatpush1.bf16.msra.mxu0 0
          %1068 = vmatprep.subr.bf16.mxu0 0
          %1069 = vmatpush1.bf16.msra.mxu0 0
          %1070 = vmatprep.subr.bf16.mxu0 0
          %1071 = vmatpush1.bf16.msra.mxu0 0
          %1072 = vmatprep.subr.bf16.mxu0 0
          %1073 = vmatpush1.bf16.msra.mxu0 0
          %1074 = vmatprep.subr.bf16.mxu0 0
          %1075 = vmatpush1.bf16.msra.mxu0 0
          %1076 = vmatprep.mubr.bf16.mxu0 0
          %1077 = vmatmul.mubr.bf16.gmra.mrb[0].mxu0 %v1039
          %v1078 = vpop.f32.mrb[0].mxu0
          %v1079 = vadd.f32 %v999, %v1078
          %v1080 = vpop.f32.mrb[0].mxu0
          %v1081 = vpop.f32.mrb[0].mxu0
          %v1082 = vadd.f32 %v1004, %v1081
          %v1083 = vpop.f32.mrb[0].mxu0
          %1084 = vmatprep.mubr.bf16.mxu0 0
          %1085 = vmatmul.mubr.bf16.gmra.mrb[0].mxu0 %v1042
          %v1086 = vpop.f32.mrb[0].mxu0
          %v1087 = vadd.f32 %v1009, %v1086
          %v1088 = vpop.f32.mrb[0].mxu0
          %v1089 = vpop.f32.mrb[0].mxu0
          %v1090 = vadd.f32 %v1014, %v1089
          %v1091 = vpop.f32.mrb[0].mxu0
          %1092 = vdwg.mxu0
          %v1093 = vpack.c.bf16 %v977, %v974
          %v1094 = vpack.c.bf16 %v985, %v982
          %s1095 = smul.u32 %s51, 2
          %s1096 = smul.addr %s1095, 8
          %s1097 = scalar_lea.vmem [#allocation3], %s1096
          %1098 = vst [vmem:[%s1097] sm:$0xff] %v1093
          %1099 = vst [vmem:[%s1097 + $0x8] sm:$0xff] %v1094
          %v1100 = vpack.c.bf16 %v1082, %v1079
          %v1101 = vpack.c.bf16 %v1090, %v1087
          %s1102 = smul.addr %s1095, 8
          %s1103 = scalar_lea.vmem [#allocation4], %s1102
          %1104 = vst [vmem:[%s1103] sm:$0xff] %v1100
          %1105 = vst [vmem:[%s1103 + $0x8] sm:$0xff] %v1101
        $region136: #{transform_mlmodel_forward.6} parent=75 // pred_fallthru
          _
        %p1106 = scmp.eq.s32.totalorder %s51, 0
        // Predicated region
        $region137: #{transform_mlmodel_forward.6} parent=75 // pred_check
          %p1107 = pneg %p1106
        $region138: #{transform_mlmodel_forward.6} parent=75 // pred_check_branch
          %1109 = sbr.rel (%p1107) target = $region140
        $region139: #{transform_mlmodel_forward.6} parent=75 // pred_region
          %v1110 = vld [vmem:[%s676] sm:$0xf]
          %v1111 = vld [vmem:[%s676 + $0x4] sm:$0xf]
          %v1112 = vld [vmem:[%s676 + $0x8] sm:$0xf]
          %v1113 = vld [vmem:[%s676 + $0xc] sm:$0xf]
          %v1114 = vunpack.c.l.bf16 %v1110
          %v1115 = vunpack.c.l.bf16 %v1111
          %v1116 = vunpack.c.l.bf16 %v1112
          %v1117 = vunpack.c.l.bf16 %v1113
          %v1118 = vld [vmem:[%s685] sm:$0xff]
          %v1119 = vld [vmem:[%s685 + $0x8] sm:$0xff]
          %v1120 = vld [vmem:[%s685 + $0x10] sm:$0xff]
          %v1121 = vld [vmem:[%s685 + $0x18] sm:$0xff]
          %1123 = vset.pattern.permute.xlu0 0
          %1124 = vperm.xlu0 %1123, %v1118
          %v1125 = vpop.permute.xlu0 %1124
          %1128 = vset.pattern.permute.xlu0 0
          %1129 = vperm.xlu0 %1128, %v1119
          %v1130 = vpop.permute.xlu0 %1129
          %1133 = vset.pattern.permute.xlu0 0
          %1134 = vperm.xlu0 %1133, %v1120
          %v1135 = vpop.permute.xlu0 %1134
          %1138 = vset.pattern.permute.xlu0 0
          %1139 = vperm.xlu0 %1138, %v1121
          %v1140 = vpop.permute.xlu0 %1139
          %v1142 = vsub.f32 %v1114, %v1125
          %v1143 = vsub.f32 %v1115, %v1130
          %v1144 = vsub.f32 %v1116, %v1135
          %v1145 = vsub.f32 %v1117, %v1140
          %v1146 = vld [vmem:[%s694] sm:$0xff]
          %v1147 = vld [vmem:[%s694 + $0x8] sm:$0xff]
          %v1148 = vld [vmem:[%s694 + $0x10] sm:$0xff]
          %v1149 = vld [vmem:[%s694 + $0x18] sm:$0xff]
          %1151 = vset.pattern.permute.xlu0 0
          %1152 = vperm.xlu0 %1151, %v1146
          %v1153 = vpop.permute.xlu0 %1152
          %1156 = vset.pattern.permute.xlu0 0
          %1157 = vperm.xlu0 %1156, %v1147
          %v1158 = vpop.permute.xlu0 %1157
          %1161 = vset.pattern.permute.xlu0 0
          %1162 = vperm.xlu0 %1161, %v1148
          %v1163 = vpop.permute.xlu0 %1162
          %1166 = vset.pattern.permute.xlu0 0
          %1167 = vperm.xlu0 %1166, %v1149
          %v1168 = vpop.permute.xlu0 %1167
          %v1170 = vmul.f32 %v1142, %v1153
          %v1171 = vmul.f32 %v1143, %v1158
          %v1172 = vmul.f32 %v1144, %v1163
          %v1173 = vmul.f32 %v1145, %v1168
          %v1174 = vpack.c.bf16 %v1171, %v1170
          %v1175 = vpack.c.bf16 %v1173, %v1172
          %v1176 = vld [vmem:[#allocation19] sm:$0xf]
          %v1177 = vld [vmem:[#allocation19 + $0x4] sm:$0xf]
          %v1178 = vld [vmem:[#allocation19 + $0x8] sm:$0xf]
          %v1179 = vld [vmem:[#allocation19 + $0xc] sm:$0xf]
          %v1180 = vld [vmem:[#allocation20] sm:$0xff]
          %v1181 = vld [vmem:[#allocation20 + $0x8] sm:$0xff]
          %v1182 = vld [vmem:[#allocation20 + $0x10] sm:$0xff]
          %v1183 = vld [vmem:[#allocation20 + $0x18] sm:$0xff]
          %1185 = vset.pattern.permute.xlu0 0
          %1186 = vperm.xlu0 %1185, %v1180
          %v1187 = vpop.permute.xlu0 %1186
          %1190 = vset.pattern.permute.xlu0 0
          %1191 = vperm.xlu0 %1190, %v1181
          %v1192 = vpop.permute.xlu0 %1191
          %1195 = vset.pattern.permute.xlu0 0
          %1196 = vperm.xlu0 %1195, %v1182
          %v1197 = vpop.permute.xlu0 %1196
          %1200 = vset.pattern.permute.xlu0 0
          %1201 = vperm.xlu0 %1200, %v1183
          %v1202 = vpop.permute.xlu0 %1201
          %v1208 = vunpack.c.l.b16 %v1176
          %v1209 = vunpack.c.l.b16 %v1177
          %v1210 = vunpack.c.l.b16 %v1178
          %v1211 = vunpack.c.l.b16 %v1179
          %v1212 = vpack.c.b16 %v1209, %v1208
          %v1213 = vpack.c.b16 %v1211, %v1210
          %vm1214 = vcmask 261120
          %v1216 = vsel %vm1214, %v1212, 0
          %v1219 = vsel %vm1214, %v1213, 0
          %1221 = vmatprep.subr.bf16.mxu0 0
          %1222 = vmatpush1.bf16.msra.mxu0 %v1174
          %1223 = vmatprep.subr.bf16.mxu0 0
          %1224 = vmatpush1.bf16.msra.mxu0 %v1175
          %1225 = vmatprep.subr.bf16.mxu0 0
          %1226 = vmatpush1.bf16.msra.mxu0 0
          %1227 = vmatprep.subr.bf16.mxu0 0
          %1228 = vmatpush1.bf16.msra.mxu0 0
          %1229 = vmatprep.subr.bf16.mxu0 0
          %1230 = vmatpush1.bf16.msra.mxu0 0
          %1231 = vmatprep.subr.bf16.mxu0 0
          %1232 = vmatpush1.bf16.msra.mxu0 0
          %1233 = vmatprep.subr.bf16.mxu0 0
          %1234 = vmatpush1.bf16.msra.mxu0 0
          %1235 = vmatprep.subr.bf16.mxu0 0
          %1236 = vmatpush1.bf16.msra.mxu0 0
          %1237 = vmatprep.subr.bf16.mxu0 0
          %1238 = vmatpush1.bf16.msra.mxu0 0
          %1239 = vmatprep.subr.bf16.mxu0 0
          %1240 = vmatpush1.bf16.msra.mxu0 0
          %1241 = vmatprep.subr.bf16.mxu0 0
          %1242 = vmatpush1.bf16.msra.mxu0 0
          %1243 = vmatprep.subr.bf16.mxu0 0
          %1244 = vmatpush1.bf16.msra.mxu0 0
          %1245 = vmatprep.subr.bf16.mxu0 0
          %1246 = vmatpush1.bf16.msra.mxu0 0
          %1247 = vmatprep.subr.bf16.mxu0 0
          %1248 = vmatpush1.bf16.msra.mxu0 0
          %1249 = vmatprep.subr.bf16.mxu0 0
          %1250 = vmatpush1.bf16.msra.mxu0 0
          %1251 = vmatprep.subr.bf16.mxu0 0
          %1252 = vmatpush1.bf16.msra.mxu0 0
          %1253 = vmatprep.mubr.bf16.mxu0 0
          %1254 = vmatmul.mubr.bf16.gmra.mrb[0].mxu0 %v1216
          %v1255 = vpop.f32.mrb[0].mxu0
          %v1256 = vadd.f32 %v1187, %v1255
          %v1257 = vpop.f32.mrb[0].mxu0
          %v1258 = vpop.f32.mrb[0].mxu0
          %v1259 = vadd.f32 %v1192, %v1258
          %v1260 = vpop.f32.mrb[0].mxu0
          %1261 = vmatprep.mubr.bf16.mxu0 0
          %1262 = vmatmul.mubr.bf16.gmra.mrb[0].mxu0 %v1219
          %v1263 = vpop.f32.mrb[0].mxu0
          %v1264 = vadd.f32 %v1197, %v1263
          %v1265 = vpop.f32.mrb[0].mxu0
          %v1266 = vpop.f32.mrb[0].mxu0
          %v1267 = vadd.f32 %v1202, %v1266
          %v1268 = vpop.f32.mrb[0].mxu0
          %1269 = vdwg.mxu0
          %v1270 = vpack.c.bf16 %v1259, %v1256
          %v1271 = vpack.c.bf16 %v1267, %v1264
          %1272 = vst [vmem:[#allocation2] sm:$0xff] %v1270
          %1273 = vst [vmem:[#allocation2 + $0x8] sm:$0xff] %v1271
          %vm1274 = vcmask 7168
          %1275 = vst.msk [vmem:[#allocation5] sm:$0xff] %vm1274, -inf
          %1276 = vst.msk [vmem:[#allocation5 + $0x8] sm:$0xff] %vm1274, -inf
          %1277 = vst.msk [vmem:[#allocation5 + $0x10] sm:$0xff] %vm1274, -inf
          %1278 = vst.msk [vmem:[#allocation5 + $0x18] sm:$0xff] %vm1274, -inf
          %1279 = vst.msk [vmem:[#allocation5 + $0x20] sm:$0xff] %vm1274, -inf
          %1280 = vst.msk [vmem:[#allocation5 + $0x28] sm:$0xff] %vm1274, -inf
          %1281 = vst.msk [vmem:[#allocation5 + $0x30] sm:$0xff] %vm1274, -inf
          %1282 = vst.msk [vmem:[#allocation5 + $0x38] sm:$0xff] %vm1274, -inf
          %1283 = vst.msk [vmem:[#allocation5 + $0x40] sm:$0xff] %vm1274, -inf
          %1284 = vst.msk [vmem:[#allocation5 + $0x48] sm:$0xff] %vm1274, -inf
          %1285 = vst.msk [vmem:[#allocation5 + $0x50] sm:$0xff] %vm1274, -inf
          %1286 = vst.msk [vmem:[#allocation5 + $0x58] sm:$0xff] %vm1274, -inf
          %1287 = vst.msk [vmem:[#allocation5 + $0x60] sm:$0xff] %vm1274, -inf
          %1288 = vst.msk [vmem:[#allocation5 + $0x68] sm:$0xff] %vm1274, -inf
          %1289 = vst.msk [vmem:[#allocation5 + $0x70] sm:$0xff] %vm1274, -inf
          %1290 = vst.msk [vmem:[#allocation5 + $0x78] sm:$0xff] %vm1274, -inf
          %1291 = vst.msk [vmem:[#allocation6] sm:$0xff] %vm1274, 0.0
          %1292 = vst.msk [vmem:[#allocation6 + $0x8] sm:$0xff] %vm1274, 0.0
          %1293 = vst.msk [vmem:[#allocation6 + $0x10] sm:$0xff] %vm1274, 0.0
          %1294 = vst.msk [vmem:[#allocation6 + $0x18] sm:$0xff] %vm1274, 0.0
          %1295 = vst.msk [vmem:[#allocation6 + $0x20] sm:$0xff] %vm1274, 0.0
          %1296 = vst.msk [vmem:[#allocation6 + $0x28] sm:$0xff] %vm1274, 0.0
          %1297 = vst.msk [vmem:[#allocation6 + $0x30] sm:$0xff] %vm1274, 0.0
          %1298 = vst.msk [vmem:[#allocation6 + $0x38] sm:$0xff] %vm1274, 0.0
          %1299 = vst.msk [vmem:[#allocation6 + $0x40] sm:$0xff] %vm1274, 0.0
          %1300 = vst.msk [vmem:[#allocation6 + $0x48] sm:$0xff] %vm1274, 0.0
          %1301 = vst.msk [vmem:[#allocation6 + $0x50] sm:$0xff] %vm1274, 0.0
          %1302 = vst.msk [vmem:[#allocation6 + $0x58] sm:$0xff] %vm1274, 0.0
          %1303 = vst.msk [vmem:[#allocation6 + $0x60] sm:$0xff] %vm1274, 0.0
          %1304 = vst.msk [vmem:[#allocation6 + $0x68] sm:$0xff] %vm1274, 0.0
          %1305 = vst.msk [vmem:[#allocation6 + $0x70] sm:$0xff] %vm1274, 0.0
          %1306 = vst.msk [vmem:[#allocation6 + $0x78] sm:$0xff] %vm1274, 0.0
          %1307 = vst.msk [vmem:[#allocation7] sm:$0xff] %vm1214, 0.0
          %1308 = vst.msk [vmem:[#allocation7 + $0x8] sm:$0xff] %vm1214, 0.0
          %1309 = vst.msk [vmem:[#allocation7 + $0x10] sm:$0xff] %vm1214, 0.0
          %1310 = vst.msk [vmem:[#allocation7 + $0x18] sm:$0xff] %vm1214, 0.0
          %1311 = vst.msk [vmem:[#allocation7 + $0x20] sm:$0xff] %vm1214, 0.0
          %1312 = vst.msk [vmem:[#allocation7 + $0x28] sm:$0xff] %vm1214, 0.0
          %1313 = vst.msk [vmem:[#allocation7 + $0x30] sm:$0xff] %vm1214, 0.0
          %1314 = vst.msk [vmem:[#allocation7 + $0x38] sm:$0xff] %vm1214, 0.0
          %1315 = vst.msk [vmem:[#allocation7 + $0x40] sm:$0xff] %vm1214, 0.0
          %1316 = vst.msk [vmem:[#allocation7 + $0x48] sm:$0xff] %vm1214, 0.0
          %1317 = vst.msk [vmem:[#allocation7 + $0x50] sm:$0xff] %vm1214, 0.0
          %1318 = vst.msk [vmem:[#allocation7 + $0x58] sm:$0xff] %vm1214, 0.0
          %1319 = vst.msk [vmem:[#allocation7 + $0x60] sm:$0xff] %vm1214, 0.0
          %1320 = vst.msk [vmem:[#allocation7 + $0x68] sm:$0xff] %vm1214, 0.0
          %1321 = vst.msk [vmem:[#allocation7 + $0x70] sm:$0xff] %vm1214, 0.0
          %1322 = vst.msk [vmem:[#allocation7 + $0x78] sm:$0xff] %vm1214, 0.0
        $region140: #{transform_mlmodel_forward.6} parent=75 // pred_fallthru
          _
        %s1323 = smul.u32 %s51, 2
        %s1324 = smul.addr %s1323, 8
        %s1325 = scalar_lea.vmem [#allocation3], %s1324
        %v1326 = vld [vmem:[%s1325] sm:$0xff]
        %v1327 = vld [vmem:[%s1325 + $0x8] sm:$0xff]
        %s1328 = smul.addr %s1323, 8
        %s1329 = scalar_lea.vmem [#allocation4], %s1328
        %v1330 = vld [vmem:[%s1329] sm:$0xff]
        %v1331 = vld [vmem:[%s1329 + $0x8] sm:$0xff]
        %v1332 = vld [vmem:[#allocation2] sm:$0xff]
        %v1333 = vld [vmem:[#allocation2 + $0x8] sm:$0xff]
        %1334 = vxpose.xlu0.c.b16.start [1/8] %v1332, 128
        %1335 = vxpose.xlu0.c.b16.cont [2/8] %v1333, 128
        %1336 = vxpose.xlu0.c.b16.cont [3/8] 0, 128
        %1337 = vxpose.xlu0.c.b16.cont [4/8] 0, 128
        %1338 = vxpose.xlu0.c.b16.cont [5/8] 0, 128
        %1339 = vxpose.xlu0.c.b16.cont [6/8] 0, 128
        %1340 = vxpose.xlu0.c.b16.cont [7/8] 0, 128
        %1341 = vxpose.xlu0.c.b16.end [8/8] 0, 128
        %v1342 = vpop.trf.xlu0
        %v1343 = vpop.trf.xlu0
        %v1344 = vpop.trf.xlu0
        %v1345 = vpop.trf.xlu0
        %v1346 = vpop.trf.xlu0
        %v1347 = vpop.trf.xlu0
        %v1348 = vpop.trf.xlu0
        %v1349 = vpop.trf.xlu0
        %vm1350 = vcmask 261120
        %v1352 = vsel %vm1350, %v1342, 0
        %v1355 = vsel %vm1350, %v1343, 0
        %v1358 = vsel %vm1350, %v1344, 0
        %v1361 = vsel %vm1350, %v1345, 0
        %v1364 = vsel %vm1350, %v1346, 0
        %v1367 = vsel %vm1350, %v1347, 0
        %v1370 = vsel %vm1350, %v1348, 0
        %v1373 = vsel %vm1350, %v1349, 0
        %1375 = vmatprep.subr.bf16.mxu0 0
        %1376 = vmatpush1.bf16.msra.mxu0 %v1326
        %1377 = vmatprep.subr.bf16.mxu0 0
        %1378 = vmatpush1.bf16.msra.mxu0 %v1327
        %1379 = vmatprep.subr.bf16.mxu0 0
        %1380 = vmatpush1.bf16.msra.mxu0 0
        %1381 = vmatprep.subr.bf16.mxu0 0
        %1382 = vmatpush1.bf16.msra.mxu0 0
        %1383 = vmatprep.subr.bf16.mxu0 0
        %1384 = vmatpush1.bf16.msra.mxu0 0
        %1385 = vmatprep.subr.bf16.mxu0 0
        %1386 = vmatpush1.bf16.msra.mxu0 0
        %1387 = vmatprep.subr.bf16.mxu0 0
        %1388 = vmatpush1.bf16.msra.mxu0 0
        %1389 = vmatprep.subr.bf16.mxu0 0
        %1390 = vmatpush1.bf16.msra.mxu0 0
        %1391 = vmatprep.subr.bf16.mxu0 0
        %1392 = vmatpush1.bf16.msra.mxu0 0
        %1393 = vmatprep.subr.bf16.mxu0 0
        %1394 = vmatpush1.bf16.msra.mxu0 0
        %1395 = vmatprep.subr.bf16.mxu0 0
        %1396 = vmatpush1.bf16.msra.mxu0 0
        %1397 = vmatprep.subr.bf16.mxu0 0
        %1398 = vmatpush1.bf16.msra.mxu0 0
        %1399 = vmatprep.subr.bf16.mxu0 0
        %1400 = vmatpush1.bf16.msra.mxu0 0
        %1401 = vmatprep.subr.bf16.mxu0 0
        %1402 = vmatpush1.bf16.msra.mxu0 0
        %1403 = vmatprep.subr.bf16.mxu0 0
        %1404 = vmatpush1.bf16.msra.mxu0 0
        %1405 = vmatprep.subr.bf16.mxu0 0
        %1406 = vmatpush1.bf16.msra.mxu0 0
        %1407 = vmatprep.mubr.bf16.mxu0 0
        %1408 = vmatmul.mubr.bf16.gmra.mrb[0].mxu0 %v1352
        %v1409 = vpop.f32.mrb[0].mxu0
        %v1410 = vadd.f32 0.0, %v1409
        %v1411 = vpop.f32.mrb[0].mxu0
        %v1412 = vpop.f32.mrb[0].mxu0
        %v1413 = vadd.f32 0.0, %v1412
        %v1414 = vpop.f32.mrb[0].mxu0
        %1415 = vmatprep.mubr.bf16.mxu0 0
        %1416 = vmatmul.mubr.bf16.gmra.mrb[0].mxu0 %v1355
        %v1417 = vpop.f32.mrb[0].mxu0
        %v1418 = vadd.f32 0.0, %v1417
        %v1419 = vpop.f32.mrb[0].mxu0
        %v1420 = vpop.f32.mrb[0].mxu0
        %v1421 = vadd.f32 0.0, %v1420
        %v1422 = vpop.f32.mrb[0].mxu0
        %1423 = vmatprep.mubr.bf16.mxu0 0
        %1424 = vmatmul.mubr.bf16.gmra.mrb[0].mxu0 %v1358
        %v1425 = vpop.f32.mrb[0].mxu0
        %v1426 = vadd.f32 0.0, %v1425
        %v1427 = vpop.f32.mrb[0].mxu0
        %v1428 = vpop.f32.mrb[0].mxu0
        %v1429 = vadd.f32 0.0, %v1428
        %v1430 = vpop.f32.mrb[0].mxu0
        %1431 = vmatprep.mubr.bf16.mxu0 0
        %1432 = vmatmul.mubr.bf16.gmra.mrb[0].mxu0 %v1361
        %v1433 = vpop.f32.mrb[0].mxu0
        %v1434 = vadd.f32 0.0, %v1433
        %v1435 = vpop.f32.mrb[0].mxu0
        %v1436 = vpop.f32.mrb[0].mxu0
        %v1437 = vadd.f32 0.0, %v1436
        %v1438 = vpop.f32.mrb[0].mxu0
        %1439 = vmatprep.mubr.bf16.mxu0 0
        %1440 = vmatmul.mubr.bf16.gmra.mrb[0].mxu0 %v1364
        %v1441 = vpop.f32.mrb[0].mxu0
        %v1442 = vadd.f32 0.0, %v1441
        %v1443 = vpop.f32.mrb[0].mxu0
        %v1444 = vpop.f32.mrb[0].mxu0
        %v1445 = vadd.f32 0.0, %v1444
        %v1446 = vpop.f32.mrb[0].mxu0
        %1447 = vmatprep.mubr.bf16.mxu0 0
        %1448 = vmatmul.mubr.bf16.gmra.mrb[0].mxu0 %v1367
        %v1449 = vpop.f32.mrb[0].mxu0
        %v1450 = vadd.f32 0.0, %v1449
        %v1451 = vpop.f32.mrb[0].mxu0
        %v1452 = vpop.f32.mrb[0].mxu0
        %v1453 = vadd.f32 0.0, %v1452
        %v1454 = vpop.f32.mrb[0].mxu0
        %1455 = vmatprep.mubr.bf16.mxu0 0
        %1456 = vmatmul.mubr.bf16.gmra.mrb[0].mxu0 %v1370
        %v1457 = vpop.f32.mrb[0].mxu0
        %v1458 = vadd.f32 0.0, %v1457
        %v1459 = vpop.f32.mrb[0].mxu0
        %v1460 = vpop.f32.mrb[0].mxu0
        %v1461 = vadd.f32 0.0, %v1460
        %v1462 = vpop.f32.mrb[0].mxu0
        %1463 = vmatprep.mubr.bf16.mxu0 0
        %1464 = vmatmul.mubr.bf16.gmra.mrb[0].mxu0 %v1373
        %v1465 = vpop.f32.mrb[0].mxu0
        %v1466 = vadd.f32 0.0, %v1465
        %v1467 = vpop.f32.mrb[0].mxu0
        %v1468 = vpop.f32.mrb[0].mxu0
        %v1469 = vadd.f32 0.0, %v1468
        %v1470 = vpop.f32.mrb[0].mxu0
        %1471 = vdwg.mxu0
        %v1472 = vld [vmem:[#allocation5] sm:$0xff]
        %v1473 = vld [vmem:[#allocation5 + $0x8] sm:$0xff]
        %v1474 = vld [vmem:[#allocation5 + $0x10] sm:$0xff]
        %v1475 = vld [vmem:[#allocation5 + $0x18] sm:$0xff]
        %v1476 = vld [vmem:[#allocation5 + $0x20] sm:$0xff]
        %v1477 = vld [vmem:[#allocation5 + $0x28] sm:$0xff]
        %v1478 = vld [vmem:[#allocation5 + $0x30] sm:$0xff]
        %v1479 = vld [vmem:[#allocation5 + $0x38] sm:$0xff]
        %v1480 = vld [vmem:[#allocation5 + $0x40] sm:$0xff]
        %v1481 = vld [vmem:[#allocation5 + $0x48] sm:$0xff]
        %v1482 = vld [vmem:[#allocation5 + $0x50] sm:$0xff]
        %v1483 = vld [vmem:[#allocation5 + $0x58] sm:$0xff]
        %v1484 = vld [vmem:[#allocation5 + $0x60] sm:$0xff]
        %v1485 = vld [vmem:[#allocation5 + $0x68] sm:$0xff]
        %v1486 = vld [vmem:[#allocation5 + $0x70] sm:$0xff]
        %v1487 = vld [vmem:[#allocation5 + $0x78] sm:$0xff]
        %1488 = vmax.xlane.f32.xlu0 %v1410
        %v1489 = vpop.xlane.xlu0 %1488
        %1490 = vmax.xlane.f32.xlu0 %v1413
        %v1491 = vpop.xlane.xlu0 %1490
        %1492 = vmax.xlane.f32.xlu0 %v1418
        %v1493 = vpop.xlane.xlu0 %1492
        %1494 = vmax.xlane.f32.xlu0 %v1421
        %v1495 = vpop.xlane.xlu0 %1494
        %1496 = vmax.xlane.f32.xlu0 %v1426
        %v1497 = vpop.xlane.xlu0 %1496
        %1498 = vmax.xlane.f32.xlu0 %v1429
        %v1499 = vpop.xlane.xlu0 %1498
        %1500 = vmax.xlane.f32.xlu0 %v1434
        %v1501 = vpop.xlane.xlu0 %1500
        %1502 = vmax.xlane.f32.xlu0 %v1437
        %v1503 = vpop.xlane.xlu0 %1502
        %1504 = vmax.xlane.f32.xlu0 %v1442
        %v1505 = vpop.xlane.xlu0 %1504
        %1506 = vmax.xlane.f32.xlu0 %v1445
        %v1507 = vpop.xlane.xlu0 %1506
        %1508 = vmax.xlane.f32.xlu0 %v1450
        %v1509 = vpop.xlane.xlu0 %1508
        %1510 = vmax.xlane.f32.xlu0 %v1453
        %v1511 = vpop.xlane.xlu0 %1510
        %1512 = vmax.xlane.f32.xlu0 %v1458
        %v1513 = vpop.xlane.xlu0 %1512
        %1514 = vmax.xlane.f32.xlu0 %v1461
        %v1515 = vpop.xlane.xlu0 %1514
        %1516 = vmax.xlane.f32.xlu0 %v1466
        %v1517 = vpop.xlane.xlu0 %1516
        %1518 = vmax.xlane.f32.xlu0 %v1469
        %v1519 = vpop.xlane.xlu0 %1518
        %v1520 = vmax.f32 %v1472, %v1489
        %v1521 = vmax.f32 %v1473, %v1491
        %v1522 = vmax.f32 %v1474, %v1493
        %v1523 = vmax.f32 %v1475, %v1495
        %v1524 = vmax.f32 %v1476, %v1497
        %v1525 = vmax.f32 %v1477, %v1499
        %v1526 = vmax.f32 %v1478, %v1501
        %v1527 = vmax.f32 %v1479, %v1503
        %v1528 = vmax.f32 %v1480, %v1505
        %v1529 = vmax.f32 %v1481, %v1507
        %v1530 = vmax.f32 %v1482, %v1509
        %v1531 = vmax.f32 %v1483, %v1511
        %v1532 = vmax.f32 %v1484, %v1513
        %v1533 = vmax.f32 %v1485, %v1515
        %v1534 = vmax.f32 %v1486, %v1517
        %v1535 = vmax.f32 %v1487, %v1519
        %v1536 = vsub.f32 %v1472, %v1520
        %v1537 = vsub.f32 %v1473, %v1521
        %v1538 = vsub.f32 %v1474, %v1522
        %v1539 = vsub.f32 %v1475, %v1523
        %v1540 = vsub.f32 %v1476, %v1524
        %v1541 = vsub.f32 %v1477, %v1525
        %v1542 = vsub.f32 %v1478, %v1526
        %v1543 = vsub.f32 %v1479, %v1527
        %v1544 = vsub.f32 %v1480, %v1528
        %v1545 = vsub.f32 %v1481, %v1529
        %v1546 = vsub.f32 %v1482, %v1530
        %v1547 = vsub.f32 %v1483, %v1531
        %v1548 = vsub.f32 %v1484, %v1532
        %v1549 = vsub.f32 %v1485, %v1533
        %v1550 = vsub.f32 %v1486, %v1534
        %v1551 = vsub.f32 %v1487, %v1535
        %v1552 = vmul.f32 %v1536, 1.442695
        %v1553 = vpow.pop %v1552
        %v1554 = vmul.f32 %v1537, 1.442695
        %v1555 = vpow.pop %v1554
        %v1556 = vmul.f32 %v1538, 1.442695
        %v1557 = vpow.pop %v1556
        %v1558 = vmul.f32 %v1539, 1.442695
        %v1559 = vpow.pop %v1558
        %v1560 = vmul.f32 %v1540, 1.442695
        %v1561 = vpow.pop %v1560
        %v1562 = vmul.f32 %v1541, 1.442695
        %v1563 = vpow.pop %v1562
        %v1564 = vmul.f32 %v1542, 1.442695
        %v1565 = vpow.pop %v1564
        %v1566 = vmul.f32 %v1543, 1.442695
        %v1567 = vpow.pop %v1566
        %v1568 = vmul.f32 %v1544, 1.442695
        %v1569 = vpow.pop %v1568
        %v1570 = vmul.f32 %v1545, 1.442695
        %v1571 = vpow.pop %v1570
        %v1572 = vmul.f32 %v1546, 1.442695
        %v1573 = vpow.pop %v1572
        %v1574 = vmul.f32 %v1547, 1.442695
        %v1575 = vpow.pop %v1574
        %v1576 = vmul.f32 %v1548, 1.442695
        %v1577 = vpow.pop %v1576
        %v1578 = vmul.f32 %v1549, 1.442695
        %v1579 = vpow.pop %v1578
        %v1580 = vmul.f32 %v1550, 1.442695
        %v1581 = vpow.pop %v1580
        %v1582 = vmul.f32 %v1551, 1.442695
        %v1583 = vpow.pop %v1582
        %1585 = vset.pattern.permute.xlu0 0
        %1586 = vperm.xlu0 %1585, %v1520
        %v1587 = vpop.permute.xlu0 %1586
        %1590 = vset.pattern.permute.xlu0 0
        %1591 = vperm.xlu0 %1590, %v1521
        %v1592 = vpop.permute.xlu0 %1591
        %1595 = vset.pattern.permute.xlu0 0
        %1596 = vperm.xlu0 %1595, %v1522
        %v1597 = vpop.permute.xlu0 %1596
        %1600 = vset.pattern.permute.xlu0 0
        %1601 = vperm.xlu0 %1600, %v1523
        %v1602 = vpop.permute.xlu0 %1601
        %1605 = vset.pattern.permute.xlu0 0
        %1606 = vperm.xlu0 %1605, %v1524
        %v1607 = vpop.permute.xlu0 %1606
        %1610 = vset.pattern.permute.xlu0 0
        %1611 = vperm.xlu0 %1610, %v1525
        %v1612 = vpop.permute.xlu0 %1611
        %1615 = vset.pattern.permute.xlu0 0
        %1616 = vperm.xlu0 %1615, %v1526
        %v1617 = vpop.permute.xlu0 %1616
        %1620 = vset.pattern.permute.xlu0 0
        %1621 = vperm.xlu0 %1620, %v1527
        %v1622 = vpop.permute.xlu0 %1621
        %1625 = vset.pattern.permute.xlu0 0
        %1626 = vperm.xlu0 %1625, %v1528
        %v1627 = vpop.permute.xlu0 %1626
        %1630 = vset.pattern.permute.xlu0 0
        %1631 = vperm.xlu0 %1630, %v1529
        %v1632 = vpop.permute.xlu0 %1631
        %1635 = vset.pattern.permute.xlu0 0
        %1636 = vperm.xlu0 %1635, %v1530
        %v1637 = vpop.permute.xlu0 %1636
        %1640 = vset.pattern.permute.xlu0 0
        %1641 = vperm.xlu0 %1640, %v1531
        %v1642 = vpop.permute.xlu0 %1641
        %1645 = vset.pattern.permute.xlu0 0
        %1646 = vperm.xlu0 %1645, %v1532
        %v1647 = vpop.permute.xlu0 %1646
        %1650 = vset.pattern.permute.xlu0 0
        %1651 = vperm.xlu0 %1650, %v1533
        %v1652 = vpop.permute.xlu0 %1651
        %1655 = vset.pattern.permute.xlu0 0
        %1656 = vperm.xlu0 %1655, %v1534
        %v1657 = vpop.permute.xlu0 %1656
        %1660 = vset.pattern.permute.xlu0 0
        %1661 = vperm.xlu0 %1660, %v1535
        %v1662 = vpop.permute.xlu0 %1661
        %v1664 = vsub.f32 %v1410, %v1587
        %v1665 = vsub.f32 %v1413, %v1592
        %v1666 = vsub.f32 %v1418, %v1597
        %v1667 = vsub.f32 %v1421, %v1602
        %v1668 = vsub.f32 %v1426, %v1607
        %v1669 = vsub.f32 %v1429, %v1612
        %v1670 = vsub.f32 %v1434, %v1617
        %v1671 = vsub.f32 %v1437, %v1622
        %v1672 = vsub.f32 %v1442, %v1627
        %v1673 = vsub.f32 %v1445, %v1632
        %v1674 = vsub.f32 %v1450, %v1637
        %v1675 = vsub.f32 %v1453, %v1642
        %v1676 = vsub.f32 %v1458, %v1647
        %v1677 = vsub.f32 %v1461, %v1652
        %v1678 = vsub.f32 %v1466, %v1657
        %v1679 = vsub.f32 %v1469, %v1662
        %v1680 = vmul.f32 %v1664, 1.442695
        %v1681 = vpow.pop %v1680
        %v1682 = vmul.f32 %v1665, 1.442695
        %v1683 = vpow.pop %v1682
        %v1684 = vmul.f32 %v1666, 1.442695
        %v1685 = vpow.pop %v1684
        %v1686 = vmul.f32 %v1667, 1.442695
        %v1687 = vpow.pop %v1686
        %v1688 = vmul.f32 %v1668, 1.442695
        %v1689 = vpow.pop %v1688
        %v1690 = vmul.f32 %v1669, 1.442695
        %v1691 = vpow.pop %v1690
        %v1692 = vmul.f32 %v1670, 1.442695
        %v1693 = vpow.pop %v1692
        %v1694 = vmul.f32 %v1671, 1.442695
        %v1695 = vpow.pop %v1694
        %v1696 = vmul.f32 %v1672, 1.442695
        %v1697 = vpow.pop %v1696
        %v1698 = vmul.f32 %v1673, 1.442695
        %v1699 = vpow.pop %v1698
        %v1700 = vmul.f32 %v1674, 1.442695
        %v1701 = vpow.pop %v1700
        %v1702 = vmul.f32 %v1675, 1.442695
        %v1703 = vpow.pop %v1702
        %v1704 = vmul.f32 %v1676, 1.442695
        %v1705 = vpow.pop %v1704
        %v1706 = vmul.f32 %v1677, 1.442695
        %v1707 = vpow.pop %v1706
        %v1708 = vmul.f32 %v1678, 1.442695
        %v1709 = vpow.pop %v1708
        %v1710 = vmul.f32 %v1679, 1.442695
        %v1711 = vpow.pop %v1710
        %1712 = vadd.xlane.f32.xlu0 %v1681
        %v1713 = vpop.xlane.xlu0 %1712
        %1714 = vadd.xlane.f32.xlu0 %v1683
        %v1715 = vpop.xlane.xlu0 %1714
        %1716 = vadd.xlane.f32.xlu0 %v1685
        %v1717 = vpop.xlane.xlu0 %1716
        %1718 = vadd.xlane.f32.xlu0 %v1687
        %v1719 = vpop.xlane.xlu0 %1718
        %1720 = vadd.xlane.f32.xlu0 %v1689
        %v1721 = vpop.xlane.xlu0 %1720
        %1722 = vadd.xlane.f32.xlu0 %v1691
        %v1723 = vpop.xlane.xlu0 %1722
        %1724 = vadd.xlane.f32.xlu0 %v1693
        %v1725 = vpop.xlane.xlu0 %1724
        %1726 = vadd.xlane.f32.xlu0 %v1695
        %v1727 = vpop.xlane.xlu0 %1726
        %1728 = vadd.xlane.f32.xlu0 %v1697
        %v1729 = vpop.xlane.xlu0 %1728
        %1730 = vadd.xlane.f32.xlu0 %v1699
        %v1731 = vpop.xlane.xlu0 %1730
        %1732 = vadd.xlane.f32.xlu0 %v1701
        %v1733 = vpop.xlane.xlu0 %1732
        %1734 = vadd.xlane.f32.xlu0 %v1703
        %v1735 = vpop.xlane.xlu0 %1734
        %1736 = vadd.xlane.f32.xlu0 %v1705
        %v1737 = vpop.xlane.xlu0 %1736
        %1738 = vadd.xlane.f32.xlu0 %v1707
        %v1739 = vpop.xlane.xlu0 %1738
        %1740 = vadd.xlane.f32.xlu0 %v1709
        %v1741 = vpop.xlane.xlu0 %1740
        %1742 = vadd.xlane.f32.xlu0 %v1711
        %v1743 = vpop.xlane.xlu0 %1742
        %v1744 = vpack.c.bf16 %v1683, %v1681
        %v1745 = vpack.c.bf16 %v1687, %v1685
        %v1746 = vpack.c.bf16 %v1691, %v1689
        %v1747 = vpack.c.bf16 %v1695, %v1693
        %v1748 = vpack.c.bf16 %v1699, %v1697
        %v1749 = vpack.c.bf16 %v1703, %v1701
        %v1750 = vpack.c.bf16 %v1707, %v1705
        %v1751 = vpack.c.bf16 %v1711, %v1709
        %v1752 = vld [vmem:[#allocation6] sm:$0xff]
        %v1753 = vld [vmem:[#allocation6 + $0x8] sm:$0xff]
        %v1754 = vld [vmem:[#allocation6 + $0x10] sm:$0xff]
        %v1755 = vld [vmem:[#allocation6 + $0x18] sm:$0xff]
        %v1756 = vld [vmem:[#allocation6 + $0x20] sm:$0xff]
        %v1757 = vld [vmem:[#allocation6 + $0x28] sm:$0xff]
        %v1758 = vld [vmem:[#allocation6 + $0x30] sm:$0xff]
        %v1759 = vld [vmem:[#allocation6 + $0x38] sm:$0xff]
        %v1760 = vld [vmem:[#allocation6 + $0x40] sm:$0xff]
        %v1761 = vld [vmem:[#allocation6 + $0x48] sm:$0xff]
        %v1762 = vld [vmem:[#allocation6 + $0x50] sm:$0xff]
        %v1763 = vld [vmem:[#allocation6 + $0x58] sm:$0xff]
        %v1764 = vld [vmem:[#allocation6 + $0x60] sm:$0xff]
        %v1765 = vld [vmem:[#allocation6 + $0x68] sm:$0xff]
        %v1766 = vld [vmem:[#allocation6 + $0x70] sm:$0xff]
        %v1767 = vld [vmem:[#allocation6 + $0x78] sm:$0xff]
        %v1768 = vmul.f32 %v1553, %v1752
        %v1769 = vmul.f32 %v1555, %v1753
        %v1770 = vmul.f32 %v1557, %v1754
        %v1771 = vmul.f32 %v1559, %v1755
        %v1772 = vmul.f32 %v1561, %v1756
        %v1773 = vmul.f32 %v1563, %v1757
        %v1774 = vmul.f32 %v1565, %v1758
        %v1775 = vmul.f32 %v1567, %v1759
        %v1776 = vmul.f32 %v1569, %v1760
        %v1777 = vmul.f32 %v1571, %v1761
        %v1778 = vmul.f32 %v1573, %v1762
        %v1779 = vmul.f32 %v1575, %v1763
        %v1780 = vmul.f32 %v1577, %v1764
        %v1781 = vmul.f32 %v1579, %v1765
        %v1782 = vmul.f32 %v1581, %v1766
        %v1783 = vmul.f32 %v1583, %v1767
        %v1784 = vadd.f32 %v1768, %v1713
        %v1785 = vadd.f32 %v1769, %v1715
        %v1786 = vadd.f32 %v1770, %v1717
        %v1787 = vadd.f32 %v1771, %v1719
        %v1788 = vadd.f32 %v1772, %v1721
        %v1789 = vadd.f32 %v1773, %v1723
        %v1790 = vadd.f32 %v1774, %v1725
        %v1791 = vadd.f32 %v1775, %v1727
        %v1792 = vadd.f32 %v1776, %v1729
        %v1793 = vadd.f32 %v1777, %v1731
        %v1794 = vadd.f32 %v1778, %v1733
        %v1795 = vadd.f32 %v1779, %v1735
        %v1796 = vadd.f32 %v1780, %v1737
        %v1797 = vadd.f32 %v1781, %v1739
        %v1798 = vadd.f32 %v1782, %v1741
        %v1799 = vadd.f32 %v1783, %v1743
        %vm1800 = vcmask 7168
        %1801 = vst.msk [vmem:[#allocation6] sm:$0xff] %vm1800, %v1784
        %1802 = vst.msk [vmem:[#allocation6 + $0x8] sm:$0xff] %vm1800, %v1785
        %1803 = vst.msk [vmem:[#allocation6 + $0x10] sm:$0xff] %vm1800, %v1786
        %1804 = vst.msk [vmem:[#allocation6 + $0x18] sm:$0xff] %vm1800, %v1787
        %1805 = vst.msk [vmem:[#allocation6 + $0x20] sm:$0xff] %vm1800, %v1788
        %1806 = vst.msk [vmem:[#allocation6 + $0x28] sm:$0xff] %vm1800, %v1789
        %1807 = vst.msk [vmem:[#allocation6 + $0x30] sm:$0xff] %vm1800, %v1790
        %1808 = vst.msk [vmem:[#allocation6 + $0x38] sm:$0xff] %vm1800, %v1791
        %1809 = vst.msk [vmem:[#allocation6 + $0x40] sm:$0xff] %vm1800, %v1792
        %1810 = vst.msk [vmem:[#allocation6 + $0x48] sm:$0xff] %vm1800, %v1793
        %1811 = vst.msk [vmem:[#allocation6 + $0x50] sm:$0xff] %vm1800, %v1794
        %1812 = vst.msk [vmem:[#allocation6 + $0x58] sm:$0xff] %vm1800, %v1795
        %1813 = vst.msk [vmem:[#allocation6 + $0x60] sm:$0xff] %vm1800, %v1796
        %1814 = vst.msk [vmem:[#allocation6 + $0x68] sm:$0xff] %vm1800, %v1797
        %1815 = vst.msk [vmem:[#allocation6 + $0x70] sm:$0xff] %vm1800, %v1798
        %1816 = vst.msk [vmem:[#allocation6 + $0x78] sm:$0xff] %vm1800, %v1799
        %v1817 = vld [vmem:[#allocation7] sm:$0xff]
        %v1818 = vld [vmem:[#allocation7 + $0x8] sm:$0xff]
        %v1819 = vld [vmem:[#allocation7 + $0x10] sm:$0xff]
        %v1820 = vld [vmem:[#allocation7 + $0x18] sm:$0xff]
        %v1821 = vld [vmem:[#allocation7 + $0x20] sm:$0xff]
        %v1822 = vld [vmem:[#allocation7 + $0x28] sm:$0xff]
        %v1823 = vld [vmem:[#allocation7 + $0x30] sm:$0xff]
        %v1824 = vld [vmem:[#allocation7 + $0x38] sm:$0xff]
        %v1825 = vld [vmem:[#allocation7 + $0x40] sm:$0xff]
        %v1826 = vld [vmem:[#allocation7 + $0x48] sm:$0xff]
        %v1827 = vld [vmem:[#allocation7 + $0x50] sm:$0xff]
        %v1828 = vld [vmem:[#allocation7 + $0x58] sm:$0xff]
        %v1829 = vld [vmem:[#allocation7 + $0x60] sm:$0xff]
        %v1830 = vld [vmem:[#allocation7 + $0x68] sm:$0xff]
        %v1831 = vld [vmem:[#allocation7 + $0x70] sm:$0xff]
        %v1832 = vld [vmem:[#allocation7 + $0x78] sm:$0xff]
        %1834 = vset.pattern.permute.xlu0 0
        %1835 = vperm.xlu0 %1834, %v1553
        %v1836 = vpop.permute.xlu0 %1835
        %1839 = vset.pattern.permute.xlu0 0
        %1840 = vperm.xlu0 %1839, %v1555
        %v1841 = vpop.permute.xlu0 %1840
        %1844 = vset.pattern.permute.xlu0 0
        %1845 = vperm.xlu0 %1844, %v1557
        %v1846 = vpop.permute.xlu0 %1845
        %1849 = vset.pattern.permute.xlu0 0
        %1850 = vperm.xlu0 %1849, %v1559
        %v1851 = vpop.permute.xlu0 %1850
        %1854 = vset.pattern.permute.xlu0 0
        %1855 = vperm.xlu0 %1854, %v1561
        %v1856 = vpop.permute.xlu0 %1855
        %1859 = vset.pattern.permute.xlu0 0
        %1860 = vperm.xlu0 %1859, %v1563
        %v1861 = vpop.permute.xlu0 %1860
        %1864 = vset.pattern.permute.xlu0 0
        %1865 = vperm.xlu0 %1864, %v1565
        %v1866 = vpop.permute.xlu0 %1865
        %1869 = vset.pattern.permute.xlu0 0
        %1870 = vperm.xlu0 %1869, %v1567
        %v1871 = vpop.permute.xlu0 %1870
        %1874 = vset.pattern.permute.xlu0 0
        %1875 = vperm.xlu0 %1874, %v1569
        %v1876 = vpop.permute.xlu0 %1875
        %1879 = vset.pattern.permute.xlu0 0
        %1880 = vperm.xlu0 %1879, %v1571
        %v1881 = vpop.permute.xlu0 %1880
        %1884 = vset.pattern.permute.xlu0 0
        %1885 = vperm.xlu0 %1884, %v1573
        %v1886 = vpop.permute.xlu0 %1885
        %1889 = vset.pattern.permute.xlu0 0
        %1890 = vperm.xlu0 %1889, %v1575
        %v1891 = vpop.permute.xlu0 %1890
        %1894 = vset.pattern.permute.xlu0 0
        %1895 = vperm.xlu0 %1894, %v1577
        %v1896 = vpop.permute.xlu0 %1895
        %1899 = vset.pattern.permute.xlu0 0
        %1900 = vperm.xlu0 %1899, %v1579
        %v1901 = vpop.permute.xlu0 %1900
        %1904 = vset.pattern.permute.xlu0 0
        %1905 = vperm.xlu0 %1904, %v1581
        %v1906 = vpop.permute.xlu0 %1905
        %1909 = vset.pattern.permute.xlu0 0
        %1910 = vperm.xlu0 %1909, %v1583
        %v1911 = vpop.permute.xlu0 %1910
        %v1913 = vmul.f32 %v1836, %v1817
        %v1914 = vmul.f32 %v1841, %v1818
        %v1915 = vmul.f32 %v1846, %v1819
        %v1916 = vmul.f32 %v1851, %v1820
        %v1917 = vmul.f32 %v1856, %v1821
        %v1918 = vmul.f32 %v1861, %v1822
        %v1919 = vmul.f32 %v1866, %v1823
        %v1920 = vmul.f32 %v1871, %v1824
        %v1921 = vmul.f32 %v1876, %v1825
        %v1922 = vmul.f32 %v1881, %v1826
        %v1923 = vmul.f32 %v1886, %v1827
        %v1924 = vmul.f32 %v1891, %v1828
        %v1925 = vmul.f32 %v1896, %v1829
        %v1926 = vmul.f32 %v1901, %v1830
        %v1927 = vmul.f32 %v1906, %v1831
        %v1928 = vmul.f32 %v1911, %v1832
        %1929 = vmatprep.subr.bf16.mxu0 0
        %1930 = vmatpush1.bf16.xpose.msra.mxu0 %v1330
        %1931 = vmatprep.subr.bf16.mxu0 0
        %1932 = vmatpush1.bf16.xpose.msra.mxu0 %v1331
        %1933 = vmatprep.subr.bf16.mxu0 0
        %1934 = vmatpush1.bf16.xpose.msra.mxu0 0
        %1935 = vmatprep.subr.bf16.mxu0 0
        %1936 = vmatpush1.bf16.xpose.msra.mxu0 0
        %1937 = vmatprep.subr.bf16.mxu0 0
        %1938 = vmatpush1.bf16.xpose.msra.mxu0 0
        %1939 = vmatprep.subr.bf16.mxu0 0
        %1940 = vmatpush1.bf16.xpose.msra.mxu0 0
        %1941 = vmatprep.subr.bf16.mxu0 0
        %1942 = vmatpush1.bf16.xpose.msra.mxu0 0
        %1943 = vmatprep.subr.bf16.mxu0 0
        %1944 = vmatpush1.bf16.xpose.msra.mxu0 0
        %1945 = vmatprep.subr.bf16.mxu0 0
        %1946 = vmatpush1.bf16.xpose.msra.mxu0 0
        %1947 = vmatprep.subr.bf16.mxu0 0
        %1948 = vmatpush1.bf16.xpose.msra.mxu0 0
        %1949 = vmatprep.subr.bf16.mxu0 0
        %1950 = vmatpush1.bf16.xpose.msra.mxu0 0
        %1951 = vmatprep.subr.bf16.mxu0 0
        %1952 = vmatpush1.bf16.xpose.msra.mxu0 0
        %1953 = vmatprep.subr.bf16.mxu0 0
        %1954 = vmatpush1.bf16.xpose.msra.mxu0 0
        %1955 = vmatprep.subr.bf16.mxu0 0
        %1956 = vmatpush1.bf16.xpose.msra.mxu0 0
        %1957 = vmatprep.subr.bf16.mxu0 0
        %1958 = vmatpush1.bf16.xpose.msra.mxu0 0
        %1959 = vmatprep.subr.bf16.mxu0 0
        %1960 = vmatpush1.bf16.xpose.msra.mxu0 0
        %1961 = vmatprep.mubr.bf16.mxu0 0
        %1962 = vmatmul.mubr.bf16.gmra.mrb[0].mxu0 %v1744
        %v1963 = vpop.f32.mrb[0].mxu0
        %v1964 = vadd.f32 0.0, %v1963
        %v1965 = vpop.f32.mrb[0].mxu0
        %v1966 = vpop.f32.mrb[0].mxu0
        %v1967 = vadd.f32 0.0, %v1966
        %v1968 = vpop.f32.mrb[0].mxu0
        %1969 = vmatprep.mubr.bf16.mxu0 0
        %1970 = vmatmul.mubr.bf16.gmra.mrb[0].mxu0 %v1745
        %v1971 = vpop.f32.mrb[0].mxu0
        %v1972 = vadd.f32 0.0, %v1971
        %v1973 = vpop.f32.mrb[0].mxu0
        %v1974 = vpop.f32.mrb[0].mxu0
        %v1975 = vadd.f32 0.0, %v1974
        %v1976 = vpop.f32.mrb[0].mxu0
        %1977 = vmatprep.mubr.bf16.mxu0 0
        %1978 = vmatmul.mubr.bf16.gmra.mrb[0].mxu0 %v1746
        %v1979 = vpop.f32.mrb[0].mxu0
        %v1980 = vadd.f32 0.0, %v1979
        %v1981 = vpop.f32.mrb[0].mxu0
        %v1982 = vpop.f32.mrb[0].mxu0
        %v1983 = vadd.f32 0.0, %v1982
        %v1984 = vpop.f32.mrb[0].mxu0
        %1985 = vmatprep.mubr.bf16.mxu0 0
        %1986 = vmatmul.mubr.bf16.gmra.mrb[0].mxu0 %v1747
        %v1987 = vpop.f32.mrb[0].mxu0
        %v1988 = vadd.f32 0.0, %v1987
        %v1989 = vpop.f32.mrb[0].mxu0
        %v1990 = vpop.f32.mrb[0].mxu0
        %v1991 = vadd.f32 0.0, %v1990
        %v1992 = vpop.f32.mrb[0].mxu0
        %1993 = vmatprep.mubr.bf16.mxu0 0
        %1994 = vmatmul.mubr.bf16.gmra.mrb[0].mxu0 %v1748
        %v1995 = vpop.f32.mrb[0].mxu0
        %v1996 = vadd.f32 0.0, %v1995
        %v1997 = vpop.f32.mrb[0].mxu0
        %v1998 = vpop.f32.mrb[0].mxu0
        %v1999 = vadd.f32 0.0, %v1998
        %v2000 = vpop.f32.mrb[0].mxu0
        %2001 = vmatprep.mubr.bf16.mxu0 0
        %2002 = vmatmul.mubr.bf16.gmra.mrb[0].mxu0 %v1749
        %v2003 = vpop.f32.mrb[0].mxu0
        %v2004 = vadd.f32 0.0, %v2003
        %v2005 = vpop.f32.mrb[0].mxu0
        %v2006 = vpop.f32.mrb[0].mxu0
        %v2007 = vadd.f32 0.0, %v2006
        %v2008 = vpop.f32.mrb[0].mxu0
        %2009 = vmatprep.mubr.bf16.mxu0 0
        %2010 = vmatmul.mubr.bf16.gmra.mrb[0].mxu0 %v1750
        %v2011 = vpop.f32.mrb[0].mxu0
        %v2012 = vadd.f32 0.0, %v2011
        %v2013 = vpop.f32.mrb[0].mxu0
        %v2014 = vpop.f32.mrb[0].mxu0
        %v2015 = vadd.f32 0.0, %v2014
        %v2016 = vpop.f32.mrb[0].mxu0
        %2017 = vmatprep.mubr.bf16.mxu0 0
        %2018 = vmatmul.mubr.bf16.gmra.mrb[0].mxu0 %v1751
        %v2019 = vpop.f32.mrb[0].mxu0
        %v2020 = vadd.f32 0.0, %v2019
        %v2021 = vpop.f32.mrb[0].mxu0
        %v2022 = vpop.f32.mrb[0].mxu0
        %v2023 = vadd.f32 0.0, %v2022
        %v2024 = vpop.f32.mrb[0].mxu0
        %2025 = vdwg.mxu0
        %v2026 = vadd.f32 %v1913, %v1964
        %v2027 = vadd.f32 %v1914, %v1967
        %v2028 = vadd.f32 %v1915, %v1972
        %v2029 = vadd.f32 %v1916, %v1975
        %v2030 = vadd.f32 %v1917, %v1980
        %v2031 = vadd.f32 %v1918, %v1983
        %v2032 = vadd.f32 %v1919, %v1988
        %v2033 = vadd.f32 %v1920, %v1991
        %v2034 = vadd.f32 %v1921, %v1996
        %v2035 = vadd.f32 %v1922, %v1999
        %v2036 = vadd.f32 %v1923, %v2004
        %v2037 = vadd.f32 %v1924, %v2007
        %v2038 = vadd.f32 %v1925, %v2012
        %v2039 = vadd.f32 %v1926, %v2015
        %v2040 = vadd.f32 %v1927, %v2020
        %v2041 = vadd.f32 %v1928, %v2023
        %2042 = vst.msk [vmem:[#allocation7] sm:$0xff] %vm1350, %v2026
        %2043 = vst.msk [vmem:[#allocation7 + $0x8] sm:$0xff] %vm1350, %v2027
        %2044 = vst.msk [vmem:[#allocation7 + $0x10] sm:$0xff] %vm1350, %v2028
        %2045 = vst.msk [vmem:[#allocation7 + $0x18] sm:$0xff] %vm1350, %v2029
        %2046 = vst.msk [vmem:[#allocation7 + $0x20] sm:$0xff] %vm1350, %v2030
        %2047 = vst.msk [vmem:[#allocation7 + $0x28] sm:$0xff] %vm1350, %v2031
        %2048 = vst.msk [vmem:[#allocation7 + $0x30] sm:$0xff] %vm1350, %v2032
        %2049 = vst.msk [vmem:[#allocation7 + $0x38] sm:$0xff] %vm1350, %v2033
        %2050 = vst.msk [vmem:[#allocation7 + $0x40] sm:$0xff] %vm1350, %v2034
        %2051 = vst.msk [vmem:[#allocation7 + $0x48] sm:$0xff] %vm1350, %v2035
        %2052 = vst.msk [vmem:[#allocation7 + $0x50] sm:$0xff] %vm1350, %v2036
        %2053 = vst.msk [vmem:[#allocation7 + $0x58] sm:$0xff] %vm1350, %v2037
        %2054 = vst.msk [vmem:[#allocation7 + $0x60] sm:$0xff] %vm1350, %v2038
        %2055 = vst.msk [vmem:[#allocation7 + $0x68] sm:$0xff] %vm1350, %v2039
        %2056 = vst.msk [vmem:[#allocation7 + $0x70] sm:$0xff] %vm1350, %v2040
        %2057 = vst.msk [vmem:[#allocation7 + $0x78] sm:$0xff] %vm1350, %v2041
        %2058 = vst.msk [vmem:[#allocation5] sm:$0xff] %vm1800, %v1520
        %2059 = vst.msk [vmem:[#allocation5 + $0x8] sm:$0xff] %vm1800, %v1521
        %2060 = vst.msk [vmem:[#allocation5 + $0x10] sm:$0xff] %vm1800, %v1522
        %2061 = vst.msk [vmem:[#allocation5 + $0x18] sm:$0xff] %vm1800, %v1523
        %2062 = vst.msk [vmem:[#allocation5 + $0x20] sm:$0xff] %vm1800, %v1524
        %2063 = vst.msk [vmem:[#allocation5 + $0x28] sm:$0xff] %vm1800, %v1525
        %2064 = vst.msk [vmem:[#allocation5 + $0x30] sm:$0xff] %vm1800, %v1526
        %2065 = vst.msk [vmem:[#allocation5 + $0x38] sm:$0xff] %vm1800, %v1527
        %2066 = vst.msk [vmem:[#allocation5 + $0x40] sm:$0xff] %vm1800, %v1528
        %2067 = vst.msk [vmem:[#allocation5 + $0x48] sm:$0xff] %vm1800, %v1529
        %2068 = vst.msk [vmem:[#allocation5 + $0x50] sm:$0xff] %vm1800, %v1530
        %2069 = vst.msk [vmem:[#allocation5 + $0x58] sm:$0xff] %vm1800, %v1531
        %2070 = vst.msk [vmem:[#allocation5 + $0x60] sm:$0xff] %vm1800, %v1532
        %2071 = vst.msk [vmem:[#allocation5 + $0x68] sm:$0xff] %vm1800, %v1533
        %2072 = vst.msk [vmem:[#allocation5 + $0x70] sm:$0xff] %vm1800, %v1534
        %2073 = vst.msk [vmem:[#allocation5 + $0x78] sm:$0xff] %vm1800, %v1535
        %p2074 = scmp.eq.s32.totalorder %s51, 1
        // Predicated region
        $region141: #{transform_mlmodel_forward.6} parent=75 // pred_check
          %p2075 = pneg %p2074
        $region142: #{transform_mlmodel_forward.6} parent=75 // pred_check_branch
          %2077 = sbr.rel (%p2075) target = $region144
        $region143: #{transform_mlmodel_forward.6} parent=75 // pred_region
          %v2078 = vld [vmem:[#allocation7] sm:$0xff]
          %v2079 = vld [vmem:[#allocation7 + $0x8] sm:$0xff]
          %v2080 = vld [vmem:[#allocation7 + $0x10] sm:$0xff]
          %v2081 = vld [vmem:[#allocation7 + $0x18] sm:$0xff]
          %v2082 = vld [vmem:[#allocation7 + $0x20] sm:$0xff]
          %v2083 = vld [vmem:[#allocation7 + $0x28] sm:$0xff]
          %v2084 = vld [vmem:[#allocation7 + $0x30] sm:$0xff]
          %v2085 = vld [vmem:[#allocation7 + $0x38] sm:$0xff]
          %v2086 = vld [vmem:[#allocation7 + $0x40] sm:$0xff]
          %v2087 = vld [vmem:[#allocation7 + $0x48] sm:$0xff]
          %v2088 = vld [vmem:[#allocation7 + $0x50] sm:$0xff]
          %v2089 = vld [vmem:[#allocation7 + $0x58] sm:$0xff]
          %v2090 = vld [vmem:[#allocation7 + $0x60] sm:$0xff]
          %v2091 = vld [vmem:[#allocation7 + $0x68] sm:$0xff]
          %v2092 = vld [vmem:[#allocation7 + $0x70] sm:$0xff]
          %v2093 = vld [vmem:[#allocation7 + $0x78] sm:$0xff]
          %v2094 = vld [vmem:[#allocation6] sm:$0xff]
          %v2095 = vld [vmem:[#allocation6 + $0x8] sm:$0xff]
          %v2096 = vld [vmem:[#allocation6 + $0x10] sm:$0xff]
          %v2097 = vld [vmem:[#allocation6 + $0x18] sm:$0xff]
          %v2098 = vld [vmem:[#allocation6 + $0x20] sm:$0xff]
          %v2099 = vld [vmem:[#allocation6 + $0x28] sm:$0xff]
          %v2100 = vld [vmem:[#allocation6 + $0x30] sm:$0xff]
          %v2101 = vld [vmem:[#allocation6 + $0x38] sm:$0xff]
          %v2102 = vld [vmem:[#allocation6 + $0x40] sm:$0xff]
          %v2103 = vld [vmem:[#allocation6 + $0x48] sm:$0xff]
          %v2104 = vld [vmem:[#allocation6 + $0x50] sm:$0xff]
          %v2105 = vld [vmem:[#allocation6 + $0x58] sm:$0xff]
          %v2106 = vld [vmem:[#allocation6 + $0x60] sm:$0xff]
          %v2107 = vld [vmem:[#allocation6 + $0x68] sm:$0xff]
          %v2108 = vld [vmem:[#allocation6 + $0x70] sm:$0xff]
          %v2109 = vld [vmem:[#allocation6 + $0x78] sm:$0xff]
          %v2110 = vrcp.pop %v2094
          %v2111 = vrcp.pop %v2095
          %v2112 = vrcp.pop %v2096
          %v2113 = vrcp.pop %v2097
          %v2114 = vrcp.pop %v2098
          %v2115 = vrcp.pop %v2099
          %v2116 = vrcp.pop %v2100
          %v2117 = vrcp.pop %v2101
          %v2118 = vrcp.pop %v2102
          %v2119 = vrcp.pop %v2103
          %v2120 = vrcp.pop %v2104
          %v2121 = vrcp.pop %v2105
          %v2122 = vrcp.pop %v2106
          %v2123 = vrcp.pop %v2107
          %v2124 = vrcp.pop %v2108
          %v2125 = vrcp.pop %v2109
          %2127 = vset.pattern.permute.xlu0 0
          %2128 = vperm.xlu0 %2127, %v2110
          %v2129 = vpop.permute.xlu0 %2128
          %2132 = vset.pattern.permute.xlu0 0
          %2133 = vperm.xlu0 %2132, %v2111
          %v2134 = vpop.permute.xlu0 %2133
          %2137 = vset.pattern.permute.xlu0 0
          %2138 = vperm.xlu0 %2137, %v2112
          %v2139 = vpop.permute.xlu0 %2138
          %2142 = vset.pattern.permute.xlu0 0
          %2143 = vperm.xlu0 %2142, %v2113
          %v2144 = vpop.permute.xlu0 %2143
          %2147 = vset.pattern.permute.xlu0 0
          %2148 = vperm.xlu0 %2147, %v2114
          %v2149 = vpop.permute.xlu0 %2148
          %2152 = vset.pattern.permute.xlu0 0
          %2153 = vperm.xlu0 %2152, %v2115
          %v2154 = vpop.permute.xlu0 %2153
          %2157 = vset.pattern.permute.xlu0 0
          %2158 = vperm.xlu0 %2157, %v2116
          %v2159 = vpop.permute.xlu0 %2158
          %2162 = vset.pattern.permute.xlu0 0
          %2163 = vperm.xlu0 %2162, %v2117
          %v2164 = vpop.permute.xlu0 %2163
          %2167 = vset.pattern.permute.xlu0 0
          %2168 = vperm.xlu0 %2167, %v2118
          %v2169 = vpop.permute.xlu0 %2168
          %2172 = vset.pattern.permute.xlu0 0
          %2173 = vperm.xlu0 %2172, %v2119
          %v2174 = vpop.permute.xlu0 %2173
          %2177 = vset.pattern.permute.xlu0 0
          %2178 = vperm.xlu0 %2177, %v2120
          %v2179 = vpop.permute.xlu0 %2178
          %2182 = vset.pattern.permute.xlu0 0
          %2183 = vperm.xlu0 %2182, %v2121
          %v2184 = vpop.permute.xlu0 %2183
          %2187 = vset.pattern.permute.xlu0 0
          %2188 = vperm.xlu0 %2187, %v2122
          %v2189 = vpop.permute.xlu0 %2188
          %2192 = vset.pattern.permute.xlu0 0
          %2193 = vperm.xlu0 %2192, %v2123
          %v2194 = vpop.permute.xlu0 %2193
          %2197 = vset.pattern.permute.xlu0 0
          %2198 = vperm.xlu0 %2197, %v2124
          %v2199 = vpop.permute.xlu0 %2198
          %2202 = vset.pattern.permute.xlu0 0
          %2203 = vperm.xlu0 %2202, %v2125
          %v2204 = vpop.permute.xlu0 %2203
          %v2206 = vmul.f32 %v2078, %v2129
          %v2207 = vmul.f32 %v2079, %v2134
          %v2208 = vmul.f32 %v2080, %v2139
          %v2209 = vmul.f32 %v2081, %v2144
          %v2210 = vmul.f32 %v2082, %v2149
          %v2211 = vmul.f32 %v2083, %v2154
          %v2212 = vmul.f32 %v2084, %v2159
          %v2213 = vmul.f32 %v2085, %v2164
          %v2214 = vmul.f32 %v2086, %v2169
          %v2215 = vmul.f32 %v2087, %v2174
          %v2216 = vmul.f32 %v2088, %v2179
          %v2217 = vmul.f32 %v2089, %v2184
          %v2218 = vmul.f32 %v2090, %v2189
          %v2219 = vmul.f32 %v2091, %v2194
          %v2220 = vmul.f32 %v2092, %v2199
          %v2221 = vmul.f32 %v2093, %v2204
          %v2222 = vld [vmem:[#allocation28] sm:$0xf]
          %v2223 = vld [vmem:[#allocation28 + $0x4] sm:$0xf]
          %v2224 = vld [vmem:[#allocation28 + $0x8] sm:$0xf]
          %v2225 = vld [vmem:[#allocation28 + $0xc] sm:$0xf]
          %v2226 = vpack.c.bf16 %v2207, %v2206
          %v2227 = vpack.c.bf16 %v2209, %v2208
          %v2228 = vpack.c.bf16 %v2211, %v2210
          %v2229 = vpack.c.bf16 %v2213, %v2212
          %v2230 = vpack.c.bf16 %v2215, %v2214
          %v2231 = vpack.c.bf16 %v2217, %v2216
          %v2232 = vpack.c.bf16 %v2219, %v2218
          %v2233 = vpack.c.bf16 %v2221, %v2220
          %v2234 = vld [vmem:[#allocation29] sm:$0xff]
          %v2235 = vld [vmem:[#allocation29 + $0x8] sm:$0xff]
          %v2236 = vld [vmem:[#allocation29 + $0x10] sm:$0xff]
          %v2237 = vld [vmem:[#allocation29 + $0x18] sm:$0xff]
          %2239 = vset.pattern.permute.xlu0 0
          %2240 = vperm.xlu0 %2239, %v2234
          %v2241 = vpop.permute.xlu0 %2240
          %2244 = vset.pattern.permute.xlu0 0
          %2245 = vperm.xlu0 %2244, %v2235
          %v2246 = vpop.permute.xlu0 %2245
          %2249 = vset.pattern.permute.xlu0 0
          %2250 = vperm.xlu0 %2249, %v2236
          %v2251 = vpop.permute.xlu0 %2250
          %2254 = vset.pattern.permute.xlu0 0
          %2255 = vperm.xlu0 %2254, %v2237
          %v2256 = vpop.permute.xlu0 %2255
          %v2262 = vunpack.c.l.b16 %v2222
          %v2263 = vunpack.c.l.b16 %v2223
          %v2264 = vunpack.c.l.b16 %v2224
          %v2265 = vunpack.c.l.b16 %v2225
          %v2266 = vpack.c.b16 %v2263, %v2262
          %v2267 = vpack.c.b16 %v2265, %v2264
          %v2269 = vsel %vm1350, %v2266, 0
          %v2272 = vsel %vm1350, %v2267, 0
          %v2275 = vsel %vm1350, %v2226, 0
          %v2278 = vsel %vm1350, %v2227, 0
          %v2281 = vsel %vm1350, %v2228, 0
          %v2284 = vsel %vm1350, %v2229, 0
          %v2287 = vsel %vm1350, %v2230, 0
          %v2290 = vsel %vm1350, %v2231, 0
          %v2293 = vsel %vm1350, %v2232, 0
          %v2296 = vsel %vm1350, %v2233, 0
          %2298 = vmatprep.subr.bf16.mxu0 0
          %2299 = vmatpush1.bf16.xpose.msra.mxu0 %v2275
          %2300 = vmatprep.subr.bf16.mxu0 0
          %2301 = vmatpush1.bf16.xpose.msra.mxu0 %v2278
          %2302 = vmatprep.subr.bf16.mxu0 0
          %2303 = vmatpush1.bf16.xpose.msra.mxu0 %v2281
          %2304 = vmatprep.subr.bf16.mxu0 0
          %2305 = vmatpush1.bf16.xpose.msra.mxu0 %v2284
          %2306 = vmatprep.subr.bf16.mxu0 0
          %2307 = vmatpush1.bf16.xpose.msra.mxu0 %v2287
          %2308 = vmatprep.subr.bf16.mxu0 0
          %2309 = vmatpush1.bf16.xpose.msra.mxu0 %v2290
          %2310 = vmatprep.subr.bf16.mxu0 0
          %2311 = vmatpush1.bf16.xpose.msra.mxu0 %v2293
          %2312 = vmatprep.subr.bf16.mxu0 0
          %2313 = vmatpush1.bf16.xpose.msra.mxu0 %v2296
          %2314 = vmatprep.subr.bf16.mxu0 0
          %2315 = vmatpush1.bf16.xpose.msra.mxu0 0
          %2316 = vmatprep.subr.bf16.mxu0 0
          %2317 = vmatpush1.bf16.xpose.msra.mxu0 0
          %2318 = vmatprep.subr.bf16.mxu0 0
          %2319 = vmatpush1.bf16.xpose.msra.mxu0 0
          %2320 = vmatprep.subr.bf16.mxu0 0
          %2321 = vmatpush1.bf16.xpose.msra.mxu0 0
          %2322 = vmatprep.subr.bf16.mxu0 0
          %2323 = vmatpush1.bf16.xpose.msra.mxu0 0
          %2324 = vmatprep.subr.bf16.mxu0 0
          %2325 = vmatpush1.bf16.xpose.msra.mxu0 0
          %2326 = vmatprep.subr.bf16.mxu0 0
          %2327 = vmatpush1.bf16.xpose.msra.mxu0 0
          %2328 = vmatprep.subr.bf16.mxu0 0
          %2329 = vmatpush1.bf16.xpose.msra.mxu0 0
          %2330 = vmatprep.mubr.bf16.mxu0 0
          %2331 = vmatmul.mubr.bf16.gmra.mrb[0].mxu0 %v2269
          %v2332 = vpop.f32.mrb[0].mxu0
          %v2333 = vadd.f32 %v2241, %v2332
          %v2334 = vpop.f32.mrb[0].mxu0
          %v2335 = vpop.f32.mrb[0].mxu0
          %v2336 = vadd.f32 %v2246, %v2335
          %v2337 = vpop.f32.mrb[0].mxu0
          %2338 = vmatprep.mubr.bf16.mxu0 0
          %2339 = vmatmul.mubr.bf16.gmra.mrb[0].mxu0 %v2272
          %v2340 = vpop.f32.mrb[0].mxu0
          %v2341 = vadd.f32 %v2251, %v2340
          %v2342 = vpop.f32.mrb[0].mxu0
          %v2343 = vpop.f32.mrb[0].mxu0
          %v2344 = vadd.f32 %v2256, %v2343
          %v2345 = vpop.f32.mrb[0].mxu0
          %2346 = vdwg.mxu0
          %v2347 = vld [vmem:[%s676] sm:$0xf]
          %v2348 = vld [vmem:[%s676 + $0x4] sm:$0xf]
          %v2349 = vld [vmem:[%s676 + $0x8] sm:$0xf]
          %v2350 = vld [vmem:[%s676 + $0xc] sm:$0xf]
          %v2351 = vunpack.c.l.bf16 %v2347
          %v2352 = vunpack.c.l.bf16 %v2348
          %v2353 = vunpack.c.l.bf16 %v2349
          %v2354 = vunpack.c.l.bf16 %v2350
          %v2355 = vadd.f32 %v2333, %v2351
          %v2356 = vadd.f32 %v2336, %v2352
          %v2357 = vadd.f32 %v2341, %v2353
          %v2358 = vadd.f32 %v2344, %v2354
          %v2359 = vpack.c.bf16 %v2356, %v2355
          %v2360 = vpack.c.bf16 %v2358, %v2357
          %v2363 = vunpack.c.l.b16 %v2359
          %v2364 = vunpack.c.h.b16 %v2359
          %v2365 = vunpack.c.l.b16 %v2360
          %v2366 = vunpack.c.h.b16 %v2360
          %v2367 = vpack.c.b16 %v2363, %v2363
          %v2368 = vpack.c.b16 %v2364, %v2364
          %v2369 = vpack.c.b16 %v2365, %v2365
          %v2370 = vpack.c.b16 %v2366, %v2366
          %2375 = vst [vmem:[%s822] sm:$0xf] %v2367
          %2376 = vst [vmem:[%s822 + $0x4] sm:$0xf] %v2368
          %2377 = vst [vmem:[%s822 + $0x8] sm:$0xf] %v2369
          %2378 = vst [vmem:[%s822 + $0xc] sm:$0xf] %v2370
        $region144: #{transform_mlmodel_forward.6} parent=75 // pred_fallthru
          _
        %s2379 = sand.u32 %s401, 1
        %s2380 = scalar_lea.sflag [#allocation10], %s2379
        %s2381 = sand.u32 %s401, 1
        %s2382 = smul.addr %s2381, 16
        %s2383 = scalar_lea.vmem [#allocation31], %s2382
        // Predicated region
        $region145: #{transform_mlmodel_forward.6} parent=75 // pred_check
          %p2384 = pneg %p411
        $region146: #{transform_mlmodel_forward.6} parent=75 // pred_check_branch
          %2386 = sbr.rel (%p2384) target = $region148
        $region147: #{transform_mlmodel_forward.6} parent=75 // pred_region
          %s2388 = ssub.s32 256, 256
          %2389 = vsyncadd %s2380, %s2388
          %s2390 = smul.addr %s49, 8
          %s2391 = sadd.s32 %s50, %s2390
          %s2392 = smul.addr %s2391, 64
          %s2393 = scalar_lea.hbm %s14, %s2392
          %s2394 = sshll.u32 %s2383, 4
          %s2395 = int_to_ptr.vmem [resolvable:$true] %s2394
          %2400 = dma.vmem_to_hbm [thread:$0]  %s2395, 256, %s2393, %s2380, 64, 128, 4
        $region148: #{transform_mlmodel_forward.6} parent=75 // pred_fallthru
          _
      $region76: #{transform_mlmodel_forward.6} parent=5 // pred_fallthru
        _
      %p2401 = scmp.le.s32.totalorder 2, %s39
      // Predicated region
      $region149: #{transform_mlmodel_forward.6} parent=5 // pred_check
        %p2402 = pneg %p2401
      $region150: #{transform_mlmodel_forward.6} parent=5 // pred_check_branch
        %2404 = sbr.rel (%p2402) target = $region152
      $region151: #{transform_mlmodel_forward.6} parent=5 // pred_region
        %s2405 = ssub.s32 %s39, 2
        // Predicated region
        $region153: #{transform_mlmodel_forward.6} parent=151 // pred_check
          %p2406 = pneg %p417
        $region154: #{transform_mlmodel_forward.6} parent=151 // pred_check_branch
          %2408 = sbr.rel (%p2406) target = $region156
        $region155: #{transform_mlmodel_forward.6} parent=151 // pred_region
          %s2409 = sand.u32 %s402, 1
          %s2410 = scalar_lea.sflag [#allocation10], %s2409
          %s2411 = sand.u32 %s402, 1
          %s2412 = smul.addr %s2411, 16
          %s2413 = scalar_lea.vmem [#allocation31], %s2412
          %2414 = dma.done %s2410, 256
        $region156: #{transform_mlmodel_forward.6} parent=151 // pred_fallthru
          _
      $region152: #{transform_mlmodel_forward.6} parent=5 // pred_fallthru
        _
    $region6: #{transform_mlmodel_forward.6} parent=1 // loop_footer
      %s43 = sadd.s32 1, %s39
    $region7: #{transform_mlmodel_forward.6} parent=1 // loop_footer_branch
      %38 = sbr.rel target = $region3
    $region8: #{transform_mlmodel_forward.6} parent=1 // loop_exit
      _
    %2415 = vsyncpa [#allocation9], 1
    %s2416 = scalar_lea.sflag [#allocation9], 1
    %2417 = vsyncpa %s2416, 1
    %2418 = vsyncpa [#allocation12], 1
    %s2419 = scalar_lea.sflag [#allocation12], 1
    %2420 = vsyncpa %s2419, 1
    %2421 = vsyncpa [#allocation15], 1
    %s2422 = scalar_lea.sflag [#allocation15], 1
    %2423 = vsyncpa %s2422, 1
    %2424 = vsyncpa [#allocation18], 1
    %s2425 = scalar_lea.sflag [#allocation18], 1
    %2426 = vsyncpa %s2425, 1
    %2427 = vsyncpa [#allocation21], 1
    %2428 = vsyncpa [#allocation24], 1
    %2429 = vsyncpa [#allocation27], 1
    %2430 = vsyncpa [#allocation30], 1
    %2431 = vsyncpa [#allocation10], 1
    %s2432 = scalar_lea.sflag [#allocation10], 1
    %2433 = vsyncpa %s2432, 1

// kernel: transform_mlmodel_forward.8
$region0: #{transform_mlmodel_forward.8}
  #allocation0 [shape = 'u32[]', space=smem, size = 0x4, offset = 0x4, fixed_abs, tag = 'smem constant byte address 0x4 - core index']
  #allocation1 [shape = 'u32[144,128]{1,0:T(1,128)}', space=vmem, size = 0x12000, scoped, tag = 'internal scratch']
  %s0 = inlined_call_operand.hbm [shape: bf16[2,32,384], index: 0, kind: input, shape index: {}]
  %s1 = inlined_call_operand.hbm [shape: bf16[9,32,32], index: 1, kind: input, shape index: {}]
  %s2 = inlined_call_operand.hbm [shape: f32[32,1], index: 2, kind: input, shape index: {}]
  %s3 = inlined_call_operand.hbm [shape: f32[2,32,288], index: 3, kind: output, shape index: {}]
  %s4 = sld [smem:[#allocation0]]
  $region57: #{transform_mlmodel_forward.8} parent=0
    _
  %s6 = ssub.s32 1, %s4
  %s7 = scalar_select 0, %s6, %s4
  $region1: #{transform_mlmodel_forward.8} parent=0
    #allocation2 [shape = 'u8[49152]{0}', space=vmem, size = 0xc000, scoped, tag = 'input window, operand 0']
    #allocation3 [shape = 's32[2]{0}', space=sflag, size = 0x8, scoped, tag = 'scoped memory for transform_mlmodel_forward.8']
    #allocation4 [shape = 's32[2]{0}', space=sflag, size = 0x8, scoped, tag = 'scoped memory for transform_mlmodel_forward.8']
    #allocation5 [shape = 'u8[73728]{0}', space=vmem, size = 0x12000, scoped, tag = 'input window, operand 1, single buffered']
    #allocation6 [shape = 's32[1]{0}', space=sflag, size = 0x4, scoped, tag = 'scoped memory for transform_mlmodel_forward.8']
    #allocation7 [shape = 'u8[16384]{0}', space=vmem, size = 0x4000, scoped, tag = 'input window, operand 2, single buffered']
    #allocation8 [shape = 'u8[98304]{0}', space=vmem, size = 0x18000, scoped, tag = 'output window, operand 0']
    %8 = vsyncpa [#allocation3], 0
    %s9 = scalar_lea.sflag [#allocation3], 1
    %10 = vsyncpa %s9, 0
    %11 = vsyncpa [#allocation6], 0
    %12 = vsyncpa [#allocation4], 0
    %s13 = scalar_lea.sflag [#allocation4], 1
    %14 = vsyncpa %s13, 0
    loop: start=0, step=1, limit=4
    $region2: #{transform_mlmodel_forward.8} parent=1 // loop_pre_header
      _
    $region3: #{transform_mlmodel_forward.8} parent=1 // loop_header
      %s16 = sphi 0, %s20
      %p17 = scmp.ge.s32.totalorder %s16, 4
      %s23 = sphi 0, %s35
      %s24 = sphi 0, %s31
      %s25 = sphi 0, %s23
      %s26 = sphi 0, %s24
      %s27 = sphi 0, %s25
      %s28 = sphi 0, %s26
      %s38 = sphi 0, %s40
      %s41 = sphi 0, %s38
      %s42 = sphi 0, %s41
      %s58 = sphi 0, %s42
      %s64 = sphi 0, %s66
      %s67 = sphi 0, %s64
      %s68 = sphi 0, %s67
      %s84 = sphi 0, %s68
      %s90 = sphi 0, %s92
      %s93 = sphi 0, %s90
      %s94 = sphi 0, %s93
      %s110 = sphi 0, %s94
      %s118 = sphi 0, %s120
      %s121 = sphi 0, %s118
      %s122 = sphi 0, %s121
      %s138 = sphi 0, %s122
    $region4: #{transform_mlmodel_forward.8} parent=1 // loop_header_branch
      %19 = sbr.rel (%p17) target = $region8
    $region5: #{transform_mlmodel_forward.8} parent=1 // loop_body
      %s21 = ssub.s32 %s16, 1
      %s22 = ssub.s32 %s16, 2
      %s29 = sadd.s32 1, %s24
      %p30 = scmp.ge.s32.totalorder %s29, 1
      %s31 = scalar_select %p30, 0, %s29
      %s32 = sadd.s32 1, %s23
      %s33 = scalar_select %p30, %s32, %s23
      %p34 = scmp.ge.s32.totalorder %s33, 2
      %s35 = scalar_select %p34, 0, %s33
      %s36 = ssub.s32 %s23, %s35
      %p37 = scmp.eq.s32.totalorder %s36, 0
      %s39 = sadd.s32 %s38, 1
      %s40 = scalar_select %p37, %s38, %s39
      %p43 = pneg %p37
      %p44 = scmp.eq.s32.totalorder %s16, 1
      %p45 = por %p43, %p44
      %p46 = scmp.ne.s32.totalorder %s38, %s41
      %p47 = scmp.eq.s32.totalorder %s16, 0
      %p48 = por %p46, %p47
      %p49 = scmp.ne.s32.totalorder %s38, %s41
      %p50 = scmp.eq.s32.totalorder %s21, 1
      %p51 = por %p49, %p50
      %p52 = scmp.ne.s32.totalorder %s41, %s42
      %p53 = scmp.eq.s32.totalorder %s21, 0
      %p54 = por %p52, %p53
      %p55 = scmp.ne.s32.totalorder %s41, %s42
      %p56 = scmp.eq.s32.totalorder %s22, 1
      %p57 = por %p55, %p56
      %p59 = scmp.ne.s32.totalorder %s42, %s58
      %p60 = scmp.eq.s32.totalorder %s22, 0
      %p61 = por %p59, %p60
      %s62 = ssub.s32 %s24, %s31
      %p63 = scmp.eq.s32.totalorder %s62, 0
      %s65 = sadd.s32 %s64, 1
      %s66 = scalar_select %p63, %s64, %s65
      %p69 = pneg %p63
      %p70 = scmp.eq.s32.totalorder %s16, 1
      %p71 = por %p69, %p70
      %p72 = scmp.ne.s32.totalorder %s64, %s67
      %p73 = scmp.eq.s32.totalorder %s16, 0
      %p74 = por %p72, %p73
      %p75 = scmp.ne.s32.totalorder %s64, %s67
      %p76 = scmp.eq.s32.totalorder %s21, 1
      %p77 = por %p75, %p76
      %p78 = scmp.ne.s32.totalorder %s67, %s68
      %p79 = scmp.eq.s32.totalorder %s21, 0
      %p80 = por %p78, %p79
      %p81 = scmp.ne.s32.totalorder %s67, %s68
      %p82 = scmp.eq.s32.totalorder %s22, 1
      %p83 = por %p81, %p82
      %p85 = scmp.ne.s32.totalorder %s68, %s84
      %p86 = scmp.eq.s32.totalorder %s22, 0
      %p87 = por %p85, %p86
      %s88 = ssub.s32 %s24, %s31
      %p89 = scmp.eq.s32.totalorder %s88, 0
      %s91 = sadd.s32 %s90, 1
      %s92 = scalar_select %p89, %s90, %s91
      %p95 = pneg %p89
      %p96 = scmp.eq.s32.totalorder %s16, 1
      %p97 = por %p95, %p96
      %p98 = scmp.ne.s32.totalorder %s90, %s93
      %p99 = scmp.eq.s32.totalorder %s16, 0
      %p100 = por %p98, %p99
      %p101 = scmp.ne.s32.totalorder %s90, %s93
      %p102 = scmp.eq.s32.totalorder %s21, 1
      %p103 = por %p101, %p102
      %p104 = scmp.ne.s32.totalorder %s93, %s94
      %p105 = scmp.eq.s32.totalorder %s21, 0
      %p106 = por %p104, %p105
      %p107 = scmp.ne.s32.totalorder %s93, %s94
      %p108 = scmp.eq.s32.totalorder %s22, 1
      %p109 = por %p107, %p108
      %p111 = scmp.ne.s32.totalorder %s94, %s110
      %p112 = scmp.eq.s32.totalorder %s22, 0
      %p113 = por %p111, %p112
      %s114 = ssub.s32 %s23, %s35
      %s115 = ssub.s32 %s24, %s31
      %s116 = sor.u32 %s114, %s115
      %p117 = scmp.eq.s32.totalorder %s116, 0
      %s119 = sadd.s32 %s118, 1
      %s120 = scalar_select %p117, %s118, %s119
      %p123 = pneg %p117
      %p124 = scmp.eq.s32.totalorder %s16, 1
      %p125 = por %p123, %p124
      %p126 = scmp.ne.s32.totalorder %s118, %s121
      %p127 = scmp.eq.s32.totalorder %s16, 0
      %p128 = por %p126, %p127
      %p129 = scmp.ne.s32.totalorder %s118, %s121
      %p130 = scmp.eq.s32.totalorder %s21, 1
      %p131 = por %p129, %p130
      %p132 = scmp.ne.s32.totalorder %s121, %s122
      %p133 = scmp.eq.s32.totalorder %s21, 0
      %p134 = por %p132, %p133
      %p135 = scmp.ne.s32.totalorder %s121, %s122
      %p136 = scmp.eq.s32.totalorder %s22, 1
      %p137 = por %p135, %p136
      %p139 = scmp.ne.s32.totalorder %s122, %s138
      %p140 = scmp.eq.s32.totalorder %s22, 0
      %p141 = por %p139, %p140
      %p142 = scmp.le.s32.totalorder 1, %s16
      %p143 = scmp.lt.s32.totalorder %s16, 3
      %p144 = pnand %p142, %p143
      %p145 = pneg %p144
      // Predicated region
      $region9: #{transform_mlmodel_forward.8} parent=5 // pred_check
        _
      $region10: #{transform_mlmodel_forward.8} parent=5 // pred_check_branch
        %147 = sbr.rel (%p144) target = $region12
      $region11: #{transform_mlmodel_forward.8} parent=5 // pred_region
        %s148 = ssub.s32 %s16, 1
        // Predicated region
        $region13: #{transform_mlmodel_forward.8} parent=11 // pred_check
          %p149 = pneg %p80
        $region14: #{transform_mlmodel_forward.8} parent=11 // pred_check_branch
          %151 = sbr.rel (%p149) target = $region16
        $region15: #{transform_mlmodel_forward.8} parent=11 // pred_region
          %s152 = smul.u32 4, %s26
          %s154 = ssub.s32 2304, 2304
          %155 = vsyncadd [#allocation6], %s154
          %s156 = smul.addr %s152, 64
          %s157 = scalar_lea.hbm %s1, %s156
          %s158 = sshll.u32 [#allocation5], 4
          %s159 = int_to_ptr.vmem [resolvable:$true] %s158
          %164 = dma.hbm_to_vmem [thread:$0]  %s157, 2304, %s159, [#allocation6], 64, 64, 4
        $region16: #{transform_mlmodel_forward.8} parent=11 // pred_fallthru
          _
        // Predicated region
        $region17: #{transform_mlmodel_forward.8} parent=11 // pred_check
          %p165 = pneg %p106
        $region18: #{transform_mlmodel_forward.8} parent=11 // pred_check_branch
          %167 = sbr.rel (%p165) target = $region20
        $region19: #{transform_mlmodel_forward.8} parent=11 // pred_region
          %s168 = smul.u32 4, %s26
          %s170 = ssub.s32 512, 512
          %171 = vsyncadd [#allocation6], %s170
          %s172 = smul.addr %s168, 128
          %s173 = scalar_lea.hbm %s2, %s172
          %s174 = sshll.u32 [#allocation7], 4
          %s175 = int_to_ptr.vmem [resolvable:$true] %s174
          %180 = dma.hbm_to_vmem [thread:$0]  %s173, 512, %s175, [#allocation6], 128, 128, 8
        $region20: #{transform_mlmodel_forward.8} parent=11 // pred_fallthru
          _
      $region12: #{transform_mlmodel_forward.8} parent=5 // pred_fallthru
        _
      %p181 = scmp.lt.s32.totalorder %s16, 2
      // Predicated region
      $region21: #{transform_mlmodel_forward.8} parent=5 // pred_check
        %p182 = pneg %p181
      $region22: #{transform_mlmodel_forward.8} parent=5 // pred_check_branch
        %184 = sbr.rel (%p182) target = $region24
      $region23: #{transform_mlmodel_forward.8} parent=5 // pred_region
        // Predicated region
        $region25: #{transform_mlmodel_forward.8} parent=23 // pred_check
          %p185 = pneg %p48
        $region26: #{transform_mlmodel_forward.8} parent=23 // pred_check_branch
          %187 = sbr.rel (%p185) target = $region28
        $region27: #{transform_mlmodel_forward.8} parent=23 // pred_region
          %s188 = sand.u32 %s38, 1
          %s189 = scalar_lea.sflag [#allocation3], %s188
          %s190 = sand.u32 %s38, 1
          %s191 = smul.addr %s190, 48
          %s192 = scalar_lea.vmem [#allocation2], %s191
          %s194 = ssub.s32 768, 768
          %195 = vsyncadd %s189, %s194
          %s196 = smul.addr %s23, 12
          %s197 = smul.addr %s196, 64
          %s198 = scalar_lea.hbm %s0, %s197
          %s199 = sshll.u32 %s192, 4
          %s200 = int_to_ptr.vmem [resolvable:$true] %s199
          %205 = dma.hbm_to_vmem [thread:$0]  %s198, 768, %s200, %s189, 192, 192, 12
        $region28: #{transform_mlmodel_forward.8} parent=23 // pred_fallthru
          _
      $region24: #{transform_mlmodel_forward.8} parent=5 // pred_fallthru
        _
      %p206 = scmp.le.s32.totalorder 1, %s16
      %p207 = scmp.lt.s32.totalorder %s16, 3
      %p208 = pnand %p206, %p207
      %p209 = pneg %p208
      // Predicated region
      $region29: #{transform_mlmodel_forward.8} parent=5 // pred_check
        _
      $region30: #{transform_mlmodel_forward.8} parent=5 // pred_check_branch
        %211 = sbr.rel (%p208) target = $region32
      $region31: #{transform_mlmodel_forward.8} parent=5 // pred_region
        %s212 = ssub.s32 %s16, 1
        %s213 = sand.u32 %s41, 1
        %s214 = scalar_lea.sflag [#allocation3], %s213
        %s215 = sand.u32 %s41, 1
        %s216 = smul.addr %s215, 48
        %s217 = scalar_lea.vmem [#allocation2], %s216
        // Predicated region
        $region33: #{transform_mlmodel_forward.8} parent=31 // pred_check
          %p218 = pneg %p54
        $region34: #{transform_mlmodel_forward.8} parent=31 // pred_check_branch
          %220 = sbr.rel (%p218) target = $region36
        $region35: #{transform_mlmodel_forward.8} parent=31 // pred_region
          %221 = dma.done %s214, 768
        $region36: #{transform_mlmodel_forward.8} parent=31 // pred_fallthru
          _
        // Predicated region
        $region37: #{transform_mlmodel_forward.8} parent=31 // pred_check
          %p222 = pneg %p80
        $region38: #{transform_mlmodel_forward.8} parent=31 // pred_check_branch
          %224 = sbr.rel (%p222) target = $region40
        $region39: #{transform_mlmodel_forward.8} parent=31 // pred_region
          %225 = dma.done [#allocation6], 2304
        $region40: #{transform_mlmodel_forward.8} parent=31 // pred_fallthru
          _
        // Predicated region
        $region41: #{transform_mlmodel_forward.8} parent=31 // pred_check
          %p226 = pneg %p106
        $region42: #{transform_mlmodel_forward.8} parent=31 // pred_check_branch
          %228 = sbr.rel (%p226) target = $region44
        $region43: #{transform_mlmodel_forward.8} parent=31 // pred_region
          %229 = dma.done [#allocation6], 512
        $region44: #{transform_mlmodel_forward.8} parent=31 // pred_fallthru
          _
        %s230 = sand.u32 %s41, 1
        %s231 = scalar_lea.sflag [#allocation3], %s230
        %s232 = sand.u32 %s41, 1
        %s233 = smul.addr %s232, 48
        %s234 = scalar_lea.vmem [#allocation2], %s233
        %p235 = pneg %p54
        %p236 = pneg %p51
        %p237 = pneg %p80
        %p238 = pneg %p77
        %p239 = pneg %p106
        %p240 = pneg %p103
        %p241 = pneg %p134
        %p242 = pneg %p131
        %s243 = sand.u32 %s121, 1
        %s244 = scalar_lea.sflag [#allocation4], %s243
        %s245 = sand.u32 %s121, 1
        %s246 = smul.addr %s245, 96
        %s247 = scalar_lea.vmem [#allocation8], %s246
        %s248 = smul.u32 4, %s26
        %s249 = smul.u32 4, %s26
        %s250 = smul.u32 4, %s26
        %v252 = vld [vmem:[%s217] sm:$0xff]
        %v253 = vld [vmem:[%s217 + $0x8] sm:$0xf]
        %v254 = vld [vmem:[%s217 + $0xc] sm:$0xff]
        %v255 = vld [vmem:[%s217 + $0x14] sm:$0xf]
        %v256 = vld [vmem:[%s217 + $0x18] sm:$0xff]
        %v257 = vld [vmem:[%s217 + $0x20] sm:$0xf]
        %v258 = vld [vmem:[%s217 + $0x24] sm:$0xff]
        %v259 = vld [vmem:[%s217 + $0x2c] sm:$0xf]
        %v260 = vld [vmem:[#allocation5] sm:$0xf]
        %v261 = vld [vmem:[#allocation5 + $0x4] sm:$0xf]
        %v262 = vld [vmem:[#allocation5 + $0x8] sm:$0xf]
        %v263 = vld [vmem:[#allocation5 + $0xc] sm:$0xf]
        %s264 = scalar_lea.vmem [#allocation5], 16
        %v265 = vld [vmem:[%s264] sm:$0xf]
        %v266 = vld [vmem:[%s264 + $0x4] sm:$0xf]
        %v267 = vld [vmem:[%s264 + $0x8] sm:$0xf]
        %v268 = vld [vmem:[%s264 + $0xc] sm:$0xf]
        %v273 = vunpack.c.l.b16 %v265
        %v274 = vunpack.c.l.b16 %v266
        %v275 = vunpack.c.l.b16 %v267
        %v276 = vunpack.c.l.b16 %v268
        %v277 = vpack.c.b16 %v274, %v273
        %v278 = vpack.c.b16 %v276, %v275
        %v287 = vunpack.c.l.b16 %v252
        %v288 = vunpack.c.h.b16 %v252
        %v289 = vunpack.c.l.b16 %v253
        %v290 = vunpack.c.l.b16 %v254
        %v291 = vunpack.c.h.b16 %v254
        %v292 = vunpack.c.l.b16 %v255
        %v293 = vunpack.c.l.b16 %v256
        %v294 = vunpack.c.h.b16 %v256
        %v295 = vunpack.c.l.b16 %v257
        %v296 = vunpack.c.l.b16 %v258
        %v297 = vunpack.c.h.b16 %v258
        %v298 = vunpack.c.l.b16 %v259
        %v299 = vpack.c.b16 %v290, %v287
        %v300 = vpack.c.b16 %v291, %v288
        %v301 = vpack.c.b16 %v292, %v289
        %v302 = vpack.c.b16 %v296, %v293
        %v303 = vpack.c.b16 %v297, %v294
        %v304 = vpack.c.b16 %v298, %v295
        %305 = vrot.lane.b32.xlu0 %v299, 127
        %v306 = vpop.permute.xlu0 %305
        %307 = vrot.lane.b32.xlu0 %v300, 127
        %v308 = vpop.permute.xlu0 %307
        %309 = vrot.lane.b32.xlu0 %v301, 127
        %v310 = vpop.permute.xlu0 %309
        %311 = vrot.lane.b32.xlu0 %v302, 127
        %v312 = vpop.permute.xlu0 %311
        %313 = vrot.lane.b32.xlu0 %v303, 127
        %v314 = vpop.permute.xlu0 %313
        %315 = vrot.lane.b32.xlu0 %v304, 127
        %v316 = vpop.permute.xlu0 %315
        %vm317 = vcmask 1039360
        %v318 = vsel %vm317, %v306, %v308
        %v319 = vsel %vm317, %v308, %v310
        %v320 = vsel %vm317, %v312, %v314
        %v321 = vsel %vm317, %v314, %v316
        %vm328 = vcmask 261120
        %v330 = vsel %vm328, %v277, 0
        %v333 = vsel %vm328, %v278, 0
        %335 = vmatprep.subr.bf16.mxu0 %v319
        %336 = vmatpush1.bf16.msra.mxu0 %v318
        %337 = vmatprep.subr.bf16.mxu0 %v321
        %338 = vmatpush1.bf16.msra.mxu0 %v320
        %339 = vmatprep.subr.bf16.mxu0 0
        %340 = vmatpush1.bf16.msra.mxu0 0
        %341 = vmatprep.subr.bf16.mxu0 0
        %342 = vmatpush1.bf16.msra.mxu0 0
        %343 = vmatprep.subr.bf16.mxu0 0
        %344 = vmatpush1.bf16.msra.mxu0 0
        %345 = vmatprep.subr.bf16.mxu0 0
        %346 = vmatpush1.bf16.msra.mxu0 0
        %347 = vmatprep.subr.bf16.mxu0 0
        %348 = vmatpush1.bf16.msra.mxu0 0
        %349 = vmatprep.subr.bf16.mxu0 0
        %350 = vmatpush1.bf16.msra.mxu0 0
        %351 = vmatprep.subr.bf16.mxu0 0
        %352 = vmatpush1.bf16.msra.mxu0 0
        %353 = vmatprep.subr.bf16.mxu0 0
        %354 = vmatpush1.bf16.msra.mxu0 0
        %355 = vmatprep.subr.bf16.mxu0 0
        %356 = vmatpush1.bf16.msra.mxu0 0
        %357 = vmatprep.subr.bf16.mxu0 0
        %358 = vmatpush1.bf16.msra.mxu0 0
        %359 = vmatprep.subr.bf16.mxu0 0
        %360 = vmatpush1.bf16.msra.mxu0 0
        %361 = vmatprep.subr.bf16.mxu0 0
        %362 = vmatpush1.bf16.msra.mxu0 0
        %363 = vmatprep.subr.bf16.mxu0 0
        %364 = vmatpush1.bf16.msra.mxu0 0
        %365 = vmatprep.subr.bf16.mxu0 0
        %366 = vmatpush1.bf16.msra.mxu0 0
        %367 = vmatprep.mubr.bf16.mxu0 0
        %368 = vmatmul.mubr.bf16.gmra.mrb[0].mxu0 %v330
        %v369 = vpop.f32.mrb[0].mxu0
        %v370 = vadd.f32 0.0, %v369
        %v371 = vpop.f32.mrb[0].mxu0
        %v372 = vadd.f32 0.0, %v371
        %v373 = vpop.f32.mrb[0].mxu0
        %v374 = vadd.f32 0.0, %v373
        %v375 = vpop.f32.mrb[0].mxu0
        %v376 = vadd.f32 0.0, %v375
        %377 = vmatprep.mubr.bf16.mxu0 0
        %378 = vmatmul.mubr.bf16.gmra.mrb[0].mxu0 %v333
        %v379 = vpop.f32.mrb[0].mxu0
        %v380 = vadd.f32 0.0, %v379
        %v381 = vpop.f32.mrb[0].mxu0
        %v382 = vadd.f32 0.0, %v381
        %v383 = vpop.f32.mrb[0].mxu0
        %v384 = vadd.f32 0.0, %v383
        %v385 = vpop.f32.mrb[0].mxu0
        %v386 = vadd.f32 0.0, %v385
        %387 = vdwg.mxu0
        %388 = vmatprep.subr.bf16.mxu0 0
        %389 = vmatpush1.bf16.msra.mxu0 %v310
        %390 = vmatprep.subr.bf16.mxu0 0
        %391 = vmatpush1.bf16.msra.mxu0 %v316
        %392 = vmatprep.subr.bf16.mxu0 0
        %393 = vmatpush1.bf16.msra.mxu0 0
        %394 = vmatprep.subr.bf16.mxu0 0
        %395 = vmatpush1.bf16.msra.mxu0 0
        %396 = vmatprep.subr.bf16.mxu0 0
        %397 = vmatpush1.bf16.msra.mxu0 0
        %398 = vmatprep.subr.bf16.mxu0 0
        %399 = vmatpush1.bf16.msra.mxu0 0
        %400 = vmatprep.subr.bf16.mxu0 0
        %401 = vmatpush1.bf16.msra.mxu0 0
        %402 = vmatprep.subr.bf16.mxu0 0
        %403 = vmatpush1.bf16.msra.mxu0 0
        %404 = vmatprep.subr.bf16.mxu0 0
        %405 = vmatpush1.bf16.msra.mxu0 0
        %406 = vmatprep.subr.bf16.mxu0 0
        %407 = vmatpush1.bf16.msra.mxu0 0
        %408 = vmatprep.subr.bf16.mxu0 0
        %409 = vmatpush1.bf16.msra.mxu0 0
        %410 = vmatprep.subr.bf16.mxu0 0
        %411 = vmatpush1.bf16.msra.mxu0 0
        %412 = vmatprep.subr.bf16.mxu0 0
        %413 = vmatpush1.bf16.msra.mxu0 0
        %414 = vmatprep.subr.bf16.mxu0 0
        %415 = vmatpush1.bf16.msra.mxu0 0
        %416 = vmatprep.subr.bf16.mxu0 0
        %417 = vmatpush1.bf16.msra.mxu0 0
        %418 = vmatprep.subr.bf16.mxu0 0
        %419 = vmatpush1.bf16.msra.mxu0 0
        %420 = vmatprep.mubr.bf16.mxu0 0
        %421 = vmatmul.mubr.bf16.gmra.mrb[0].mxu0 %v330
        %v422 = vpop.f32.mrb[0].mxu0
        %v423 = vadd.f32 0.0, %v422
        %v424 = vpop.f32.mrb[0].mxu0
        %v425 = vpop.f32.mrb[0].mxu0
        %v426 = vadd.f32 0.0, %v425
        %v427 = vpop.f32.mrb[0].mxu0
        %428 = vmatprep.mubr.bf16.mxu0 0
        %429 = vmatmul.mubr.bf16.gmra.mrb[0].mxu0 %v333
        %v430 = vpop.f32.mrb[0].mxu0
        %v431 = vadd.f32 0.0, %v430
        %v432 = vpop.f32.mrb[0].mxu0
        %v433 = vpop.f32.mrb[0].mxu0
        %v434 = vadd.f32 0.0, %v433
        %v435 = vpop.f32.mrb[0].mxu0
        %436 = vdwg.mxu0
        %v441 = vunpack.c.l.b16 %v260
        %v442 = vunpack.c.l.b16 %v261
        %v443 = vunpack.c.l.b16 %v262
        %v444 = vunpack.c.l.b16 %v263
        %v445 = vpack.c.b16 %v442, %v441
        %v446 = vpack.c.b16 %v444, %v443
        %v454 = vsel %vm328, %v445, 0
        %v457 = vsel %vm328, %v446, 0
        %459 = vmatprep.subr.bf16.mxu0 %v300
        %460 = vmatpush1.bf16.msra.mxu0 %v299
        %461 = vmatprep.subr.bf16.mxu0 %v303
        %462 = vmatpush1.bf16.msra.mxu0 %v302
        %463 = vmatprep.subr.bf16.mxu0 0
        %464 = vmatpush1.bf16.msra.mxu0 0
        %465 = vmatprep.subr.bf16.mxu0 0
        %466 = vmatpush1.bf16.msra.mxu0 0
        %467 = vmatprep.subr.bf16.mxu0 0
        %468 = vmatpush1.bf16.msra.mxu0 0
        %469 = vmatprep.subr.bf16.mxu0 0
        %470 = vmatpush1.bf16.msra.mxu0 0
        %471 = vmatprep.subr.bf16.mxu0 0
        %472 = vmatpush1.bf16.msra.mxu0 0
        %473 = vmatprep.subr.bf16.mxu0 0
        %474 = vmatpush1.bf16.msra.mxu0 0
        %475 = vmatprep.subr.bf16.mxu0 0
        %476 = vmatpush1.bf16.msra.mxu0 0
        %477 = vmatprep.subr.bf16.mxu0 0
        %478 = vmatpush1.bf16.msra.mxu0 0
        %479 = vmatprep.subr.bf16.mxu0 0
        %480 = vmatpush1.bf16.msra.mxu0 0
        %481 = vmatprep.subr.bf16.mxu0 0
        %482 = vmatpush1.bf16.msra.mxu0 0
        %483 = vmatprep.subr.bf16.mxu0 0
        %484 = vmatpush1.bf16.msra.mxu0 0
        %485 = vmatprep.subr.bf16.mxu0 0
        %486 = vmatpush1.bf16.msra.mxu0 0
        %487 = vmatprep.subr.bf16.mxu0 0
        %488 = vmatpush1.bf16.msra.mxu0 0
        %489 = vmatprep.subr.bf16.mxu0 0
        %490 = vmatpush1.bf16.msra.mxu0 0
        %491 = vmatprep.mubr.bf16.mxu0 0
        %492 = vmatmul.mubr.bf16.gmra.mrb[0].mxu0 %v454
        %v493 = vpop.f32.mrb[0].mxu0
        %v494 = vadd.f32 %v370, %v493
        %v495 = vpop.f32.mrb[0].mxu0
        %v496 = vadd.f32 %v372, %v495
        %v497 = vpop.f32.mrb[0].mxu0
        %v498 = vadd.f32 %v374, %v497
        %v499 = vpop.f32.mrb[0].mxu0
        %v500 = vadd.f32 %v376, %v499
        %501 = vmatprep.mubr.bf16.mxu0 0
        %502 = vmatmul.mubr.bf16.gmra.mrb[0].mxu0 %v457
        %v503 = vpop.f32.mrb[0].mxu0
        %v504 = vadd.f32 %v380, %v503
        %v505 = vpop.f32.mrb[0].mxu0
        %v506 = vadd.f32 %v382, %v505
        %v507 = vpop.f32.mrb[0].mxu0
        %v508 = vadd.f32 %v384, %v507
        %v509 = vpop.f32.mrb[0].mxu0
        %v510 = vadd.f32 %v386, %v509
        %511 = vdwg.mxu0
        %512 = vmatprep.subr.bf16.mxu0 0
        %513 = vmatpush1.bf16.msra.mxu0 %v301
        %514 = vmatprep.subr.bf16.mxu0 0
        %515 = vmatpush1.bf16.msra.mxu0 %v304
        %516 = vmatprep.subr.bf16.mxu0 0
        %517 = vmatpush1.bf16.msra.mxu0 0
        %518 = vmatprep.subr.bf16.mxu0 0
        %519 = vmatpush1.bf16.msra.mxu0 0
        %520 = vmatprep.subr.bf16.mxu0 0
        %521 = vmatpush1.bf16.msra.mxu0 0
        %522 = vmatprep.subr.bf16.mxu0 0
        %523 = vmatpush1.bf16.msra.mxu0 0
        %524 = vmatprep.subr.bf16.mxu0 0
        %525 = vmatpush1.bf16.msra.mxu0 0
        %526 = vmatprep.subr.bf16.mxu0 0
        %527 = vmatpush1.bf16.msra.mxu0 0
        %528 = vmatprep.subr.bf16.mxu0 0
        %529 = vmatpush1.bf16.msra.mxu0 0
        %530 = vmatprep.subr.bf16.mxu0 0
        %531 = vmatpush1.bf16.msra.mxu0 0
        %532 = vmatprep.subr.bf16.mxu0 0
        %533 = vmatpush1.bf16.msra.mxu0 0
        %534 = vmatprep.subr.bf16.mxu0 0
        %535 = vmatpush1.bf16.msra.mxu0 0
        %536 = vmatprep.subr.bf16.mxu0 0
        %537 = vmatpush1.bf16.msra.mxu0 0
        %538 = vmatprep.subr.bf16.mxu0 0
        %539 = vmatpush1.bf16.msra.mxu0 0
        %540 = vmatprep.subr.bf16.mxu0 0
        %541 = vmatpush1.bf16.msra.mxu0 0
        %542 = vmatprep.subr.bf16.mxu0 0
        %543 = vmatpush1.bf16.msra.mxu0 0
        %544 = vmatprep.mubr.bf16.mxu0 0
        %545 = vmatmul.mubr.bf16.gmra.mrb[0].mxu0 %v454
        %v546 = vpop.f32.mrb[0].mxu0
        %v547 = vadd.f32 %v423, %v546
        %v548 = vpop.f32.mrb[0].mxu0
        %v549 = vpop.f32.mrb[0].mxu0
        %v550 = vadd.f32 %v426, %v549
        %v551 = vpop.f32.mrb[0].mxu0
        %552 = vmatprep.mubr.bf16.mxu0 0
        %553 = vmatmul.mubr.bf16.gmra.mrb[0].mxu0 %v457
        %v554 = vpop.f32.mrb[0].mxu0
        %v555 = vadd.f32 %v431, %v554
        %v556 = vpop.f32.mrb[0].mxu0
        %v557 = vpop.f32.mrb[0].mxu0
        %v558 = vadd.f32 %v434, %v557
        %v559 = vpop.f32.mrb[0].mxu0
        %560 = vdwg.mxu0
        %s561 = scalar_lea.vmem [#allocation5], 32
        %v562 = vld [vmem:[%s561] sm:$0xf]
        %v563 = vld [vmem:[%s561 + $0x4] sm:$0xf]
        %v564 = vld [vmem:[%s561 + $0x8] sm:$0xf]
        %v565 = vld [vmem:[%s561 + $0xc] sm:$0xf]
        %v570 = vunpack.c.l.b16 %v562
        %v571 = vunpack.c.l.b16 %v563
        %v572 = vunpack.c.l.b16 %v564
        %v573 = vunpack.c.l.b16 %v565
        %v574 = vpack.c.b16 %v571, %v570
        %v575 = vpack.c.b16 %v573, %v572
        %576 = vrot.lane.b32.xlu0 %v299, 126
        %v577 = vpop.permute.xlu0 %576
        %578 = vrot.lane.b32.xlu0 %v300, 126
        %v579 = vpop.permute.xlu0 %578
        %580 = vrot.lane.b32.xlu0 %v301, 126
        %v581 = vpop.permute.xlu0 %580
        %582 = vrot.lane.b32.xlu0 %v302, 126
        %v583 = vpop.permute.xlu0 %582
        %584 = vrot.lane.b32.xlu0 %v303, 126
        %v585 = vpop.permute.xlu0 %584
        %586 = vrot.lane.b32.xlu0 %v304, 126
        %v587 = vpop.permute.xlu0 %586
        %vm588 = vcmask 1031168
        %v589 = vsel %vm588, %v577, %v579
        %v590 = vsel %vm588, %v579, %v581
        %v591 = vsel %vm588, %v583, %v585
        %v592 = vsel %vm588, %v585, %v587
        %v600 = vsel %vm328, %v574, 0
        %v603 = vsel %vm328, %v575, 0
        %605 = vmatprep.subr.bf16.mxu0 %v590
        %606 = vmatpush1.bf16.msra.mxu0 %v589
        %607 = vmatprep.subr.bf16.mxu0 %v592
        %608 = vmatpush1.bf16.msra.mxu0 %v591
        %609 = vmatprep.subr.bf16.mxu0 0
        %610 = vmatpush1.bf16.msra.mxu0 0
        %611 = vmatprep.subr.bf16.mxu0 0
        %612 = vmatpush1.bf16.msra.mxu0 0
        %613 = vmatprep.subr.bf16.mxu0 0
        %614 = vmatpush1.bf16.msra.mxu0 0
        %615 = vmatprep.subr.bf16.mxu0 0
        %616 = vmatpush1.bf16.msra.mxu0 0
        %617 = vmatprep.subr.bf16.mxu0 0
        %618 = vmatpush1.bf16.msra.mxu0 0
        %619 = vmatprep.subr.bf16.mxu0 0
        %620 = vmatpush1.bf16.msra.mxu0 0
        %621 = vmatprep.subr.bf16.mxu0 0
        %622 = vmatpush1.bf16.msra.mxu0 0
        %623 = vmatprep.subr.bf16.mxu0 0
        %624 = vmatpush1.bf16.msra.mxu0 0
        %625 = vmatprep.subr.bf16.mxu0 0
        %626 = vmatpush1.bf16.msra.mxu0 0
        %627 = vmatprep.subr.bf16.mxu0 0
        %628 = vmatpush1.bf16.msra.mxu0 0
        %629 = vmatprep.subr.bf16.mxu0 0
        %630 = vmatpush1.bf16.msra.mxu0 0
        %631 = vmatprep.subr.bf16.mxu0 0
        %632 = vmatpush1.bf16.msra.mxu0 0
        %633 = vmatprep.subr.bf16.mxu0 0
        %634 = vmatpush1.bf16.msra.mxu0 0
        %635 = vmatprep.subr.bf16.mxu0 0
        %636 = vmatpush1.bf16.msra.mxu0 0
        %637 = vmatprep.mubr.bf16.mxu0 0
        %638 = vmatmul.mubr.bf16.gmra.mrb[0].mxu0 %v600
        %v639 = vpop.f32.mrb[0].mxu0
        %v640 = vadd.f32 0.0, %v639
        %v641 = vpop.f32.mrb[0].mxu0
        %v642 = vadd.f32 0.0, %v641
        %v643 = vpop.f32.mrb[0].mxu0
        %v644 = vadd.f32 0.0, %v643
        %v645 = vpop.f32.mrb[0].mxu0
        %v646 = vadd.f32 0.0, %v645
        %647 = vmatprep.mubr.bf16.mxu0 0
        %648 = vmatmul.mubr.bf16.gmra.mrb[0].mxu0 %v603
        %v649 = vpop.f32.mrb[0].mxu0
        %v650 = vadd.f32 0.0, %v649
        %v651 = vpop.f32.mrb[0].mxu0
        %v652 = vadd.f32 0.0, %v651
        %v653 = vpop.f32.mrb[0].mxu0
        %v654 = vadd.f32 0.0, %v653
        %v655 = vpop.f32.mrb[0].mxu0
        %v656 = vadd.f32 0.0, %v655
        %657 = vdwg.mxu0
        %658 = vmatprep.subr.bf16.mxu0 0
        %659 = vmatpush1.bf16.msra.mxu0 %v581
        %660 = vmatprep.subr.bf16.mxu0 0
        %661 = vmatpush1.bf16.msra.mxu0 %v587
        %662 = vmatprep.subr.bf16.mxu0 0
        %663 = vmatpush1.bf16.msra.mxu0 0
        %664 = vmatprep.subr.bf16.mxu0 0
        %665 = vmatpush1.bf16.msra.mxu0 0
        %666 = vmatprep.subr.bf16.mxu0 0
        %667 = vmatpush1.bf16.msra.mxu0 0
        %668 = vmatprep.subr.bf16.mxu0 0
        %669 = vmatpush1.bf16.msra.mxu0 0
        %670 = vmatprep.subr.bf16.mxu0 0
        %671 = vmatpush1.bf16.msra.mxu0 0
        %672 = vmatprep.subr.bf16.mxu0 0
        %673 = vmatpush1.bf16.msra.mxu0 0
        %674 = vmatprep.subr.bf16.mxu0 0
        %675 = vmatpush1.bf16.msra.mxu0 0
        %676 = vmatprep.subr.bf16.mxu0 0
        %677 = vmatpush1.bf16.msra.mxu0 0
        %678 = vmatprep.subr.bf16.mxu0 0
        %679 = vmatpush1.bf16.msra.mxu0 0
        %680 = vmatprep.subr.bf16.mxu0 0
        %681 = vmatpush1.bf16.msra.mxu0 0
        %682 = vmatprep.subr.bf16.mxu0 0
        %683 = vmatpush1.bf16.msra.mxu0 0
        %684 = vmatprep.subr.bf16.mxu0 0
        %685 = vmatpush1.bf16.msra.mxu0 0
        %686 = vmatprep.subr.bf16.mxu0 0
        %687 = vmatpush1.bf16.msra.mxu0 0
        %688 = vmatprep.subr.bf16.mxu0 0
        %689 = vmatpush1.bf16.msra.mxu0 0
        %690 = vmatprep.mubr.bf16.mxu0 0
        %691 = vmatmul.mubr.bf16.gmra.mrb[0].mxu0 %v600
        %v692 = vpop.f32.mrb[0].mxu0
        %v693 = vadd.f32 0.0, %v692
        %v694 = vpop.f32.mrb[0].mxu0
        %v695 = vpop.f32.mrb[0].mxu0
        %v696 = vadd.f32 0.0, %v695
        %v697 = vpop.f32.mrb[0].mxu0
        %698 = vmatprep.mubr.bf16.mxu0 0
        %699 = vmatmul.mubr.bf16.gmra.mrb[0].mxu0 %v603
        %v700 = vpop.f32.mrb[0].mxu0
        %v701 = vadd.f32 0.0, %v700
        %v702 = vpop.f32.mrb[0].mxu0
        %v703 = vpop.f32.mrb[0].mxu0
        %v704 = vadd.f32 0.0, %v703
        %v705 = vpop.f32.mrb[0].mxu0
        %706 = vdwg.mxu0
        %v707 = vadd.f32 %v494, %v640
        %v708 = vadd.f32 %v496, %v642
        %v709 = vadd.f32 %v547, %v693
        %v710 = vadd.f32 %v498, %v644
        %v711 = vadd.f32 %v500, %v646
        %v712 = vadd.f32 %v550, %v696
        %v713 = vadd.f32 %v504, %v650
        %v714 = vadd.f32 %v506, %v652
        %v715 = vadd.f32 %v555, %v701
        %v716 = vadd.f32 %v508, %v654
        %v717 = vadd.f32 %v510, %v656
        %v718 = vadd.f32 %v558, %v704
        %s719 = scalar_lea.vmem [#allocation5], 48
        %v720 = vld [vmem:[%s719] sm:$0xf]
        %v721 = vld [vmem:[%s719 + $0x4] sm:$0xf]
        %v722 = vld [vmem:[%s719 + $0x8] sm:$0xf]
        %v723 = vld [vmem:[%s719 + $0xc] sm:$0xf]
        %v728 = vunpack.c.l.b16 %v720
        %v729 = vunpack.c.l.b16 %v721
        %v730 = vunpack.c.l.b16 %v722
        %v731 = vunpack.c.l.b16 %v723
        %v732 = vpack.c.b16 %v729, %v728
        %v733 = vpack.c.b16 %v731, %v730
        %734 = vrot.lane.b32.xlu0 %v299, 110
        %v735 = vpop.permute.xlu0 %734
        %736 = vrot.lane.b32.xlu0 %v300, 110
        %v737 = vpop.permute.xlu0 %736
        %738 = vrot.lane.b32.xlu0 %v301, 110
        %v739 = vpop.permute.xlu0 %738
        %740 = vrot.lane.b32.xlu0 %v302, 110
        %v741 = vpop.permute.xlu0 %740
        %742 = vrot.lane.b32.xlu0 %v303, 110
        %v743 = vpop.permute.xlu0 %742
        %744 = vrot.lane.b32.xlu0 %v304, 110
        %v745 = vpop.permute.xlu0 %744
        %vm746 = vcmask 900096
        %v747 = vsel %vm746, %v735, %v737
        %v748 = vsel %vm746, %v737, %v739
        %v749 = vsel %vm746, %v741, %v743
        %v750 = vsel %vm746, %v743, %v745
        %v758 = vsel %vm328, %v732, 0
        %v761 = vsel %vm328, %v733, 0
        %763 = vmatprep.subr.bf16.mxu0 %v748
        %764 = vmatpush1.bf16.msra.mxu0 %v747
        %765 = vmatprep.subr.bf16.mxu0 %v750
        %766 = vmatpush1.bf16.msra.mxu0 %v749
        %767 = vmatprep.subr.bf16.mxu0 0
        %768 = vmatpush1.bf16.msra.mxu0 0
        %769 = vmatprep.subr.bf16.mxu0 0
        %770 = vmatpush1.bf16.msra.mxu0 0
        %771 = vmatprep.subr.bf16.mxu0 0
        %772 = vmatpush1.bf16.msra.mxu0 0
        %773 = vmatprep.subr.bf16.mxu0 0
        %774 = vmatpush1.bf16.msra.mxu0 0
        %775 = vmatprep.subr.bf16.mxu0 0
        %776 = vmatpush1.bf16.msra.mxu0 0
        %777 = vmatprep.subr.bf16.mxu0 0
        %778 = vmatpush1.bf16.msra.mxu0 0
        %779 = vmatprep.subr.bf16.mxu0 0
        %780 = vmatpush1.bf16.msra.mxu0 0
        %781 = vmatprep.subr.bf16.mxu0 0
        %782 = vmatpush1.bf16.msra.mxu0 0
        %783 = vmatprep.subr.bf16.mxu0 0
        %784 = vmatpush1.bf16.msra.mxu0 0
        %785 = vmatprep.subr.bf16.mxu0 0
        %786 = vmatpush1.bf16.msra.mxu0 0
        %787 = vmatprep.subr.bf16.mxu0 0
        %788 = vmatpush1.bf16.msra.mxu0 0
        %789 = vmatprep.subr.bf16.mxu0 0
        %790 = vmatpush1.bf16.msra.mxu0 0
        %791 = vmatprep.subr.bf16.mxu0 0
        %792 = vmatpush1.bf16.msra.mxu0 0
        %793 = vmatprep.subr.bf16.mxu0 0
        %794 = vmatpush1.bf16.msra.mxu0 0
        %795 = vmatprep.mubr.bf16.mxu0 0
        %796 = vmatmul.mubr.bf16.gmra.mrb[0].mxu0 %v758
        %v797 = vpop.f32.mrb[0].mxu0
        %v798 = vadd.f32 0.0, %v797
        %v799 = vpop.f32.mrb[0].mxu0
        %v800 = vadd.f32 0.0, %v799
        %v801 = vpop.f32.mrb[0].mxu0
        %v802 = vadd.f32 0.0, %v801
        %v803 = vpop.f32.mrb[0].mxu0
        %v804 = vadd.f32 0.0, %v803
        %805 = vmatprep.mubr.bf16.mxu0 0
        %806 = vmatmul.mubr.bf16.gmra.mrb[0].mxu0 %v761
        %v807 = vpop.f32.mrb[0].mxu0
        %v808 = vadd.f32 0.0, %v807
        %v809 = vpop.f32.mrb[0].mxu0
        %v810 = vadd.f32 0.0, %v809
        %v811 = vpop.f32.mrb[0].mxu0
        %v812 = vadd.f32 0.0, %v811
        %v813 = vpop.f32.mrb[0].mxu0
        %v814 = vadd.f32 0.0, %v813
        %815 = vdwg.mxu0
        %816 = vmatprep.subr.bf16.mxu0 0
        %817 = vmatpush1.bf16.msra.mxu0 %v739
        %818 = vmatprep.subr.bf16.mxu0 0
        %819 = vmatpush1.bf16.msra.mxu0 %v745
        %820 = vmatprep.subr.bf16.mxu0 0
        %821 = vmatpush1.bf16.msra.mxu0 0
        %822 = vmatprep.subr.bf16.mxu0 0
        %823 = vmatpush1.bf16.msra.mxu0 0
        %824 = vmatprep.subr.bf16.mxu0 0
        %825 = vmatpush1.bf16.msra.mxu0 0
        %826 = vmatprep.subr.bf16.mxu0 0
        %827 = vmatpush1.bf16.msra.mxu0 0
        %828 = vmatprep.subr.bf16.mxu0 0
        %829 = vmatpush1.bf16.msra.mxu0 0
        %830 = vmatprep.subr.bf16.mxu0 0
        %831 = vmatpush1.bf16.msra.mxu0 0
        %832 = vmatprep.subr.bf16.mxu0 0
        %833 = vmatpush1.bf16.msra.mxu0 0
        %834 = vmatprep.subr.bf16.mxu0 0
        %835 = vmatpush1.bf16.msra.mxu0 0
        %836 = vmatprep.subr.bf16.mxu0 0
        %837 = vmatpush1.bf16.msra.mxu0 0
        %838 = vmatprep.subr.bf16.mxu0 0
        %839 = vmatpush1.bf16.msra.mxu0 0
        %840 = vmatprep.subr.bf16.mxu0 0
        %841 = vmatpush1.bf16.msra.mxu0 0
        %842 = vmatprep.subr.bf16.mxu0 0
        %843 = vmatpush1.bf16.msra.mxu0 0
        %844 = vmatprep.subr.bf16.mxu0 0
        %845 = vmatpush1.bf16.msra.mxu0 0
        %846 = vmatprep.subr.bf16.mxu0 0
        %847 = vmatpush1.bf16.msra.mxu0 0
        %848 = vmatprep.mubr.bf16.mxu0 0
        %849 = vmatmul.mubr.bf16.gmra.mrb[0].mxu0 %v758
        %v850 = vpop.f32.mrb[0].mxu0
        %v851 = vadd.f32 0.0, %v850
        %v852 = vpop.f32.mrb[0].mxu0
        %v853 = vpop.f32.mrb[0].mxu0
        %v854 = vadd.f32 0.0, %v853
        %v855 = vpop.f32.mrb[0].mxu0
        %856 = vmatprep.mubr.bf16.mxu0 0
        %857 = vmatmul.mubr.bf16.gmra.mrb[0].mxu0 %v761
        %v858 = vpop.f32.mrb[0].mxu0
        %v859 = vadd.f32 0.0, %v858
        %v860 = vpop.f32.mrb[0].mxu0
        %v861 = vpop.f32.mrb[0].mxu0
        %v862 = vadd.f32 0.0, %v861
        %v863 = vpop.f32.mrb[0].mxu0
        %864 = vdwg.mxu0
        %v865 = vadd.f32 %v707, %v798
        %v866 = vadd.f32 %v708, %v800
        %v867 = vadd.f32 %v709, %v851
        %v868 = vadd.f32 %v710, %v802
        %v869 = vadd.f32 %v711, %v804
        %v870 = vadd.f32 %v712, %v854
        %v871 = vadd.f32 %v713, %v808
        %v872 = vadd.f32 %v714, %v810
        %v873 = vadd.f32 %v715, %v859
        %v874 = vadd.f32 %v716, %v812
        %v875 = vadd.f32 %v717, %v814
        %v876 = vadd.f32 %v718, %v862
        %s877 = scalar_lea.vmem [#allocation5], 64
        %v878 = vld [vmem:[%s877] sm:$0xf]
        %v879 = vld [vmem:[%s877 + $0x4] sm:$0xf]
        %v880 = vld [vmem:[%s877 + $0x8] sm:$0xf]
        %v881 = vld [vmem:[%s877 + $0xc] sm:$0xf]
        %v886 = vunpack.c.l.b16 %v878
        %v887 = vunpack.c.l.b16 %v879
        %v888 = vunpack.c.l.b16 %v880
        %v889 = vunpack.c.l.b16 %v881
        %v890 = vpack.c.b16 %v887, %v886
        %v891 = vpack.c.b16 %v889, %v888
        %892 = vrot.lane.b32.xlu0 %v299, 109
        %v893 = vpop.permute.xlu0 %892
        %894 = vrot.lane.b32.xlu0 %v300, 109
        %v895 = vpop.permute.xlu0 %894
        %896 = vrot.lane.b32.xlu0 %v301, 109
        %v897 = vpop.permute.xlu0 %896
        %898 = vrot.lane.b32.xlu0 %v302, 109
        %v899 = vpop.permute.xlu0 %898
        %900 = vrot.lane.b32.xlu0 %v303, 109
        %v901 = vpop.permute.xlu0 %900
        %902 = vrot.lane.b32.xlu0 %v304, 109
        %v903 = vpop.permute.xlu0 %902
        %vm904 = vcmask 891904
        %v905 = vsel %vm904, %v893, %v895
        %v906 = vsel %vm904, %v895, %v897
        %v907 = vsel %vm904, %v899, %v901
        %v908 = vsel %vm904, %v901, %v903
        %v916 = vsel %vm328, %v890, 0
        %v919 = vsel %vm328, %v891, 0
        %921 = vmatprep.subr.bf16.mxu0 %v906
        %922 = vmatpush1.bf16.msra.mxu0 %v905
        %923 = vmatprep.subr.bf16.mxu0 %v908
        %924 = vmatpush1.bf16.msra.mxu0 %v907
        %925 = vmatprep.subr.bf16.mxu0 0
        %926 = vmatpush1.bf16.msra.mxu0 0
        %927 = vmatprep.subr.bf16.mxu0 0
        %928 = vmatpush1.bf16.msra.mxu0 0
        %929 = vmatprep.subr.bf16.mxu0 0
        %930 = vmatpush1.bf16.msra.mxu0 0
        %931 = vmatprep.subr.bf16.mxu0 0
        %932 = vmatpush1.bf16.msra.mxu0 0
        %933 = vmatprep.subr.bf16.mxu0 0
        %934 = vmatpush1.bf16.msra.mxu0 0
        %935 = vmatprep.subr.bf16.mxu0 0
        %936 = vmatpush1.bf16.msra.mxu0 0
        %937 = vmatprep.subr.bf16.mxu0 0
        %938 = vmatpush1.bf16.msra.mxu0 0
        %939 = vmatprep.subr.bf16.mxu0 0
        %940 = vmatpush1.bf16.msra.mxu0 0
        %941 = vmatprep.subr.bf16.mxu0 0
        %942 = vmatpush1.bf16.msra.mxu0 0
        %943 = vmatprep.subr.bf16.mxu0 0
        %944 = vmatpush1.bf16.msra.mxu0 0
        %945 = vmatprep.subr.bf16.mxu0 0
        %946 = vmatpush1.bf16.msra.mxu0 0
        %947 = vmatprep.subr.bf16.mxu0 0
        %948 = vmatpush1.bf16.msra.mxu0 0
        %949 = vmatprep.subr.bf16.mxu0 0
        %950 = vmatpush1.bf16.msra.mxu0 0
        %951 = vmatprep.subr.bf16.mxu0 0
        %952 = vmatpush1.bf16.msra.mxu0 0
        %953 = vmatprep.mubr.bf16.mxu0 0
        %954 = vmatmul.mubr.bf16.gmra.mrb[0].mxu0 %v916
        %v955 = vpop.f32.mrb[0].mxu0
        %v956 = vadd.f32 0.0, %v955
        %v957 = vpop.f32.mrb[0].mxu0
        %v958 = vadd.f32 0.0, %v957
        %v959 = vpop.f32.mrb[0].mxu0
        %v960 = vadd.f32 0.0, %v959
        %v961 = vpop.f32.mrb[0].mxu0
        %v962 = vadd.f32 0.0, %v961
        %963 = vmatprep.mubr.bf16.mxu0 0
        %964 = vmatmul.mubr.bf16.gmra.mrb[0].mxu0 %v919
        %v965 = vpop.f32.mrb[0].mxu0
        %v966 = vadd.f32 0.0, %v965
        %v967 = vpop.f32.mrb[0].mxu0
        %v968 = vadd.f32 0.0, %v967
        %v969 = vpop.f32.mrb[0].mxu0
        %v970 = vadd.f32 0.0, %v969
        %v971 = vpop.f32.mrb[0].mxu0
        %v972 = vadd.f32 0.0, %v971
        %973 = vdwg.mxu0
        %974 = vmatprep.subr.bf16.mxu0 0
        %975 = vmatpush1.bf16.msra.mxu0 %v897
        %976 = vmatprep.subr.bf16.mxu0 0
        %977 = vmatpush1.bf16.msra.mxu0 %v903
        %978 = vmatprep.subr.bf16.mxu0 0
        %979 = vmatpush1.bf16.msra.mxu0 0
        %980 = vmatprep.subr.bf16.mxu0 0
        %981 = vmatpush1.bf16.msra.mxu0 0
        %982 = vmatprep.subr.bf16.mxu0 0
        %983 = vmatpush1.bf16.msra.mxu0 0
        %984 = vmatprep.subr.bf16.mxu0 0
        %985 = vmatpush1.bf16.msra.mxu0 0
        %986 = vmatprep.subr.bf16.mxu0 0
        %987 = vmatpush1.bf16.msra.mxu0 0
        %988 = vmatprep.subr.bf16.mxu0 0
        %989 = vmatpush1.bf16.msra.mxu0 0
        %990 = vmatprep.subr.bf16.mxu0 0
        %991 = vmatpush1.bf16.msra.mxu0 0
        %992 = vmatprep.subr.bf16.mxu0 0
        %993 = vmatpush1.bf16.msra.mxu0 0
        %994 = vmatprep.subr.bf16.mxu0 0
        %995 = vmatpush1.bf16.msra.mxu0 0
        %996 = vmatprep.subr.bf16.mxu0 0
        %997 = vmatpush1.bf16.msra.mxu0 0
        %998 = vmatprep.subr.bf16.mxu0 0
        %999 = vmatpush1.bf16.msra.mxu0 0
        %1000 = vmatprep.subr.bf16.mxu0 0
        %1001 = vmatpush1.bf16.msra.mxu0 0
        %1002 = vmatprep.subr.bf16.mxu0 0
        %1003 = vmatpush1.bf16.msra.mxu0 0
        %1004 = vmatprep.subr.bf16.mxu0 0
        %1005 = vmatpush1.bf16.msra.mxu0 0
        %1006 = vmatprep.mubr.bf16.mxu0 0
        %1007 = vmatmul.mubr.bf16.gmra.mrb[0].mxu0 %v916
        %v1008 = vpop.f32.mrb[0].mxu0
        %v1009 = vadd.f32 0.0, %v1008
        %v1010 = vpop.f32.mrb[0].mxu0
        %v1011 = vpop.f32.mrb[0].mxu0
        %v1012 = vadd.f32 0.0, %v1011
        %v1013 = vpop.f32.mrb[0].mxu0
        %1014 = vmatprep.mubr.bf16.mxu0 0
        %1015 = vmatmul.mubr.bf16.gmra.mrb[0].mxu0 %v919
        %v1016 = vpop.f32.mrb[0].mxu0
        %v1017 = vadd.f32 0.0, %v1016
        %v1018 = vpop.f32.mrb[0].mxu0
        %v1019 = vpop.f32.mrb[0].mxu0
        %v1020 = vadd.f32 0.0, %v1019
        %v1021 = vpop.f32.mrb[0].mxu0
        %1022 = vdwg.mxu0
        %v1023 = vadd.f32 %v865, %v956
        %v1024 = vadd.f32 %v866, %v958
        %v1025 = vadd.f32 %v867, %v1009
        %v1026 = vadd.f32 %v868, %v960
        %v1027 = vadd.f32 %v869, %v962
        %v1028 = vadd.f32 %v870, %v1012
        %v1029 = vadd.f32 %v871, %v966
        %v1030 = vadd.f32 %v872, %v968
        %v1031 = vadd.f32 %v873, %v1017
        %v1032 = vadd.f32 %v874, %v970
        %v1033 = vadd.f32 %v875, %v972
        %v1034 = vadd.f32 %v876, %v1020
        %s1035 = scalar_lea.vmem [#allocation5], 80
        %v1036 = vld [vmem:[%s1035] sm:$0xf]
        %v1037 = vld [vmem:[%s1035 + $0x4] sm:$0xf]
        %v1038 = vld [vmem:[%s1035 + $0x8] sm:$0xf]
        %v1039 = vld [vmem:[%s1035 + $0xc] sm:$0xf]
        %v1044 = vunpack.c.l.b16 %v1036
        %v1045 = vunpack.c.l.b16 %v1037
        %v1046 = vunpack.c.l.b16 %v1038
        %v1047 = vunpack.c.l.b16 %v1039
        %v1048 = vpack.c.b16 %v1045, %v1044
        %v1049 = vpack.c.b16 %v1047, %v1046
        %1050 = vrot.lane.b32.xlu0 %v299, 108
        %v1051 = vpop.permute.xlu0 %1050
        %1052 = vrot.lane.b32.xlu0 %v300, 108
        %v1053 = vpop.permute.xlu0 %1052
        %1054 = vrot.lane.b32.xlu0 %v301, 108
        %v1055 = vpop.permute.xlu0 %1054
        %1056 = vrot.lane.b32.xlu0 %v302, 108
        %v1057 = vpop.permute.xlu0 %1056
        %1058 = vrot.lane.b32.xlu0 %v303, 108
        %v1059 = vpop.permute.xlu0 %1058
        %1060 = vrot.lane.b32.xlu0 %v304, 108
        %v1061 = vpop.permute.xlu0 %1060
        %vm1062 = vcmask 883712
        %v1063 = vsel %vm1062, %v1051, %v1053
        %v1064 = vsel %vm1062, %v1053, %v1055
        %v1065 = vsel %vm1062, %v1057, %v1059
        %v1066 = vsel %vm1062, %v1059, %v1061
        %v1074 = vsel %vm328, %v1048, 0
        %v1077 = vsel %vm328, %v1049, 0
        %1079 = vmatprep.subr.bf16.mxu0 %v1064
        %1080 = vmatpush1.bf16.msra.mxu0 %v1063
        %1081 = vmatprep.subr.bf16.mxu0 %v1066
        %1082 = vmatpush1.bf16.msra.mxu0 %v1065
        %1083 = vmatprep.subr.bf16.mxu0 0
        %1084 = vmatpush1.bf16.msra.mxu0 0
        %1085 = vmatprep.subr.bf16.mxu0 0
        %1086 = vmatpush1.bf16.msra.mxu0 0
        %1087 = vmatprep.subr.bf16.mxu0 0
        %1088 = vmatpush1.bf16.msra.mxu0 0
        %1089 = vmatprep.subr.bf16.mxu0 0
        %1090 = vmatpush1.bf16.msra.mxu0 0
        %1091 = vmatprep.subr.bf16.mxu0 0
        %1092 = vmatpush1.bf16.msra.mxu0 0
        %1093 = vmatprep.subr.bf16.mxu0 0
        %1094 = vmatpush1.bf16.msra.mxu0 0
        %1095 = vmatprep.subr.bf16.mxu0 0
        %1096 = vmatpush1.bf16.msra.mxu0 0
        %1097 = vmatprep.subr.bf16.mxu0 0
        %1098 = vmatpush1.bf16.msra.mxu0 0
        %1099 = vmatprep.subr.bf16.mxu0 0
        %1100 = vmatpush1.bf16.msra.mxu0 0
        %1101 = vmatprep.subr.bf16.mxu0 0
        %1102 = vmatpush1.bf16.msra.mxu0 0
        %1103 = vmatprep.subr.bf16.mxu0 0
        %1104 = vmatpush1.bf16.msra.mxu0 0
        %1105 = vmatprep.subr.bf16.mxu0 0
        %1106 = vmatpush1.bf16.msra.mxu0 0
        %1107 = vmatprep.subr.bf16.mxu0 0
        %1108 = vmatpush1.bf16.msra.mxu0 0
        %1109 = vmatprep.subr.bf16.mxu0 0
        %1110 = vmatpush1.bf16.msra.mxu0 0
        %1111 = vmatprep.mubr.bf16.mxu0 0
        %1112 = vmatmul.mubr.bf16.gmra.mrb[0].mxu0 %v1074
        %v1113 = vpop.f32.mrb[0].mxu0
        %v1114 = vadd.f32 0.0, %v1113
        %v1115 = vpop.f32.mrb[0].mxu0
        %v1116 = vadd.f32 0.0, %v1115
        %v1117 = vpop.f32.mrb[0].mxu0
        %v1118 = vadd.f32 0.0, %v1117
        %v1119 = vpop.f32.mrb[0].mxu0
        %v1120 = vadd.f32 0.0, %v1119
        %1121 = vmatprep.mubr.bf16.mxu0 0
        %1122 = vmatmul.mubr.bf16.gmra.mrb[0].mxu0 %v1077
        %v1123 = vpop.f32.mrb[0].mxu0
        %v1124 = vadd.f32 0.0, %v1123
        %v1125 = vpop.f32.mrb[0].mxu0
        %v1126 = vadd.f32 0.0, %v1125
        %v1127 = vpop.f32.mrb[0].mxu0
        %v1128 = vadd.f32 0.0, %v1127
        %v1129 = vpop.f32.mrb[0].mxu0
        %v1130 = vadd.f32 0.0, %v1129
        %1131 = vdwg.mxu0
        %1132 = vmatprep.subr.bf16.mxu0 0
        %1133 = vmatpush1.bf16.msra.mxu0 %v1055
        %1134 = vmatprep.subr.bf16.mxu0 0
        %1135 = vmatpush1.bf16.msra.mxu0 %v1061
        %1136 = vmatprep.subr.bf16.mxu0 0
        %1137 = vmatpush1.bf16.msra.mxu0 0
        %1138 = vmatprep.subr.bf16.mxu0 0
        %1139 = vmatpush1.bf16.msra.mxu0 0
        %1140 = vmatprep.subr.bf16.mxu0 0
        %1141 = vmatpush1.bf16.msra.mxu0 0
        %1142 = vmatprep.subr.bf16.mxu0 0
        %1143 = vmatpush1.bf16.msra.mxu0 0
        %1144 = vmatprep.subr.bf16.mxu0 0
        %1145 = vmatpush1.bf16.msra.mxu0 0
        %1146 = vmatprep.subr.bf16.mxu0 0
        %1147 = vmatpush1.bf16.msra.mxu0 0
        %1148 = vmatprep.subr.bf16.mxu0 0
        %1149 = vmatpush1.bf16.msra.mxu0 0
        %1150 = vmatprep.subr.bf16.mxu0 0
        %1151 = vmatpush1.bf16.msra.mxu0 0
        %1152 = vmatprep.subr.bf16.mxu0 0
        %1153 = vmatpush1.bf16.msra.mxu0 0
        %1154 = vmatprep.subr.bf16.mxu0 0
        %1155 = vmatpush1.bf16.msra.mxu0 0
        %1156 = vmatprep.subr.bf16.mxu0 0
        %1157 = vmatpush1.bf16.msra.mxu0 0
        %1158 = vmatprep.subr.bf16.mxu0 0
        %1159 = vmatpush1.bf16.msra.mxu0 0
        %1160 = vmatprep.subr.bf16.mxu0 0
        %1161 = vmatpush1.bf16.msra.mxu0 0
        %1162 = vmatprep.subr.bf16.mxu0 0
        %1163 = vmatpush1.bf16.msra.mxu0 0
        %1164 = vmatprep.mubr.bf16.mxu0 0
        %1165 = vmatmul.mubr.bf16.gmra.mrb[0].mxu0 %v1074
        %v1166 = vpop.f32.mrb[0].mxu0
        %v1167 = vadd.f32 0.0, %v1166
        %v1168 = vpop.f32.mrb[0].mxu0
        %v1169 = vpop.f32.mrb[0].mxu0
        %v1170 = vadd.f32 0.0, %v1169
        %v1171 = vpop.f32.mrb[0].mxu0
        %1172 = vmatprep.mubr.bf16.mxu0 0
        %1173 = vmatmul.mubr.bf16.gmra.mrb[0].mxu0 %v1077
        %v1174 = vpop.f32.mrb[0].mxu0
        %v1175 = vadd.f32 0.0, %v1174
        %v1176 = vpop.f32.mrb[0].mxu0
        %v1177 = vpop.f32.mrb[0].mxu0
        %v1178 = vadd.f32 0.0, %v1177
        %v1179 = vpop.f32.mrb[0].mxu0
        %1180 = vdwg.mxu0
        %v1181 = vadd.f32 %v1023, %v1114
        %v1182 = vadd.f32 %v1024, %v1116
        %v1183 = vadd.f32 %v1025, %v1167
        %v1184 = vadd.f32 %v1026, %v1118
        %v1185 = vadd.f32 %v1027, %v1120
        %v1186 = vadd.f32 %v1028, %v1170
        %v1187 = vadd.f32 %v1029, %v1124
        %v1188 = vadd.f32 %v1030, %v1126
        %v1189 = vadd.f32 %v1031, %v1175
        %v1190 = vadd.f32 %v1032, %v1128
        %v1191 = vadd.f32 %v1033, %v1130
        %v1192 = vadd.f32 %v1034, %v1178
        %s1193 = scalar_lea.vmem [#allocation5], 96
        %v1194 = vld [vmem:[%s1193] sm:$0xf]
        %v1195 = vld [vmem:[%s1193 + $0x4] sm:$0xf]
        %v1196 = vld [vmem:[%s1193 + $0x8] sm:$0xf]
        %v1197 = vld [vmem:[%s1193 + $0xc] sm:$0xf]
        %v1202 = vunpack.c.l.b16 %v1194
        %v1203 = vunpack.c.l.b16 %v1195
        %v1204 = vunpack.c.l.b16 %v1196
        %v1205 = vunpack.c.l.b16 %v1197
        %v1206 = vpack.c.b16 %v1203, %v1202
        %v1207 = vpack.c.b16 %v1205, %v1204
        %1208 = vrot.lane.b32.xlu0 %v299, 92
        %v1209 = vpop.permute.xlu0 %1208
        %1210 = vrot.lane.b32.xlu0 %v300, 92
        %v1211 = vpop.permute.xlu0 %1210
        %1212 = vrot.lane.b32.xlu0 %v301, 92
        %v1213 = vpop.permute.xlu0 %1212
        %1214 = vrot.lane.b32.xlu0 %v302, 92
        %v1215 = vpop.permute.xlu0 %1214
        %1216 = vrot.lane.b32.xlu0 %v303, 92
        %v1217 = vpop.permute.xlu0 %1216
        %1218 = vrot.lane.b32.xlu0 %v304, 92
        %v1219 = vpop.permute.xlu0 %1218
        %vm1220 = vcmask 752640
        %v1221 = vsel %vm1220, %v1209, %v1211
        %v1222 = vsel %vm1220, %v1211, %v1213
        %v1223 = vsel %vm1220, %v1215, %v1217
        %v1224 = vsel %vm1220, %v1217, %v1219
        %v1232 = vsel %vm328, %v1206, 0
        %v1235 = vsel %vm328, %v1207, 0
        %1237 = vmatprep.subr.bf16.mxu0 %v1222
        %1238 = vmatpush1.bf16.msra.mxu0 %v1221
        %1239 = vmatprep.subr.bf16.mxu0 %v1224
        %1240 = vmatpush1.bf16.msra.mxu0 %v1223
        %1241 = vmatprep.subr.bf16.mxu0 0
        %1242 = vmatpush1.bf16.msra.mxu0 0
        %1243 = vmatprep.subr.bf16.mxu0 0
        %1244 = vmatpush1.bf16.msra.mxu0 0
        %1245 = vmatprep.subr.bf16.mxu0 0
        %1246 = vmatpush1.bf16.msra.mxu0 0
        %1247 = vmatprep.subr.bf16.mxu0 0
        %1248 = vmatpush1.bf16.msra.mxu0 0
        %1249 = vmatprep.subr.bf16.mxu0 0
        %1250 = vmatpush1.bf16.msra.mxu0 0
        %1251 = vmatprep.subr.bf16.mxu0 0
        %1252 = vmatpush1.bf16.msra.mxu0 0
        %1253 = vmatprep.subr.bf16.mxu0 0
        %1254 = vmatpush1.bf16.msra.mxu0 0
        %1255 = vmatprep.subr.bf16.mxu0 0
        %1256 = vmatpush1.bf16.msra.mxu0 0
        %1257 = vmatprep.subr.bf16.mxu0 0
        %1258 = vmatpush1.bf16.msra.mxu0 0
        %1259 = vmatprep.subr.bf16.mxu0 0
        %1260 = vmatpush1.bf16.msra.mxu0 0
        %1261 = vmatprep.subr.bf16.mxu0 0
        %1262 = vmatpush1.bf16.msra.mxu0 0
        %1263 = vmatprep.subr.bf16.mxu0 0
        %1264 = vmatpush1.bf16.msra.mxu0 0
        %1265 = vmatprep.subr.bf16.mxu0 0
        %1266 = vmatpush1.bf16.msra.mxu0 0
        %1267 = vmatprep.subr.bf16.mxu0 0
        %1268 = vmatpush1.bf16.msra.mxu0 0
        %1269 = vmatprep.mubr.bf16.mxu0 0
        %1270 = vmatmul.mubr.bf16.gmra.mrb[0].mxu0 %v1232
        %v1271 = vpop.f32.mrb[0].mxu0
        %v1272 = vadd.f32 0.0, %v1271
        %v1273 = vpop.f32.mrb[0].mxu0
        %v1274 = vadd.f32 0.0, %v1273
        %v1275 = vpop.f32.mrb[0].mxu0
        %v1276 = vadd.f32 0.0, %v1275
        %v1277 = vpop.f32.mrb[0].mxu0
        %v1278 = vadd.f32 0.0, %v1277
        %1279 = vmatprep.mubr.bf16.mxu0 0
        %1280 = vmatmul.mubr.bf16.gmra.mrb[0].mxu0 %v1235
        %v1281 = vpop.f32.mrb[0].mxu0
        %v1282 = vadd.f32 0.0, %v1281
        %v1283 = vpop.f32.mrb[0].mxu0
        %v1284 = vadd.f32 0.0, %v1283
        %v1285 = vpop.f32.mrb[0].mxu0
        %v1286 = vadd.f32 0.0, %v1285
        %v1287 = vpop.f32.mrb[0].mxu0
        %v1288 = vadd.f32 0.0, %v1287
        %1289 = vdwg.mxu0
        %1290 = vmatprep.subr.bf16.mxu0 0
        %1291 = vmatpush1.bf16.msra.mxu0 %v1213
        %1292 = vmatprep.subr.bf16.mxu0 0
        %1293 = vmatpush1.bf16.msra.mxu0 %v1219
        %1294 = vmatprep.subr.bf16.mxu0 0
        %1295 = vmatpush1.bf16.msra.mxu0 0
        %1296 = vmatprep.subr.bf16.mxu0 0
        %1297 = vmatpush1.bf16.msra.mxu0 0
        %1298 = vmatprep.subr.bf16.mxu0 0
        %1299 = vmatpush1.bf16.msra.mxu0 0
        %1300 = vmatprep.subr.bf16.mxu0 0
        %1301 = vmatpush1.bf16.msra.mxu0 0
        %1302 = vmatprep.subr.bf16.mxu0 0
        %1303 = vmatpush1.bf16.msra.mxu0 0
        %1304 = vmatprep.subr.bf16.mxu0 0
        %1305 = vmatpush1.bf16.msra.mxu0 0
        %1306 = vmatprep.subr.bf16.mxu0 0
        %1307 = vmatpush1.bf16.msra.mxu0 0
        %1308 = vmatprep.subr.bf16.mxu0 0
        %1309 = vmatpush1.bf16.msra.mxu0 0
        %1310 = vmatprep.subr.bf16.mxu0 0
        %1311 = vmatpush1.bf16.msra.mxu0 0
        %1312 = vmatprep.subr.bf16.mxu0 0
        %1313 = vmatpush1.bf16.msra.mxu0 0
        %1314 = vmatprep.subr.bf16.mxu0 0
        %1315 = vmatpush1.bf16.msra.mxu0 0
        %1316 = vmatprep.subr.bf16.mxu0 0
        %1317 = vmatpush1.bf16.msra.mxu0 0
        %1318 = vmatprep.subr.bf16.mxu0 0
        %1319 = vmatpush1.bf16.msra.mxu0 0
        %1320 = vmatprep.subr.bf16.mxu0 0
        %1321 = vmatpush1.bf16.msra.mxu0 0
        %1322 = vmatprep.mubr.bf16.mxu0 0
        %1323 = vmatmul.mubr.bf16.gmra.mrb[0].mxu0 %v1232
        %v1324 = vpop.f32.mrb[0].mxu0
        %v1325 = vadd.f32 0.0, %v1324
        %v1326 = vpop.f32.mrb[0].mxu0
        %v1327 = vpop.f32.mrb[0].mxu0
        %v1328 = vadd.f32 0.0, %v1327
        %v1329 = vpop.f32.mrb[0].mxu0
        %1330 = vmatprep.mubr.bf16.mxu0 0
        %1331 = vmatmul.mubr.bf16.gmra.mrb[0].mxu0 %v1235
        %v1332 = vpop.f32.mrb[0].mxu0
        %v1333 = vadd.f32 0.0, %v1332
        %v1334 = vpop.f32.mrb[0].mxu0
        %v1335 = vpop.f32.mrb[0].mxu0
        %v1336 = vadd.f32 0.0, %v1335
        %v1337 = vpop.f32.mrb[0].mxu0
        %1338 = vdwg.mxu0
        %v1339 = vadd.f32 %v1181, %v1272
        %v1340 = vadd.f32 %v1182, %v1274
        %v1341 = vadd.f32 %v1183, %v1325
        %v1342 = vadd.f32 %v1184, %v1276
        %v1343 = vadd.f32 %v1185, %v1278
        %v1344 = vadd.f32 %v1186, %v1328
        %v1345 = vadd.f32 %v1187, %v1282
        %v1346 = vadd.f32 %v1188, %v1284
        %v1347 = vadd.f32 %v1189, %v1333
        %v1348 = vadd.f32 %v1190, %v1286
        %v1349 = vadd.f32 %v1191, %v1288
        %v1350 = vadd.f32 %v1192, %v1336
        %s1351 = scalar_lea.vmem [#allocation5], 112
        %v1352 = vld [vmem:[%s1351] sm:$0xf]
        %v1353 = vld [vmem:[%s1351 + $0x4] sm:$0xf]
        %v1354 = vld [vmem:[%s1351 + $0x8] sm:$0xf]
        %v1355 = vld [vmem:[%s1351 + $0xc] sm:$0xf]
        %v1360 = vunpack.c.l.b16 %v1352
        %v1361 = vunpack.c.l.b16 %v1353
        %v1362 = vunpack.c.l.b16 %v1354
        %v1363 = vunpack.c.l.b16 %v1355
        %v1364 = vpack.c.b16 %v1361, %v1360
        %v1365 = vpack.c.b16 %v1363, %v1362
        %1366 = vrot.lane.b32.xlu0 %v299, 91
        %v1367 = vpop.permute.xlu0 %1366
        %1368 = vrot.lane.b32.xlu0 %v300, 91
        %v1369 = vpop.permute.xlu0 %1368
        %1370 = vrot.lane.b32.xlu0 %v301, 91
        %v1371 = vpop.permute.xlu0 %1370
        %1372 = vrot.lane.b32.xlu0 %v302, 91
        %v1373 = vpop.permute.xlu0 %1372
        %1374 = vrot.lane.b32.xlu0 %v303, 91
        %v1375 = vpop.permute.xlu0 %1374
        %1376 = vrot.lane.b32.xlu0 %v304, 91
        %v1377 = vpop.permute.xlu0 %1376
        %vm1378 = vcmask 744448
        %v1379 = vsel %vm1378, %v1367, %v1369
        %v1380 = vsel %vm1378, %v1369, %v1371
        %v1381 = vsel %vm1378, %v1373, %v1375
        %v1382 = vsel %vm1378, %v1375, %v1377
        %v1390 = vsel %vm328, %v1364, 0
        %v1393 = vsel %vm328, %v1365, 0
        %1395 = vmatprep.subr.bf16.mxu0 %v1380
        %1396 = vmatpush1.bf16.msra.mxu0 %v1379
        %1397 = vmatprep.subr.bf16.mxu0 %v1382
        %1398 = vmatpush1.bf16.msra.mxu0 %v1381
        %1399 = vmatprep.subr.bf16.mxu0 0
        %1400 = vmatpush1.bf16.msra.mxu0 0
        %1401 = vmatprep.subr.bf16.mxu0 0
        %1402 = vmatpush1.bf16.msra.mxu0 0
        %1403 = vmatprep.subr.bf16.mxu0 0
        %1404 = vmatpush1.bf16.msra.mxu0 0
        %1405 = vmatprep.subr.bf16.mxu0 0
        %1406 = vmatpush1.bf16.msra.mxu0 0
        %1407 = vmatprep.subr.bf16.mxu0 0
        %1408 = vmatpush1.bf16.msra.mxu0 0
        %1409 = vmatprep.subr.bf16.mxu0 0
        %1410 = vmatpush1.bf16.msra.mxu0 0
        %1411 = vmatprep.subr.bf16.mxu0 0
        %1412 = vmatpush1.bf16.msra.mxu0 0
        %1413 = vmatprep.subr.bf16.mxu0 0
        %1414 = vmatpush1.bf16.msra.mxu0 0
        %1415 = vmatprep.subr.bf16.mxu0 0
        %1416 = vmatpush1.bf16.msra.mxu0 0
        %1417 = vmatprep.subr.bf16.mxu0 0
        %1418 = vmatpush1.bf16.msra.mxu0 0
        %1419 = vmatprep.subr.bf16.mxu0 0
        %1420 = vmatpush1.bf16.msra.mxu0 0
        %1421 = vmatprep.subr.bf16.mxu0 0
        %1422 = vmatpush1.bf16.msra.mxu0 0
        %1423 = vmatprep.subr.bf16.mxu0 0
        %1424 = vmatpush1.bf16.msra.mxu0 0
        %1425 = vmatprep.subr.bf16.mxu0 0
        %1426 = vmatpush1.bf16.msra.mxu0 0
        %1427 = vmatprep.mubr.bf16.mxu0 0
        %1428 = vmatmul.mubr.bf16.gmra.mrb[0].mxu0 %v1390
        %v1429 = vpop.f32.mrb[0].mxu0
        %v1430 = vadd.f32 0.0, %v1429
        %v1431 = vpop.f32.mrb[0].mxu0
        %v1432 = vadd.f32 0.0, %v1431
        %v1433 = vpop.f32.mrb[0].mxu0
        %v1434 = vadd.f32 0.0, %v1433
        %v1435 = vpop.f32.mrb[0].mxu0
        %v1436 = vadd.f32 0.0, %v1435
        %1437 = vmatprep.mubr.bf16.mxu0 0
        %1438 = vmatmul.mubr.bf16.gmra.mrb[0].mxu0 %v1393
        %v1439 = vpop.f32.mrb[0].mxu0
        %v1440 = vadd.f32 0.0, %v1439
        %v1441 = vpop.f32.mrb[0].mxu0
        %v1442 = vadd.f32 0.0, %v1441
        %v1443 = vpop.f32.mrb[0].mxu0
        %v1444 = vadd.f32 0.0, %v1443
        %v1445 = vpop.f32.mrb[0].mxu0
        %v1446 = vadd.f32 0.0, %v1445
        %1447 = vdwg.mxu0
        %1448 = vmatprep.subr.bf16.mxu0 0
        %1449 = vmatpush1.bf16.msra.mxu0 %v1371
        %1450 = vmatprep.subr.bf16.mxu0 0
        %1451 = vmatpush1.bf16.msra.mxu0 %v1377
        %1452 = vmatprep.subr.bf16.mxu0 0
        %1453 = vmatpush1.bf16.msra.mxu0 0
        %1454 = vmatprep.subr.bf16.mxu0 0
        %1455 = vmatpush1.bf16.msra.mxu0 0
        %1456 = vmatprep.subr.bf16.mxu0 0
        %1457 = vmatpush1.bf16.msra.mxu0 0
        %1458 = vmatprep.subr.bf16.mxu0 0
        %1459 = vmatpush1.bf16.msra.mxu0 0
        %1460 = vmatprep.subr.bf16.mxu0 0
        %1461 = vmatpush1.bf16.msra.mxu0 0
        %1462 = vmatprep.subr.bf16.mxu0 0
        %1463 = vmatpush1.bf16.msra.mxu0 0
        %1464 = vmatprep.subr.bf16.mxu0 0
        %1465 = vmatpush1.bf16.msra.mxu0 0
        %1466 = vmatprep.subr.bf16.mxu0 0
        %1467 = vmatpush1.bf16.msra.mxu0 0
        %1468 = vmatprep.subr.bf16.mxu0 0
        %1469 = vmatpush1.bf16.msra.mxu0 0
        %1470 = vmatprep.subr.bf16.mxu0 0
        %1471 = vmatpush1.bf16.msra.mxu0 0
        %1472 = vmatprep.subr.bf16.mxu0 0
        %1473 = vmatpush1.bf16.msra.mxu0 0
        %1474 = vmatprep.subr.bf16.mxu0 0
        %1475 = vmatpush1.bf16.msra.mxu0 0
        %1476 = vmatprep.subr.bf16.mxu0 0
        %1477 = vmatpush1.bf16.msra.mxu0 0
        %1478 = vmatprep.subr.bf16.mxu0 0
        %1479 = vmatpush1.bf16.msra.mxu0 0
        %1480 = vmatprep.mubr.bf16.mxu0 0
        %1481 = vmatmul.mubr.bf16.gmra.mrb[0].mxu0 %v1390
        %v1482 = vpop.f32.mrb[0].mxu0
        %v1483 = vadd.f32 0.0, %v1482
        %v1484 = vpop.f32.mrb[0].mxu0
        %v1485 = vpop.f32.mrb[0].mxu0
        %v1486 = vadd.f32 0.0, %v1485
        %v1487 = vpop.f32.mrb[0].mxu0
        %1488 = vmatprep.mubr.bf16.mxu0 0
        %1489 = vmatmul.mubr.bf16.gmra.mrb[0].mxu0 %v1393
        %v1490 = vpop.f32.mrb[0].mxu0
        %v1491 = vadd.f32 0.0, %v1490
        %v1492 = vpop.f32.mrb[0].mxu0
        %v1493 = vpop.f32.mrb[0].mxu0
        %v1494 = vadd.f32 0.0, %v1493
        %v1495 = vpop.f32.mrb[0].mxu0
        %1496 = vdwg.mxu0
        %v1497 = vadd.f32 %v1339, %v1430
        %v1498 = vadd.f32 %v1340, %v1432
        %v1499 = vadd.f32 %v1341, %v1483
        %v1500 = vadd.f32 %v1342, %v1434
        %v1501 = vadd.f32 %v1343, %v1436
        %v1502 = vadd.f32 %v1344, %v1486
        %v1503 = vadd.f32 %v1345, %v1440
        %v1504 = vadd.f32 %v1346, %v1442
        %v1505 = vadd.f32 %v1347, %v1491
        %v1506 = vadd.f32 %v1348, %v1444
        %v1507 = vadd.f32 %v1349, %v1446
        %v1508 = vadd.f32 %v1350, %v1494
        %s1509 = scalar_lea.vmem [#allocation5], 128
        %v1510 = vld [vmem:[%s1509] sm:$0xf]
        %v1511 = vld [vmem:[%s1509 + $0x4] sm:$0xf]
        %v1512 = vld [vmem:[%s1509 + $0x8] sm:$0xf]
        %v1513 = vld [vmem:[%s1509 + $0xc] sm:$0xf]
        %v1518 = vunpack.c.l.b16 %v1510
        %v1519 = vunpack.c.l.b16 %v1511
        %v1520 = vunpack.c.l.b16 %v1512
        %v1521 = vunpack.c.l.b16 %v1513
        %v1522 = vpack.c.b16 %v1519, %v1518
        %v1523 = vpack.c.b16 %v1521, %v1520
        %1524 = vrot.lane.b32.xlu0 %v299, 90
        %v1525 = vpop.permute.xlu0 %1524
        %1526 = vrot.lane.b32.xlu0 %v300, 90
        %v1527 = vpop.permute.xlu0 %1526
        %1528 = vrot.lane.b32.xlu0 %v301, 90
        %v1529 = vpop.permute.xlu0 %1528
        %1530 = vrot.lane.b32.xlu0 %v302, 90
        %v1531 = vpop.permute.xlu0 %1530
        %1532 = vrot.lane.b32.xlu0 %v303, 90
        %v1533 = vpop.permute.xlu0 %1532
        %1534 = vrot.lane.b32.xlu0 %v304, 90
        %v1535 = vpop.permute.xlu0 %1534
        %vm1536 = vcmask 736256
        %v1537 = vsel %vm1536, %v1525, %v1527
        %v1538 = vsel %vm1536, %v1527, %v1529
        %v1539 = vsel %vm1536, %v1531, %v1533
        %v1540 = vsel %vm1536, %v1533, %v1535
        %v1548 = vsel %vm328, %v1522, 0
        %v1551 = vsel %vm328, %v1523, 0
        %1553 = vmatprep.subr.bf16.mxu0 %v1538
        %1554 = vmatpush1.bf16.msra.mxu0 %v1537
        %1555 = vmatprep.subr.bf16.mxu0 %v1540
        %1556 = vmatpush1.bf16.msra.mxu0 %v1539
        %1557 = vmatprep.subr.bf16.mxu0 0
        %1558 = vmatpush1.bf16.msra.mxu0 0
        %1559 = vmatprep.subr.bf16.mxu0 0
        %1560 = vmatpush1.bf16.msra.mxu0 0
        %1561 = vmatprep.subr.bf16.mxu0 0
        %1562 = vmatpush1.bf16.msra.mxu0 0
        %1563 = vmatprep.subr.bf16.mxu0 0
        %1564 = vmatpush1.bf16.msra.mxu0 0
        %1565 = vmatprep.subr.bf16.mxu0 0
        %1566 = vmatpush1.bf16.msra.mxu0 0
        %1567 = vmatprep.subr.bf16.mxu0 0
        %1568 = vmatpush1.bf16.msra.mxu0 0
        %1569 = vmatprep.subr.bf16.mxu0 0
        %1570 = vmatpush1.bf16.msra.mxu0 0
        %1571 = vmatprep.subr.bf16.mxu0 0
        %1572 = vmatpush1.bf16.msra.mxu0 0
        %1573 = vmatprep.subr.bf16.mxu0 0
        %1574 = vmatpush1.bf16.msra.mxu0 0
        %1575 = vmatprep.subr.bf16.mxu0 0
        %1576 = vmatpush1.bf16.msra.mxu0 0
        %1577 = vmatprep.subr.bf16.mxu0 0
        %1578 = vmatpush1.bf16.msra.mxu0 0
        %1579 = vmatprep.subr.bf16.mxu0 0
        %1580 = vmatpush1.bf16.msra.mxu0 0
        %1581 = vmatprep.subr.bf16.mxu0 0
        %1582 = vmatpush1.bf16.msra.mxu0 0
        %1583 = vmatprep.subr.bf16.mxu0 0
        %1584 = vmatpush1.bf16.msra.mxu0 0
        %1585 = vmatprep.mubr.bf16.mxu0 0
        %1586 = vmatmul.mubr.bf16.gmra.mrb[0].mxu0 %v1548
        %v1587 = vpop.f32.mrb[0].mxu0
        %v1588 = vadd.f32 0.0, %v1587
        %v1589 = vpop.f32.mrb[0].mxu0
        %v1590 = vadd.f32 0.0, %v1589
        %v1591 = vpop.f32.mrb[0].mxu0
        %v1592 = vadd.f32 0.0, %v1591
        %v1593 = vpop.f32.mrb[0].mxu0
        %v1594 = vadd.f32 0.0, %v1593
        %1595 = vmatprep.mubr.bf16.mxu0 0
        %1596 = vmatmul.mubr.bf16.gmra.mrb[0].mxu0 %v1551
        %v1597 = vpop.f32.mrb[0].mxu0
        %v1598 = vadd.f32 0.0, %v1597
        %v1599 = vpop.f32.mrb[0].mxu0
        %v1600 = vadd.f32 0.0, %v1599
        %v1601 = vpop.f32.mrb[0].mxu0
        %v1602 = vadd.f32 0.0, %v1601
        %v1603 = vpop.f32.mrb[0].mxu0
        %v1604 = vadd.f32 0.0, %v1603
        %1605 = vdwg.mxu0
        %1606 = vmatprep.subr.bf16.mxu0 0
        %1607 = vmatpush1.bf16.msra.mxu0 %v1529
        %1608 = vmatprep.subr.bf16.mxu0 0
        %1609 = vmatpush1.bf16.msra.mxu0 %v1535
        %1610 = vmatprep.subr.bf16.mxu0 0
        %1611 = vmatpush1.bf16.msra.mxu0 0
        %1612 = vmatprep.subr.bf16.mxu0 0
        %1613 = vmatpush1.bf16.msra.mxu0 0
        %1614 = vmatprep.subr.bf16.mxu0 0
        %1615 = vmatpush1.bf16.msra.mxu0 0
        %1616 = vmatprep.subr.bf16.mxu0 0
        %1617 = vmatpush1.bf16.msra.mxu0 0
        %1618 = vmatprep.subr.bf16.mxu0 0
        %1619 = vmatpush1.bf16.msra.mxu0 0
        %1620 = vmatprep.subr.bf16.mxu0 0
        %1621 = vmatpush1.bf16.msra.mxu0 0
        %1622 = vmatprep.subr.bf16.mxu0 0
        %1623 = vmatpush1.bf16.msra.mxu0 0
        %1624 = vmatprep.subr.bf16.mxu0 0
        %1625 = vmatpush1.bf16.msra.mxu0 0
        %1626 = vmatprep.subr.bf16.mxu0 0
        %1627 = vmatpush1.bf16.msra.mxu0 0
        %1628 = vmatprep.subr.bf16.mxu0 0
        %1629 = vmatpush1.bf16.msra.mxu0 0
        %1630 = vmatprep.subr.bf16.mxu0 0
        %1631 = vmatpush1.bf16.msra.mxu0 0
        %1632 = vmatprep.subr.bf16.mxu0 0
        %1633 = vmatpush1.bf16.msra.mxu0 0
        %1634 = vmatprep.subr.bf16.mxu0 0
        %1635 = vmatpush1.bf16.msra.mxu0 0
        %1636 = vmatprep.subr.bf16.mxu0 0
        %1637 = vmatpush1.bf16.msra.mxu0 0
        %1638 = vmatprep.mubr.bf16.mxu0 0
        %1639 = vmatmul.mubr.bf16.gmra.mrb[0].mxu0 %v1548
        %v1640 = vpop.f32.mrb[0].mxu0
        %v1641 = vadd.f32 0.0, %v1640
        %v1642 = vpop.f32.mrb[0].mxu0
        %v1643 = vpop.f32.mrb[0].mxu0
        %v1644 = vadd.f32 0.0, %v1643
        %v1645 = vpop.f32.mrb[0].mxu0
        %1646 = vmatprep.mubr.bf16.mxu0 0
        %1647 = vmatmul.mubr.bf16.gmra.mrb[0].mxu0 %v1551
        %v1648 = vpop.f32.mrb[0].mxu0
        %v1649 = vadd.f32 0.0, %v1648
        %v1650 = vpop.f32.mrb[0].mxu0
        %v1651 = vpop.f32.mrb[0].mxu0
        %v1652 = vadd.f32 0.0, %v1651
        %v1653 = vpop.f32.mrb[0].mxu0
        %1654 = vdwg.mxu0
        %v1655 = vadd.f32 %v1497, %v1588
        %v1656 = vadd.f32 %v1498, %v1590
        %v1657 = vadd.f32 %v1499, %v1641
        %v1658 = vadd.f32 %v1500, %v1592
        %v1659 = vadd.f32 %v1501, %v1594
        %v1660 = vadd.f32 %v1502, %v1644
        %v1661 = vadd.f32 %v1503, %v1598
        %v1662 = vadd.f32 %v1504, %v1600
        %v1663 = vadd.f32 %v1505, %v1649
        %v1664 = vadd.f32 %v1506, %v1602
        %v1665 = vadd.f32 %v1507, %v1604
        %v1666 = vadd.f32 %v1508, %v1652
        %v1667 = vld [vmem:[#allocation7] sm:$0xff]
        %v1668 = vld [vmem:[#allocation7 + $0x8] sm:$0xff]
        %v1669 = vld [vmem:[#allocation7 + $0x10] sm:$0xff]
        %v1670 = vld [vmem:[#allocation7 + $0x18] sm:$0xff]
        %1672 = vset.pattern.permute.xlu0 0
        %1673 = vperm.xlu0 %1672, %v1667
        %v1674 = vpop.permute.xlu0 %1673
        %1677 = vset.pattern.permute.xlu0 0
        %1678 = vperm.xlu0 %1677, %v1668
        %v1679 = vpop.permute.xlu0 %1678
        %1682 = vset.pattern.permute.xlu0 0
        %1683 = vperm.xlu0 %1682, %v1669
        %v1684 = vpop.permute.xlu0 %1683
        %1687 = vset.pattern.permute.xlu0 0
        %1688 = vperm.xlu0 %1687, %v1670
        %v1689 = vpop.permute.xlu0 %1688
        %v1691 = vadd.f32 %v1655, %v1674
        %v1692 = vadd.f32 %v1656, %v1674
        %v1693 = vadd.f32 %v1657, %v1674
        %v1694 = vadd.f32 %v1658, %v1679
        %v1695 = vadd.f32 %v1659, %v1679
        %v1696 = vadd.f32 %v1660, %v1679
        %v1697 = vadd.f32 %v1661, %v1684
        %v1698 = vadd.f32 %v1662, %v1684
        %v1699 = vadd.f32 %v1663, %v1684
        %v1700 = vadd.f32 %v1664, %v1689
        %v1701 = vadd.f32 %v1665, %v1689
        %v1702 = vadd.f32 %v1666, %v1689
        %1703 = vst [vmem:[%s247] sm:$0xff] %v1691
        %1704 = vst [vmem:[%s247 + $0x8] sm:$0xff] %v1692
        %1705 = vst.msk [vmem:[%s247 + $0x10] sm:$0xff] %vm328, %v1693
        %1706 = vst [vmem:[%s247 + $0x18] sm:$0xff] %v1694
        %1707 = vst [vmem:[%s247 + $0x20] sm:$0xff] %v1695
        %1708 = vst.msk [vmem:[%s247 + $0x28] sm:$0xff] %vm328, %v1696
        %1709 = vst [vmem:[%s247 + $0x30] sm:$0xff] %v1697
        %1710 = vst [vmem:[%s247 + $0x38] sm:$0xff] %v1698
        %1711 = vst.msk [vmem:[%s247 + $0x40] sm:$0xff] %vm328, %v1699
        %1712 = vst [vmem:[%s247 + $0x48] sm:$0xff] %v1700
        %1713 = vst [vmem:[%s247 + $0x50] sm:$0xff] %v1701
        %1714 = vst.msk [vmem:[%s247 + $0x58] sm:$0xff] %vm328, %v1702
        %s1715 = sand.u32 %s121, 1
        %s1716 = scalar_lea.sflag [#allocation4], %s1715
        %s1717 = sand.u32 %s121, 1
        %s1718 = smul.addr %s1717, 96
        %s1719 = scalar_lea.vmem [#allocation8], %s1718
        // Predicated region
        $region45: #{transform_mlmodel_forward.8} parent=31 // pred_check
          %p1720 = pneg %p131
        $region46: #{transform_mlmodel_forward.8} parent=31 // pred_check_branch
          %1722 = sbr.rel (%p1720) target = $region48
        $region47: #{transform_mlmodel_forward.8} parent=31 // pred_region
          %s1723 = smul.u32 4, %s26
          %s1725 = ssub.s32 1536, 1536
          %1726 = vsyncadd %s1716, %s1725
          %s1727 = smul.addr %s1723, 3
          %s1728 = smul.addr %s25, 12
          %s1729 = sadd.s32 %s1727, %s1728
          %s1730 = smul.addr %s1729, 128
          %s1731 = scalar_lea.hbm %s3, %s1730
          %s1732 = sshll.u32 %s1719, 4
          %s1733 = int_to_ptr.vmem [resolvable:$true] %s1732
          %1738 = dma.vmem_to_hbm [thread:$0]  %s1733, 1536, %s1731, %s1716, 384, 384, 24
        $region48: #{transform_mlmodel_forward.8} parent=31 // pred_fallthru
          _
      $region32: #{transform_mlmodel_forward.8} parent=5 // pred_fallthru
        _
      %p1739 = scmp.le.s32.totalorder 2, %s16
      // Predicated region
      $region49: #{transform_mlmodel_forward.8} parent=5 // pred_check
        %p1740 = pneg %p1739
      $region50: #{transform_mlmodel_forward.8} parent=5 // pred_check_branch
        %1742 = sbr.rel (%p1740) target = $region52
      $region51: #{transform_mlmodel_forward.8} parent=5 // pred_region
        %s1743 = ssub.s32 %s16, 2
        // Predicated region
        $region53: #{transform_mlmodel_forward.8} parent=51 // pred_check
          %p1744 = pneg %p137
        $region54: #{transform_mlmodel_forward.8} parent=51 // pred_check_branch
          %1746 = sbr.rel (%p1744) target = $region56
        $region55: #{transform_mlmodel_forward.8} parent=51 // pred_region
          %s1747 = sand.u32 %s122, 1
          %s1748 = scalar_lea.sflag [#allocation4], %s1747
          %s1749 = sand.u32 %s122, 1
          %s1750 = smul.addr %s1749, 96
          %s1751 = scalar_lea.vmem [#allocation8], %s1750
          %1752 = dma.done %s1748, 1536
        $region56: #{transform_mlmodel_forward.8} parent=51 // pred_fallthru
          _
      $region52: #{transform_mlmodel_forward.8} parent=5 // pred_fallthru
        _
    $region6: #{transform_mlmodel_forward.8} parent=1 // loop_footer
      %s20 = sadd.s32 1, %s16
    $region7: #{transform_mlmodel_forward.8} parent=1 // loop_footer_branch
      %15 = sbr.rel target = $region3
    $region8: #{transform_mlmodel_forward.8} parent=1 // loop_exit
      _
    %1753 = vsyncpa [#allocation3], 1
    %s1754 = scalar_lea.sflag [#allocation3], 1
    %1755 = vsyncpa %s1754, 1
    %1756 = vsyncpa [#allocation6], 1
    %1757 = vsyncpa [#allocation4], 1
    %s1758 = scalar_lea.sflag [#allocation4], 1
    %1759 = vsyncpa %s1758, 1

</llo_original>
